<compile_context>
chip_gen: v7x
topology: tpu7x:2x2x1
jax: 0.10.0
libtpu: 0.0.40
codegen_flags: <defaults>
</compile_context>

<pallas_src>
import functools
import math

import jax
import jax.numpy as jnp
from jax.experimental import pallas as pl
from jax.experimental.pallas import tpu as pltpu


# ----------------------------------------------------------------------------
# Pallas kernel: staged weight prefetch + all FC layers, LSTMCell recurrence,
# fused heads with per-segment log-softmax.
# ----------------------------------------------------------------------------
def _prednet_kernel(T, BP, H, dims, n_heads, layout,
                    seq_ref, query_ref, state_ref, wE1_ref, bias_ref,
                    wE2_hbm, wL_hbm, wL1_hbm, wL2_hbm, wH_hbm,
                    out_ref,
                    wE2_v, wL_v, wL1_v, wL2_v, wH_v, sems):
    f32 = jnp.float32
    bf16 = jnp.bfloat16
    PB, PO, PM = dims["PB"], dims["PO"], dims["PM"]

    # ---- kick off all late-weight DMAs immediately (overlap with the compute below) ----
    copies = [
        pltpu.make_async_copy(wE2_hbm, wE2_v, sems.at[0]),   # 2nd-layer + msg weights
        pltpu.make_async_copy(wL_hbm, wL_v, sems.at[1]),      # fused W_ih + W_hh
        pltpu.make_async_copy(wL1_hbm, wL1_v, sems.at[2]),    # wq1 | wf1h | wf1q
        pltpu.make_async_copy(wL2_hbm, wL2_v, sems.at[3]),    # wq2 | wf2
        pltpu.make_async_copy(wH_hbm, wH_v, sems.at[4]),      # fused heads
    ]
    for c in copies:
        c.start()

    def bias(name):
        off, n = layout["bias"][name]            # lane offsets are multiples of 128
        return bias_ref[:, off:off + n]

    def rows(ref, group, name):
        r0, nr = layout[group][name]             # row offsets are multiples of 16
        return ref[r0:r0 + nr, :]

    def mm(x, w):
        # bf16 operands on the MXU, f32 accumulation.
        return jnp.dot(x.astype(bf16), w, preferred_element_type=f32)

    def lin_relu(x, w, b):
        return jnp.maximum(mm(x, w) + b, 0.0)

    # ---- phase 0a: first-layer board/order branches (only wE1 + bias are resident) ----
    seq = seq_ref[...]                           # (T*BP, PB+PO+PM), time-major, batch padded
    board_x = seq[:, 0:PB]
    order_x = seq[:, PB:PB + PO]
    msg_x = seq[:, PB + PO:PB + PO + PM]

    b1 = lin_relu(board_x, rows(wE1_ref, "E1", "wb1"), bias("bb1"))   # (T*BP, 1024)
    o1 = lin_relu(order_x, rows(wE1_ref, "E1", "wo1"), bias("bo1"))

    # ---- phase 0b: second layers + (lane-padded) msg branch ----
    copies[0].wait()                                                  # wE2 arrived
    m1 = lin_relu(msg_x, rows(wE2_v, "E2", "wm1"), bias("bm1"))       # (T*BP, 128)
    board_h = lin_relu(b1, rows(wE2_v, "E2", "wb2"), bias("bb2"))     # (T*BP, 128)
    order_h = lin_relu(o1, rows(wE2_v, "E2", "wo2"), bias("bo2"))
    msg_h = lin_relu(m1, rows(wE2_v, "E2", "wm2"), bias("bm2"))       # lanes >= 32 are 0

    # ---- phase 0c: one fused W_ih matmul + LSTMCell recurrence ----
    # x_concat = [e_char, board, msg, order]; e_char is exactly zero (s==0 path) so its
    # W_ih block is dropped.  bias('blstm') = bih + bhh (folded once in pack_params).
    copies[1].wait()                                                  # wL arrived
    x_in = jnp.concatenate([board_h, msg_h, order_h], axis=-1)        # (T*BP, 384)
    gx = mm(x_in, rows(wL_v, "L", "wih")) + bias("blstm")             # (T*BP, 4H)

    whh = rows(wL_v, "L", "whh")
    hx = state_ref[:, 0:H]
    cx = state_ref[:, H:2 * H]
    # T is tiny (4) -> static unroll; switch to lax.fori_loop(..., unroll=True) if T grows.
    for t in range(T):
        g = gx[t * BP:(t + 1) * BP, :] + mm(hx, whh)                  # (BP, 4H), aligned
        i_g = jax.nn.sigmoid(g[:, 0:H])
        f_g = jax.nn.sigmoid(g[:, H:2 * H])
        g_g = jnp.tanh(g[:, 2 * H:3 * H])
        o_g = jax.nn.sigmoid(g[:, 3 * H:4 * H])
        cx = f_g * cx + i_g * g_g
        hx = o_g * jnp.tanh(cx)

    # ---- phase 1: query branch, fc1/fc2 and fused heads (prefetched weights) ----
    copies[2].wait()
    copies[3].wait()
    copies[4].wait()

    q = lin_relu(query_ref[...], rows(wL1_v, "L1", "wq1"), bias("bq1"))
    q = lin_relu(q, rows(wL2_v, "L2", "wq2"), bias("bq2"))

    # x = cat([hx_last, q]) -> fc1 -> fc2 (fc1 weight split by rows to avoid lane concat)
    x = jnp.maximum(mm(hx, rows(wL1_v, "L1", "wf1h"))
                    + mm(q, rows(wL1_v, "L1", "wf1q")) + bias("bf1"), 0.0)
    x = lin_relu(x, rows(wL2_v, "L2", "wf2"), bias("bf2"))            # (BP, 128)

    # fused heads: one lane-dense matmul, then per-segment masked log-softmax (f32)
    logits = mm(x, wH_v[...]) + bias("bhead")                         # (BP, 128)

    lane = jax.lax.broadcasted_iota(jnp.int32, logits.shape, 1)
    m_b = jnp.zeros_like(logits)
    ls_b = jnp.zeros_like(logits)
    start = 0
    for n in n_heads:
        mask = (lane >= start) & (lane < start + n)
        m = jnp.max(jnp.where(mask, logits, -1e30), axis=-1, keepdims=True)
        e = jnp.exp(jnp.where(mask, logits - m, -1e30))               # masked lanes -> 0
        s = jnp.sum(e, axis=-1, keepdims=True)
        maskf = mask.astype(f32)
        m_b = m_b + maskf * m
        ls_b = ls_b + maskf * jnp.log(s)
        start += n
    out_ref[...] = logits - m_b - ls_b                                # pad lanes stay 0


# ----------------------------------------------------------------------------
# Deterministic parameter init (PyTorch-style uniform bounds).
# ----------------------------------------------------------------------------
def _linear(key, fan_in, fan_out):
    kw, kb = jax.random.split(key)
    bound = 1.0 / math.sqrt(fan_in)
    w = jax.random.uniform(kw, (fan_in, fan_out), jnp.float32, -bound, bound)
    b = jax.random.uniform(kb, (1, fan_out), jnp.float32, -bound, bound)
    return w, b


def init_params(key, cfg):
    H = cfg["lstm_hidden_dim"]
    C = cfg["char_output_dim"]
    num_loc, board_feat = cfg["num_loc"], cfg["board_feat"]
    num_order, order_feat = cfg["num_order"], cfg["order_feat"]
    msg_feat, send_dim, Q = cfg["msg_feat"], cfg["send_dim"], cfg["query_output_dim"]
    hidden_size = C + cfg["num_msg"] * msg_feat + 128          # no_char=True formula
    assert hidden_size == C + 288, "LSTM input size must match x_concat width"
    dim_feature = H + Q                                        # no_char=True formula

    keys = jax.random.split(key, 16)
    p = {}
    p["wm1"], p["bm1"] = _linear(keys[0], 2 * msg_feat, 64)
    p["wm2"], p["bm2"] = _linear(keys[1], 64, 32)
    p["wb1"], p["bb1"] = _linear(keys[2], num_loc * board_feat, 1024)
    p["wb2"], p["bb2"] = _linear(keys[3], 1024, 128)
    p["wo1"], p["bo1"] = _linear(keys[4], num_order * order_feat, 1024)
    p["wo2"], p["bo2"] = _linear(keys[5], 1024, 128)
    p["wq1"], p["bq1"] = _linear(keys[6], num_loc + send_dim + num_loc * board_feat, 1024)
    p["wq2"], p["bq2"] = _linear(keys[7], 1024, Q)
    wf1, p["bf1"] = _linear(keys[8], dim_feature, 1024)
    p["wf1h"], p["wf1q"] = wf1[:H], wf1[H:]
    p["wf2"], p["bf2"] = _linear(keys[9], 1024, 128)
    p["woh"], p["boh"] = _linear(keys[10], 128, 4)
    p["wdh"], p["bdh"] = _linear(keys[11], 128, num_loc)
    p["wrh"], p["brh"] = _linear(keys[12], 128, 2)

    # LSTMCell parameters (stored transposed: (in, 4H) / (H, 4H)).
    bound = 1.0 / math.sqrt(H)
    k = jax.random.split(keys[13], 4)
    wih = jax.random.uniform(k[0], (hidden_size, 4 * H), jnp.float32, -bound, bound)
    p["whh"] = jax.random.uniform(k[1], (H, 4 * H), jnp.float32, -bound, bound)
    p["bih"] = jax.random.uniform(k[2], (1, 4 * H), jnp.float32, -bound, bound)
    p["bhh"] = jax.random.uniform(k[3], (1, 4 * H), jnp.float32, -bound, bound)
    # x_concat column order: [e_char(C), board(128), msg(32), order(128)]
    p["wih_b"] = wih[C:C + 128]
    p["wih_m"] = wih[C + 128:C + 160]
    p["wih_o"] = wih[C + 160:C + 288]
    return p


# ----------------------------------------------------------------------------
# Pack params into a few bf16 weight groups + one f32 bias pack.
#   early (VMEM inputs): wE1 (first-layer board/order), bias pack
#   late  (HBM inputs, async-prefetched in-kernel): wE2, wL (LSTM), wL1, wL2, wH
# ----------------------------------------------------------------------------
def pack_params(p, cfg):
    bf16 = jnp.bfloat16
    H = cfg["lstm_hidden_dim"]
    board_w = cfg["num_loc"] * cfg["board_feat"]
    order_w = cfg["num_order"] * cfg["order_feat"]
    msg_w = 2 * cfg["msg_feat"]
    query_w = cfg["num_loc"] + cfg["send_dim"] + board_w

    c128 = lambda n: -(-n // 128) * 128
    c16 = lambda n: -(-n // 16) * 16
    PB, PO, PM, QW = c128(board_w), c128(order_w), c128(msg_w), c16(query_w)

    def pad2(x, rows_, cols_):
        return jnp.pad(x, ((0, rows_ - x.shape[0]), (0, cols_ - x.shape[1])))

    def row_pack(items):
        blocks, lay, off = [], {}, 0
        for name, w in items:
            assert w.shape[0] % 16 == 0, name   # keep bf16 sublane-tile alignment
            lay[name] = (off, w.shape[0])
            blocks.append(w.astype(bf16))
            off += w.shape[0]
        return jnp.concatenate(blocks, axis=0), lay

    # early group: first-layer 1024-wide weights (zero row-padded to lane-dense inputs)
    wE1, layE1 = row_pack([("wb1", pad2(p["wb1"], PB, 1024)),
                           ("wo1", pad2(p["wo1"], PO, 1024))])

    # late group E2: second layers + fully lane-padded msg branch (128-wide outputs)
    wE2, layE2 = row_pack([("wb2", p["wb2"]),
                           ("wo2", p["wo2"]),
                           ("wm1", pad2(p["wm1"], PM, 128)),
                           ("wm2", pad2(p["wm2"], 128, 128))])

    # late group L: fused W_ih (board | msg-padded | order) + W_hh, all (., 4H)
    wih_fused = jnp.concatenate([p["wih_b"],
                                 pad2(p["wih_m"], 128, 4 * H),
                                 p["wih_o"]], axis=0)
    wL, layL = row_pack([("wih", wih_fused), ("whh", p["whh"])])

    # late group L1/L2: query + fc weights
    wL1, layL1 = row_pack([("wq1", pad2(p["wq1"], QW, 1024)),
                           ("wf1h", p["wf1h"]),
                           ("wf1q", p["wf1q"])])
    wL2, layL2 = row_pack([("wq2", p["wq2"]), ("wf2", p["wf2"])])

    # fused heads, zero-padded to a lane-dense 128-wide matmul
    n_heads = (4, cfg["num_loc"], 2)
    head_w = jnp.concatenate([p["woh"], p["wdh"], p["wrh"]], axis=1)
    head_b = jnp.concatenate([p["boh"], p["bdh"], p["brh"]], axis=1)
    assert head_w.shape[1] <= 128
    wH = pad2(head_w, 128, 128).astype(bf16)
    bhead = pad2(head_b, 1, 128)

    # all biases in one f32 row; each chunk padded to a multiple of 128 lanes
    bias_items = [("bb1", p["bb1"]), ("bo1", p["bo1"]),
                  ("bb2", p["bb2"]), ("bo2", p["bo2"]),
                  ("bm1", pad2(p["bm1"], 1, 128)), ("bm2", pad2(p["bm2"], 1, 128)),
                  ("blstm", p["bih"] + p["bhh"]),          # hoisted: bih + bhh folded once
                  ("bq1", p["bq1"]), ("bq2", p["bq2"]),
                  ("bf1", p["bf1"]), ("bf2", p["bf2"]),
                  ("bhead", bhead)]
    chunks, layB, off = [], {}, 0
    for name, b in bias_items:
        n = b.shape[-1]
        npad = c128(n)
        chunks.append(jnp.pad(b.reshape(1, -1), ((0, 0), (0, npad - n))))
        layB[name] = (off, n)
        off += npad
    biases = jnp.concatenate(chunks, axis=-1).astype(jnp.float32)

    arrays = {"wE1": wE1, "wE2": wE2, "wL": wL, "wL1": wL1, "wL2": wL2,
              "wH": wH, "bias": biases}
    layout = {"E1": layE1, "E2": layE2, "L": layL, "L1": layL1, "L2": layL2,
              "bias": layB}
    dims = {"PB": PB, "PO": PO, "PM": PM, "QW": QW}
    return arrays, layout, dims, n_heads


# ----------------------------------------------------------------------------
# Forward wrapper (glue: slicing / reshapes / padding), then one pallas_call.
# ----------------------------------------------------------------------------
def only_lstm_prednet_forward(packed, cfg, past_board, past_order, past_msg,
                              curr_board, curr_src, curr_msg, curr_send,
                              curr_order, other_ind, me_ind, hx0, cx0):
    arrays, layout, dims, n_heads = packed
    B = curr_board.shape[0]
    # one full bf16 sublane tile minimum; the whole batch runs in a single call so larger
    # batches (up to a few hundred rows) amortize the weight DMA essentially for free
    BP = max(16, -(-B // 16) * 16)
    H = cfg["lstm_hidden_dim"]
    Q = cfg["query_output_dim"]
    num_agent = cfg["num_agent"]

    curr_board_last = curr_board[:, -1]          # (B, L, F)
    prep_curr_board = curr_board[:, :-1]         # (B, T, L, F)
    prep_curr_msg = curr_msg[:, :-1, :]          # (B, T, 2*msg_feat)
    T = prep_curr_board.shape[1]

    # Mirror the torch forward's one-hot bookkeeping (unused when no_char=True).
    _ = jax.nn.one_hot(me_ind[:, -1], num_agent).reshape(-1, num_agent)[:, None, :]
    _ = jax.nn.one_hot(other_ind[:, -1], num_agent).reshape(-1, num_agent)[:, None, :]
    _ = jax.nn.one_hot(me_ind[:, :-1], num_agent).reshape(-1, 4, num_agent)
    _ = jax.nn.one_hot(other_ind[:, :-1], num_agent).reshape(-1, 4, num_agent)

    s = past_board.shape[2]
    assert s == 0, "only the s == 0 (zero e_char) path is implemented"
    # TODO(synk): GCN_CharNet / FC_CharNet (s > 0) branch not defined in the reference
    # snippet; here e_char_2d is exact zeros, as in the torch code.

    def to_time_major(x, width):                 # (B, T, F) -> (T*BP, width)
        x = jnp.transpose(x, (1, 0, 2))
        x = jnp.pad(x, ((0, 0), (0, BP - B), (0, width - x.shape[-1])))
        return x.reshape(T * BP, width)

    board_in = to_time_major(prep_curr_board.reshape(B, T, -1), dims["PB"])
    order_in = to_time_major(curr_order, dims["PO"])
    msg_in = to_time_major(prep_curr_msg, dims["PM"])
    # lane order [board | order | msg], each segment padded to a 128-multiple
    seq_in = jnp.concatenate([board_in, order_in, msg_in], axis=-1).astype(jnp.float32)

    query_in = jnp.concatenate([curr_src.reshape(B, -1), curr_send.reshape(B, -1),
                                curr_board_last.reshape(B, -1)], axis=-1)
    query_in = jnp.pad(query_in, ((0, BP - B), (0, dims["QW"] - query_in.shape[-1])))
    query_in = query_in.astype(jnp.float32)

    state_in = jnp.pad(jnp.concatenate([hx0, cx0], axis=-1),
                       ((0, BP - B), (0, 0))).astype(jnp.float32)

    ins = (seq_in, query_in, state_in, arrays["wE1"], arrays["bias"],
           arrays["wE2"], arrays["wL"], arrays["wL1"], arrays["wL2"], arrays["wH"])

    vmem = pl.BlockSpec(memory_space=pltpu.MemorySpace.VMEM)
    hbm = pl.BlockSpec(memory_space=pl.ANY)
    in_specs = [vmem] * 5 + [hbm] * 5
    out_shape = jax.ShapeDtypeStruct((BP, 128), jnp.float32)

    scratch_shapes = [pltpu.VMEM(arrays["wE2"].shape, jnp.bfloat16),
                      pltpu.VMEM(arrays["wL"].shape, jnp.bfloat16),
                      pltpu.VMEM(arrays["wL1"].shape, jnp.bfloat16),
                      pltpu.VMEM(arrays["wL2"].shape, jnp.bfloat16),
                      pltpu.VMEM(arrays["wH"].shape, jnp.bfloat16),
                      pltpu.SemaphoreType.DMA((5,))]

    # Per-layer FLOP count: time-rows (T*BP) for the branches + gate matmul, BP rows for
    # the recurrence step / query / fc / heads.
    TB = T * BP
    PB_, PO_, PM_, QW_ = dims["PB"], dims["PO"], dims["PM"], dims["QW"]
    mmf = lambda rows_, k, n: 2 * rows_ * k * n
    flops = (mmf(TB, PB_, 1024) + mmf(TB, PO_, 1024) + mmf(TB, PM_, 128)
             + 2 * mmf(TB, 1024, 128) + mmf(TB, 128, 128)
             + mmf(TB, 3 * 128, 4 * H) + T * mmf(BP, H, 4 * H)
             + mmf(BP, QW_, 1024) + mmf(BP, 1024, Q)
             + mmf(BP, H, 1024) + mmf(BP, Q, 1024)
             + mmf(BP, 1024, 128) + mmf(BP, 128, 128))
    transcendentals = TB * 5 * H + BP * 128 * len(n_heads)    # sigmoid/tanh + softmax exp
    bytes_accessed = int(sum(int(a.size) * a.dtype.itemsize for a in ins) + BP * 128 * 4)
    cost = pl.CostEstimate(flops=int(flops), transcendentals=int(transcendentals),
                           bytes_accessed=bytes_accessed)

    kernel = functools.partial(_prednet_kernel, T, BP, H, dims, n_heads, layout)

    out = pl.pallas_call(
        kernel,
        out_shape=out_shape,
        in_specs=in_specs,
        out_specs=vmem,
        scratch_shapes=scratch_shapes,
        cost_estimate=cost,
    )(*ins)

    n_ord, n_dst, n_rsp = n_heads
    order_lp = out[:B, 0:n_ord]
    dst_lp = out[:B, n_ord:n_ord + n_dst]
    resp_lp = out[:B, n_ord + n_dst:n_ord + n_dst + n_rsp]
    return order_lp, dst_lp, resp_lp, None


# ----------------------------------------------------------------------------
# Pure-JAX reference (same bf16 weights, f32 accumulation) for validation.
# ----------------------------------------------------------------------------
def reference_forward(params, cfg, curr_board, curr_src, curr_msg, curr_send,
                      curr_order, hx0, cx0):
    bf16 = jnp.bfloat16
    B = curr_board.shape[0]
    H = cfg["lstm_hidden_dim"]
    prep_curr_board = curr_board[:, :-1]
    prep_curr_msg = curr_msg[:, :-1, :]
    T = prep_curr_board.shape[1]
    p = {k: (v.astype(bf16) if k.startswith("w") else v) for k, v in params.items()}

    def mm(x, w):
        return jnp.dot(x.astype(bf16), w, preferred_element_type=jnp.float32)

    def lr(x, w, b):
        return jnp.maximum(mm(x, w) + b, 0.0)

    board = lr(lr(prep_curr_board.reshape(B, T, -1), p["wb1"], p["bb1"]), p["wb2"], p["bb2"])
    msg = lr(lr(prep_curr_msg, p["wm1"], p["bm1"]), p["wm2"], p["bm2"])
    order = lr(lr(curr_order, p["wo1"], p["bo1"]), p["wo2"], p["bo2"])

    hx, cx = hx0, cx0
    for t in range(T):
        g = (mm(board[:, t], p["wih_b"]) + mm(msg[:, t], p["wih_m"])
             + mm(order[:, t], p["wih_o"]) + p["bih"] + p["bhh"] + mm(hx, p["whh"]))
        i = jax.nn.sigmoid(g[:, 0:H])
        f = jax.nn.sigmoid(g[:, H:2 * H])
        gg = jnp.tanh(g[:, 2 * H:3 * H])
        o = jax.nn.sigmoid(g[:, 3 * H:4 * H])
        cx = f * cx + i * gg
        hx = o * jnp.tanh(cx)

    query = jnp.concatenate([curr_src.reshape(B, -1), curr_send.reshape(B, -1),
                             curr_board[:, -1].reshape(B, -1)], axis=-1)
    q = lr(lr(query, p["wq1"], p["bq1"]), p["wq2"], p["bq2"])
    x = jnp.maximum(mm(hx, p["wf1h"]) + mm(q, p["wf1q"]) + p["bf1"], 0.0)
    x = lr(x, p["wf2"], p["bf2"])
    order_lp = jax.nn.log_softmax(mm(x, p["woh"]) + p["boh"])
    dst_lp = jax.nn.log_softmax(mm(x, p["wdh"]) + p["bdh"])
    resp_lp = jax.nn.log_softmax(mm(x, p["wrh"]) + p["brh"])
    return order_lp, dst_lp, resp_lp


# ----------------------------------------------------------------------------
if __name__ == "__main__":
    cfg = dict(
        no_char=True, gcn=False,
        num_agent=4, num_loc=8, board_feat=16,
        num_order=8, order_feat=16,
        msg_feat=16, num_msg=10,
        send_dim=8, char_output_dim=32,
        lstm_hidden_dim=128, query_output_dim=128,
    )
    B, T = 2, 4

    key = jax.random.PRNGKey(0)
    kp, kb, km, ko, ks, kd, ki1, ki2, kh, kc = jax.random.split(key, 10)

    params = init_params(kp, cfg)
    packed = pack_params(params, cfg)

    curr_board = jax.random.normal(kb, (B, T + 1, cfg["num_loc"], cfg["board_feat"]), jnp.float32)
    curr_msg = jax.random.normal(km, (B, T + 1, 2 * cfg["msg_feat"]), jnp.float32)
    curr_order = jax.random.normal(ko, (B, T, cfg["num_order"] * cfg["order_feat"]), jnp.float32)
    curr_src = jax.random.normal(ks, (B, cfg["num_loc"]), jnp.float32)
    curr_send = jax.random.normal(kd, (B, cfg["send_dim"]), jnp.float32)
    past_board = jnp.zeros((B, 4, 0, cfg["num_loc"], cfg["board_feat"]), jnp.float32)
    past_order = jnp.zeros((B, 4, 0, cfg["num_order"] * cfg["order_feat"]), jnp.float32)
    past_msg = jnp.zeros((B, 4, 0, 2 * cfg["msg_feat"]), jnp.float32)
    me_ind = jax.random.randint(ki1, (B, 5), 0, cfg["num_agent"], jnp.int32)
    other_ind = jax.random.randint(ki2, (B, 5), 0, cfg["num_agent"], jnp.int32)
    # init_hidden: deterministic stand-in for torch.randn
    hx0 = jax.random.normal(kh, (B, cfg["lstm_hidden_dim"]), jnp.float32)
    cx0 = jax.random.normal(kc, (B, cfg["lstm_hidden_dim"]), jnp.float32)

    order, dst, response, _none = only_lstm_prednet_forward(
        packed, cfg, past_board, past_order, past_msg, curr_board, curr_src,
        curr_msg, curr_send, curr_order, other_ind, me_ind, hx0, cx0)
    jax.block_until_ready((order, dst, response))

    # Sanity: shapes, finiteness, LogSoftmax rows exponentiate to distributions.
    assert order.shape == (B, 4) and dst.shape == (B, cfg["num_loc"]) and response.shape == (B, 2)
    assert bool(jnp.all(jnp.isfinite(order)) & jnp.all(jnp.isfinite(dst))
                & jnp.all(jnp.isfinite(response)))
    assert bool(jnp.allclose(jnp.exp(order).sum(-1), 1.0, atol=1e-3))
    assert bool(jnp.allclose(jnp.exp(dst).sum(-1), 1.0, atol=1e-3))
    assert bool(jnp.allclose(jnp.exp(response).sum(-1), 1.0, atol=1e-3))

    # Numerical check against a pure-JAX reference using the same bf16 weights.
    order_r, dst_r, resp_r = reference_forward(
        params, cfg, curr_board, curr_src, curr_msg, curr_send, curr_order, hx0, cx0)
    assert bool(jnp.allclose(order, order_r, atol=2e-2, rtol=2e-2))
    assert bool(jnp.allclose(dst, dst_r, atol=2e-2, rtol=2e-2))
    assert bool(jnp.allclose(response, resp_r, atol=2e-2, rtol=2e-2))

    print("KERNEL_OK")
</pallas_src>

<mosaic_0001>
module attributes {stable_mosaic.version = 11 : i64} {
  func.func @_prednet_kernel(%arg0: memref<64x384xf32, #tpu.memory_space<vmem>>, %arg1: memref<16x144xf32, #tpu.memory_space<vmem>>, %arg2: memref<16x256xf32, #tpu.memory_space<vmem>>, %arg3: memref<256x1024xbf16, #tpu.memory_space<vmem>>, %arg4: memref<1x5504xf32, #tpu.memory_space<vmem>>, %arg5: memref<2304x128xbf16, #tpu.memory_space<any>>, %arg6: memref<512x512xbf16, #tpu.memory_space<any>>, %arg7: memref<400x1024xbf16, #tpu.memory_space<any>>, %arg8: memref<2048x128xbf16, #tpu.memory_space<any>>, %arg9: memref<128x128xbf16, #tpu.memory_space<any>>, %arg10: memref<16x128xf32, #tpu.memory_space<vmem>>, %arg11: memref<2304x128xbf16, #tpu.memory_space<vmem>>, %arg12: memref<512x512xbf16, #tpu.memory_space<vmem>>, %arg13: memref<400x1024xbf16, #tpu.memory_space<vmem>>, %arg14: memref<2048x128xbf16, #tpu.memory_space<vmem>>, %arg15: memref<128x128xbf16, #tpu.memory_space<vmem>>, %arg16: memref<5x!tpu.dma_semaphore, #tpu.memory_space<semaphore_mem>>) attributes {dimension_semantics = [], scalar_prefetch = 0 : i64, scratch_operands = 6 : i64, tpu.core_type = #tpu.core_type<tc>} {
    %c0_i32 = arith.constant 0 : i32
    %0 = tpu.memref_slice %arg16[%c0_i32] : memref<5x!tpu.dma_semaphore, #tpu.memory_space<semaphore_mem>> -> memref<1x!tpu.dma_semaphore, #tpu.memory_space<semaphore_mem>>
    %1 = tpu.memref_squeeze %0 : memref<1x!tpu.dma_semaphore, #tpu.memory_space<semaphore_mem>> -> memref<!tpu.dma_semaphore, #tpu.memory_space<semaphore_mem>>
    tpu.enqueue_dma source(%arg5 : memref<2304x128xbf16, #tpu.memory_space<any>>) target(%arg11 : memref<2304x128xbf16, #tpu.memory_space<vmem>>) target_semaphore(%1 : memref<!tpu.dma_semaphore, #tpu.memory_space<semaphore_mem>>)
    %c1_i32 = arith.constant 1 : i32
    %2 = tpu.memref_slice %arg16[%c1_i32] : memref<5x!tpu.dma_semaphore, #tpu.memory_space<semaphore_mem>> -> memref<1x!tpu.dma_semaphore, #tpu.memory_space<semaphore_mem>>
    %3 = tpu.memref_squeeze %2 : memref<1x!tpu.dma_semaphore, #tpu.memory_space<semaphore_mem>> -> memref<!tpu.dma_semaphore, #tpu.memory_space<semaphore_mem>>
    tpu.enqueue_dma source(%arg6 : memref<512x512xbf16, #tpu.memory_space<any>>) target(%arg12 : memref<512x512xbf16, #tpu.memory_space<vmem>>) target_semaphore(%3 : memref<!tpu.dma_semaphore, #tpu.memory_space<semaphore_mem>>)
    %c2_i32 = arith.constant 2 : i32
    %4 = tpu.memref_slice %arg16[%c2_i32] : memref<5x!tpu.dma_semaphore, #tpu.memory_space<semaphore_mem>> -> memref<1x!tpu.dma_semaphore, #tpu.memory_space<semaphore_mem>>
    %5 = tpu.memref_squeeze %4 : memref<1x!tpu.dma_semaphore, #tpu.memory_space<semaphore_mem>> -> memref<!tpu.dma_semaphore, #tpu.memory_space<semaphore_mem>>
    tpu.enqueue_dma source(%arg7 : memref<400x1024xbf16, #tpu.memory_space<any>>) target(%arg13 : memref<400x1024xbf16, #tpu.memory_space<vmem>>) target_semaphore(%5 : memref<!tpu.dma_semaphore, #tpu.memory_space<semaphore_mem>>)
    %c3_i32 = arith.constant 3 : i32
    %6 = tpu.memref_slice %arg16[%c3_i32] : memref<5x!tpu.dma_semaphore, #tpu.memory_space<semaphore_mem>> -> memref<1x!tpu.dma_semaphore, #tpu.memory_space<semaphore_mem>>
    %7 = tpu.memref_squeeze %6 : memref<1x!tpu.dma_semaphore, #tpu.memory_space<semaphore_mem>> -> memref<!tpu.dma_semaphore, #tpu.memory_space<semaphore_mem>>
    tpu.enqueue_dma source(%arg8 : memref<2048x128xbf16, #tpu.memory_space<any>>) target(%arg14 : memref<2048x128xbf16, #tpu.memory_space<vmem>>) target_semaphore(%7 : memref<!tpu.dma_semaphore, #tpu.memory_space<semaphore_mem>>)
    %c4_i32 = arith.constant 4 : i32
    %8 = tpu.memref_slice %arg16[%c4_i32] : memref<5x!tpu.dma_semaphore, #tpu.memory_space<semaphore_mem>> -> memref<1x!tpu.dma_semaphore, #tpu.memory_space<semaphore_mem>>
    %9 = tpu.memref_squeeze %8 : memref<1x!tpu.dma_semaphore, #tpu.memory_space<semaphore_mem>> -> memref<!tpu.dma_semaphore, #tpu.memory_space<semaphore_mem>>
    tpu.enqueue_dma source(%arg9 : memref<128x128xbf16, #tpu.memory_space<any>>) target(%arg15 : memref<128x128xbf16, #tpu.memory_space<vmem>>) target_semaphore(%9 : memref<!tpu.dma_semaphore, #tpu.memory_space<semaphore_mem>>)
    %c0 = arith.constant 0 : index
    %c0_0 = arith.constant 0 : index
    %10 = vector.load %arg0[%c0, %c0_0] : memref<64x384xf32, #tpu.memory_space<vmem>>, vector<64x384xf32>
    %11 = vector.extract_strided_slice %10 {offsets = [0, 0], sizes = [64, 128], strides = [1, 1]} : vector<64x384xf32> to vector<64x128xf32>
    %12 = vector.extract_strided_slice %10 {offsets = [0, 128], sizes = [64, 128], strides = [1, 1]} : vector<64x384xf32> to vector<64x128xf32>
    %13 = vector.extract_strided_slice %10 {offsets = [0, 256], sizes = [64, 128], strides = [1, 1]} : vector<64x384xf32> to vector<64x128xf32>
    %c0_1 = arith.constant 0 : index
    %c0_2 = arith.constant 0 : index
    %14 = vector.load %arg3[%c0_1, %c0_2] : memref<256x1024xbf16, #tpu.memory_space<vmem>>, vector<128x1024xbf16>
    %c0_3 = arith.constant 0 : index
    %c0_4 = arith.constant 0 : index
    %15 = vector.load %arg4[%c0_3, %c0_4] : memref<1x5504xf32, #tpu.memory_space<vmem>>, vector<1x1024xf32>
    %16 = arith.truncf %11 : vector<64x128xf32> to vector<64x128xbf16>
    %cst = arith.constant dense<0.000000e+00> : vector<64x1024xf32>
    %17 = tpu.matmul %16, %14, %cst {dimension_numbers = #tpu.dot_dimension_numbers<[1], [0], [0], [1], [0, 0, 1, 1], [], []>} : vector<64x128xbf16>, vector<128x1024xbf16>, vector<64x1024xf32> -> vector<64x1024xf32>
    %18 = vector.broadcast %15 : vector<1x1024xf32> to vector<64x1024xf32>
    %19 = arith.addf %17, %18 : vector<64x1024xf32>
    %cst_5 = arith.constant 0.000000e+00 : f32
    %20 = vector.broadcast %cst_5 : f32 to vector<64x1024xf32>
    %21 = arith.maximumf %19, %20 : vector<64x1024xf32>
    %c128 = arith.constant 128 : index
    %c0_6 = arith.constant 0 : index
    %22 = vector.load %arg3[%c128, %c0_6] : memref<256x1024xbf16, #tpu.memory_space<vmem>>, vector<128x1024xbf16>
    %c0_7 = arith.constant 0 : index
    %c1024 = arith.constant 1024 : index
    %23 = vector.load %arg4[%c0_7, %c1024] : memref<1x5504xf32, #tpu.memory_space<vmem>>, vector<1x1024xf32>
    %24 = arith.truncf %12 : vector<64x128xf32> to vector<64x128xbf16>
    %cst_8 = arith.constant dense<0.000000e+00> : vector<64x1024xf32>
    %25 = tpu.matmul %24, %22, %cst_8 {dimension_numbers = #tpu.dot_dimension_numbers<[1], [0], [0], [1], [0, 0, 1, 1], [], []>} : vector<64x128xbf16>, vector<128x1024xbf16>, vector<64x1024xf32> -> vector<64x1024xf32>
    %26 = vector.broadcast %23 : vector<1x1024xf32> to vector<64x1024xf32>
    %27 = arith.addf %25, %26 : vector<64x1024xf32>
    %cst_9 = arith.constant 0.000000e+00 : f32
    %28 = vector.broadcast %cst_9 : f32 to vector<64x1024xf32>
    %29 = arith.maximumf %27, %28 : vector<64x1024xf32>
    %c0_i32_10 = arith.constant 0 : i32
    %30 = tpu.memref_slice %arg16[%c0_i32_10] : memref<5x!tpu.dma_semaphore, #tpu.memory_space<semaphore_mem>> -> memref<1x!tpu.dma_semaphore, #tpu.memory_space<semaphore_mem>>
    %31 = tpu.memref_squeeze %30 : memref<1x!tpu.dma_semaphore, #tpu.memory_space<semaphore_mem>> -> memref<!tpu.dma_semaphore, #tpu.memory_space<semaphore_mem>>
    tpu.wait_dma2 semaphore(%31 : memref<!tpu.dma_semaphore, #tpu.memory_space<semaphore_mem>>) src(%arg5 : memref<2304x128xbf16, #tpu.memory_space<any>>) dst(%arg11 : memref<2304x128xbf16, #tpu.memory_space<vmem>>)
    %c2048 = arith.constant 2048 : index
    %c0_11 = arith.constant 0 : index
    %32 = vector.load %arg11[%c2048, %c0_11] : memref<2304x128xbf16, #tpu.memory_space<vmem>>, vector<128x128xbf16>
    %c0_12 = arith.constant 0 : index
    %c2304 = arith.constant 2304 : index
    %33 = vector.load %arg4[%c0_12, %c2304] : memref<1x5504xf32, #tpu.memory_space<vmem>>, vector<1x128xf32>
    %34 = arith.truncf %13 : vector<64x128xf32> to vector<64x128xbf16>
    %cst_13 = arith.constant dense<0.000000e+00> : vector<64x128xf32>
    %35 = tpu.matmul %34, %32, %cst_13 {dimension_numbers = #tpu.dot_dimension_numbers<[1], [0], [0], [1], [0, 0, 1, 1], [], []>} : vector<64x128xbf16>, vector<128x128xbf16>, vector<64x128xf32> -> vector<64x128xf32>
    %36 = vector.broadcast %33 : vector<1x128xf32> to vector<64x128xf32>
    %37 = arith.addf %35, %36 : vector<64x128xf32>
    %cst_14 = arith.constant 0.000000e+00 : f32
    %38 = vector.broadcast %cst_14 : f32 to vector<64x128xf32>
    %39 = arith.maximumf %37, %38 : vector<64x128xf32>
    %c0_15 = arith.constant 0 : index
    %c0_16 = arith.constant 0 : index
    %40 = vector.load %arg11[%c0_15, %c0_16] : memref<2304x128xbf16, #tpu.memory_space<vmem>>, vector<1024x128xbf16>
    %c0_17 = arith.constant 0 : index
    %c2048_18 = arith.constant 2048 : index
    %41 = vector.load %arg4[%c0_17, %c2048_18] : memref<1x5504xf32, #tpu.memory_space<vmem>>, vector<1x128xf32>
    %42 = arith.truncf %21 : vector<64x1024xf32> to vector<64x1024xbf16>
    %cst_19 = arith.constant dense<0.000000e+00> : vector<64x128xf32>
    %43 = tpu.matmul %42, %40, %cst_19 {dimension_numbers = #tpu.dot_dimension_numbers<[1], [0], [0], [1], [0, 0, 1, 1], [], []>} : vector<64x1024xbf16>, vector<1024x128xbf16>, vector<64x128xf32> -> vector<64x128xf32>
    %44 = vector.broadcast %41 : vector<1x128xf32> to vector<64x128xf32>
    %45 = arith.addf %43, %44 : vector<64x128xf32>
    %cst_20 = arith.constant 0.000000e+00 : f32
    %46 = vector.broadcast %cst_20 : f32 to vector<64x128xf32>
    %47 = arith.maximumf %45, %46 : vector<64x128xf32>
    %c1024_21 = arith.constant 1024 : index
    %c0_22 = arith.constant 0 : index
    %48 = vector.load %arg11[%c1024_21, %c0_22] : memref<2304x128xbf16, #tpu.memory_space<vmem>>, vector<1024x128xbf16>
    %c0_23 = arith.constant 0 : index
    %c2176 = arith.constant 2176 : index
    %49 = vector.load %arg4[%c0_23, %c2176] : memref<1x5504xf32, #tpu.memory_space<vmem>>, vector<1x128xf32>
    %50 = arith.truncf %29 : vector<64x1024xf32> to vector<64x1024xbf16>
    %cst_24 = arith.constant dense<0.000000e+00> : vector<64x128xf32>
    %51 = tpu.matmul %50, %48, %cst_24 {dimension_numbers = #tpu.dot_dimension_numbers<[1], [0], [0], [1], [0, 0, 1, 1], [], []>} : vector<64x1024xbf16>, vector<1024x128xbf16>, vector<64x128xf32> -> vector<64x128xf32>
    %52 = vector.broadcast %49 : vector<1x128xf32> to vector<64x128xf32>
    %53 = arith.addf %51, %52 : vector<64x128xf32>
    %cst_25 = arith.constant 0.000000e+00 : f32
    %54 = vector.broadcast %cst_25 : f32 to vector<64x128xf32>
    %55 = arith.maximumf %53, %54 : vector<64x128xf32>
    %c2176_26 = arith.constant 2176 : index
    %c0_27 = arith.constant 0 : index
    %56 = vector.load %arg11[%c2176_26, %c0_27] : memref<2304x128xbf16, #tpu.memory_space<vmem>>, vector<128x128xbf16>
    %c0_28 = arith.constant 0 : index
    %c2432 = arith.constant 2432 : index
    %57 = vector.load %arg4[%c0_28, %c2432] : memref<1x5504xf32, #tpu.memory_space<vmem>>, vector<1x128xf32>
    %58 = arith.truncf %39 : vector<64x128xf32> to vector<64x128xbf16>
    %cst_29 = arith.constant dense<0.000000e+00> : vector<64x128xf32>
    %59 = tpu.matmul %58, %56, %cst_29 {dimension_numbers = #tpu.dot_dimension_numbers<[1], [0], [0], [1], [0, 0, 1, 1], [], []>} : vector<64x128xbf16>, vector<128x128xbf16>, vector<64x128xf32> -> vector<64x128xf32>
    %60 = vector.broadcast %57 : vector<1x128xf32> to vector<64x128xf32>
    %61 = arith.addf %59, %60 : vector<64x128xf32>
    %cst_30 = arith.constant 0.000000e+00 : f32
    %62 = vector.broadcast %cst_30 : f32 to vector<64x128xf32>
    %63 = arith.maximumf %61, %62 : vector<64x128xf32>
    %c1_i32_31 = arith.constant 1 : i32
    %64 = tpu.memref_slice %arg16[%c1_i32_31] : memref<5x!tpu.dma_semaphore, #tpu.memory_space<semaphore_mem>> -> memref<1x!tpu.dma_semaphore, #tpu.memory_space<semaphore_mem>>
    %65 = tpu.memref_squeeze %64 : memref<1x!tpu.dma_semaphore, #tpu.memory_space<semaphore_mem>> -> memref<!tpu.dma_semaphore, #tpu.memory_space<semaphore_mem>>
    tpu.wait_dma2 semaphore(%65 : memref<!tpu.dma_semaphore, #tpu.memory_space<semaphore_mem>>) src(%arg6 : memref<512x512xbf16, #tpu.memory_space<any>>) dst(%arg12 : memref<512x512xbf16, #tpu.memory_space<vmem>>)
    %66 = tpu.concatenate %47, %63, %55 in 1 : vector<64x128xf32>, vector<64x128xf32>, vector<64x128xf32> -> vector<64x384xf32>
    %c0_32 = arith.constant 0 : index
    %c0_33 = arith.constant 0 : index
    %67 = vector.load %arg12[%c0_32, %c0_33] : memref<512x512xbf16, #tpu.memory_space<vmem>>, vector<384x512xbf16>
    %68 = arith.truncf %66 : vector<64x384xf32> to vector<64x384xbf16>
    %cst_34 = arith.constant dense<0.000000e+00> : vector<64x512xf32>
    %69 = tpu.matmul %68, %67, %cst_34 {dimension_numbers = #tpu.dot_dimension_numbers<[1], [0], [0], [1], [0, 0, 1, 1], [], []>} : vector<64x384xbf16>, vector<384x512xbf16>, vector<64x512xf32> -> vector<64x512xf32>
    %c0_35 = arith.constant 0 : index
    %c2560 = arith.constant 2560 : index
    %70 = vector.load %arg4[%c0_35, %c2560] : memref<1x5504xf32, #tpu.memory_space<vmem>>, vector<1x512xf32>
    %71 = vector.broadcast %70 : vector<1x512xf32> to vector<64x512xf32>
    %72 = arith.addf %69, %71 : vector<64x512xf32>
    %c384 = arith.constant 384 : index
    %c0_36 = arith.constant 0 : index
    %73 = vector.load %arg12[%c384, %c0_36] : memref<512x512xbf16, #tpu.memory_space<vmem>>, vector<128x512xbf16>
    %c0_37 = arith.constant 0 : index
    %c0_38 = arith.constant 0 : index
    %74 = vector.load %arg2[%c0_37, %c0_38] : memref<16x256xf32, #tpu.memory_space<vmem>>, vector<16x128xf32>
    %c0_39 = arith.constant 0 : index
    %c128_40 = arith.constant 128 : index
    %75 = vector.load %arg2[%c0_39, %c128_40] : memref<16x256xf32, #tpu.memory_space<vmem>>, vector<16x128xf32>
    %76 = vector.extract_strided_slice %72 {offsets = [0, 0], sizes = [16, 512], strides = [1, 1]} : vector<64x512xf32> to vector<16x512xf32>
    %77 = arith.truncf %74 : vector<16x128xf32> to vector<16x128xbf16>
    %cst_41 = arith.constant dense<0.000000e+00> : vector<16x512xf32>
    %78 = tpu.matmul %77, %73, %cst_41 {dimension_numbers = #tpu.dot_dimension_numbers<[1], [0], [0], [1], [0, 0, 1, 1], [], []>} : vector<16x128xbf16>, vector<128x512xbf16>, vector<16x512xf32> -> vector<16x512xf32>
    %79 = arith.addf %76, %78 : vector<16x512xf32>
    %80 = vector.extract_strided_slice %79 {offsets = [0, 0], sizes = [16, 128], strides = [1, 1]} : vector<16x512xf32> to vector<16x128xf32>
    %81 = arith.negf %80 : vector<16x128xf32>
    %82 = math.exp %81 : vector<16x128xf32>
    %cst_42 = arith.constant 1.000000e+00 : f32
    %83 = vector.broadcast %cst_42 : f32 to vector<16x128xf32>
    %84 = arith.addf %83, %82 : vector<16x128xf32>
    %85 = arith.divf %83, %84 : vector<16x128xf32>
    %86 = vector.extract_strided_slice %79 {offsets = [0, 128], sizes = [16, 128], strides = [1, 1]} : vector<16x512xf32> to vector<16x128xf32>
    %87 = arith.negf %86 : vector<16x128xf32>
    %88 = math.exp %87 : vector<16x128xf32>
    %cst_43 = arith.constant 1.000000e+00 : f32
    %89 = vector.broadcast %cst_43 : f32 to vector<16x128xf32>
    %90 = arith.addf %89, %88 : vector<16x128xf32>
    %91 = arith.divf %89, %90 : vector<16x128xf32>
    %92 = vector.extract_strided_slice %79 {offsets = [0, 256], sizes = [16, 128], strides = [1, 1]} : vector<16x512xf32> to vector<16x128xf32>
    %93 = math.tanh %92 : vector<16x128xf32>
    %94 = vector.extract_strided_slice %79 {offsets = [0, 384], sizes = [16, 128], strides = [1, 1]} : vector<16x512xf32> to vector<16x128xf32>
    %95 = arith.negf %94 : vector<16x128xf32>
    %96 = math.exp %95 : vector<16x128xf32>
    %cst_44 = arith.constant 1.000000e+00 : f32
    %97 = vector.broadcast %cst_44 : f32 to vector<16x128xf32>
    %98 = arith.addf %97, %96 : vector<16x128xf32>
    %99 = arith.divf %97, %98 : vector<16x128xf32>
    %100 = arith.mulf %91, %75 : vector<16x128xf32>
    %101 = arith.mulf %85, %93 : vector<16x128xf32>
    %102 = arith.addf %100, %101 : vector<16x128xf32>
    %103 = math.tanh %102 : vector<16x128xf32>
    %104 = arith.mulf %99, %103 : vector<16x128xf32>
    %105 = vector.extract_strided_slice %72 {offsets = [16, 0], sizes = [16, 512], strides = [1, 1]} : vector<64x512xf32> to vector<16x512xf32>
    %106 = arith.truncf %104 : vector<16x128xf32> to vector<16x128xbf16>
    %cst_45 = arith.constant dense<0.000000e+00> : vector<16x512xf32>
    %107 = tpu.matmul %106, %73, %cst_45 {dimension_numbers = #tpu.dot_dimension_numbers<[1], [0], [0], [1], [0, 0, 1, 1], [], []>} : vector<16x128xbf16>, vector<128x512xbf16>, vector<16x512xf32> -> vector<16x512xf32>
    %108 = arith.addf %105, %107 : vector<16x512xf32>
    %109 = vector.extract_strided_slice %108 {offsets = [0, 0], sizes = [16, 128], strides = [1, 1]} : vector<16x512xf32> to vector<16x128xf32>
    %110 = arith.negf %109 : vector<16x128xf32>
    %111 = math.exp %110 : vector<16x128xf32>
    %cst_46 = arith.constant 1.000000e+00 : f32
    %112 = vector.broadcast %cst_46 : f32 to vector<16x128xf32>
    %113 = arith.addf %112, %111 : vector<16x128xf32>
    %114 = arith.divf %112, %113 : vector<16x128xf32>
    %115 = vector.extract_strided_slice %108 {offsets = [0, 128], sizes = [16, 128], strides = [1, 1]} : vector<16x512xf32> to vector<16x128xf32>
    %116 = arith.negf %115 : vector<16x128xf32>
    %117 = math.exp %116 : vector<16x128xf32>
    %cst_47 = arith.constant 1.000000e+00 : f32
    %118 = vector.broadcast %cst_47 : f32 to vector<16x128xf32>
    %119 = arith.addf %118, %117 : vector<16x128xf32>
    %120 = arith.divf %118, %119 : vector<16x128xf32>
    %121 = vector.extract_strided_slice %108 {offsets = [0, 256], sizes = [16, 128], strides = [1, 1]} : vector<16x512xf32> to vector<16x128xf32>
    %122 = math.tanh %121 : vector<16x128xf32>
    %123 = vector.extract_strided_slice %108 {offsets = [0, 384], sizes = [16, 128], strides = [1, 1]} : vector<16x512xf32> to vector<16x128xf32>
    %124 = arith.negf %123 : vector<16x128xf32>
    %125 = math.exp %124 : vector<16x128xf32>
    %cst_48 = arith.constant 1.000000e+00 : f32
    %126 = vector.broadcast %cst_48 : f32 to vector<16x128xf32>
    %127 = arith.addf %126, %125 : vector<16x128xf32>
    %128 = arith.divf %126, %127 : vector<16x128xf32>
    %129 = arith.mulf %120, %102 : vector<16x128xf32>
    %130 = arith.mulf %114, %122 : vector<16x128xf32>
    %131 = arith.addf %129, %130 : vector<16x128xf32>
    %132 = math.tanh %131 : vector<16x128xf32>
    %133 = arith.mulf %128, %132 : vector<16x128xf32>
    %134 = vector.extract_strided_slice %72 {offsets = [32, 0], sizes = [16, 512], strides = [1, 1]} : vector<64x512xf32> to vector<16x512xf32>
    %135 = arith.truncf %133 : vector<16x128xf32> to vector<16x128xbf16>
    %cst_49 = arith.constant dense<0.000000e+00> : vector<16x512xf32>
    %136 = tpu.matmul %135, %73, %cst_49 {dimension_numbers = #tpu.dot_dimension_numbers<[1], [0], [0], [1], [0, 0, 1, 1], [], []>} : vector<16x128xbf16>, vector<128x512xbf16>, vector<16x512xf32> -> vector<16x512xf32>
    %137 = arith.addf %134, %136 : vector<16x512xf32>
    %138 = vector.extract_strided_slice %137 {offsets = [0, 0], sizes = [16, 128], strides = [1, 1]} : vector<16x512xf32> to vector<16x128xf32>
    %139 = arith.negf %138 : vector<16x128xf32>
    %140 = math.exp %139 : vector<16x128xf32>
    %cst_50 = arith.constant 1.000000e+00 : f32
    %141 = vector.broadcast %cst_50 : f32 to vector<16x128xf32>
    %142 = arith.addf %141, %140 : vector<16x128xf32>
    %143 = arith.divf %141, %142 : vector<16x128xf32>
    %144 = vector.extract_strided_slice %137 {offsets = [0, 128], sizes = [16, 128], strides = [1, 1]} : vector<16x512xf32> to vector<16x128xf32>
    %145 = arith.negf %144 : vector<16x128xf32>
    %146 = math.exp %145 : vector<16x128xf32>
    %cst_51 = arith.constant 1.000000e+00 : f32
    %147 = vector.broadcast %cst_51 : f32 to vector<16x128xf32>
    %148 = arith.addf %147, %146 : vector<16x128xf32>
    %149 = arith.divf %147, %148 : vector<16x128xf32>
    %150 = vector.extract_strided_slice %137 {offsets = [0, 256], sizes = [16, 128], strides = [1, 1]} : vector<16x512xf32> to vector<16x128xf32>
    %151 = math.tanh %150 : vector<16x128xf32>
    %152 = vector.extract_strided_slice %137 {offsets = [0, 384], sizes = [16, 128], strides = [1, 1]} : vector<16x512xf32> to vector<16x128xf32>
    %153 = arith.negf %152 : vector<16x128xf32>
    %154 = math.exp %153 : vector<16x128xf32>
    %cst_52 = arith.constant 1.000000e+00 : f32
    %155 = vector.broadcast %cst_52 : f32 to vector<16x128xf32>
    %156 = arith.addf %155, %154 : vector<16x128xf32>
    %157 = arith.divf %155, %156 : vector<16x128xf32>
    %158 = arith.mulf %149, %131 : vector<16x128xf32>
    %159 = arith.mulf %143, %151 : vector<16x128xf32>
    %160 = arith.addf %158, %159 : vector<16x128xf32>
    %161 = math.tanh %160 : vector<16x128xf32>
    %162 = arith.mulf %157, %161 : vector<16x128xf32>
    %163 = vector.extract_strided_slice %72 {offsets = [48, 0], sizes = [16, 512], strides = [1, 1]} : vector<64x512xf32> to vector<16x512xf32>
    %164 = arith.truncf %162 : vector<16x128xf32> to vector<16x128xbf16>
    %cst_53 = arith.constant dense<0.000000e+00> : vector<16x512xf32>
    %165 = tpu.matmul %164, %73, %cst_53 {dimension_numbers = #tpu.dot_dimension_numbers<[1], [0], [0], [1], [0, 0, 1, 1], [], []>} : vector<16x128xbf16>, vector<128x512xbf16>, vector<16x512xf32> -> vector<16x512xf32>
    %166 = arith.addf %163, %165 : vector<16x512xf32>
    %167 = vector.extract_strided_slice %166 {offsets = [0, 0], sizes = [16, 128], strides = [1, 1]} : vector<16x512xf32> to vector<16x128xf32>
    %168 = arith.negf %167 : vector<16x128xf32>
    %169 = math.exp %168 : vector<16x128xf32>
    %cst_54 = arith.constant 1.000000e+00 : f32
    %170 = vector.broadcast %cst_54 : f32 to vector<16x128xf32>
    %171 = arith.addf %170, %169 : vector<16x128xf32>
    %172 = arith.divf %170, %171 : vector<16x128xf32>
    %173 = vector.extract_strided_slice %166 {offsets = [0, 128], sizes = [16, 128], strides = [1, 1]} : vector<16x512xf32> to vector<16x128xf32>
    %174 = arith.negf %173 : vector<16x128xf32>
    %175 = math.exp %174 : vector<16x128xf32>
    %cst_55 = arith.constant 1.000000e+00 : f32
    %176 = vector.broadcast %cst_55 : f32 to vector<16x128xf32>
    %177 = arith.addf %176, %175 : vector<16x128xf32>
    %178 = arith.divf %176, %177 : vector<16x128xf32>
    %179 = vector.extract_strided_slice %166 {offsets = [0, 256], sizes = [16, 128], strides = [1, 1]} : vector<16x512xf32> to vector<16x128xf32>
    %180 = math.tanh %179 : vector<16x128xf32>
    %181 = vector.extract_strided_slice %166 {offsets = [0, 384], sizes = [16, 128], strides = [1, 1]} : vector<16x512xf32> to vector<16x128xf32>
    %182 = arith.negf %181 : vector<16x128xf32>
    %183 = math.exp %182 : vector<16x128xf32>
    %cst_56 = arith.constant 1.000000e+00 : f32
    %184 = vector.broadcast %cst_56 : f32 to vector<16x128xf32>
    %185 = arith.addf %184, %183 : vector<16x128xf32>
    %186 = arith.divf %184, %185 : vector<16x128xf32>
    %187 = arith.mulf %178, %160 : vector<16x128xf32>
    %188 = arith.mulf %172, %180 : vector<16x128xf32>
    %189 = arith.addf %187, %188 : vector<16x128xf32>
    %190 = math.tanh %189 : vector<16x128xf32>
    %191 = arith.mulf %186, %190 : vector<16x128xf32>
    %c2_i32_57 = arith.constant 2 : i32
    %192 = tpu.memref_slice %arg16[%c2_i32_57] : memref<5x!tpu.dma_semaphore, #tpu.memory_space<semaphore_mem>> -> memref<1x!tpu.dma_semaphore, #tpu.memory_space<semaphore_mem>>
    %193 = tpu.memref_squeeze %192 : memref<1x!tpu.dma_semaphore, #tpu.memory_space<semaphore_mem>> -> memref<!tpu.dma_semaphore, #tpu.memory_space<semaphore_mem>>
    tpu.wait_dma2 semaphore(%193 : memref<!tpu.dma_semaphore, #tpu.memory_space<semaphore_mem>>) src(%arg7 : memref<400x1024xbf16, #tpu.memory_space<any>>) dst(%arg13 : memref<400x1024xbf16, #tpu.memory_space<vmem>>)
    %c3_i32_58 = arith.constant 3 : i32
    %194 = tpu.memref_slice %arg16[%c3_i32_58] : memref<5x!tpu.dma_semaphore, #tpu.memory_space<semaphore_mem>> -> memref<1x!tpu.dma_semaphore, #tpu.memory_space<semaphore_mem>>
    %195 = tpu.memref_squeeze %194 : memref<1x!tpu.dma_semaphore, #tpu.memory_space<semaphore_mem>> -> memref<!tpu.dma_semaphore, #tpu.memory_space<semaphore_mem>>
    tpu.wait_dma2 semaphore(%195 : memref<!tpu.dma_semaphore, #tpu.memory_space<semaphore_mem>>) src(%arg8 : memref<2048x128xbf16, #tpu.memory_space<any>>) dst(%arg14 : memref<2048x128xbf16, #tpu.memory_space<vmem>>)
    %c4_i32_59 = arith.constant 4 : i32
    %196 = tpu.memref_slice %arg16[%c4_i32_59] : memref<5x!tpu.dma_semaphore, #tpu.memory_space<semaphore_mem>> -> memref<1x!tpu.dma_semaphore, #tpu.memory_space<semaphore_mem>>
    %197 = tpu.memref_squeeze %196 : memref<1x!tpu.dma_semaphore, #tpu.memory_space<semaphore_mem>> -> memref<!tpu.dma_semaphore, #tpu.memory_space<semaphore_mem>>
    tpu.wait_dma2 semaphore(%197 : memref<!tpu.dma_semaphore, #tpu.memory_space<semaphore_mem>>) src(%arg9 : memref<128x128xbf16, #tpu.memory_space<any>>) dst(%arg15 : memref<128x128xbf16, #tpu.memory_space<vmem>>)
    %c0_60 = arith.constant 0 : index
    %c0_61 = arith.constant 0 : index
    %198 = vector.load %arg1[%c0_60, %c0_61] : memref<16x144xf32, #tpu.memory_space<vmem>>, vector<16x144xf32>
    %c0_62 = arith.constant 0 : index
    %c0_63 = arith.constant 0 : index
    %199 = vector.load %arg13[%c0_62, %c0_63] : memref<400x1024xbf16, #tpu.memory_space<vmem>>, vector<144x1024xbf16>
    %c0_64 = arith.constant 0 : index
    %c3072 = arith.constant 3072 : index
    %200 = vector.load %arg4[%c0_64, %c3072] : memref<1x5504xf32, #tpu.memory_space<vmem>>, vector<1x1024xf32>
    %201 = arith.truncf %198 : vector<16x144xf32> to vector<16x144xbf16>
    %cst_65 = arith.constant dense<0.000000e+00> : vector<16x1024xf32>
    %202 = tpu.matmul %201, %199, %cst_65 {dimension_numbers = #tpu.dot_dimension_numbers<[1], [0], [0], [1], [0, 0, 1, 1], [], []>} : vector<16x144xbf16>, vector<144x1024xbf16>, vector<16x1024xf32> -> vector<16x1024xf32>
    %203 = vector.broadcast %200 : vector<1x1024xf32> to vector<16x1024xf32>
    %204 = arith.addf %202, %203 : vector<16x1024xf32>
    %cst_66 = arith.constant 0.000000e+00 : f32
    %205 = vector.broadcast %cst_66 : f32 to vector<16x1024xf32>
    %206 = arith.maximumf %204, %205 : vector<16x1024xf32>
    %c0_67 = arith.constant 0 : index
    %c0_68 = arith.constant 0 : index
    %207 = vector.load %arg14[%c0_67, %c0_68] : memref<2048x128xbf16, #tpu.memory_space<vmem>>, vector<1024x128xbf16>
    %c0_69 = arith.constant 0 : index
    %c4096 = arith.constant 4096 : index
    %208 = vector.load %arg4[%c0_69, %c4096] : memref<1x5504xf32, #tpu.memory_space<vmem>>, vector<1x128xf32>
    %209 = arith.truncf %206 : vector<16x1024xf32> to vector<16x1024xbf16>
    %cst_70 = arith.constant dense<0.000000e+00> : vector<16x128xf32>
    %210 = tpu.matmul %209, %207, %cst_70 {dimension_numbers = #tpu.dot_dimension_numbers<[1], [0], [0], [1], [0, 0, 1, 1], [], []>} : vector<16x1024xbf16>, vector<1024x128xbf16>, vector<16x128xf32> -> vector<16x128xf32>
    %211 = vector.broadcast %208 : vector<1x128xf32> to vector<16x128xf32>
    %212 = arith.addf %210, %211 : vector<16x128xf32>
    %cst_71 = arith.constant 0.000000e+00 : f32
    %213 = vector.broadcast %cst_71 : f32 to vector<16x128xf32>
    %214 = arith.maximumf %212, %213 : vector<16x128xf32>
    %c144 = arith.constant 144 : index
    %c0_72 = arith.constant 0 : index
    %215 = vector.load %arg13[%c144, %c0_72] : memref<400x1024xbf16, #tpu.memory_space<vmem>>, vector<128x1024xbf16>
    %216 = arith.truncf %191 : vector<16x128xf32> to vector<16x128xbf16>
    %cst_73 = arith.constant dense<0.000000e+00> : vector<16x1024xf32>
    %217 = tpu.matmul %216, %215, %cst_73 {dimension_numbers = #tpu.dot_dimension_numbers<[1], [0], [0], [1], [0, 0, 1, 1], [], []>} : vector<16x128xbf16>, vector<128x1024xbf16>, vector<16x1024xf32> -> vector<16x1024xf32>
    %c272 = arith.constant 272 : index
    %c0_74 = arith.constant 0 : index
    %218 = vector.load %arg13[%c272, %c0_74] : memref<400x1024xbf16, #tpu.memory_space<vmem>>, vector<128x1024xbf16>
    %219 = arith.truncf %214 : vector<16x128xf32> to vector<16x128xbf16>
    %cst_75 = arith.constant dense<0.000000e+00> : vector<16x1024xf32>
    %220 = tpu.matmul %219, %218, %cst_75 {dimension_numbers = #tpu.dot_dimension_numbers<[1], [0], [0], [1], [0, 0, 1, 1], [], []>} : vector<16x128xbf16>, vector<128x1024xbf16>, vector<16x1024xf32> -> vector<16x1024xf32>
    %221 = arith.addf %217, %220 : vector<16x1024xf32>
    %c0_76 = arith.constant 0 : index
    %c4224 = arith.constant 4224 : index
    %222 = vector.load %arg4[%c0_76, %c4224] : memref<1x5504xf32, #tpu.memory_space<vmem>>, vector<1x1024xf32>
    %223 = vector.broadcast %222 : vector<1x1024xf32> to vector<16x1024xf32>
    %224 = arith.addf %221, %223 : vector<16x1024xf32>
    %cst_77 = arith.constant 0.000000e+00 : f32
    %225 = vector.broadcast %cst_77 : f32 to vector<16x1024xf32>
    %226 = arith.maximumf %224, %225 : vector<16x1024xf32>
    %c1024_78 = arith.constant 1024 : index
    %c0_79 = arith.constant 0 : index
    %227 = vector.load %arg14[%c1024_78, %c0_79] : memref<2048x128xbf16, #tpu.memory_space<vmem>>, vector<1024x128xbf16>
    %c0_80 = arith.constant 0 : index
    %c5248 = arith.constant 5248 : index
    %228 = vector.load %arg4[%c0_80, %c5248] : memref<1x5504xf32, #tpu.memory_space<vmem>>, vector<1x128xf32>
    %229 = arith.truncf %226 : vector<16x1024xf32> to vector<16x1024xbf16>
    %cst_81 = arith.constant dense<0.000000e+00> : vector<16x128xf32>
    %230 = tpu.matmul %229, %227, %cst_81 {dimension_numbers = #tpu.dot_dimension_numbers<[1], [0], [0], [1], [0, 0, 1, 1], [], []>} : vector<16x1024xbf16>, vector<1024x128xbf16>, vector<16x128xf32> -> vector<16x128xf32>
    %231 = vector.broadcast %228 : vector<1x128xf32> to vector<16x128xf32>
    %232 = arith.addf %230, %231 : vector<16x128xf32>
    %cst_82 = arith.constant 0.000000e+00 : f32
    %233 = vector.broadcast %cst_82 : f32 to vector<16x128xf32>
    %234 = arith.maximumf %232, %233 : vector<16x128xf32>
    %c0_83 = arith.constant 0 : index
    %c0_84 = arith.constant 0 : index
    %235 = vector.load %arg15[%c0_83, %c0_84] : memref<128x128xbf16, #tpu.memory_space<vmem>>, vector<128x128xbf16>
    %236 = arith.truncf %234 : vector<16x128xf32> to vector<16x128xbf16>
    %cst_85 = arith.constant dense<0.000000e+00> : vector<16x128xf32>
    %237 = tpu.matmul %236, %235, %cst_85 {dimension_numbers = #tpu.dot_dimension_numbers<[1], [0], [0], [1], [0, 0, 1, 1], [], []>} : vector<16x128xbf16>, vector<128x128xbf16>, vector<16x128xf32> -> vector<16x128xf32>
    %c0_86 = arith.constant 0 : index
    %c5376 = arith.constant 5376 : index
    %238 = vector.load %arg4[%c0_86, %c5376] : memref<1x5504xf32, #tpu.memory_space<vmem>>, vector<1x128xf32>
    %239 = vector.broadcast %238 : vector<1x128xf32> to vector<16x128xf32>
    %240 = arith.addf %237, %239 : vector<16x128xf32>
    %241 = tpu.iota {dimensions = array<i32: 1>} : vector<16x128xi32>
    %cst_87 = arith.constant 0.000000e+00 : f32
    %242 = vector.broadcast %cst_87 : f32 to vector<16x128xf32>
    %cst_88 = arith.constant 0.000000e+00 : f32
    %243 = vector.broadcast %cst_88 : f32 to vector<16x128xf32>
    %c0_i32_89 = arith.constant 0 : i32
    %244 = vector.broadcast %c0_i32_89 : i32 to vector<16x128xi32>
    %245 = arith.cmpi sge, %241, %244 : vector<16x128xi32>
    %c4_i32_90 = arith.constant 4 : i32
    %246 = vector.broadcast %c4_i32_90 : i32 to vector<16x128xi32>
    %247 = arith.cmpi slt, %241, %246 : vector<16x128xi32>
    %248 = arith.andi %245, %247 : vector<16x128xi1>
    %cst_91 = arith.constant -1.000000e+30 : f32
    %249 = vector.broadcast %cst_91 : f32 to vector<16x128xf32>
    %250 = arith.select %248, %240, %249 : vector<16x128xi1>, vector<16x128xf32>
    %cst_92 = arith.constant dense<0xFF800000> : vector<16xf32>
    %251 = vector.multi_reduction <maximumf>, %250, %cst_92 [1] : vector<16x128xf32> to vector<16xf32>
    %252 = vector.shape_cast %251 : vector<16xf32> to vector<16x1xf32>
    %253 = vector.broadcast %252 : vector<16x1xf32> to vector<16x128xf32>
    %254 = arith.subf %240, %253 : vector<16x128xf32>
    %cst_93 = arith.constant -1.000000e+30 : f32
    %255 = vector.broadcast %cst_93 : f32 to vector<16x128xf32>
    %256 = arith.select %248, %254, %255 : vector<16x128xi1>, vector<16x128xf32>
    %257 = math.exp %256 : vector<16x128xf32>
    %cst_94 = arith.constant dense<0.000000e+00> : vector<16xf32>
    %258 = vector.multi_reduction <add>, %257, %cst_94 [1] : vector<16x128xf32> to vector<16xf32>
    %259 = vector.shape_cast %258 : vector<16xf32> to vector<16x1xf32>
    %260 = arith.extui %248 : vector<16x128xi1> to vector<16x128xi32>
    %261 = arith.sitofp %260 : vector<16x128xi32> to vector<16x128xf32>
    %262 = vector.broadcast %252 : vector<16x1xf32> to vector<16x128xf32>
    %263 = arith.mulf %261, %262 : vector<16x128xf32>
    %264 = arith.addf %242, %263 : vector<16x128xf32>
    %265 = math.log %259 : vector<16x1xf32>
    %266 = vector.broadcast %265 : vector<16x1xf32> to vector<16x128xf32>
    %267 = arith.mulf %261, %266 : vector<16x128xf32>
    %268 = arith.addf %243, %267 : vector<16x128xf32>
    %c4_i32_95 = arith.constant 4 : i32
    %269 = vector.broadcast %c4_i32_95 : i32 to vector<16x128xi32>
    %270 = arith.cmpi sge, %241, %269 : vector<16x128xi32>
    %c12_i32 = arith.constant 12 : i32
    %271 = vector.broadcast %c12_i32 : i32 to vector<16x128xi32>
    %272 = arith.cmpi slt, %241, %271 : vector<16x128xi32>
    %273 = arith.andi %270, %272 : vector<16x128xi1>
    %cst_96 = arith.constant -1.000000e+30 : f32
    %274 = vector.broadcast %cst_96 : f32 to vector<16x128xf32>
    %275 = arith.select %273, %240, %274 : vector<16x128xi1>, vector<16x128xf32>
    %cst_97 = arith.constant dense<0xFF800000> : vector<16xf32>
    %276 = vector.multi_reduction <maximumf>, %275, %cst_97 [1] : vector<16x128xf32> to vector<16xf32>
    %277 = vector.shape_cast %276 : vector<16xf32> to vector<16x1xf32>
    %278 = vector.broadcast %277 : vector<16x1xf32> to vector<16x128xf32>
    %279 = arith.subf %240, %278 : vector<16x128xf32>
    %cst_98 = arith.constant -1.000000e+30 : f32
    %280 = vector.broadcast %cst_98 : f32 to vector<16x128xf32>
    %281 = arith.select %273, %279, %280 : vector<16x128xi1>, vector<16x128xf32>
    %282 = math.exp %281 : vector<16x128xf32>
    %cst_99 = arith.constant dense<0.000000e+00> : vector<16xf32>
    %283 = vector.multi_reduction <add>, %282, %cst_99 [1] : vector<16x128xf32> to vector<16xf32>
    %284 = vector.shape_cast %283 : vector<16xf32> to vector<16x1xf32>
    %285 = arith.extui %273 : vector<16x128xi1> to vector<16x128xi32>
    %286 = arith.sitofp %285 : vector<16x128xi32> to vector<16x128xf32>
    %287 = vector.broadcast %277 : vector<16x1xf32> to vector<16x128xf32>
    %288 = arith.mulf %286, %287 : vector<16x128xf32>
    %289 = arith.addf %264, %288 : vector<16x128xf32>
    %290 = math.log %284 : vector<16x1xf32>
    %291 = vector.broadcast %290 : vector<16x1xf32> to vector<16x128xf32>
    %292 = arith.mulf %286, %291 : vector<16x128xf32>
    %293 = arith.addf %268, %292 : vector<16x128xf32>
    %c12_i32_100 = arith.constant 12 : i32
    %294 = vector.broadcast %c12_i32_100 : i32 to vector<16x128xi32>
    %295 = arith.cmpi sge, %241, %294 : vector<16x128xi32>
    %c14_i32 = arith.constant 14 : i32
    %296 = vector.broadcast %c14_i32 : i32 to vector<16x128xi32>
    %297 = arith.cmpi slt, %241, %296 : vector<16x128xi32>
    %298 = arith.andi %295, %297 : vector<16x128xi1>
    %cst_101 = arith.constant -1.000000e+30 : f32
    %299 = vector.broadcast %cst_101 : f32 to vector<16x128xf32>
    %300 = arith.select %298, %240, %299 : vector<16x128xi1>, vector<16x128xf32>
    %cst_102 = arith.constant dense<0xFF800000> : vector<16xf32>
    %301 = vector.multi_reduction <maximumf>, %300, %cst_102 [1] : vector<16x128xf32> to vector<16xf32>
    %302 = vector.shape_cast %301 : vector<16xf32> to vector<16x1xf32>
    %303 = vector.broadcast %302 : vector<16x1xf32> to vector<16x128xf32>
    %304 = arith.subf %240, %303 : vector<16x128xf32>
    %cst_103 = arith.constant -1.000000e+30 : f32
    %305 = vector.broadcast %cst_103 : f32 to vector<16x128xf32>
    %306 = arith.select %298, %304, %305 : vector<16x128xi1>, vector<16x128xf32>
    %307 = math.exp %306 : vector<16x128xf32>
    %cst_104 = arith.constant dense<0.000000e+00> : vector<16xf32>
    %308 = vector.multi_reduction <add>, %307, %cst_104 [1] : vector<16x128xf32> to vector<16xf32>
    %309 = vector.shape_cast %308 : vector<16xf32> to vector<16x1xf32>
    %310 = arith.extui %298 : vector<16x128xi1> to vector<16x128xi32>
    %311 = arith.sitofp %310 : vector<16x128xi32> to vector<16x128xf32>
    %312 = vector.broadcast %302 : vector<16x1xf32> to vector<16x128xf32>
    %313 = arith.mulf %311, %312 : vector<16x128xf32>
    %314 = arith.addf %289, %313 : vector<16x128xf32>
    %315 = math.log %309 : vector<16x1xf32>
    %316 = vector.broadcast %315 : vector<16x1xf32> to vector<16x128xf32>
    %317 = arith.mulf %311, %316 : vector<16x128xf32>
    %318 = arith.addf %293, %317 : vector<16x128xf32>
    %319 = arith.subf %240, %314 : vector<16x128xf32>
    %320 = arith.subf %319, %318 : vector<16x128xf32>
    %c0_105 = arith.constant 0 : index
    %c0_106 = arith.constant 0 : index
    %321 = vector.load %arg10[%c0_105, %c0_106] : memref<16x128xf32, #tpu.memory_space<vmem>>, vector<16x128xf32>
    tpu.vector_store %arg10[%c0_105, %c0_106], %320 {strides = array<i32>} : memref<16x128xf32, #tpu.memory_space<vmem>>, vector<16x128xf32>,
    return
  }
}

</mosaic_0001>

<llo_original>
// kernel: tpu_custom_call.1
$region0: #{tpu_custom_call.1}
  #allocation0 [shape = 'u32[]', space=smem, size = 0x4, offset = 0x4, fixed_abs, tag = 'smem constant byte address 0x4 - core index']
  #allocation1 [shape = 'u32[144,128]{1,0:T(1,128)}', space=vmem, size = 0x12000, scoped, tag = 'internal scratch']
  #allocation2 [shape = 'bf16[2304,128]{1,0:T(16,128)(2,1)}', space=vmem, size = 0x90000, scoped, tag = 'scratch operand']
  #allocation3 [shape = 'bf16[512,512]{1,0:T(16,128)(2,1)}', space=vmem, size = 0x80000, scoped, tag = 'scratch operand']
  #allocation4 [shape = 'bf16[400,1024]{1,0:T(16,128)(2,1)}', space=vmem, size = 0xc8000, scoped, tag = 'scratch operand']
  #allocation5 [shape = 'bf16[2048,128]{1,0:T(16,128)(2,1)}', space=vmem, size = 0x80000, scoped, tag = 'scratch operand']
  #allocation6 [shape = 'bf16[128,128]{1,0:T(16,128)(2,1)}', space=vmem, size = 0x8000, scoped, tag = 'scratch operand']
  #allocation7 [shape = 's32[5]{0}', space=sflag, size = 0x14, scoped, tag = 'scratch operand']
  #allocation18 [shape = 's32[]', space=sflag, size = 0x4, offset = 0, fixed_abs, tag = 'sflag constant byte address 0x0 - dummy sync flag']
  #allocation19 [shape = 's32[]', space=sflag, size = 0x4, offset = 0, fixed_abs, tag = 'sflag constant byte address 0x0 - dummy sync flag']
  #allocation20 [shape = 'u32[]', space=smem, size = 0x4, offset = 0x44, fixed_abs, tag = 'smem constant byte address 0x44 - assertion arg 0']
  #allocation21 [shape = 'u32[]', space=smem, size = 0x4, offset = 0x48, fixed_abs, tag = 'smem constant byte address 0x48 - assertion arg 1']
  #allocation22 [shape = 's32[]', space=sflag, size = 0x4, offset = 0, fixed_abs, tag = 'sflag constant byte address 0x0 - dummy sync flag']
  #allocation24 [shape = 's32[]', space=sflag, size = 0x4, offset = 0, fixed_abs, tag = 'sflag constant byte address 0x0 - dummy sync flag']
  #allocation26 [shape = 's32[]', space=sflag, size = 0x4, offset = 0, fixed_abs, tag = 'sflag constant byte address 0x0 - dummy sync flag']
  #allocation27 [shape = 's32[]', space=sflag, size = 0x4, offset = 0, fixed_abs, tag = 'sflag constant byte address 0x0 - dummy sync flag']
  #allocation28 [shape = 's32[]', space=sflag, size = 0x4, offset = 0, fixed_abs, tag = 'sflag constant byte address 0x0 - dummy sync flag']
  #allocation29 [shape = 's32[]', space=sflag, size = 0x4, offset = 0, fixed_abs, tag = 'sflag constant byte address 0x0 - dummy sync flag']
  %s0 = inlined_call_operand.hbm [shape: f32[64,384], index: 0, kind: input, shape index: {}]
  %s1 = inlined_call_operand.hbm [shape: f32[16,144], index: 1, kind: input, shape index: {}]
  %s2 = inlined_call_operand.hbm [shape: f32[16,256], index: 2, kind: input, shape index: {}]
  %s3 = inlined_call_operand.hbm [shape: bf16[256,1024], index: 3, kind: input, shape index: {}]
  %s4 = inlined_call_operand.hbm [shape: f32[1,5504], index: 4, kind: input, shape index: {}]
  %s5 = inlined_call_operand.hbm [shape: bf16[2304,128], index: 5, kind: input, shape index: {}]
  %s6 = inlined_call_operand.hbm [shape: bf16[512,512], index: 6, kind: input, shape index: {}]
  %s7 = inlined_call_operand.hbm [shape: bf16[400,1024], index: 7, kind: input, shape index: {}]
  %s8 = inlined_call_operand.hbm [shape: bf16[2048,128], index: 8, kind: input, shape index: {}]
  %s9 = inlined_call_operand.hbm [shape: bf16[128,128], index: 9, kind: input, shape index: {}]
  %s10 = inlined_call_operand.hbm [shape: f32[16,128], index: 10, kind: output, shape index: {}]
  %s11 = sld [smem:[#allocation0]]
  $region62: #{tpu_custom_call.1} parent=0
    _
  %s13 = ssub.s32 1, %s11
  %s14 = scalar_select 0, %s13, %s11
  $region1: #{tpu_custom_call.1} parent=0
    #allocation8 [shape = 'u8[98304]{0}', space=vmem, size = 0x18000, scoped, tag = 'input window, operand 0, single buffered']
    #allocation9 [shape = 's32[1]{0}', space=sflag, size = 0x4, scoped, tag = 'scoped memory for tpu_custom_call.1']
    #allocation10 [shape = 's32[1]{0}', space=sflag, size = 0x4, scoped, tag = 'scoped memory for tpu_custom_call.1']
    #allocation11 [shape = 'u8[16384]{0}', space=vmem, size = 0x4000, scoped, tag = 'input window, operand 1, single buffered']
    #allocation12 [shape = 's32[1]{0}', space=sflag, size = 0x4, scoped, tag = 'scoped memory for tpu_custom_call.1']
    #allocation13 [shape = 'u8[16384]{0}', space=vmem, size = 0x4000, scoped, tag = 'input window, operand 2, single buffered']
    #allocation14 [shape = 'u8[524288]{0}', space=vmem, size = 0x80000, scoped, tag = 'input window, operand 3, single buffered']
    #allocation15 [shape = 's32[1]{0}', space=sflag, size = 0x4, scoped, tag = 'scoped memory for tpu_custom_call.1']
    #allocation16 [shape = 'u8[22016]{0}', space=vmem, size = 0x5800, scoped, tag = 'input window, operand 4, single buffered']
    #allocation17 [shape = 'u8[8192]{0}', space=vmem, size = 0x2000, scoped, tag = 'output window, operand 0, single buffered']
    #allocation23 [shape = 'u32[9]{0}', space=smem, size = 0x24, scoped, tag = 'DMA stride descriptor']
    #allocation25 [shape = 'u32[9]{0}', space=smem, size = 0x24, scoped, tag = 'DMA stride descriptor']
    %15 = vsyncpa [#allocation9], 0
    %16 = vsyncpa [#allocation12], 0
    %17 = vsyncpa [#allocation15], 0
    %18 = vsyncpa [#allocation10], 0
    // Predicated region
    $region2: #{tpu_custom_call.1} parent=1 // pred_check
      _
    $region3: #{tpu_custom_call.1} parent=1 // pred_check_branch
      %20 = sbr.rel (0) target = $region5
    $region4: #{tpu_custom_call.1} parent=1 // pred_region
      %s22 = ssub.s32 3072, 3072
      %23 = vsyncadd [#allocation9], %s22
      %s24 = sshll.u32 [#allocation8], 4
      %s25 = int_to_ptr.vmem [resolvable:$true] %s24
      %30 = dma.hbm_to_vmem [thread:$0]  %s0, 3072, %s25, [#allocation9], 384, 384, 24
    $region5: #{tpu_custom_call.1} parent=1 // pred_fallthru
      _
    // Predicated region
    $region6: #{tpu_custom_call.1} parent=1 // pred_check
      _
    $region7: #{tpu_custom_call.1} parent=1 // pred_check_branch
      %32 = sbr.rel (0) target = $region9
    $region8: #{tpu_custom_call.1} parent=1 // pred_region
      %s34 = ssub.s32 512, 512
      %35 = vsyncadd [#allocation12], %s34
      %s36 = sshll.u32 [#allocation11], 4
      %s37 = int_to_ptr.vmem [resolvable:$true] %s36
      %42 = dma.hbm_to_vmem [thread:$0]  %s1, 512, %s37, [#allocation12], 256, 256, 16
    $region9: #{tpu_custom_call.1} parent=1 // pred_fallthru
      _
    // Predicated region
    $region10: #{tpu_custom_call.1} parent=1 // pred_check
      _
    $region11: #{tpu_custom_call.1} parent=1 // pred_check_branch
      %44 = sbr.rel (0) target = $region13
    $region12: #{tpu_custom_call.1} parent=1 // pred_region
      %s46 = ssub.s32 512, 512
      %47 = vsyncadd [#allocation12], %s46
      %s48 = sshll.u32 [#allocation13], 4
      %s49 = int_to_ptr.vmem [resolvable:$true] %s48
      %54 = dma.hbm_to_vmem [thread:$0]  %s2, 512, %s49, [#allocation12], 256, 256, 16
    $region13: #{tpu_custom_call.1} parent=1 // pred_fallthru
      _
    // Predicated region
    $region14: #{tpu_custom_call.1} parent=1 // pred_check
      _
    $region15: #{tpu_custom_call.1} parent=1 // pred_check_branch
      %56 = sbr.rel (0) target = $region17
    $region16: #{tpu_custom_call.1} parent=1 // pred_region
      %s58 = ssub.s32 16384, 16384
      %59 = vsyncadd [#allocation15], %s58
      %s60 = sshll.u32 [#allocation14], 4
      %s61 = int_to_ptr.vmem [resolvable:$true] %s60
      %66 = dma.hbm_to_vmem [thread:$0]  %s3, 16384, %s61, [#allocation15], 512, 512, 32
    $region17: #{tpu_custom_call.1} parent=1 // pred_fallthru
      _
    // Predicated region
    $region18: #{tpu_custom_call.1} parent=1 // pred_check
      _
    $region19: #{tpu_custom_call.1} parent=1 // pred_check_branch
      %68 = sbr.rel (0) target = $region21
    $region20: #{tpu_custom_call.1} parent=1 // pred_region
      %s70 = ssub.s32 688, 688
      %71 = vsyncadd [#allocation15], %s70
      %s73 = sshll.u32 [#allocation16], 4
      %s74 = int_to_ptr.vmem [resolvable:$true] %s73
      %76 = dma.hbm_to_vmem [thread:$0]  %s4, 688, %s74, [#allocation15]
    $region21: #{tpu_custom_call.1} parent=1 // pred_fallthru
      _
    // Predicated region
    $region22: #{tpu_custom_call.1} parent=1 // pred_check
      _
    $region23: #{tpu_custom_call.1} parent=1 // pred_check_branch
      %78 = sbr.rel (0) target = $region25
    $region24: #{tpu_custom_call.1} parent=1 // pred_region
      %79 = dma.done [#allocation9], 3072
    $region25: #{tpu_custom_call.1} parent=1 // pred_fallthru
      _
    // Predicated region
    $region26: #{tpu_custom_call.1} parent=1 // pred_check
      _
    $region27: #{tpu_custom_call.1} parent=1 // pred_check_branch
      %81 = sbr.rel (0) target = $region29
    $region28: #{tpu_custom_call.1} parent=1 // pred_region
      %82 = dma.done [#allocation12], 512
    $region29: #{tpu_custom_call.1} parent=1 // pred_fallthru
      _
    // Predicated region
    $region30: #{tpu_custom_call.1} parent=1 // pred_check
      _
    $region31: #{tpu_custom_call.1} parent=1 // pred_check_branch
      %84 = sbr.rel (0) target = $region33
    $region32: #{tpu_custom_call.1} parent=1 // pred_region
      %85 = dma.done [#allocation12], 512
    $region33: #{tpu_custom_call.1} parent=1 // pred_fallthru
      _
    // Predicated region
    $region34: #{tpu_custom_call.1} parent=1 // pred_check
      _
    $region35: #{tpu_custom_call.1} parent=1 // pred_check_branch
      %87 = sbr.rel (0) target = $region37
    $region36: #{tpu_custom_call.1} parent=1 // pred_region
      %88 = dma.done [#allocation15], 16384
    $region37: #{tpu_custom_call.1} parent=1 // pred_fallthru
      _
    // Predicated region
    $region38: #{tpu_custom_call.1} parent=1 // pred_check
      _
    $region39: #{tpu_custom_call.1} parent=1 // pred_check_branch
      %90 = sbr.rel (0) target = $region41
    $region40: #{tpu_custom_call.1} parent=1 // pred_region
      %91 = dma.done [#allocation15], 688
    $region41: #{tpu_custom_call.1} parent=1 // pred_fallthru
      _
    // Predicated region
    $region42: #{tpu_custom_call.1} parent=1 // pred_check
      _
    $region43: #{tpu_custom_call.1} parent=1 // pred_check_branch
      %94 = sbr.rel target = $region45
    $region44: #{tpu_custom_call.1} parent=1 // pred_region
      %95 = sst [smem:[#allocation20]] [#allocation19]
      %96 = sst [smem:[#allocation21]] [#allocation18]
    $region45: #{tpu_custom_call.1} parent=1 // pred_fallthru
      _
    %98 = shalt.err (0)
    %s100 = sshll.u32 [#allocation2], 4
    %s101 = int_to_ptr.vmem [resolvable:$true] %s100
    %103 = dma.hbm_to_vmem [thread:$0]  %s5, 18432, %s101, [#allocation7]
    %s104 = scalar_lea.sflag [#allocation7], 1
    %s106 = sshll.u32 1, 14
    %s107 = sxor.u32 4294967295, %s106
    %s109 = sld [smem:[#allocation0]]
    %s110 = sadd.s32 2, %s109
    %s112 = sshll.u32 7, 26
    %s113 = sxor.u32 4294967295, %s112
    %s114 = sand.u32 0, %s113
    %s115 = sshll.u32 %s110, 26
    %s116 = sor.u32 %s114, %s115
    %s117 = sshll.u32 [#allocation3], 4
    %s118 = int_to_ptr.vmem [resolvable:$true] %s117
    %121 = sst [smem:[#allocation23]] 512
    %s122 = scalar_lea.smem [#allocation23], 1
    %123 = sst [smem:[%s122]] 512
    %s124 = scalar_lea.smem [#allocation23], 2
    %125 = sst [smem:[%s124]] 4
    %s126 = scalar_lea.smem [#allocation23], 3
    %127 = sst [smem:[%s126]] 64
    %s128 = scalar_lea.smem [#allocation23], 4
    %129 = sst [smem:[%s128]] 128
    %s130 = scalar_lea.smem [#allocation23], 5
    %131 = sst [smem:[%s130]] 2
    %s132 = scalar_lea.smem [#allocation23], 6
    %133 = sst [smem:[%s132]] 256
    %s134 = scalar_lea.smem [#allocation23], 7
    %135 = sst [smem:[%s134]] 64
    %s136 = scalar_lea.smem [#allocation23], 8
    %137 = sst [smem:[%s136]] 4
    %139 = dma.general %s6, 16384, %s118, %s104, [#allocation22], [#allocation23], %s116, 0
    %s140 = scalar_lea.sflag [#allocation7], 2
    %s142 = sshll.u32 1, 14
    %s143 = sxor.u32 4294967295, %s142
    %s145 = sadd.s32 2, %s109
    %s147 = sshll.u32 7, 26
    %s148 = sxor.u32 4294967295, %s147
    %s149 = sand.u32 0, %s148
    %s150 = sshll.u32 %s145, 26
    %s151 = sor.u32 %s149, %s150
    %s152 = sshll.u32 [#allocation4], 4
    %s153 = int_to_ptr.vmem [resolvable:$true] %s152
    %156 = sst [smem:[#allocation25]] 1024
    %s157 = scalar_lea.smem [#allocation25], 1
    %158 = sst [smem:[%s157]] 1024
    %s159 = scalar_lea.smem [#allocation25], 2
    %160 = sst [smem:[%s159]] 8
    %s161 = scalar_lea.smem [#allocation25], 3
    %162 = sst [smem:[%s161]] 64
    %s163 = scalar_lea.smem [#allocation25], 4
    %164 = sst [smem:[%s163]] 128
    %s165 = scalar_lea.smem [#allocation25], 5
    %166 = sst [smem:[%s165]] 2
    %s167 = scalar_lea.smem [#allocation25], 6
    %168 = sst [smem:[%s167]] 512
    %s169 = scalar_lea.smem [#allocation25], 7
    %170 = sst [smem:[%s169]] 64
    %s171 = scalar_lea.smem [#allocation25], 8
    %172 = sst [smem:[%s171]] 4
    %174 = dma.general %s7, 25600, %s153, %s140, [#allocation24], [#allocation25], %s151, 0
    %s175 = scalar_lea.sflag [#allocation7], 3
    // Predicated region
    $region46: #{tpu_custom_call.1} parent=1 // pred_check
      _
    $region47: #{tpu_custom_call.1} parent=1 // pred_check_branch
      %177 = sbr.rel target = $region49
    $region48: #{tpu_custom_call.1} parent=1 // pred_region
      %178 = sst [smem:[#allocation20]] [#allocation27]
      %179 = sst [smem:[#allocation21]] [#allocation26]
    $region49: #{tpu_custom_call.1} parent=1 // pred_fallthru
      _
    %181 = shalt.err (0)
    %s183 = sshll.u32 [#allocation5], 4
    %s184 = int_to_ptr.vmem [resolvable:$true] %s183
    %186 = dma.hbm_to_vmem [thread:$0]  %s8, 16384, %s184, %s175
    %s187 = scalar_lea.sflag [#allocation7], 4
    // Predicated region
    $region50: #{tpu_custom_call.1} parent=1 // pred_check
      _
    $region51: #{tpu_custom_call.1} parent=1 // pred_check_branch
      %189 = sbr.rel target = $region53
    $region52: #{tpu_custom_call.1} parent=1 // pred_region
      %190 = sst [smem:[#allocation20]] [#allocation29]
      %191 = sst [smem:[#allocation21]] [#allocation28]
    $region53: #{tpu_custom_call.1} parent=1 // pred_fallthru
      _
    %193 = shalt.err (0)
    %s195 = sshll.u32 [#allocation6], 4
    %s196 = int_to_ptr.vmem [resolvable:$true] %s195
    %198 = dma.hbm_to_vmem [thread:$0]  %s9, 1024, %s196, %s187
    %v199 = vld [vmem:[#allocation8] sm:$0xff]
    %v200 = vld [vmem:[#allocation8 + $0x8] sm:$0xff]
    %v201 = vld [vmem:[#allocation8 + $0x10] sm:$0xff]
    %v202 = vld [vmem:[#allocation8 + $0x18] sm:$0xff]
    %v203 = vld [vmem:[#allocation8 + $0x20] sm:$0xff]
    %v204 = vld [vmem:[#allocation8 + $0x28] sm:$0xff]
    %v205 = vld [vmem:[#allocation8 + $0x30] sm:$0xff]
    %v206 = vld [vmem:[#allocation8 + $0x38] sm:$0xff]
    %v207 = vld [vmem:[#allocation8 + $0x40] sm:$0xff]
    %v208 = vld [vmem:[#allocation8 + $0x48] sm:$0xff]
    %v209 = vld [vmem:[#allocation8 + $0x50] sm:$0xff]
    %v210 = vld [vmem:[#allocation8 + $0x58] sm:$0xff]
    %v211 = vld [vmem:[#allocation8 + $0x60] sm:$0xff]
    %v212 = vld [vmem:[#allocation8 + $0x68] sm:$0xff]
    %v213 = vld [vmem:[#allocation8 + $0x70] sm:$0xff]
    %v214 = vld [vmem:[#allocation8 + $0x78] sm:$0xff]
    %v215 = vld [vmem:[#allocation8 + $0x80] sm:$0xff]
    %v216 = vld [vmem:[#allocation8 + $0x88] sm:$0xff]
    %v217 = vld [vmem:[#allocation8 + $0x90] sm:$0xff]
    %v218 = vld [vmem:[#allocation8 + $0x98] sm:$0xff]
    %v219 = vld [vmem:[#allocation8 + $0xa0] sm:$0xff]
    %v220 = vld [vmem:[#allocation8 + $0xa8] sm:$0xff]
    %v221 = vld [vmem:[#allocation8 + $0xb0] sm:$0xff]
    %v222 = vld [vmem:[#allocation8 + $0xb8] sm:$0xff]
    %v223 = vld [vmem:[#allocation14] sm:$0xff]
    %v224 = vld [vmem:[#allocation14 + $0x8] sm:$0xff]
    %v225 = vld [vmem:[#allocation14 + $0x10] sm:$0xff]
    %v226 = vld [vmem:[#allocation14 + $0x18] sm:$0xff]
    %v227 = vld [vmem:[#allocation14 + $0x20] sm:$0xff]
    %v228 = vld [vmem:[#allocation14 + $0x28] sm:$0xff]
    %v229 = vld [vmem:[#allocation14 + $0x30] sm:$0xff]
    %v230 = vld [vmem:[#allocation14 + $0x38] sm:$0xff]
    %v231 = vld [vmem:[#allocation14 + $0x40] sm:$0xff]
    %v232 = vld [vmem:[#allocation14 + $0x48] sm:$0xff]
    %v233 = vld [vmem:[#allocation14 + $0x50] sm:$0xff]
    %v234 = vld [vmem:[#allocation14 + $0x58] sm:$0xff]
    %v235 = vld [vmem:[#allocation14 + $0x60] sm:$0xff]
    %v236 = vld [vmem:[#allocation14 + $0x68] sm:$0xff]
    %v237 = vld [vmem:[#allocation14 + $0x70] sm:$0xff]
    %v238 = vld [vmem:[#allocation14 + $0x78] sm:$0xff]
    %v239 = vld [vmem:[#allocation14 + $0x80] sm:$0xff]
    %v240 = vld [vmem:[#allocation14 + $0x88] sm:$0xff]
    %v241 = vld [vmem:[#allocation14 + $0x90] sm:$0xff]
    %v242 = vld [vmem:[#allocation14 + $0x98] sm:$0xff]
    %v243 = vld [vmem:[#allocation14 + $0xa0] sm:$0xff]
    %v244 = vld [vmem:[#allocation14 + $0xa8] sm:$0xff]
    %v245 = vld [vmem:[#allocation14 + $0xb0] sm:$0xff]
    %v246 = vld [vmem:[#allocation14 + $0xb8] sm:$0xff]
    %v247 = vld [vmem:[#allocation14 + $0xc0] sm:$0xff]
    %v248 = vld [vmem:[#allocation14 + $0xc8] sm:$0xff]
    %v249 = vld [vmem:[#allocation14 + $0xd0] sm:$0xff]
    %v250 = vld [vmem:[#allocation14 + $0xd8] sm:$0xff]
    %v251 = vld [vmem:[#allocation14 + $0xe0] sm:$0xff]
    %v252 = vld [vmem:[#allocation14 + $0xe8] sm:$0xff]
    %v253 = vld [vmem:[#allocation14 + $0xf0] sm:$0xff]
    %v254 = vld [vmem:[#allocation14 + $0xf8] sm:$0xff]
    %v255 = vld [vmem:[#allocation14 + $0x100] sm:$0xff]
    %v256 = vld [vmem:[#allocation14 + $0x108] sm:$0xff]
    %v257 = vld [vmem:[#allocation14 + $0x110] sm:$0xff]
    %v258 = vld [vmem:[#allocation14 + $0x118] sm:$0xff]
    %v259 = vld [vmem:[#allocation14 + $0x120] sm:$0xff]
    %v260 = vld [vmem:[#allocation14 + $0x128] sm:$0xff]
    %v261 = vld [vmem:[#allocation14 + $0x130] sm:$0xff]
    %v262 = vld [vmem:[#allocation14 + $0x138] sm:$0xff]
    %v263 = vld [vmem:[#allocation14 + $0x140] sm:$0xff]
    %v264 = vld [vmem:[#allocation14 + $0x148] sm:$0xff]
    %v265 = vld [vmem:[#allocation14 + $0x150] sm:$0xff]
    %v266 = vld [vmem:[#allocation14 + $0x158] sm:$0xff]
    %v267 = vld [vmem:[#allocation14 + $0x160] sm:$0xff]
    %v268 = vld [vmem:[#allocation14 + $0x168] sm:$0xff]
    %v269 = vld [vmem:[#allocation14 + $0x170] sm:$0xff]
    %v270 = vld [vmem:[#allocation14 + $0x178] sm:$0xff]
    %v271 = vld [vmem:[#allocation14 + $0x180] sm:$0xff]
    %v272 = vld [vmem:[#allocation14 + $0x188] sm:$0xff]
    %v273 = vld [vmem:[#allocation14 + $0x190] sm:$0xff]
    %v274 = vld [vmem:[#allocation14 + $0x198] sm:$0xff]
    %v275 = vld [vmem:[#allocation14 + $0x1a0] sm:$0xff]
    %v276 = vld [vmem:[#allocation14 + $0x1a8] sm:$0xff]
    %v277 = vld [vmem:[#allocation14 + $0x1b0] sm:$0xff]
    %v278 = vld [vmem:[#allocation14 + $0x1b8] sm:$0xff]
    %v279 = vld [vmem:[#allocation14 + $0x1c0] sm:$0xff]
    %v280 = vld [vmem:[#allocation14 + $0x1c8] sm:$0xff]
    %v281 = vld [vmem:[#allocation14 + $0x1d0] sm:$0xff]
    %v282 = vld [vmem:[#allocation14 + $0x1d8] sm:$0xff]
    %v283 = vld [vmem:[#allocation14 + $0x1e0] sm:$0xff]
    %v284 = vld [vmem:[#allocation14 + $0x1e8] sm:$0xff]
    %v285 = vld [vmem:[#allocation14 + $0x1f0] sm:$0xff]
    %v286 = vld [vmem:[#allocation14 + $0x1f8] sm:$0xff]
    %v287 = vld [vmem:[#allocation16] sm:$0xff]
    %v288 = vpack.c.bf16 %v202, %v199
    %v289 = vpack.c.bf16 %v208, %v205
    %v290 = vpack.c.bf16 %v214, %v211
    %v291 = vpack.c.bf16 %v220, %v217
    %v293 = vlaneseq
    %v294 = vshrl.u32 %v293, 7
    %v295 = vsub.s32 0, %v294
    %v296 = vrot.slane %v287, %v295
    %v297 = vlaneseq
    %v298 = vshrl.u32 %v297, 7
    %v299 = vsub.s32 1, %v298
    %v300 = vrot.slane %v287, %v299
    %v301 = vlaneseq
    %v302 = vshrl.u32 %v301, 7
    %v303 = vsub.s32 2, %v302
    %v304 = vrot.slane %v287, %v303
    %v305 = vlaneseq
    %v306 = vshrl.u32 %v305, 7
    %v307 = vsub.s32 3, %v306
    %v308 = vrot.slane %v287, %v307
    %v309 = vlaneseq
    %v310 = vshrl.u32 %v309, 7
    %v311 = vsub.s32 4, %v310
    %v312 = vrot.slane %v287, %v311
    %v313 = vlaneseq
    %v314 = vshrl.u32 %v313, 7
    %v315 = vsub.s32 5, %v314
    %v316 = vrot.slane %v287, %v315
    %v317 = vlaneseq
    %v318 = vshrl.u32 %v317, 7
    %v319 = vsub.s32 6, %v318
    %v320 = vrot.slane %v287, %v319
    %v321 = vlaneseq
    %v322 = vshrl.u32 %v321, 7
    %v323 = vsub.s32 7, %v322
    %v324 = vrot.slane %v287, %v323
    %v397 = vunpack.c.l.b16 %v223
    %v398 = vunpack.c.h.b16 %v223
    %v399 = vunpack.c.l.b16 %v224
    %v400 = vunpack.c.h.b16 %v224
    %v401 = vunpack.c.l.b16 %v225
    %v402 = vunpack.c.h.b16 %v225
    %v403 = vunpack.c.l.b16 %v226
    %v404 = vunpack.c.h.b16 %v226
    %v405 = vunpack.c.l.b16 %v227
    %v406 = vunpack.c.h.b16 %v227
    %v407 = vunpack.c.l.b16 %v228
    %v408 = vunpack.c.h.b16 %v228
    %v409 = vunpack.c.l.b16 %v229
    %v410 = vunpack.c.h.b16 %v229
    %v411 = vunpack.c.l.b16 %v230
    %v412 = vunpack.c.h.b16 %v230
    %v413 = vunpack.c.l.b16 %v231
    %v414 = vunpack.c.h.b16 %v231
    %v415 = vunpack.c.l.b16 %v232
    %v416 = vunpack.c.h.b16 %v232
    %v417 = vunpack.c.l.b16 %v233
    %v418 = vunpack.c.h.b16 %v233
    %v419 = vunpack.c.l.b16 %v234
    %v420 = vunpack.c.h.b16 %v234
    %v421 = vunpack.c.l.b16 %v235
    %v422 = vunpack.c.h.b16 %v235
    %v423 = vunpack.c.l.b16 %v236
    %v424 = vunpack.c.h.b16 %v236
    %v425 = vunpack.c.l.b16 %v237
    %v426 = vunpack.c.h.b16 %v237
    %v427 = vunpack.c.l.b16 %v238
    %v428 = vunpack.c.h.b16 %v238
    %v429 = vunpack.c.l.b16 %v239
    %v430 = vunpack.c.h.b16 %v239
    %v431 = vunpack.c.l.b16 %v240
    %v432 = vunpack.c.h.b16 %v240
    %v433 = vunpack.c.l.b16 %v241
    %v434 = vunpack.c.h.b16 %v241
    %v435 = vunpack.c.l.b16 %v242
    %v436 = vunpack.c.h.b16 %v242
    %v437 = vunpack.c.l.b16 %v243
    %v438 = vunpack.c.h.b16 %v243
    %v439 = vunpack.c.l.b16 %v244
    %v440 = vunpack.c.h.b16 %v244
    %v441 = vunpack.c.l.b16 %v245
    %v442 = vunpack.c.h.b16 %v245
    %v443 = vunpack.c.l.b16 %v246
    %v444 = vunpack.c.h.b16 %v246
    %v445 = vunpack.c.l.b16 %v247
    %v446 = vunpack.c.h.b16 %v247
    %v447 = vunpack.c.l.b16 %v248
    %v448 = vunpack.c.h.b16 %v248
    %v449 = vunpack.c.l.b16 %v249
    %v450 = vunpack.c.h.b16 %v249
    %v451 = vunpack.c.l.b16 %v250
    %v452 = vunpack.c.h.b16 %v250
    %v453 = vunpack.c.l.b16 %v251
    %v454 = vunpack.c.h.b16 %v251
    %v455 = vunpack.c.l.b16 %v252
    %v456 = vunpack.c.h.b16 %v252
    %v457 = vunpack.c.l.b16 %v253
    %v458 = vunpack.c.h.b16 %v253
    %v459 = vunpack.c.l.b16 %v254
    %v460 = vunpack.c.h.b16 %v254
    %v461 = vunpack.c.l.b16 %v255
    %v462 = vunpack.c.h.b16 %v255
    %v463 = vunpack.c.l.b16 %v256
    %v464 = vunpack.c.h.b16 %v256
    %v465 = vunpack.c.l.b16 %v257
    %v466 = vunpack.c.h.b16 %v257
    %v467 = vunpack.c.l.b16 %v258
    %v468 = vunpack.c.h.b16 %v258
    %v469 = vunpack.c.l.b16 %v259
    %v470 = vunpack.c.h.b16 %v259
    %v471 = vunpack.c.l.b16 %v260
    %v472 = vunpack.c.h.b16 %v260
    %v473 = vunpack.c.l.b16 %v261
    %v474 = vunpack.c.h.b16 %v261
    %v475 = vunpack.c.l.b16 %v262
    %v476 = vunpack.c.h.b16 %v262
    %v477 = vunpack.c.l.b16 %v263
    %v478 = vunpack.c.h.b16 %v263
    %v479 = vunpack.c.l.b16 %v264
    %v480 = vunpack.c.h.b16 %v264
    %v481 = vunpack.c.l.b16 %v265
    %v482 = vunpack.c.h.b16 %v265
    %v483 = vunpack.c.l.b16 %v266
    %v484 = vunpack.c.h.b16 %v266
    %v485 = vunpack.c.l.b16 %v267
    %v486 = vunpack.c.h.b16 %v267
    %v487 = vunpack.c.l.b16 %v268
    %v488 = vunpack.c.h.b16 %v268
    %v489 = vunpack.c.l.b16 %v269
    %v490 = vunpack.c.h.b16 %v269
    %v491 = vunpack.c.l.b16 %v270
    %v492 = vunpack.c.h.b16 %v270
    %v493 = vunpack.c.l.b16 %v271
    %v494 = vunpack.c.h.b16 %v271
    %v495 = vunpack.c.l.b16 %v272
    %v496 = vunpack.c.h.b16 %v272
    %v497 = vunpack.c.l.b16 %v273
    %v498 = vunpack.c.h.b16 %v273
    %v499 = vunpack.c.l.b16 %v274
    %v500 = vunpack.c.h.b16 %v274
    %v501 = vunpack.c.l.b16 %v275
    %v502 = vunpack.c.h.b16 %v275
    %v503 = vunpack.c.l.b16 %v276
    %v504 = vunpack.c.h.b16 %v276
    %v505 = vunpack.c.l.b16 %v277
    %v506 = vunpack.c.h.b16 %v277
    %v507 = vunpack.c.l.b16 %v278
    %v508 = vunpack.c.h.b16 %v278
    %v509 = vunpack.c.l.b16 %v279
    %v510 = vunpack.c.h.b16 %v279
    %v511 = vunpack.c.l.b16 %v280
    %v512 = vunpack.c.h.b16 %v280
    %v513 = vunpack.c.l.b16 %v281
    %v514 = vunpack.c.h.b16 %v281
    %v515 = vunpack.c.l.b16 %v282
    %v516 = vunpack.c.h.b16 %v282
    %v517 = vunpack.c.l.b16 %v283
    %v518 = vunpack.c.h.b16 %v283
    %v519 = vunpack.c.l.b16 %v284
    %v520 = vunpack.c.h.b16 %v284
    %v521 = vunpack.c.l.b16 %v285
    %v522 = vunpack.c.h.b16 %v285
    %v523 = vunpack.c.l.b16 %v286
    %v524 = vunpack.c.h.b16 %v286
    %v525 = vpack.c.b16 %v405, %v397
    %v526 = vpack.c.b16 %v406, %v398
    %v527 = vpack.c.b16 %v407, %v399
    %v528 = vpack.c.b16 %v408, %v400
    %v529 = vpack.c.b16 %v409, %v401
    %v530 = vpack.c.b16 %v410, %v402
    %v531 = vpack.c.b16 %v411, %v403
    %v532 = vpack.c.b16 %v412, %v404
    %v533 = vpack.c.b16 %v421, %v413
    %v534 = vpack.c.b16 %v422, %v414
    %v535 = vpack.c.b16 %v423, %v415
    %v536 = vpack.c.b16 %v424, %v416
    %v537 = vpack.c.b16 %v425, %v417
    %v538 = vpack.c.b16 %v426, %v418
    %v539 = vpack.c.b16 %v427, %v419
    %v540 = vpack.c.b16 %v428, %v420
    %v541 = vpack.c.b16 %v437, %v429
    %v542 = vpack.c.b16 %v438, %v430
    %v543 = vpack.c.b16 %v439, %v431
    %v544 = vpack.c.b16 %v440, %v432
    %v545 = vpack.c.b16 %v441, %v433
    %v546 = vpack.c.b16 %v442, %v434
    %v547 = vpack.c.b16 %v443, %v435
    %v548 = vpack.c.b16 %v444, %v436
    %v549 = vpack.c.b16 %v453, %v445
    %v550 = vpack.c.b16 %v454, %v446
    %v551 = vpack.c.b16 %v455, %v447
    %v552 = vpack.c.b16 %v456, %v448
    %v553 = vpack.c.b16 %v457, %v449
    %v554 = vpack.c.b16 %v458, %v450
    %v555 = vpack.c.b16 %v459, %v451
    %v556 = vpack.c.b16 %v460, %v452
    %v557 = vpack.c.b16 %v469, %v461
    %v558 = vpack.c.b16 %v470, %v462
    %v559 = vpack.c.b16 %v471, %v463
    %v560 = vpack.c.b16 %v472, %v464
    %v561 = vpack.c.b16 %v473, %v465
    %v562 = vpack.c.b16 %v474, %v466
    %v563 = vpack.c.b16 %v475, %v467
    %v564 = vpack.c.b16 %v476, %v468
    %v565 = vpack.c.b16 %v485, %v477
    %v566 = vpack.c.b16 %v486, %v478
    %v567 = vpack.c.b16 %v487, %v479
    %v568 = vpack.c.b16 %v488, %v480
    %v569 = vpack.c.b16 %v489, %v481
    %v570 = vpack.c.b16 %v490, %v482
    %v571 = vpack.c.b16 %v491, %v483
    %v572 = vpack.c.b16 %v492, %v484
    %v573 = vpack.c.b16 %v501, %v493
    %v574 = vpack.c.b16 %v502, %v494
    %v575 = vpack.c.b16 %v503, %v495
    %v576 = vpack.c.b16 %v504, %v496
    %v577 = vpack.c.b16 %v505, %v497
    %v578 = vpack.c.b16 %v506, %v498
    %v579 = vpack.c.b16 %v507, %v499
    %v580 = vpack.c.b16 %v508, %v500
    %v581 = vpack.c.b16 %v517, %v509
    %v582 = vpack.c.b16 %v518, %v510
    %v583 = vpack.c.b16 %v519, %v511
    %v584 = vpack.c.b16 %v520, %v512
    %v585 = vpack.c.b16 %v521, %v513
    %v586 = vpack.c.b16 %v522, %v514
    %v587 = vpack.c.b16 %v523, %v515
    %v588 = vpack.c.b16 %v524, %v516
    %653 = vmatprep.subr.bf16.mxu0 %v526
    %654 = vmatpush1.bf16.msra.mxu0 %v525
    %655 = vmatprep.subr.bf16.mxu0 %v534
    %656 = vmatpush1.bf16.msra.mxu0 %v533
    %657 = vmatprep.subr.bf16.mxu0 %v542
    %658 = vmatpush1.bf16.msra.mxu0 %v541
    %659 = vmatprep.subr.bf16.mxu0 %v550
    %660 = vmatpush1.bf16.msra.mxu0 %v549
    %661 = vmatprep.subr.bf16.mxu0 %v558
    %662 = vmatpush1.bf16.msra.mxu0 %v557
    %663 = vmatprep.subr.bf16.mxu0 %v566
    %664 = vmatpush1.bf16.msra.mxu0 %v565
    %665 = vmatprep.subr.bf16.mxu0 %v574
    %666 = vmatpush1.bf16.msra.mxu0 %v573
    %667 = vmatprep.subr.bf16.mxu0 %v582
    %668 = vmatpush1.bf16.msra.mxu0 %v581
    %669 = vmatprep.subr.bf16.mxu0 0
    %670 = vmatpush1.bf16.msra.mxu0 0
    %671 = vmatprep.subr.bf16.mxu0 0
    %672 = vmatpush1.bf16.msra.mxu0 0
    %673 = vmatprep.subr.bf16.mxu0 0
    %674 = vmatpush1.bf16.msra.mxu0 0
    %675 = vmatprep.subr.bf16.mxu0 0
    %676 = vmatpush1.bf16.msra.mxu0 0
    %677 = vmatprep.subr.bf16.mxu0 0
    %678 = vmatpush1.bf16.msra.mxu0 0
    %679 = vmatprep.subr.bf16.mxu0 0
    %680 = vmatpush1.bf16.msra.mxu0 0
    %681 = vmatprep.subr.bf16.mxu0 0
    %682 = vmatpush1.bf16.msra.mxu0 0
    %683 = vmatprep.subr.bf16.mxu0 0
    %684 = vmatpush1.bf16.msra.mxu0 0
    %685 = vmatprep.mubr.bf16.mxu0 0
    %686 = vmatmul.mubr.bf16.gmra.mrb[0].mxu0 %v288
    %v687 = vpop.f32.mrb[0].mxu0
    %v688 = vadd.f32 %v296, %v687
    %v689 = vpop.f32.mrb[0].mxu0
    %v690 = vadd.f32 %v300, %v689
    %v691 = vpop.f32.mrb[0].mxu0
    %v692 = vadd.f32 %v296, %v691
    %v693 = vpop.f32.mrb[0].mxu0
    %v694 = vadd.f32 %v300, %v693
    %695 = vmatprep.mubr.bf16.mxu0 0
    %696 = vmatmul.mubr.bf16.gmra.mrb[0].mxu0 %v289
    %v697 = vpop.f32.mrb[0].mxu0
    %v698 = vadd.f32 %v296, %v697
    %v699 = vpop.f32.mrb[0].mxu0
    %v700 = vadd.f32 %v300, %v699
    %v701 = vpop.f32.mrb[0].mxu0
    %v702 = vadd.f32 %v296, %v701
    %v703 = vpop.f32.mrb[0].mxu0
    %v704 = vadd.f32 %v300, %v703
    %705 = vmatprep.mubr.bf16.mxu0 0
    %706 = vmatmul.mubr.bf16.gmra.mrb[0].mxu0 %v290
    %v707 = vpop.f32.mrb[0].mxu0
    %v708 = vadd.f32 %v296, %v707
    %v709 = vpop.f32.mrb[0].mxu0
    %v710 = vadd.f32 %v300, %v709
    %v711 = vpop.f32.mrb[0].mxu0
    %v712 = vadd.f32 %v296, %v711
    %v713 = vpop.f32.mrb[0].mxu0
    %v714 = vadd.f32 %v300, %v713
    %715 = vmatprep.mubr.bf16.mxu0 0
    %716 = vmatmul.mubr.bf16.gmra.mrb[0].mxu0 %v291
    %v717 = vpop.f32.mrb[0].mxu0
    %v718 = vadd.f32 %v296, %v717
    %v719 = vpop.f32.mrb[0].mxu0
    %v720 = vadd.f32 %v300, %v719
    %v721 = vpop.f32.mrb[0].mxu0
    %v722 = vadd.f32 %v296, %v721
    %v723 = vpop.f32.mrb[0].mxu0
    %v724 = vadd.f32 %v300, %v723
    %725 = vdwg.mxu0
    %726 = vmatprep.subr.bf16.mxu0 %v528
    %727 = vmatpush1.bf16.msra.mxu0 %v527
    %728 = vmatprep.subr.bf16.mxu0 %v536
    %729 = vmatpush1.bf16.msra.mxu0 %v535
    %730 = vmatprep.subr.bf16.mxu0 %v544
    %731 = vmatpush1.bf16.msra.mxu0 %v543
    %732 = vmatprep.subr.bf16.mxu0 %v552
    %733 = vmatpush1.bf16.msra.mxu0 %v551
    %734 = vmatprep.subr.bf16.mxu0 %v560
    %735 = vmatpush1.bf16.msra.mxu0 %v559
    %736 = vmatprep.subr.bf16.mxu0 %v568
    %737 = vmatpush1.bf16.msra.mxu0 %v567
    %738 = vmatprep.subr.bf16.mxu0 %v576
    %739 = vmatpush1.bf16.msra.mxu0 %v575
    %740 = vmatprep.subr.bf16.mxu0 %v584
    %741 = vmatpush1.bf16.msra.mxu0 %v583
    %742 = vmatprep.subr.bf16.mxu0 0
    %743 = vmatpush1.bf16.msra.mxu0 0
    %744 = vmatprep.subr.bf16.mxu0 0
    %745 = vmatpush1.bf16.msra.mxu0 0
    %746 = vmatprep.subr.bf16.mxu0 0
    %747 = vmatpush1.bf16.msra.mxu0 0
    %748 = vmatprep.subr.bf16.mxu0 0
    %749 = vmatpush1.bf16.msra.mxu0 0
    %750 = vmatprep.subr.bf16.mxu0 0
    %751 = vmatpush1.bf16.msra.mxu0 0
    %752 = vmatprep.subr.bf16.mxu0 0
    %753 = vmatpush1.bf16.msra.mxu0 0
    %754 = vmatprep.subr.bf16.mxu0 0
    %755 = vmatpush1.bf16.msra.mxu0 0
    %756 = vmatprep.subr.bf16.mxu0 0
    %757 = vmatpush1.bf16.msra.mxu0 0
    %758 = vmatprep.mubr.bf16.mxu0 0
    %759 = vmatmul.mubr.bf16.gmra.mrb[0].mxu0 %v288
    %v760 = vpop.f32.mrb[0].mxu0
    %v761 = vadd.f32 %v304, %v760
    %v762 = vpop.f32.mrb[0].mxu0
    %v763 = vadd.f32 %v308, %v762
    %v764 = vpop.f32.mrb[0].mxu0
    %v765 = vadd.f32 %v304, %v764
    %v766 = vpop.f32.mrb[0].mxu0
    %v767 = vadd.f32 %v308, %v766
    %768 = vmatprep.mubr.bf16.mxu0 0
    %769 = vmatmul.mubr.bf16.gmra.mrb[0].mxu0 %v289
    %v770 = vpop.f32.mrb[0].mxu0
    %v771 = vadd.f32 %v304, %v770
    %v772 = vpop.f32.mrb[0].mxu0
    %v773 = vadd.f32 %v308, %v772
    %v774 = vpop.f32.mrb[0].mxu0
    %v775 = vadd.f32 %v304, %v774
    %v776 = vpop.f32.mrb[0].mxu0
    %v777 = vadd.f32 %v308, %v776
    %778 = vmatprep.mubr.bf16.mxu0 0
    %779 = vmatmul.mubr.bf16.gmra.mrb[0].mxu0 %v290
    %v780 = vpop.f32.mrb[0].mxu0
    %v781 = vadd.f32 %v304, %v780
    %v782 = vpop.f32.mrb[0].mxu0
    %v783 = vadd.f32 %v308, %v782
    %v784 = vpop.f32.mrb[0].mxu0
    %v785 = vadd.f32 %v304, %v784
    %v786 = vpop.f32.mrb[0].mxu0
    %v787 = vadd.f32 %v308, %v786
    %788 = vmatprep.mubr.bf16.mxu0 0
    %789 = vmatmul.mubr.bf16.gmra.mrb[0].mxu0 %v291
    %v790 = vpop.f32.mrb[0].mxu0
    %v791 = vadd.f32 %v304, %v790
    %v792 = vpop.f32.mrb[0].mxu0
    %v793 = vadd.f32 %v308, %v792
    %v794 = vpop.f32.mrb[0].mxu0
    %v795 = vadd.f32 %v304, %v794
    %v796 = vpop.f32.mrb[0].mxu0
    %v797 = vadd.f32 %v308, %v796
    %798 = vdwg.mxu0
    %799 = vmatprep.subr.bf16.mxu0 %v530
    %800 = vmatpush1.bf16.msra.mxu0 %v529
    %801 = vmatprep.subr.bf16.mxu0 %v538
    %802 = vmatpush1.bf16.msra.mxu0 %v537
    %803 = vmatprep.subr.bf16.mxu0 %v546
    %804 = vmatpush1.bf16.msra.mxu0 %v545
    %805 = vmatprep.subr.bf16.mxu0 %v554
    %806 = vmatpush1.bf16.msra.mxu0 %v553
    %807 = vmatprep.subr.bf16.mxu0 %v562
    %808 = vmatpush1.bf16.msra.mxu0 %v561
    %809 = vmatprep.subr.bf16.mxu0 %v570
    %810 = vmatpush1.bf16.msra.mxu0 %v569
    %811 = vmatprep.subr.bf16.mxu0 %v578
    %812 = vmatpush1.bf16.msra.mxu0 %v577
    %813 = vmatprep.subr.bf16.mxu0 %v586
    %814 = vmatpush1.bf16.msra.mxu0 %v585
    %815 = vmatprep.subr.bf16.mxu0 0
    %816 = vmatpush1.bf16.msra.mxu0 0
    %817 = vmatprep.subr.bf16.mxu0 0
    %818 = vmatpush1.bf16.msra.mxu0 0
    %819 = vmatprep.subr.bf16.mxu0 0
    %820 = vmatpush1.bf16.msra.mxu0 0
    %821 = vmatprep.subr.bf16.mxu0 0
    %822 = vmatpush1.bf16.msra.mxu0 0
    %823 = vmatprep.subr.bf16.mxu0 0
    %824 = vmatpush1.bf16.msra.mxu0 0
    %825 = vmatprep.subr.bf16.mxu0 0
    %826 = vmatpush1.bf16.msra.mxu0 0
    %827 = vmatprep.subr.bf16.mxu0 0
    %828 = vmatpush1.bf16.msra.mxu0 0
    %829 = vmatprep.subr.bf16.mxu0 0
    %830 = vmatpush1.bf16.msra.mxu0 0
    %831 = vmatprep.mubr.bf16.mxu0 0
    %832 = vmatmul.mubr.bf16.gmra.mrb[0].mxu0 %v288
    %v833 = vpop.f32.mrb[0].mxu0
    %v834 = vadd.f32 %v312, %v833
    %v835 = vpop.f32.mrb[0].mxu0
    %v836 = vadd.f32 %v316, %v835
    %v837 = vpop.f32.mrb[0].mxu0
    %v838 = vadd.f32 %v312, %v837
    %v839 = vpop.f32.mrb[0].mxu0
    %v840 = vadd.f32 %v316, %v839
    %841 = vmatprep.mubr.bf16.mxu0 0
    %842 = vmatmul.mubr.bf16.gmra.mrb[0].mxu0 %v289
    %v843 = vpop.f32.mrb[0].mxu0
    %v844 = vadd.f32 %v312, %v843
    %v845 = vpop.f32.mrb[0].mxu0
    %v846 = vadd.f32 %v316, %v845
    %v847 = vpop.f32.mrb[0].mxu0
    %v848 = vadd.f32 %v312, %v847
    %v849 = vpop.f32.mrb[0].mxu0
    %v850 = vadd.f32 %v316, %v849
    %851 = vmatprep.mubr.bf16.mxu0 0
    %852 = vmatmul.mubr.bf16.gmra.mrb[0].mxu0 %v290
    %v853 = vpop.f32.mrb[0].mxu0
    %v854 = vadd.f32 %v312, %v853
    %v855 = vpop.f32.mrb[0].mxu0
    %v856 = vadd.f32 %v316, %v855
    %v857 = vpop.f32.mrb[0].mxu0
    %v858 = vadd.f32 %v312, %v857
    %v859 = vpop.f32.mrb[0].mxu0
    %v860 = vadd.f32 %v316, %v859
    %861 = vmatprep.mubr.bf16.mxu0 0
    %862 = vmatmul.mubr.bf16.gmra.mrb[0].mxu0 %v291
    %v863 = vpop.f32.mrb[0].mxu0
    %v864 = vadd.f32 %v312, %v863
    %v865 = vpop.f32.mrb[0].mxu0
    %v866 = vadd.f32 %v316, %v865
    %v867 = vpop.f32.mrb[0].mxu0
    %v868 = vadd.f32 %v312, %v867
    %v869 = vpop.f32.mrb[0].mxu0
    %v870 = vadd.f32 %v316, %v869
    %871 = vdwg.mxu0
    %872 = vmatprep.subr.bf16.mxu0 %v532
    %873 = vmatpush1.bf16.msra.mxu0 %v531
    %874 = vmatprep.subr.bf16.mxu0 %v540
    %875 = vmatpush1.bf16.msra.mxu0 %v539
    %876 = vmatprep.subr.bf16.mxu0 %v548
    %877 = vmatpush1.bf16.msra.mxu0 %v547
    %878 = vmatprep.subr.bf16.mxu0 %v556
    %879 = vmatpush1.bf16.msra.mxu0 %v555
    %880 = vmatprep.subr.bf16.mxu0 %v564
    %881 = vmatpush1.bf16.msra.mxu0 %v563
    %882 = vmatprep.subr.bf16.mxu0 %v572
    %883 = vmatpush1.bf16.msra.mxu0 %v571
    %884 = vmatprep.subr.bf16.mxu0 %v580
    %885 = vmatpush1.bf16.msra.mxu0 %v579
    %886 = vmatprep.subr.bf16.mxu0 %v588
    %887 = vmatpush1.bf16.msra.mxu0 %v587
    %888 = vmatprep.subr.bf16.mxu0 0
    %889 = vmatpush1.bf16.msra.mxu0 0
    %890 = vmatprep.subr.bf16.mxu0 0
    %891 = vmatpush1.bf16.msra.mxu0 0
    %892 = vmatprep.subr.bf16.mxu0 0
    %893 = vmatpush1.bf16.msra.mxu0 0
    %894 = vmatprep.subr.bf16.mxu0 0
    %895 = vmatpush1.bf16.msra.mxu0 0
    %896 = vmatprep.subr.bf16.mxu0 0
    %897 = vmatpush1.bf16.msra.mxu0 0
    %898 = vmatprep.subr.bf16.mxu0 0
    %899 = vmatpush1.bf16.msra.mxu0 0
    %900 = vmatprep.subr.bf16.mxu0 0
    %901 = vmatpush1.bf16.msra.mxu0 0
    %902 = vmatprep.subr.bf16.mxu0 0
    %903 = vmatpush1.bf16.msra.mxu0 0
    %904 = vmatprep.mubr.bf16.mxu0 0
    %905 = vmatmul.mubr.bf16.gmra.mrb[0].mxu0 %v288
    %v906 = vpop.f32.mrb[0].mxu0
    %v907 = vadd.f32 %v320, %v906
    %v908 = vpop.f32.mrb[0].mxu0
    %v909 = vadd.f32 %v324, %v908
    %v910 = vpop.f32.mrb[0].mxu0
    %v911 = vadd.f32 %v320, %v910
    %v912 = vpop.f32.mrb[0].mxu0
    %v913 = vadd.f32 %v324, %v912
    %914 = vmatprep.mubr.bf16.mxu0 0
    %915 = vmatmul.mubr.bf16.gmra.mrb[0].mxu0 %v289
    %v916 = vpop.f32.mrb[0].mxu0
    %v917 = vadd.f32 %v320, %v916
    %v918 = vpop.f32.mrb[0].mxu0
    %v919 = vadd.f32 %v324, %v918
    %v920 = vpop.f32.mrb[0].mxu0
    %v921 = vadd.f32 %v320, %v920
    %v922 = vpop.f32.mrb[0].mxu0
    %v923 = vadd.f32 %v324, %v922
    %924 = vmatprep.mubr.bf16.mxu0 0
    %925 = vmatmul.mubr.bf16.gmra.mrb[0].mxu0 %v290
    %v926 = vpop.f32.mrb[0].mxu0
    %v927 = vadd.f32 %v320, %v926
    %v928 = vpop.f32.mrb[0].mxu0
    %v929 = vadd.f32 %v324, %v928
    %v930 = vpop.f32.mrb[0].mxu0
    %v931 = vadd.f32 %v320, %v930
    %v932 = vpop.f32.mrb[0].mxu0
    %v933 = vadd.f32 %v324, %v932
    %934 = vmatprep.mubr.bf16.mxu0 0
    %935 = vmatmul.mubr.bf16.gmra.mrb[0].mxu0 %v291
    %v936 = vpop.f32.mrb[0].mxu0
    %v937 = vadd.f32 %v320, %v936
    %v938 = vpop.f32.mrb[0].mxu0
    %v939 = vadd.f32 %v324, %v938
    %v940 = vpop.f32.mrb[0].mxu0
    %v941 = vadd.f32 %v320, %v940
    %v942 = vpop.f32.mrb[0].mxu0
    %v943 = vadd.f32 %v324, %v942
    %944 = vdwg.mxu0
    %v945 = vmax.f32 %v688, 0.0
    %v946 = vmax.f32 %v690, 0.0
    %v947 = vmax.f32 %v761, 0.0
    %v948 = vmax.f32 %v763, 0.0
    %v949 = vmax.f32 %v834, 0.0
    %v950 = vmax.f32 %v836, 0.0
    %v951 = vmax.f32 %v907, 0.0
    %v952 = vmax.f32 %v909, 0.0
    %v953 = vmax.f32 %v692, 0.0
    %v954 = vmax.f32 %v694, 0.0
    %v955 = vmax.f32 %v765, 0.0
    %v956 = vmax.f32 %v767, 0.0
    %v957 = vmax.f32 %v838, 0.0
    %v958 = vmax.f32 %v840, 0.0
    %v959 = vmax.f32 %v911, 0.0
    %v960 = vmax.f32 %v913, 0.0
    %v961 = vmax.f32 %v698, 0.0
    %v962 = vmax.f32 %v700, 0.0
    %v963 = vmax.f32 %v771, 0.0
    %v964 = vmax.f32 %v773, 0.0
    %v965 = vmax.f32 %v844, 0.0
    %v966 = vmax.f32 %v846, 0.0
    %v967 = vmax.f32 %v917, 0.0
    %v968 = vmax.f32 %v919, 0.0
    %v969 = vmax.f32 %v702, 0.0
    %v970 = vmax.f32 %v704, 0.0
    %v971 = vmax.f32 %v775, 0.0
    %v972 = vmax.f32 %v777, 0.0
    %v973 = vmax.f32 %v848, 0.0
    %v974 = vmax.f32 %v850, 0.0
    %v975 = vmax.f32 %v921, 0.0
    %v976 = vmax.f32 %v923, 0.0
    %v977 = vmax.f32 %v708, 0.0
    %v978 = vmax.f32 %v710, 0.0
    %v979 = vmax.f32 %v781, 0.0
    %v980 = vmax.f32 %v783, 0.0
    %v981 = vmax.f32 %v854, 0.0
    %v982 = vmax.f32 %v856, 0.0
    %v983 = vmax.f32 %v927, 0.0
    %v984 = vmax.f32 %v929, 0.0
    %v985 = vmax.f32 %v712, 0.0
    %v986 = vmax.f32 %v714, 0.0
    %v987 = vmax.f32 %v785, 0.0
    %v988 = vmax.f32 %v787, 0.0
    %v989 = vmax.f32 %v858, 0.0
    %v990 = vmax.f32 %v860, 0.0
    %v991 = vmax.f32 %v931, 0.0
    %v992 = vmax.f32 %v933, 0.0
    %v993 = vmax.f32 %v718, 0.0
    %v994 = vmax.f32 %v720, 0.0
    %v995 = vmax.f32 %v791, 0.0
    %v996 = vmax.f32 %v793, 0.0
    %v997 = vmax.f32 %v864, 0.0
    %v998 = vmax.f32 %v866, 0.0
    %v999 = vmax.f32 %v937, 0.0
    %v1000 = vmax.f32 %v939, 0.0
    %v1001 = vmax.f32 %v722, 0.0
    %v1002 = vmax.f32 %v724, 0.0
    %v1003 = vmax.f32 %v795, 0.0
    %v1004 = vmax.f32 %v797, 0.0
    %v1005 = vmax.f32 %v868, 0.0
    %v1006 = vmax.f32 %v870, 0.0
    %v1007 = vmax.f32 %v941, 0.0
    %v1008 = vmax.f32 %v943, 0.0
    %v1009 = vld [vmem:[#allocation14 + $0x200] sm:$0xff]
    %v1010 = vld [vmem:[#allocation14 + $0x208] sm:$0xff]
    %v1011 = vld [vmem:[#allocation14 + $0x210] sm:$0xff]
    %v1012 = vld [vmem:[#allocation14 + $0x218] sm:$0xff]
    %v1013 = vld [vmem:[#allocation14 + $0x220] sm:$0xff]
    %v1014 = vld [vmem:[#allocation14 + $0x228] sm:$0xff]
    %v1015 = vld [vmem:[#allocation14 + $0x230] sm:$0xff]
    %v1016 = vld [vmem:[#allocation14 + $0x238] sm:$0xff]
    %v1017 = vld [vmem:[#allocation14 + $0x240] sm:$0xff]
    %v1018 = vld [vmem:[#allocation14 + $0x248] sm:$0xff]
    %v1019 = vld [vmem:[#allocation14 + $0x250] sm:$0xff]
    %v1020 = vld [vmem:[#allocation14 + $0x258] sm:$0xff]
    %v1021 = vld [vmem:[#allocation14 + $0x260] sm:$0xff]
    %v1022 = vld [vmem:[#allocation14 + $0x268] sm:$0xff]
    %v1023 = vld [vmem:[#allocation14 + $0x270] sm:$0xff]
    %v1024 = vld [vmem:[#allocation14 + $0x278] sm:$0xff]
    %v1025 = vld [vmem:[#allocation14 + $0x280] sm:$0xff]
    %v1026 = vld [vmem:[#allocation14 + $0x288] sm:$0xff]
    %v1027 = vld [vmem:[#allocation14 + $0x290] sm:$0xff]
    %v1028 = vld [vmem:[#allocation14 + $0x298] sm:$0xff]
    %v1029 = vld [vmem:[#allocation14 + $0x2a0] sm:$0xff]
    %v1030 = vld [vmem:[#allocation14 + $0x2a8] sm:$0xff]
    %v1031 = vld [vmem:[#allocation14 + $0x2b0] sm:$0xff]
    %v1032 = vld [vmem:[#allocation14 + $0x2b8] sm:$0xff]
    %v1033 = vld [vmem:[#allocation14 + $0x2c0] sm:$0xff]
    %v1034 = vld [vmem:[#allocation14 + $0x2c8] sm:$0xff]
    %v1035 = vld [vmem:[#allocation14 + $0x2d0] sm:$0xff]
    %v1036 = vld [vmem:[#allocation14 + $0x2d8] sm:$0xff]
    %v1037 = vld [vmem:[#allocation14 + $0x2e0] sm:$0xff]
    %v1038 = vld [vmem:[#allocation14 + $0x2e8] sm:$0xff]
    %v1039 = vld [vmem:[#allocation14 + $0x2f0] sm:$0xff]
    %v1040 = vld [vmem:[#allocation14 + $0x2f8] sm:$0xff]
    %v1041 = vld [vmem:[#allocation14 + $0x300] sm:$0xff]
    %v1042 = vld [vmem:[#allocation14 + $0x308] sm:$0xff]
    %v1043 = vld [vmem:[#allocation14 + $0x310] sm:$0xff]
    %v1044 = vld [vmem:[#allocation14 + $0x318] sm:$0xff]
    %v1045 = vld [vmem:[#allocation14 + $0x320] sm:$0xff]
    %v1046 = vld [vmem:[#allocation14 + $0x328] sm:$0xff]
    %v1047 = vld [vmem:[#allocation14 + $0x330] sm:$0xff]
    %v1048 = vld [vmem:[#allocation14 + $0x338] sm:$0xff]
    %v1049 = vld [vmem:[#allocation14 + $0x340] sm:$0xff]
    %v1050 = vld [vmem:[#allocation14 + $0x348] sm:$0xff]
    %v1051 = vld [vmem:[#allocation14 + $0x350] sm:$0xff]
    %v1052 = vld [vmem:[#allocation14 + $0x358] sm:$0xff]
    %v1053 = vld [vmem:[#allocation14 + $0x360] sm:$0xff]
    %v1054 = vld [vmem:[#allocation14 + $0x368] sm:$0xff]
    %v1055 = vld [vmem:[#allocation14 + $0x370] sm:$0xff]
    %v1056 = vld [vmem:[#allocation14 + $0x378] sm:$0xff]
    %v1057 = vld [vmem:[#allocation14 + $0x380] sm:$0xff]
    %v1058 = vld [vmem:[#allocation14 + $0x388] sm:$0xff]
    %v1059 = vld [vmem:[#allocation14 + $0x390] sm:$0xff]
    %v1060 = vld [vmem:[#allocation14 + $0x398] sm:$0xff]
    %v1061 = vld [vmem:[#allocation14 + $0x3a0] sm:$0xff]
    %v1062 = vld [vmem:[#allocation14 + $0x3a8] sm:$0xff]
    %v1063 = vld [vmem:[#allocation14 + $0x3b0] sm:$0xff]
    %v1064 = vld [vmem:[#allocation14 + $0x3b8] sm:$0xff]
    %v1065 = vld [vmem:[#allocation14 + $0x3c0] sm:$0xff]
    %v1066 = vld [vmem:[#allocation14 + $0x3c8] sm:$0xff]
    %v1067 = vld [vmem:[#allocation14 + $0x3d0] sm:$0xff]
    %v1068 = vld [vmem:[#allocation14 + $0x3d8] sm:$0xff]
    %v1069 = vld [vmem:[#allocation14 + $0x3e0] sm:$0xff]
    %v1070 = vld [vmem:[#allocation14 + $0x3e8] sm:$0xff]
    %v1071 = vld [vmem:[#allocation14 + $0x3f0] sm:$0xff]
    %v1072 = vld [vmem:[#allocation14 + $0x3f8] sm:$0xff]
    %v1073 = vld [vmem:[#allocation16 + $0x8] sm:$0xff]
    %v1074 = vpack.c.bf16 %v203, %v200
    %v1075 = vpack.c.bf16 %v209, %v206
    %v1076 = vpack.c.bf16 %v215, %v212
    %v1077 = vpack.c.bf16 %v221, %v218
    %v1079 = vlaneseq
    %v1080 = vshrl.u32 %v1079, 7
    %v1081 = vsub.s32 0, %v1080
    %v1082 = vrot.slane %v1073, %v1081
    %v1083 = vlaneseq
    %v1084 = vshrl.u32 %v1083, 7
    %v1085 = vsub.s32 1, %v1084
    %v1086 = vrot.slane %v1073, %v1085
    %v1087 = vlaneseq
    %v1088 = vshrl.u32 %v1087, 7
    %v1089 = vsub.s32 2, %v1088
    %v1090 = vrot.slane %v1073, %v1089
    %v1091 = vlaneseq
    %v1092 = vshrl.u32 %v1091, 7
    %v1093 = vsub.s32 3, %v1092
    %v1094 = vrot.slane %v1073, %v1093
    %v1095 = vlaneseq
    %v1096 = vshrl.u32 %v1095, 7
    %v1097 = vsub.s32 4, %v1096
    %v1098 = vrot.slane %v1073, %v1097
    %v1099 = vlaneseq
    %v1100 = vshrl.u32 %v1099, 7
    %v1101 = vsub.s32 5, %v1100
    %v1102 = vrot.slane %v1073, %v1101
    %v1103 = vlaneseq
    %v1104 = vshrl.u32 %v1103, 7
    %v1105 = vsub.s32 6, %v1104
    %v1106 = vrot.slane %v1073, %v1105
    %v1107 = vlaneseq
    %v1108 = vshrl.u32 %v1107, 7
    %v1109 = vsub.s32 7, %v1108
    %v1110 = vrot.slane %v1073, %v1109
    %v1183 = vunpack.c.l.b16 %v1009
    %v1184 = vunpack.c.h.b16 %v1009
    %v1185 = vunpack.c.l.b16 %v1010
    %v1186 = vunpack.c.h.b16 %v1010
    %v1187 = vunpack.c.l.b16 %v1011
    %v1188 = vunpack.c.h.b16 %v1011
    %v1189 = vunpack.c.l.b16 %v1012
    %v1190 = vunpack.c.h.b16 %v1012
    %v1191 = vunpack.c.l.b16 %v1013
    %v1192 = vunpack.c.h.b16 %v1013
    %v1193 = vunpack.c.l.b16 %v1014
    %v1194 = vunpack.c.h.b16 %v1014
    %v1195 = vunpack.c.l.b16 %v1015
    %v1196 = vunpack.c.h.b16 %v1015
    %v1197 = vunpack.c.l.b16 %v1016
    %v1198 = vunpack.c.h.b16 %v1016
    %v1199 = vunpack.c.l.b16 %v1017
    %v1200 = vunpack.c.h.b16 %v1017
    %v1201 = vunpack.c.l.b16 %v1018
    %v1202 = vunpack.c.h.b16 %v1018
    %v1203 = vunpack.c.l.b16 %v1019
    %v1204 = vunpack.c.h.b16 %v1019
    %v1205 = vunpack.c.l.b16 %v1020
    %v1206 = vunpack.c.h.b16 %v1020
    %v1207 = vunpack.c.l.b16 %v1021
    %v1208 = vunpack.c.h.b16 %v1021
    %v1209 = vunpack.c.l.b16 %v1022
    %v1210 = vunpack.c.h.b16 %v1022
    %v1211 = vunpack.c.l.b16 %v1023
    %v1212 = vunpack.c.h.b16 %v1023
    %v1213 = vunpack.c.l.b16 %v1024
    %v1214 = vunpack.c.h.b16 %v1024
    %v1215 = vunpack.c.l.b16 %v1025
    %v1216 = vunpack.c.h.b16 %v1025
    %v1217 = vunpack.c.l.b16 %v1026
    %v1218 = vunpack.c.h.b16 %v1026
    %v1219 = vunpack.c.l.b16 %v1027
    %v1220 = vunpack.c.h.b16 %v1027
    %v1221 = vunpack.c.l.b16 %v1028
    %v1222 = vunpack.c.h.b16 %v1028
    %v1223 = vunpack.c.l.b16 %v1029
    %v1224 = vunpack.c.h.b16 %v1029
    %v1225 = vunpack.c.l.b16 %v1030
    %v1226 = vunpack.c.h.b16 %v1030
    %v1227 = vunpack.c.l.b16 %v1031
    %v1228 = vunpack.c.h.b16 %v1031
    %v1229 = vunpack.c.l.b16 %v1032
    %v1230 = vunpack.c.h.b16 %v1032
    %v1231 = vunpack.c.l.b16 %v1033
    %v1232 = vunpack.c.h.b16 %v1033
    %v1233 = vunpack.c.l.b16 %v1034
    %v1234 = vunpack.c.h.b16 %v1034
    %v1235 = vunpack.c.l.b16 %v1035
    %v1236 = vunpack.c.h.b16 %v1035
    %v1237 = vunpack.c.l.b16 %v1036
    %v1238 = vunpack.c.h.b16 %v1036
    %v1239 = vunpack.c.l.b16 %v1037
    %v1240 = vunpack.c.h.b16 %v1037
    %v1241 = vunpack.c.l.b16 %v1038
    %v1242 = vunpack.c.h.b16 %v1038
    %v1243 = vunpack.c.l.b16 %v1039
    %v1244 = vunpack.c.h.b16 %v1039
    %v1245 = vunpack.c.l.b16 %v1040
    %v1246 = vunpack.c.h.b16 %v1040
    %v1247 = vunpack.c.l.b16 %v1041
    %v1248 = vunpack.c.h.b16 %v1041
    %v1249 = vunpack.c.l.b16 %v1042
    %v1250 = vunpack.c.h.b16 %v1042
    %v1251 = vunpack.c.l.b16 %v1043
    %v1252 = vunpack.c.h.b16 %v1043
    %v1253 = vunpack.c.l.b16 %v1044
    %v1254 = vunpack.c.h.b16 %v1044
    %v1255 = vunpack.c.l.b16 %v1045
    %v1256 = vunpack.c.h.b16 %v1045
    %v1257 = vunpack.c.l.b16 %v1046
    %v1258 = vunpack.c.h.b16 %v1046
    %v1259 = vunpack.c.l.b16 %v1047
    %v1260 = vunpack.c.h.b16 %v1047
    %v1261 = vunpack.c.l.b16 %v1048
    %v1262 = vunpack.c.h.b16 %v1048
    %v1263 = vunpack.c.l.b16 %v1049
    %v1264 = vunpack.c.h.b16 %v1049
    %v1265 = vunpack.c.l.b16 %v1050
    %v1266 = vunpack.c.h.b16 %v1050
    %v1267 = vunpack.c.l.b16 %v1051
    %v1268 = vunpack.c.h.b16 %v1051
    %v1269 = vunpack.c.l.b16 %v1052
    %v1270 = vunpack.c.h.b16 %v1052
    %v1271 = vunpack.c.l.b16 %v1053
    %v1272 = vunpack.c.h.b16 %v1053
    %v1273 = vunpack.c.l.b16 %v1054
    %v1274 = vunpack.c.h.b16 %v1054
    %v1275 = vunpack.c.l.b16 %v1055
    %v1276 = vunpack.c.h.b16 %v1055
    %v1277 = vunpack.c.l.b16 %v1056
    %v1278 = vunpack.c.h.b16 %v1056
    %v1279 = vunpack.c.l.b16 %v1057
    %v1280 = vunpack.c.h.b16 %v1057
    %v1281 = vunpack.c.l.b16 %v1058
    %v1282 = vunpack.c.h.b16 %v1058
    %v1283 = vunpack.c.l.b16 %v1059
    %v1284 = vunpack.c.h.b16 %v1059
    %v1285 = vunpack.c.l.b16 %v1060
    %v1286 = vunpack.c.h.b16 %v1060
    %v1287 = vunpack.c.l.b16 %v1061
    %v1288 = vunpack.c.h.b16 %v1061
    %v1289 = vunpack.c.l.b16 %v1062
    %v1290 = vunpack.c.h.b16 %v1062
    %v1291 = vunpack.c.l.b16 %v1063
    %v1292 = vunpack.c.h.b16 %v1063
    %v1293 = vunpack.c.l.b16 %v1064
    %v1294 = vunpack.c.h.b16 %v1064
    %v1295 = vunpack.c.l.b16 %v1065
    %v1296 = vunpack.c.h.b16 %v1065
    %v1297 = vunpack.c.l.b16 %v1066
    %v1298 = vunpack.c.h.b16 %v1066
    %v1299 = vunpack.c.l.b16 %v1067
    %v1300 = vunpack.c.h.b16 %v1067
    %v1301 = vunpack.c.l.b16 %v1068
    %v1302 = vunpack.c.h.b16 %v1068
    %v1303 = vunpack.c.l.b16 %v1069
    %v1304 = vunpack.c.h.b16 %v1069
    %v1305 = vunpack.c.l.b16 %v1070
    %v1306 = vunpack.c.h.b16 %v1070
    %v1307 = vunpack.c.l.b16 %v1071
    %v1308 = vunpack.c.h.b16 %v1071
    %v1309 = vunpack.c.l.b16 %v1072
    %v1310 = vunpack.c.h.b16 %v1072
    %v1311 = vpack.c.b16 %v1191, %v1183
    %v1312 = vpack.c.b16 %v1192, %v1184
    %v1313 = vpack.c.b16 %v1193, %v1185
    %v1314 = vpack.c.b16 %v1194, %v1186
    %v1315 = vpack.c.b16 %v1195, %v1187
    %v1316 = vpack.c.b16 %v1196, %v1188
    %v1317 = vpack.c.b16 %v1197, %v1189
    %v1318 = vpack.c.b16 %v1198, %v1190
    %v1319 = vpack.c.b16 %v1207, %v1199
    %v1320 = vpack.c.b16 %v1208, %v1200
    %v1321 = vpack.c.b16 %v1209, %v1201
    %v1322 = vpack.c.b16 %v1210, %v1202
    %v1323 = vpack.c.b16 %v1211, %v1203
    %v1324 = vpack.c.b16 %v1212, %v1204
    %v1325 = vpack.c.b16 %v1213, %v1205
    %v1326 = vpack.c.b16 %v1214, %v1206
    %v1327 = vpack.c.b16 %v1223, %v1215
    %v1328 = vpack.c.b16 %v1224, %v1216
    %v1329 = vpack.c.b16 %v1225, %v1217
    %v1330 = vpack.c.b16 %v1226, %v1218
    %v1331 = vpack.c.b16 %v1227, %v1219
    %v1332 = vpack.c.b16 %v1228, %v1220
    %v1333 = vpack.c.b16 %v1229, %v1221
    %v1334 = vpack.c.b16 %v1230, %v1222
    %v1335 = vpack.c.b16 %v1239, %v1231
    %v1336 = vpack.c.b16 %v1240, %v1232
    %v1337 = vpack.c.b16 %v1241, %v1233
    %v1338 = vpack.c.b16 %v1242, %v1234
    %v1339 = vpack.c.b16 %v1243, %v1235
    %v1340 = vpack.c.b16 %v1244, %v1236
    %v1341 = vpack.c.b16 %v1245, %v1237
    %v1342 = vpack.c.b16 %v1246, %v1238
    %v1343 = vpack.c.b16 %v1255, %v1247
    %v1344 = vpack.c.b16 %v1256, %v1248
    %v1345 = vpack.c.b16 %v1257, %v1249
    %v1346 = vpack.c.b16 %v1258, %v1250
    %v1347 = vpack.c.b16 %v1259, %v1251
    %v1348 = vpack.c.b16 %v1260, %v1252
    %v1349 = vpack.c.b16 %v1261, %v1253
    %v1350 = vpack.c.b16 %v1262, %v1254
    %v1351 = vpack.c.b16 %v1271, %v1263
    %v1352 = vpack.c.b16 %v1272, %v1264
    %v1353 = vpack.c.b16 %v1273, %v1265
    %v1354 = vpack.c.b16 %v1274, %v1266
    %v1355 = vpack.c.b16 %v1275, %v1267
    %v1356 = vpack.c.b16 %v1276, %v1268
    %v1357 = vpack.c.b16 %v1277, %v1269
    %v1358 = vpack.c.b16 %v1278, %v1270
    %v1359 = vpack.c.b16 %v1287, %v1279
    %v1360 = vpack.c.b16 %v1288, %v1280
    %v1361 = vpack.c.b16 %v1289, %v1281
    %v1362 = vpack.c.b16 %v1290, %v1282
    %v1363 = vpack.c.b16 %v1291, %v1283
    %v1364 = vpack.c.b16 %v1292, %v1284
    %v1365 = vpack.c.b16 %v1293, %v1285
    %v1366 = vpack.c.b16 %v1294, %v1286
    %v1367 = vpack.c.b16 %v1303, %v1295
    %v1368 = vpack.c.b16 %v1304, %v1296
    %v1369 = vpack.c.b16 %v1305, %v1297
    %v1370 = vpack.c.b16 %v1306, %v1298
    %v1371 = vpack.c.b16 %v1307, %v1299
    %v1372 = vpack.c.b16 %v1308, %v1300
    %v1373 = vpack.c.b16 %v1309, %v1301
    %v1374 = vpack.c.b16 %v1310, %v1302
    %1439 = vmatprep.subr.bf16.mxu0 %v1312
    %1440 = vmatpush1.bf16.msra.mxu0 %v1311
    %1441 = vmatprep.subr.bf16.mxu0 %v1320
    %1442 = vmatpush1.bf16.msra.mxu0 %v1319
    %1443 = vmatprep.subr.bf16.mxu0 %v1328
    %1444 = vmatpush1.bf16.msra.mxu0 %v1327
    %1445 = vmatprep.subr.bf16.mxu0 %v1336
    %1446 = vmatpush1.bf16.msra.mxu0 %v1335
    %1447 = vmatprep.subr.bf16.mxu0 %v1344
    %1448 = vmatpush1.bf16.msra.mxu0 %v1343
    %1449 = vmatprep.subr.bf16.mxu0 %v1352
    %1450 = vmatpush1.bf16.msra.mxu0 %v1351
    %1451 = vmatprep.subr.bf16.mxu0 %v1360
    %1452 = vmatpush1.bf16.msra.mxu0 %v1359
    %1453 = vmatprep.subr.bf16.mxu0 %v1368
    %1454 = vmatpush1.bf16.msra.mxu0 %v1367
    %1455 = vmatprep.subr.bf16.mxu0 0
    %1456 = vmatpush1.bf16.msra.mxu0 0
    %1457 = vmatprep.subr.bf16.mxu0 0
    %1458 = vmatpush1.bf16.msra.mxu0 0
    %1459 = vmatprep.subr.bf16.mxu0 0
    %1460 = vmatpush1.bf16.msra.mxu0 0
    %1461 = vmatprep.subr.bf16.mxu0 0
    %1462 = vmatpush1.bf16.msra.mxu0 0
    %1463 = vmatprep.subr.bf16.mxu0 0
    %1464 = vmatpush1.bf16.msra.mxu0 0
    %1465 = vmatprep.subr.bf16.mxu0 0
    %1466 = vmatpush1.bf16.msra.mxu0 0
    %1467 = vmatprep.subr.bf16.mxu0 0
    %1468 = vmatpush1.bf16.msra.mxu0 0
    %1469 = vmatprep.subr.bf16.mxu0 0
    %1470 = vmatpush1.bf16.msra.mxu0 0
    %1471 = vmatprep.mubr.bf16.mxu0 0
    %1472 = vmatmul.mubr.bf16.gmra.mrb[0].mxu0 %v1074
    %v1473 = vpop.f32.mrb[0].mxu0
    %v1474 = vadd.f32 %v1082, %v1473
    %v1475 = vpop.f32.mrb[0].mxu0
    %v1476 = vadd.f32 %v1086, %v1475
    %v1477 = vpop.f32.mrb[0].mxu0
    %v1478 = vadd.f32 %v1082, %v1477
    %v1479 = vpop.f32.mrb[0].mxu0
    %v1480 = vadd.f32 %v1086, %v1479
    %1481 = vmatprep.mubr.bf16.mxu0 0
    %1482 = vmatmul.mubr.bf16.gmra.mrb[0].mxu0 %v1075
    %v1483 = vpop.f32.mrb[0].mxu0
    %v1484 = vadd.f32 %v1082, %v1483
    %v1485 = vpop.f32.mrb[0].mxu0
    %v1486 = vadd.f32 %v1086, %v1485
    %v1487 = vpop.f32.mrb[0].mxu0
    %v1488 = vadd.f32 %v1082, %v1487
    %v1489 = vpop.f32.mrb[0].mxu0
    %v1490 = vadd.f32 %v1086, %v1489
    %1491 = vmatprep.mubr.bf16.mxu0 0
    %1492 = vmatmul.mubr.bf16.gmra.mrb[0].mxu0 %v1076
    %v1493 = vpop.f32.mrb[0].mxu0
    %v1494 = vadd.f32 %v1082, %v1493
    %v1495 = vpop.f32.mrb[0].mxu0
    %v1496 = vadd.f32 %v1086, %v1495
    %v1497 = vpop.f32.mrb[0].mxu0
    %v1498 = vadd.f32 %v1082, %v1497
    %v1499 = vpop.f32.mrb[0].mxu0
    %v1500 = vadd.f32 %v1086, %v1499
    %1501 = vmatprep.mubr.bf16.mxu0 0
    %1502 = vmatmul.mubr.bf16.gmra.mrb[0].mxu0 %v1077
    %v1503 = vpop.f32.mrb[0].mxu0
    %v1504 = vadd.f32 %v1082, %v1503
    %v1505 = vpop.f32.mrb[0].mxu0
    %v1506 = vadd.f32 %v1086, %v1505
    %v1507 = vpop.f32.mrb[0].mxu0
    %v1508 = vadd.f32 %v1082, %v1507
    %v1509 = vpop.f32.mrb[0].mxu0
    %v1510 = vadd.f32 %v1086, %v1509
    %1511 = vdwg.mxu0
    %1512 = vmatprep.subr.bf16.mxu0 %v1314
    %1513 = vmatpush1.bf16.msra.mxu0 %v1313
    %1514 = vmatprep.subr.bf16.mxu0 %v1322
    %1515 = vmatpush1.bf16.msra.mxu0 %v1321
    %1516 = vmatprep.subr.bf16.mxu0 %v1330
    %1517 = vmatpush1.bf16.msra.mxu0 %v1329
    %1518 = vmatprep.subr.bf16.mxu0 %v1338
    %1519 = vmatpush1.bf16.msra.mxu0 %v1337
    %1520 = vmatprep.subr.bf16.mxu0 %v1346
    %1521 = vmatpush1.bf16.msra.mxu0 %v1345
    %1522 = vmatprep.subr.bf16.mxu0 %v1354
    %1523 = vmatpush1.bf16.msra.mxu0 %v1353
    %1524 = vmatprep.subr.bf16.mxu0 %v1362
    %1525 = vmatpush1.bf16.msra.mxu0 %v1361
    %1526 = vmatprep.subr.bf16.mxu0 %v1370
    %1527 = vmatpush1.bf16.msra.mxu0 %v1369
    %1528 = vmatprep.subr.bf16.mxu0 0
    %1529 = vmatpush1.bf16.msra.mxu0 0
    %1530 = vmatprep.subr.bf16.mxu0 0
    %1531 = vmatpush1.bf16.msra.mxu0 0
    %1532 = vmatprep.subr.bf16.mxu0 0
    %1533 = vmatpush1.bf16.msra.mxu0 0
    %1534 = vmatprep.subr.bf16.mxu0 0
    %1535 = vmatpush1.bf16.msra.mxu0 0
    %1536 = vmatprep.subr.bf16.mxu0 0
    %1537 = vmatpush1.bf16.msra.mxu0 0
    %1538 = vmatprep.subr.bf16.mxu0 0
    %1539 = vmatpush1.bf16.msra.mxu0 0
    %1540 = vmatprep.subr.bf16.mxu0 0
    %1541 = vmatpush1.bf16.msra.mxu0 0
    %1542 = vmatprep.subr.bf16.mxu0 0
    %1543 = vmatpush1.bf16.msra.mxu0 0
    %1544 = vmatprep.mubr.bf16.mxu0 0
    %1545 = vmatmul.mubr.bf16.gmra.mrb[0].mxu0 %v1074
    %v1546 = vpop.f32.mrb[0].mxu0
    %v1547 = vadd.f32 %v1090, %v1546
    %v1548 = vpop.f32.mrb[0].mxu0
    %v1549 = vadd.f32 %v1094, %v1548
    %v1550 = vpop.f32.mrb[0].mxu0
    %v1551 = vadd.f32 %v1090, %v1550
    %v1552 = vpop.f32.mrb[0].mxu0
    %v1553 = vadd.f32 %v1094, %v1552
    %1554 = vmatprep.mubr.bf16.mxu0 0
    %1555 = vmatmul.mubr.bf16.gmra.mrb[0].mxu0 %v1075
    %v1556 = vpop.f32.mrb[0].mxu0
    %v1557 = vadd.f32 %v1090, %v1556
    %v1558 = vpop.f32.mrb[0].mxu0
    %v1559 = vadd.f32 %v1094, %v1558
    %v1560 = vpop.f32.mrb[0].mxu0
    %v1561 = vadd.f32 %v1090, %v1560
    %v1562 = vpop.f32.mrb[0].mxu0
    %v1563 = vadd.f32 %v1094, %v1562
    %1564 = vmatprep.mubr.bf16.mxu0 0
    %1565 = vmatmul.mubr.bf16.gmra.mrb[0].mxu0 %v1076
    %v1566 = vpop.f32.mrb[0].mxu0
    %v1567 = vadd.f32 %v1090, %v1566
    %v1568 = vpop.f32.mrb[0].mxu0
    %v1569 = vadd.f32 %v1094, %v1568
    %v1570 = vpop.f32.mrb[0].mxu0
    %v1571 = vadd.f32 %v1090, %v1570
    %v1572 = vpop.f32.mrb[0].mxu0
    %v1573 = vadd.f32 %v1094, %v1572
    %1574 = vmatprep.mubr.bf16.mxu0 0
    %1575 = vmatmul.mubr.bf16.gmra.mrb[0].mxu0 %v1077
    %v1576 = vpop.f32.mrb[0].mxu0
    %v1577 = vadd.f32 %v1090, %v1576
    %v1578 = vpop.f32.mrb[0].mxu0
    %v1579 = vadd.f32 %v1094, %v1578
    %v1580 = vpop.f32.mrb[0].mxu0
    %v1581 = vadd.f32 %v1090, %v1580
    %v1582 = vpop.f32.mrb[0].mxu0
    %v1583 = vadd.f32 %v1094, %v1582
    %1584 = vdwg.mxu0
    %1585 = vmatprep.subr.bf16.mxu0 %v1316
    %1586 = vmatpush1.bf16.msra.mxu0 %v1315
    %1587 = vmatprep.subr.bf16.mxu0 %v1324
    %1588 = vmatpush1.bf16.msra.mxu0 %v1323
    %1589 = vmatprep.subr.bf16.mxu0 %v1332
    %1590 = vmatpush1.bf16.msra.mxu0 %v1331
    %1591 = vmatprep.subr.bf16.mxu0 %v1340
    %1592 = vmatpush1.bf16.msra.mxu0 %v1339
    %1593 = vmatprep.subr.bf16.mxu0 %v1348
    %1594 = vmatpush1.bf16.msra.mxu0 %v1347
    %1595 = vmatprep.subr.bf16.mxu0 %v1356
    %1596 = vmatpush1.bf16.msra.mxu0 %v1355
    %1597 = vmatprep.subr.bf16.mxu0 %v1364
    %1598 = vmatpush1.bf16.msra.mxu0 %v1363
    %1599 = vmatprep.subr.bf16.mxu0 %v1372
    %1600 = vmatpush1.bf16.msra.mxu0 %v1371
    %1601 = vmatprep.subr.bf16.mxu0 0
    %1602 = vmatpush1.bf16.msra.mxu0 0
    %1603 = vmatprep.subr.bf16.mxu0 0
    %1604 = vmatpush1.bf16.msra.mxu0 0
    %1605 = vmatprep.subr.bf16.mxu0 0
    %1606 = vmatpush1.bf16.msra.mxu0 0
    %1607 = vmatprep.subr.bf16.mxu0 0
    %1608 = vmatpush1.bf16.msra.mxu0 0
    %1609 = vmatprep.subr.bf16.mxu0 0
    %1610 = vmatpush1.bf16.msra.mxu0 0
    %1611 = vmatprep.subr.bf16.mxu0 0
    %1612 = vmatpush1.bf16.msra.mxu0 0
    %1613 = vmatprep.subr.bf16.mxu0 0
    %1614 = vmatpush1.bf16.msra.mxu0 0
    %1615 = vmatprep.subr.bf16.mxu0 0
    %1616 = vmatpush1.bf16.msra.mxu0 0
    %1617 = vmatprep.mubr.bf16.mxu0 0
    %1618 = vmatmul.mubr.bf16.gmra.mrb[0].mxu0 %v1074
    %v1619 = vpop.f32.mrb[0].mxu0
    %v1620 = vadd.f32 %v1098, %v1619
    %v1621 = vpop.f32.mrb[0].mxu0
    %v1622 = vadd.f32 %v1102, %v1621
    %v1623 = vpop.f32.mrb[0].mxu0
    %v1624 = vadd.f32 %v1098, %v1623
    %v1625 = vpop.f32.mrb[0].mxu0
    %v1626 = vadd.f32 %v1102, %v1625
    %1627 = vmatprep.mubr.bf16.mxu0 0
    %1628 = vmatmul.mubr.bf16.gmra.mrb[0].mxu0 %v1075
    %v1629 = vpop.f32.mrb[0].mxu0
    %v1630 = vadd.f32 %v1098, %v1629
    %v1631 = vpop.f32.mrb[0].mxu0
    %v1632 = vadd.f32 %v1102, %v1631
    %v1633 = vpop.f32.mrb[0].mxu0
    %v1634 = vadd.f32 %v1098, %v1633
    %v1635 = vpop.f32.mrb[0].mxu0
    %v1636 = vadd.f32 %v1102, %v1635
    %1637 = vmatprep.mubr.bf16.mxu0 0
    %1638 = vmatmul.mubr.bf16.gmra.mrb[0].mxu0 %v1076
    %v1639 = vpop.f32.mrb[0].mxu0
    %v1640 = vadd.f32 %v1098, %v1639
    %v1641 = vpop.f32.mrb[0].mxu0
    %v1642 = vadd.f32 %v1102, %v1641
    %v1643 = vpop.f32.mrb[0].mxu0
    %v1644 = vadd.f32 %v1098, %v1643
    %v1645 = vpop.f32.mrb[0].mxu0
    %v1646 = vadd.f32 %v1102, %v1645
    %1647 = vmatprep.mubr.bf16.mxu0 0
    %1648 = vmatmul.mubr.bf16.gmra.mrb[0].mxu0 %v1077
    %v1649 = vpop.f32.mrb[0].mxu0
    %v1650 = vadd.f32 %v1098, %v1649
    %v1651 = vpop.f32.mrb[0].mxu0
    %v1652 = vadd.f32 %v1102, %v1651
    %v1653 = vpop.f32.mrb[0].mxu0
    %v1654 = vadd.f32 %v1098, %v1653
    %v1655 = vpop.f32.mrb[0].mxu0
    %v1656 = vadd.f32 %v1102, %v1655
    %1657 = vdwg.mxu0
    %1658 = vmatprep.subr.bf16.mxu0 %v1318
    %1659 = vmatpush1.bf16.msra.mxu0 %v1317
    %1660 = vmatprep.subr.bf16.mxu0 %v1326
    %1661 = vmatpush1.bf16.msra.mxu0 %v1325
    %1662 = vmatprep.subr.bf16.mxu0 %v1334
    %1663 = vmatpush1.bf16.msra.mxu0 %v1333
    %1664 = vmatprep.subr.bf16.mxu0 %v1342
    %1665 = vmatpush1.bf16.msra.mxu0 %v1341
    %1666 = vmatprep.subr.bf16.mxu0 %v1350
    %1667 = vmatpush1.bf16.msra.mxu0 %v1349
    %1668 = vmatprep.subr.bf16.mxu0 %v1358
    %1669 = vmatpush1.bf16.msra.mxu0 %v1357
    %1670 = vmatprep.subr.bf16.mxu0 %v1366
    %1671 = vmatpush1.bf16.msra.mxu0 %v1365
    %1672 = vmatprep.subr.bf16.mxu0 %v1374
    %1673 = vmatpush1.bf16.msra.mxu0 %v1373
    %1674 = vmatprep.subr.bf16.mxu0 0
    %1675 = vmatpush1.bf16.msra.mxu0 0
    %1676 = vmatprep.subr.bf16.mxu0 0
    %1677 = vmatpush1.bf16.msra.mxu0 0
    %1678 = vmatprep.subr.bf16.mxu0 0
    %1679 = vmatpush1.bf16.msra.mxu0 0
    %1680 = vmatprep.subr.bf16.mxu0 0
    %1681 = vmatpush1.bf16.msra.mxu0 0
    %1682 = vmatprep.subr.bf16.mxu0 0
    %1683 = vmatpush1.bf16.msra.mxu0 0
    %1684 = vmatprep.subr.bf16.mxu0 0
    %1685 = vmatpush1.bf16.msra.mxu0 0
    %1686 = vmatprep.subr.bf16.mxu0 0
    %1687 = vmatpush1.bf16.msra.mxu0 0
    %1688 = vmatprep.subr.bf16.mxu0 0
    %1689 = vmatpush1.bf16.msra.mxu0 0
    %1690 = vmatprep.mubr.bf16.mxu0 0
    %1691 = vmatmul.mubr.bf16.gmra.mrb[0].mxu0 %v1074
    %v1692 = vpop.f32.mrb[0].mxu0
    %v1693 = vadd.f32 %v1106, %v1692
    %v1694 = vpop.f32.mrb[0].mxu0
    %v1695 = vadd.f32 %v1110, %v1694
    %v1696 = vpop.f32.mrb[0].mxu0
    %v1697 = vadd.f32 %v1106, %v1696
    %v1698 = vpop.f32.mrb[0].mxu0
    %v1699 = vadd.f32 %v1110, %v1698
    %1700 = vmatprep.mubr.bf16.mxu0 0
    %1701 = vmatmul.mubr.bf16.gmra.mrb[0].mxu0 %v1075
    %v1702 = vpop.f32.mrb[0].mxu0
    %v1703 = vadd.f32 %v1106, %v1702
    %v1704 = vpop.f32.mrb[0].mxu0
    %v1705 = vadd.f32 %v1110, %v1704
    %v1706 = vpop.f32.mrb[0].mxu0
    %v1707 = vadd.f32 %v1106, %v1706
    %v1708 = vpop.f32.mrb[0].mxu0
    %v1709 = vadd.f32 %v1110, %v1708
    %1710 = vmatprep.mubr.bf16.mxu0 0
    %1711 = vmatmul.mubr.bf16.gmra.mrb[0].mxu0 %v1076
    %v1712 = vpop.f32.mrb[0].mxu0
    %v1713 = vadd.f32 %v1106, %v1712
    %v1714 = vpop.f32.mrb[0].mxu0
    %v1715 = vadd.f32 %v1110, %v1714
    %v1716 = vpop.f32.mrb[0].mxu0
    %v1717 = vadd.f32 %v1106, %v1716
    %v1718 = vpop.f32.mrb[0].mxu0
    %v1719 = vadd.f32 %v1110, %v1718
    %1720 = vmatprep.mubr.bf16.mxu0 0
    %1721 = vmatmul.mubr.bf16.gmra.mrb[0].mxu0 %v1077
    %v1722 = vpop.f32.mrb[0].mxu0
    %v1723 = vadd.f32 %v1106, %v1722
    %v1724 = vpop.f32.mrb[0].mxu0
    %v1725 = vadd.f32 %v1110, %v1724
    %v1726 = vpop.f32.mrb[0].mxu0
    %v1727 = vadd.f32 %v1106, %v1726
    %v1728 = vpop.f32.mrb[0].mxu0
    %v1729 = vadd.f32 %v1110, %v1728
    %1730 = vdwg.mxu0
    %v1731 = vmax.f32 %v1474, 0.0
    %v1732 = vmax.f32 %v1476, 0.0
    %v1733 = vmax.f32 %v1547, 0.0
    %v1734 = vmax.f32 %v1549, 0.0
    %v1735 = vmax.f32 %v1620, 0.0
    %v1736 = vmax.f32 %v1622, 0.0
    %v1737 = vmax.f32 %v1693, 0.0
    %v1738 = vmax.f32 %v1695, 0.0
    %v1739 = vmax.f32 %v1478, 0.0
    %v1740 = vmax.f32 %v1480, 0.0
    %v1741 = vmax.f32 %v1551, 0.0
    %v1742 = vmax.f32 %v1553, 0.0
    %v1743 = vmax.f32 %v1624, 0.0
    %v1744 = vmax.f32 %v1626, 0.0
    %v1745 = vmax.f32 %v1697, 0.0
    %v1746 = vmax.f32 %v1699, 0.0
    %v1747 = vmax.f32 %v1484, 0.0
    %v1748 = vmax.f32 %v1486, 0.0
    %v1749 = vmax.f32 %v1557, 0.0
    %v1750 = vmax.f32 %v1559, 0.0
    %v1751 = vmax.f32 %v1630, 0.0
    %v1752 = vmax.f32 %v1632, 0.0
    %v1753 = vmax.f32 %v1703, 0.0
    %v1754 = vmax.f32 %v1705, 0.0
    %v1755 = vmax.f32 %v1488, 0.0
    %v1756 = vmax.f32 %v1490, 0.0
    %v1757 = vmax.f32 %v1561, 0.0
    %v1758 = vmax.f32 %v1563, 0.0
    %v1759 = vmax.f32 %v1634, 0.0
    %v1760 = vmax.f32 %v1636, 0.0
    %v1761 = vmax.f32 %v1707, 0.0
    %v1762 = vmax.f32 %v1709, 0.0
    %v1763 = vmax.f32 %v1494, 0.0
    %v1764 = vmax.f32 %v1496, 0.0
    %v1765 = vmax.f32 %v1567, 0.0
    %v1766 = vmax.f32 %v1569, 0.0
    %v1767 = vmax.f32 %v1640, 0.0
    %v1768 = vmax.f32 %v1642, 0.0
    %v1769 = vmax.f32 %v1713, 0.0
    %v1770 = vmax.f32 %v1715, 0.0
    %v1771 = vmax.f32 %v1498, 0.0
    %v1772 = vmax.f32 %v1500, 0.0
    %v1773 = vmax.f32 %v1571, 0.0
    %v1774 = vmax.f32 %v1573, 0.0
    %v1775 = vmax.f32 %v1644, 0.0
    %v1776 = vmax.f32 %v1646, 0.0
    %v1777 = vmax.f32 %v1717, 0.0
    %v1778 = vmax.f32 %v1719, 0.0
    %v1779 = vmax.f32 %v1504, 0.0
    %v1780 = vmax.f32 %v1506, 0.0
    %v1781 = vmax.f32 %v1577, 0.0
    %v1782 = vmax.f32 %v1579, 0.0
    %v1783 = vmax.f32 %v1650, 0.0
    %v1784 = vmax.f32 %v1652, 0.0
    %v1785 = vmax.f32 %v1723, 0.0
    %v1786 = vmax.f32 %v1725, 0.0
    %v1787 = vmax.f32 %v1508, 0.0
    %v1788 = vmax.f32 %v1510, 0.0
    %v1789 = vmax.f32 %v1581, 0.0
    %v1790 = vmax.f32 %v1583, 0.0
    %v1791 = vmax.f32 %v1654, 0.0
    %v1792 = vmax.f32 %v1656, 0.0
    %v1793 = vmax.f32 %v1727, 0.0
    %v1794 = vmax.f32 %v1729, 0.0
    %s1795 = smul.u32 4, 288
    %s1796 = smul.u32 %s1795, 1
    %s1797 = sshll.u32 %s1796, 4
    %1798 = dma.done [#allocation7], %s1797
    %v1799 = vld [vmem:[#allocation2 + $0x400] sm:$0xff]
    %v1800 = vld [vmem:[#allocation2 + $0x408] sm:$0xff]
    %v1801 = vld [vmem:[#allocation2 + $0x410] sm:$0xff]
    %v1802 = vld [vmem:[#allocation2 + $0x418] sm:$0xff]
    %v1803 = vld [vmem:[#allocation2 + $0x420] sm:$0xff]
    %v1804 = vld [vmem:[#allocation2 + $0x428] sm:$0xff]
    %v1805 = vld [vmem:[#allocation2 + $0x430] sm:$0xff]
    %v1806 = vld [vmem:[#allocation2 + $0x438] sm:$0xff]
    %v1807 = vld [vmem:[#allocation16 + $0x12] sm:$0x1]
    %v1808 = vpack.c.bf16 %v204, %v201
    %v1809 = vpack.c.bf16 %v210, %v207
    %v1810 = vpack.c.bf16 %v216, %v213
    %v1811 = vpack.c.bf16 %v222, %v219
    %v1813 = vlaneseq
    %v1814 = vshrl.u32 %v1813, 7
    %v1815 = vsub.s32 0, %v1814
    %v1816 = vrot.slane %v1807, %v1815
    %1818 = vmatprep.subr.bf16.mxu0 0
    %1819 = vmatpush1.bf16.msra.mxu0 %v1799
    %1820 = vmatprep.subr.bf16.mxu0 0
    %1821 = vmatpush1.bf16.msra.mxu0 %v1800
    %1822 = vmatprep.subr.bf16.mxu0 0
    %1823 = vmatpush1.bf16.msra.mxu0 %v1801
    %1824 = vmatprep.subr.bf16.mxu0 0
    %1825 = vmatpush1.bf16.msra.mxu0 %v1802
    %1826 = vmatprep.subr.bf16.mxu0 0
    %1827 = vmatpush1.bf16.msra.mxu0 %v1803
    %1828 = vmatprep.subr.bf16.mxu0 0
    %1829 = vmatpush1.bf16.msra.mxu0 %v1804
    %1830 = vmatprep.subr.bf16.mxu0 0
    %1831 = vmatpush1.bf16.msra.mxu0 %v1805
    %1832 = vmatprep.subr.bf16.mxu0 0
    %1833 = vmatpush1.bf16.msra.mxu0 %v1806
    %1834 = vmatprep.subr.bf16.mxu0 0
    %1835 = vmatpush1.bf16.msra.mxu0 0
    %1836 = vmatprep.subr.bf16.mxu0 0
    %1837 = vmatpush1.bf16.msra.mxu0 0
    %1838 = vmatprep.subr.bf16.mxu0 0
    %1839 = vmatpush1.bf16.msra.mxu0 0
    %1840 = vmatprep.subr.bf16.mxu0 0
    %1841 = vmatpush1.bf16.msra.mxu0 0
    %1842 = vmatprep.subr.bf16.mxu0 0
    %1843 = vmatpush1.bf16.msra.mxu0 0
    %1844 = vmatprep.subr.bf16.mxu0 0
    %1845 = vmatpush1.bf16.msra.mxu0 0
    %1846 = vmatprep.subr.bf16.mxu0 0
    %1847 = vmatpush1.bf16.msra.mxu0 0
    %1848 = vmatprep.subr.bf16.mxu0 0
    %1849 = vmatpush1.bf16.msra.mxu0 0
    %1850 = vmatprep.mubr.bf16.mxu0 0
    %1851 = vmatmul.mubr.bf16.gmra.mrb[0].mxu0 %v1808
    %v1852 = vpop.f32.mrb[0].mxu0
    %v1853 = vadd.f32 %v1816, %v1852
    %v1854 = vpop.f32.mrb[0].mxu0
    %v1855 = vpop.f32.mrb[0].mxu0
    %v1856 = vadd.f32 %v1816, %v1855
    %v1857 = vpop.f32.mrb[0].mxu0
    %1858 = vmatprep.mubr.bf16.mxu0 0
    %1859 = vmatmul.mubr.bf16.gmra.mrb[0].mxu0 %v1809
    %v1860 = vpop.f32.mrb[0].mxu0
    %v1861 = vadd.f32 %v1816, %v1860
    %v1862 = vpop.f32.mrb[0].mxu0
    %v1863 = vpop.f32.mrb[0].mxu0
    %v1864 = vadd.f32 %v1816, %v1863
    %v1865 = vpop.f32.mrb[0].mxu0
    %1866 = vmatprep.mubr.bf16.mxu0 0
    %1867 = vmatmul.mubr.bf16.gmra.mrb[0].mxu0 %v1810
    %v1868 = vpop.f32.mrb[0].mxu0
    %v1869 = vadd.f32 %v1816, %v1868
    %v1870 = vpop.f32.mrb[0].mxu0
    %v1871 = vpop.f32.mrb[0].mxu0
    %v1872 = vadd.f32 %v1816, %v1871
    %v1873 = vpop.f32.mrb[0].mxu0
    %1874 = vmatprep.mubr.bf16.mxu0 0
    %1875 = vmatmul.mubr.bf16.gmra.mrb[0].mxu0 %v1811
    %v1876 = vpop.f32.mrb[0].mxu0
    %v1877 = vadd.f32 %v1816, %v1876
    %v1878 = vpop.f32.mrb[0].mxu0
    %v1879 = vpop.f32.mrb[0].mxu0
    %v1880 = vadd.f32 %v1816, %v1879
    %v1881 = vpop.f32.mrb[0].mxu0
    %1882 = vdwg.mxu0
    %v1883 = vmax.f32 %v1853, 0.0
    %v1884 = vmax.f32 %v1856, 0.0
    %v1885 = vmax.f32 %v1861, 0.0
    %v1886 = vmax.f32 %v1864, 0.0
    %v1887 = vmax.f32 %v1869, 0.0
    %v1888 = vmax.f32 %v1872, 0.0
    %v1889 = vmax.f32 %v1877, 0.0
    %v1890 = vmax.f32 %v1880, 0.0
    %v1891 = vld [vmem:[#allocation2] sm:$0xff]
    %v1892 = vld [vmem:[#allocation2 + $0x8] sm:$0xff]
    %v1893 = vld [vmem:[#allocation2 + $0x10] sm:$0xff]
    %v1894 = vld [vmem:[#allocation2 + $0x18] sm:$0xff]
    %v1895 = vld [vmem:[#allocation2 + $0x20] sm:$0xff]
    %v1896 = vld [vmem:[#allocation2 + $0x28] sm:$0xff]
    %v1897 = vld [vmem:[#allocation2 + $0x30] sm:$0xff]
    %v1898 = vld [vmem:[#allocation2 + $0x38] sm:$0xff]
    %v1899 = vld [vmem:[#allocation2 + $0x40] sm:$0xff]
    %v1900 = vld [vmem:[#allocation2 + $0x48] sm:$0xff]
    %v1901 = vld [vmem:[#allocation2 + $0x50] sm:$0xff]
    %v1902 = vld [vmem:[#allocation2 + $0x58] sm:$0xff]
    %v1903 = vld [vmem:[#allocation2 + $0x60] sm:$0xff]
    %v1904 = vld [vmem:[#allocation2 + $0x68] sm:$0xff]
    %v1905 = vld [vmem:[#allocation2 + $0x70] sm:$0xff]
    %v1906 = vld [vmem:[#allocation2 + $0x78] sm:$0xff]
    %v1907 = vld [vmem:[#allocation2 + $0x80] sm:$0xff]
    %v1908 = vld [vmem:[#allocation2 + $0x88] sm:$0xff]
    %v1909 = vld [vmem:[#allocation2 + $0x90] sm:$0xff]
    %v1910 = vld [vmem:[#allocation2 + $0x98] sm:$0xff]
    %v1911 = vld [vmem:[#allocation2 + $0xa0] sm:$0xff]
    %v1912 = vld [vmem:[#allocation2 + $0xa8] sm:$0xff]
    %v1913 = vld [vmem:[#allocation2 + $0xb0] sm:$0xff]
    %v1914 = vld [vmem:[#allocation2 + $0xb8] sm:$0xff]
    %v1915 = vld [vmem:[#allocation2 + $0xc0] sm:$0xff]
    %v1916 = vld [vmem:[#allocation2 + $0xc8] sm:$0xff]
    %v1917 = vld [vmem:[#allocation2 + $0xd0] sm:$0xff]
    %v1918 = vld [vmem:[#allocation2 + $0xd8] sm:$0xff]
    %v1919 = vld [vmem:[#allocation2 + $0xe0] sm:$0xff]
    %v1920 = vld [vmem:[#allocation2 + $0xe8] sm:$0xff]
    %v1921 = vld [vmem:[#allocation2 + $0xf0] sm:$0xff]
    %v1922 = vld [vmem:[#allocation2 + $0xf8] sm:$0xff]
    %v1923 = vld [vmem:[#allocation2 + $0x100] sm:$0xff]
    %v1924 = vld [vmem:[#allocation2 + $0x108] sm:$0xff]
    %v1925 = vld [vmem:[#allocation2 + $0x110] sm:$0xff]
    %v1926 = vld [vmem:[#allocation2 + $0x118] sm:$0xff]
    %v1927 = vld [vmem:[#allocation2 + $0x120] sm:$0xff]
    %v1928 = vld [vmem:[#allocation2 + $0x128] sm:$0xff]
    %v1929 = vld [vmem:[#allocation2 + $0x130] sm:$0xff]
    %v1930 = vld [vmem:[#allocation2 + $0x138] sm:$0xff]
    %v1931 = vld [vmem:[#allocation2 + $0x140] sm:$0xff]
    %v1932 = vld [vmem:[#allocation2 + $0x148] sm:$0xff]
    %v1933 = vld [vmem:[#allocation2 + $0x150] sm:$0xff]
    %v1934 = vld [vmem:[#allocation2 + $0x158] sm:$0xff]
    %v1935 = vld [vmem:[#allocation2 + $0x160] sm:$0xff]
    %v1936 = vld [vmem:[#allocation2 + $0x168] sm:$0xff]
    %v1937 = vld [vmem:[#allocation2 + $0x170] sm:$0xff]
    %v1938 = vld [vmem:[#allocation2 + $0x178] sm:$0xff]
    %v1939 = vld [vmem:[#allocation2 + $0x180] sm:$0xff]
    %v1940 = vld [vmem:[#allocation2 + $0x188] sm:$0xff]
    %v1941 = vld [vmem:[#allocation2 + $0x190] sm:$0xff]
    %v1942 = vld [vmem:[#allocation2 + $0x198] sm:$0xff]
    %v1943 = vld [vmem:[#allocation2 + $0x1a0] sm:$0xff]
    %v1944 = vld [vmem:[#allocation2 + $0x1a8] sm:$0xff]
    %v1945 = vld [vmem:[#allocation2 + $0x1b0] sm:$0xff]
    %v1946 = vld [vmem:[#allocation2 + $0x1b8] sm:$0xff]
    %v1947 = vld [vmem:[#allocation2 + $0x1c0] sm:$0xff]
    %v1948 = vld [vmem:[#allocation2 + $0x1c8] sm:$0xff]
    %v1949 = vld [vmem:[#allocation2 + $0x1d0] sm:$0xff]
    %v1950 = vld [vmem:[#allocation2 + $0x1d8] sm:$0xff]
    %v1951 = vld [vmem:[#allocation2 + $0x1e0] sm:$0xff]
    %v1952 = vld [vmem:[#allocation2 + $0x1e8] sm:$0xff]
    %v1953 = vld [vmem:[#allocation2 + $0x1f0] sm:$0xff]
    %v1954 = vld [vmem:[#allocation2 + $0x1f8] sm:$0xff]
    %v1955 = vld [vmem:[#allocation16 + $0x10] sm:$0x1]
    %v1956 = vpack.c.bf16 %v953, %v945
    %v1957 = vpack.c.bf16 %v954, %v946
    %v1958 = vpack.c.bf16 %v955, %v947
    %v1959 = vpack.c.bf16 %v956, %v948
    %v1960 = vpack.c.bf16 %v957, %v949
    %v1961 = vpack.c.bf16 %v958, %v950
    %v1962 = vpack.c.bf16 %v959, %v951
    %v1963 = vpack.c.bf16 %v960, %v952
    %v1964 = vpack.c.bf16 %v969, %v961
    %v1965 = vpack.c.bf16 %v970, %v962
    %v1966 = vpack.c.bf16 %v971, %v963
    %v1967 = vpack.c.bf16 %v972, %v964
    %v1968 = vpack.c.bf16 %v973, %v965
    %v1969 = vpack.c.bf16 %v974, %v966
    %v1970 = vpack.c.bf16 %v975, %v967
    %v1971 = vpack.c.bf16 %v976, %v968
    %v1972 = vpack.c.bf16 %v985, %v977
    %v1973 = vpack.c.bf16 %v986, %v978
    %v1974 = vpack.c.bf16 %v987, %v979
    %v1975 = vpack.c.bf16 %v988, %v980
    %v1976 = vpack.c.bf16 %v989, %v981
    %v1977 = vpack.c.bf16 %v990, %v982
    %v1978 = vpack.c.bf16 %v991, %v983
    %v1979 = vpack.c.bf16 %v992, %v984
    %v1980 = vpack.c.bf16 %v1001, %v993
    %v1981 = vpack.c.bf16 %v1002, %v994
    %v1982 = vpack.c.bf16 %v1003, %v995
    %v1983 = vpack.c.bf16 %v1004, %v996
    %v1984 = vpack.c.bf16 %v1005, %v997
    %v1985 = vpack.c.bf16 %v1006, %v998
    %v1986 = vpack.c.bf16 %v1007, %v999
    %v1987 = vpack.c.bf16 %v1008, %v1000
    %v1989 = vlaneseq
    %v1990 = vshrl.u32 %v1989, 7
    %v1991 = vsub.s32 0, %v1990
    %v1992 = vrot.slane %v1955, %v1991
    %1994 = vmatprep.subr.bf16.mxu0 0
    %1995 = vmatpush1.bf16.msra.mxu0 %v1891
    %1996 = vmatprep.subr.bf16.mxu0 0
    %1997 = vmatpush1.bf16.msra.mxu0 %v1892
    %1998 = vmatprep.subr.bf16.mxu0 0
    %1999 = vmatpush1.bf16.msra.mxu0 %v1893
    %2000 = vmatprep.subr.bf16.mxu0 0
    %2001 = vmatpush1.bf16.msra.mxu0 %v1894
    %2002 = vmatprep.subr.bf16.mxu0 0
    %2003 = vmatpush1.bf16.msra.mxu0 %v1895
    %2004 = vmatprep.subr.bf16.mxu0 0
    %2005 = vmatpush1.bf16.msra.mxu0 %v1896
    %2006 = vmatprep.subr.bf16.mxu0 0
    %2007 = vmatpush1.bf16.msra.mxu0 %v1897
    %2008 = vmatprep.subr.bf16.mxu0 0
    %2009 = vmatpush1.bf16.msra.mxu0 %v1898
    %2010 = vmatprep.subr.bf16.mxu0 0
    %2011 = vmatpush1.bf16.msra.mxu0 %v1899
    %2012 = vmatprep.subr.bf16.mxu0 0
    %2013 = vmatpush1.bf16.msra.mxu0 %v1900
    %2014 = vmatprep.subr.bf16.mxu0 0
    %2015 = vmatpush1.bf16.msra.mxu0 %v1901
    %2016 = vmatprep.subr.bf16.mxu0 0
    %2017 = vmatpush1.bf16.msra.mxu0 %v1902
    %2018 = vmatprep.subr.bf16.mxu0 0
    %2019 = vmatpush1.bf16.msra.mxu0 %v1903
    %2020 = vmatprep.subr.bf16.mxu0 0
    %2021 = vmatpush1.bf16.msra.mxu0 %v1904
    %2022 = vmatprep.subr.bf16.mxu0 0
    %2023 = vmatpush1.bf16.msra.mxu0 %v1905
    %2024 = vmatprep.subr.bf16.mxu0 0
    %2025 = vmatpush1.bf16.msra.mxu0 %v1906
    %2026 = vmatprep.mubr.bf16.mxu0 %v1957
    %2027 = vmatmul.mubr.bf16.gmra.mrb[0].mxu0 %v1956
    %v2028 = vpop.f32.mrb[0].mxu0
    %v2029 = vadd.f32 %v1992, %v2028
    %v2030 = vpop.f32.mrb[0].mxu0
    %v2031 = vpop.f32.mrb[0].mxu0
    %v2032 = vadd.f32 %v1992, %v2031
    %v2033 = vpop.f32.mrb[0].mxu0
    %2034 = vmatprep.mubr.bf16.mxu0 %v1965
    %2035 = vmatmul.mubr.bf16.gmra.mrb[0].mxu0 %v1964
    %v2036 = vpop.f32.mrb[0].mxu0
    %v2037 = vadd.f32 %v1992, %v2036
    %v2038 = vpop.f32.mrb[0].mxu0
    %v2039 = vpop.f32.mrb[0].mxu0
    %v2040 = vadd.f32 %v1992, %v2039
    %v2041 = vpop.f32.mrb[0].mxu0
    %2042 = vmatprep.mubr.bf16.mxu0 %v1973
    %2043 = vmatmul.mubr.bf16.gmra.mrb[0].mxu0 %v1972
    %v2044 = vpop.f32.mrb[0].mxu0
    %v2045 = vadd.f32 %v1992, %v2044
    %v2046 = vpop.f32.mrb[0].mxu0
    %v2047 = vpop.f32.mrb[0].mxu0
    %v2048 = vadd.f32 %v1992, %v2047
    %v2049 = vpop.f32.mrb[0].mxu0
    %2050 = vmatprep.mubr.bf16.mxu0 %v1981
    %2051 = vmatmul.mubr.bf16.gmra.mrb[0].mxu0 %v1980
    %v2052 = vpop.f32.mrb[0].mxu0
    %v2053 = vadd.f32 %v1992, %v2052
    %v2054 = vpop.f32.mrb[0].mxu0
    %v2055 = vpop.f32.mrb[0].mxu0
    %v2056 = vadd.f32 %v1992, %v2055
    %v2057 = vpop.f32.mrb[0].mxu0
    %2058 = vdwg.mxu0
    %2059 = vmatprep.subr.bf16.mxu0 0
    %2060 = vmatpush1.bf16.msra.mxu0 %v1907
    %2061 = vmatprep.subr.bf16.mxu0 0
    %2062 = vmatpush1.bf16.msra.mxu0 %v1908
    %2063 = vmatprep.subr.bf16.mxu0 0
    %2064 = vmatpush1.bf16.msra.mxu0 %v1909
    %2065 = vmatprep.subr.bf16.mxu0 0
    %2066 = vmatpush1.bf16.msra.mxu0 %v1910
    %2067 = vmatprep.subr.bf16.mxu0 0
    %2068 = vmatpush1.bf16.msra.mxu0 %v1911
    %2069 = vmatprep.subr.bf16.mxu0 0
    %2070 = vmatpush1.bf16.msra.mxu0 %v1912
    %2071 = vmatprep.subr.bf16.mxu0 0
    %2072 = vmatpush1.bf16.msra.mxu0 %v1913
    %2073 = vmatprep.subr.bf16.mxu0 0
    %2074 = vmatpush1.bf16.msra.mxu0 %v1914
    %2075 = vmatprep.subr.bf16.mxu0 0
    %2076 = vmatpush1.bf16.msra.mxu0 %v1915
    %2077 = vmatprep.subr.bf16.mxu0 0
    %2078 = vmatpush1.bf16.msra.mxu0 %v1916
    %2079 = vmatprep.subr.bf16.mxu0 0
    %2080 = vmatpush1.bf16.msra.mxu0 %v1917
    %2081 = vmatprep.subr.bf16.mxu0 0
    %2082 = vmatpush1.bf16.msra.mxu0 %v1918
    %2083 = vmatprep.subr.bf16.mxu0 0
    %2084 = vmatpush1.bf16.msra.mxu0 %v1919
    %2085 = vmatprep.subr.bf16.mxu0 0
    %2086 = vmatpush1.bf16.msra.mxu0 %v1920
    %2087 = vmatprep.subr.bf16.mxu0 0
    %2088 = vmatpush1.bf16.msra.mxu0 %v1921
    %2089 = vmatprep.subr.bf16.mxu0 0
    %2090 = vmatpush1.bf16.msra.mxu0 %v1922
    %2091 = vmatprep.mubr.bf16.mxu0 %v1959
    %2092 = vmatmul.mubr.bf16.gmra.mrb[0].mxu0 %v1958
    %v2093 = vpop.f32.mrb[0].mxu0
    %v2094 = vadd.f32 %v2029, %v2093
    %v2095 = vpop.f32.mrb[0].mxu0
    %v2096 = vpop.f32.mrb[0].mxu0
    %v2097 = vadd.f32 %v2032, %v2096
    %v2098 = vpop.f32.mrb[0].mxu0
    %2099 = vmatprep.mubr.bf16.mxu0 %v1967
    %2100 = vmatmul.mubr.bf16.gmra.mrb[0].mxu0 %v1966
    %v2101 = vpop.f32.mrb[0].mxu0
    %v2102 = vadd.f32 %v2037, %v2101
    %v2103 = vpop.f32.mrb[0].mxu0
    %v2104 = vpop.f32.mrb[0].mxu0
    %v2105 = vadd.f32 %v2040, %v2104
    %v2106 = vpop.f32.mrb[0].mxu0
    %2107 = vmatprep.mubr.bf16.mxu0 %v1975
    %2108 = vmatmul.mubr.bf16.gmra.mrb[0].mxu0 %v1974
    %v2109 = vpop.f32.mrb[0].mxu0
    %v2110 = vadd.f32 %v2045, %v2109
    %v2111 = vpop.f32.mrb[0].mxu0
    %v2112 = vpop.f32.mrb[0].mxu0
    %v2113 = vadd.f32 %v2048, %v2112
    %v2114 = vpop.f32.mrb[0].mxu0
    %2115 = vmatprep.mubr.bf16.mxu0 %v1983
    %2116 = vmatmul.mubr.bf16.gmra.mrb[0].mxu0 %v1982
    %v2117 = vpop.f32.mrb[0].mxu0
    %v2118 = vadd.f32 %v2053, %v2117
    %v2119 = vpop.f32.mrb[0].mxu0
    %v2120 = vpop.f32.mrb[0].mxu0
    %v2121 = vadd.f32 %v2056, %v2120
    %v2122 = vpop.f32.mrb[0].mxu0
    %2123 = vdwg.mxu0
    %2124 = vmatprep.subr.bf16.mxu0 0
    %2125 = vmatpush1.bf16.msra.mxu0 %v1923
    %2126 = vmatprep.subr.bf16.mxu0 0
    %2127 = vmatpush1.bf16.msra.mxu0 %v1924
    %2128 = vmatprep.subr.bf16.mxu0 0
    %2129 = vmatpush1.bf16.msra.mxu0 %v1925
    %2130 = vmatprep.subr.bf16.mxu0 0
    %2131 = vmatpush1.bf16.msra.mxu0 %v1926
    %2132 = vmatprep.subr.bf16.mxu0 0
    %2133 = vmatpush1.bf16.msra.mxu0 %v1927
    %2134 = vmatprep.subr.bf16.mxu0 0
    %2135 = vmatpush1.bf16.msra.mxu0 %v1928
    %2136 = vmatprep.subr.bf16.mxu0 0
    %2137 = vmatpush1.bf16.msra.mxu0 %v1929
    %2138 = vmatprep.subr.bf16.mxu0 0
    %2139 = vmatpush1.bf16.msra.mxu0 %v1930
    %2140 = vmatprep.subr.bf16.mxu0 0
    %2141 = vmatpush1.bf16.msra.mxu0 %v1931
    %2142 = vmatprep.subr.bf16.mxu0 0
    %2143 = vmatpush1.bf16.msra.mxu0 %v1932
    %2144 = vmatprep.subr.bf16.mxu0 0
    %2145 = vmatpush1.bf16.msra.mxu0 %v1933
    %2146 = vmatprep.subr.bf16.mxu0 0
    %2147 = vmatpush1.bf16.msra.mxu0 %v1934
    %2148 = vmatprep.subr.bf16.mxu0 0
    %2149 = vmatpush1.bf16.msra.mxu0 %v1935
    %2150 = vmatprep.subr.bf16.mxu0 0
    %2151 = vmatpush1.bf16.msra.mxu0 %v1936
    %2152 = vmatprep.subr.bf16.mxu0 0
    %2153 = vmatpush1.bf16.msra.mxu0 %v1937
    %2154 = vmatprep.subr.bf16.mxu0 0
    %2155 = vmatpush1.bf16.msra.mxu0 %v1938
    %2156 = vmatprep.mubr.bf16.mxu0 %v1961
    %2157 = vmatmul.mubr.bf16.gmra.mrb[0].mxu0 %v1960
    %v2158 = vpop.f32.mrb[0].mxu0
    %v2159 = vadd.f32 %v2094, %v2158
    %v2160 = vpop.f32.mrb[0].mxu0
    %v2161 = vpop.f32.mrb[0].mxu0
    %v2162 = vadd.f32 %v2097, %v2161
    %v2163 = vpop.f32.mrb[0].mxu0
    %2164 = vmatprep.mubr.bf16.mxu0 %v1969
    %2165 = vmatmul.mubr.bf16.gmra.mrb[0].mxu0 %v1968
    %v2166 = vpop.f32.mrb[0].mxu0
    %v2167 = vadd.f32 %v2102, %v2166
    %v2168 = vpop.f32.mrb[0].mxu0
    %v2169 = vpop.f32.mrb[0].mxu0
    %v2170 = vadd.f32 %v2105, %v2169
    %v2171 = vpop.f32.mrb[0].mxu0
    %2172 = vmatprep.mubr.bf16.mxu0 %v1977
    %2173 = vmatmul.mubr.bf16.gmra.mrb[0].mxu0 %v1976
    %v2174 = vpop.f32.mrb[0].mxu0
    %v2175 = vadd.f32 %v2110, %v2174
    %v2176 = vpop.f32.mrb[0].mxu0
    %v2177 = vpop.f32.mrb[0].mxu0
    %v2178 = vadd.f32 %v2113, %v2177
    %v2179 = vpop.f32.mrb[0].mxu0
    %2180 = vmatprep.mubr.bf16.mxu0 %v1985
    %2181 = vmatmul.mubr.bf16.gmra.mrb[0].mxu0 %v1984
    %v2182 = vpop.f32.mrb[0].mxu0
    %v2183 = vadd.f32 %v2118, %v2182
    %v2184 = vpop.f32.mrb[0].mxu0
    %v2185 = vpop.f32.mrb[0].mxu0
    %v2186 = vadd.f32 %v2121, %v2185
    %v2187 = vpop.f32.mrb[0].mxu0
    %2188 = vdwg.mxu0
    %2189 = vmatprep.subr.bf16.mxu0 0
    %2190 = vmatpush1.bf16.msra.mxu0 %v1939
    %2191 = vmatprep.subr.bf16.mxu0 0
    %2192 = vmatpush1.bf16.msra.mxu0 %v1940
    %2193 = vmatprep.subr.bf16.mxu0 0
    %2194 = vmatpush1.bf16.msra.mxu0 %v1941
    %2195 = vmatprep.subr.bf16.mxu0 0
    %2196 = vmatpush1.bf16.msra.mxu0 %v1942
    %2197 = vmatprep.subr.bf16.mxu0 0
    %2198 = vmatpush1.bf16.msra.mxu0 %v1943
    %2199 = vmatprep.subr.bf16.mxu0 0
    %2200 = vmatpush1.bf16.msra.mxu0 %v1944
    %2201 = vmatprep.subr.bf16.mxu0 0
    %2202 = vmatpush1.bf16.msra.mxu0 %v1945
    %2203 = vmatprep.subr.bf16.mxu0 0
    %2204 = vmatpush1.bf16.msra.mxu0 %v1946
    %2205 = vmatprep.subr.bf16.mxu0 0
    %2206 = vmatpush1.bf16.msra.mxu0 %v1947
    %2207 = vmatprep.subr.bf16.mxu0 0
    %2208 = vmatpush1.bf16.msra.mxu0 %v1948
    %2209 = vmatprep.subr.bf16.mxu0 0
    %2210 = vmatpush1.bf16.msra.mxu0 %v1949
    %2211 = vmatprep.subr.bf16.mxu0 0
    %2212 = vmatpush1.bf16.msra.mxu0 %v1950
    %2213 = vmatprep.subr.bf16.mxu0 0
    %2214 = vmatpush1.bf16.msra.mxu0 %v1951
    %2215 = vmatprep.subr.bf16.mxu0 0
    %2216 = vmatpush1.bf16.msra.mxu0 %v1952
    %2217 = vmatprep.subr.bf16.mxu0 0
    %2218 = vmatpush1.bf16.msra.mxu0 %v1953
    %2219 = vmatprep.subr.bf16.mxu0 0
    %2220 = vmatpush1.bf16.msra.mxu0 %v1954
    %2221 = vmatprep.mubr.bf16.mxu0 %v1963
    %2222 = vmatmul.mubr.bf16.gmra.mrb[0].mxu0 %v1962
    %v2223 = vpop.f32.mrb[0].mxu0
    %v2224 = vadd.f32 %v2159, %v2223
    %v2225 = vpop.f32.mrb[0].mxu0
    %v2226 = vpop.f32.mrb[0].mxu0
    %v2227 = vadd.f32 %v2162, %v2226
    %v2228 = vpop.f32.mrb[0].mxu0
    %2229 = vmatprep.mubr.bf16.mxu0 %v1971
    %2230 = vmatmul.mubr.bf16.gmra.mrb[0].mxu0 %v1970
    %v2231 = vpop.f32.mrb[0].mxu0
    %v2232 = vadd.f32 %v2167, %v2231
    %v2233 = vpop.f32.mrb[0].mxu0
    %v2234 = vpop.f32.mrb[0].mxu0
    %v2235 = vadd.f32 %v2170, %v2234
    %v2236 = vpop.f32.mrb[0].mxu0
    %2237 = vmatprep.mubr.bf16.mxu0 %v1979
    %2238 = vmatmul.mubr.bf16.gmra.mrb[0].mxu0 %v1978
    %v2239 = vpop.f32.mrb[0].mxu0
    %v2240 = vadd.f32 %v2175, %v2239
    %v2241 = vpop.f32.mrb[0].mxu0
    %v2242 = vpop.f32.mrb[0].mxu0
    %v2243 = vadd.f32 %v2178, %v2242
    %v2244 = vpop.f32.mrb[0].mxu0
    %2245 = vmatprep.mubr.bf16.mxu0 %v1987
    %2246 = vmatmul.mubr.bf16.gmra.mrb[0].mxu0 %v1986
    %v2247 = vpop.f32.mrb[0].mxu0
    %v2248 = vadd.f32 %v2183, %v2247
    %v2249 = vpop.f32.mrb[0].mxu0
    %v2250 = vpop.f32.mrb[0].mxu0
    %v2251 = vadd.f32 %v2186, %v2250
    %v2252 = vpop.f32.mrb[0].mxu0
    %2253 = vdwg.mxu0
    %v2254 = vmax.f32 %v2224, 0.0
    %v2255 = vmax.f32 %v2227, 0.0
    %v2256 = vmax.f32 %v2232, 0.0
    %v2257 = vmax.f32 %v2235, 0.0
    %v2258 = vmax.f32 %v2240, 0.0
    %v2259 = vmax.f32 %v2243, 0.0
    %v2260 = vmax.f32 %v2248, 0.0
    %v2261 = vmax.f32 %v2251, 0.0
    %v2262 = vld [vmem:[#allocation2 + $0x200] sm:$0xff]
    %v2263 = vld [vmem:[#allocation2 + $0x208] sm:$0xff]
    %v2264 = vld [vmem:[#allocation2 + $0x210] sm:$0xff]
    %v2265 = vld [vmem:[#allocation2 + $0x218] sm:$0xff]
    %v2266 = vld [vmem:[#allocation2 + $0x220] sm:$0xff]
    %v2267 = vld [vmem:[#allocation2 + $0x228] sm:$0xff]
    %v2268 = vld [vmem:[#allocation2 + $0x230] sm:$0xff]
    %v2269 = vld [vmem:[#allocation2 + $0x238] sm:$0xff]
    %v2270 = vld [vmem:[#allocation2 + $0x240] sm:$0xff]
    %v2271 = vld [vmem:[#allocation2 + $0x248] sm:$0xff]
    %v2272 = vld [vmem:[#allocation2 + $0x250] sm:$0xff]
    %v2273 = vld [vmem:[#allocation2 + $0x258] sm:$0xff]
    %v2274 = vld [vmem:[#allocation2 + $0x260] sm:$0xff]
    %v2275 = vld [vmem:[#allocation2 + $0x268] sm:$0xff]
    %v2276 = vld [vmem:[#allocation2 + $0x270] sm:$0xff]
    %v2277 = vld [vmem:[#allocation2 + $0x278] sm:$0xff]
    %v2278 = vld [vmem:[#allocation2 + $0x280] sm:$0xff]
    %v2279 = vld [vmem:[#allocation2 + $0x288] sm:$0xff]
    %v2280 = vld [vmem:[#allocation2 + $0x290] sm:$0xff]
    %v2281 = vld [vmem:[#allocation2 + $0x298] sm:$0xff]
    %v2282 = vld [vmem:[#allocation2 + $0x2a0] sm:$0xff]
    %v2283 = vld [vmem:[#allocation2 + $0x2a8] sm:$0xff]
    %v2284 = vld [vmem:[#allocation2 + $0x2b0] sm:$0xff]
    %v2285 = vld [vmem:[#allocation2 + $0x2b8] sm:$0xff]
    %v2286 = vld [vmem:[#allocation2 + $0x2c0] sm:$0xff]
    %v2287 = vld [vmem:[#allocation2 + $0x2c8] sm:$0xff]
    %v2288 = vld [vmem:[#allocation2 + $0x2d0] sm:$0xff]
    %v2289 = vld [vmem:[#allocation2 + $0x2d8] sm:$0xff]
    %v2290 = vld [vmem:[#allocation2 + $0x2e0] sm:$0xff]
    %v2291 = vld [vmem:[#allocation2 + $0x2e8] sm:$0xff]
    %v2292 = vld [vmem:[#allocation2 + $0x2f0] sm:$0xff]
    %v2293 = vld [vmem:[#allocation2 + $0x2f8] sm:$0xff]
    %v2294 = vld [vmem:[#allocation2 + $0x300] sm:$0xff]
    %v2295 = vld [vmem:[#allocation2 + $0x308] sm:$0xff]
    %v2296 = vld [vmem:[#allocation2 + $0x310] sm:$0xff]
    %v2297 = vld [vmem:[#allocation2 + $0x318] sm:$0xff]
    %v2298 = vld [vmem:[#allocation2 + $0x320] sm:$0xff]
    %v2299 = vld [vmem:[#allocation2 + $0x328] sm:$0xff]
    %v2300 = vld [vmem:[#allocation2 + $0x330] sm:$0xff]
    %v2301 = vld [vmem:[#allocation2 + $0x338] sm:$0xff]
    %v2302 = vld [vmem:[#allocation2 + $0x340] sm:$0xff]
    %v2303 = vld [vmem:[#allocation2 + $0x348] sm:$0xff]
    %v2304 = vld [vmem:[#allocation2 + $0x350] sm:$0xff]
    %v2305 = vld [vmem:[#allocation2 + $0x358] sm:$0xff]
    %v2306 = vld [vmem:[#allocation2 + $0x360] sm:$0xff]
    %v2307 = vld [vmem:[#allocation2 + $0x368] sm:$0xff]
    %v2308 = vld [vmem:[#allocation2 + $0x370] sm:$0xff]
    %v2309 = vld [vmem:[#allocation2 + $0x378] sm:$0xff]
    %v2310 = vld [vmem:[#allocation2 + $0x380] sm:$0xff]
    %v2311 = vld [vmem:[#allocation2 + $0x388] sm:$0xff]
    %v2312 = vld [vmem:[#allocation2 + $0x390] sm:$0xff]
    %v2313 = vld [vmem:[#allocation2 + $0x398] sm:$0xff]
    %v2314 = vld [vmem:[#allocation2 + $0x3a0] sm:$0xff]
    %v2315 = vld [vmem:[#allocation2 + $0x3a8] sm:$0xff]
    %v2316 = vld [vmem:[#allocation2 + $0x3b0] sm:$0xff]
    %v2317 = vld [vmem:[#allocation2 + $0x3b8] sm:$0xff]
    %v2318 = vld [vmem:[#allocation2 + $0x3c0] sm:$0xff]
    %v2319 = vld [vmem:[#allocation2 + $0x3c8] sm:$0xff]
    %v2320 = vld [vmem:[#allocation2 + $0x3d0] sm:$0xff]
    %v2321 = vld [vmem:[#allocation2 + $0x3d8] sm:$0xff]
    %v2322 = vld [vmem:[#allocation2 + $0x3e0] sm:$0xff]
    %v2323 = vld [vmem:[#allocation2 + $0x3e8] sm:$0xff]
    %v2324 = vld [vmem:[#allocation2 + $0x3f0] sm:$0xff]
    %v2325 = vld [vmem:[#allocation2 + $0x3f8] sm:$0xff]
    %v2326 = vld [vmem:[#allocation16 + $0x11] sm:$0x1]
    %v2327 = vpack.c.bf16 %v1739, %v1731
    %v2328 = vpack.c.bf16 %v1740, %v1732
    %v2329 = vpack.c.bf16 %v1741, %v1733
    %v2330 = vpack.c.bf16 %v1742, %v1734
    %v2331 = vpack.c.bf16 %v1743, %v1735
    %v2332 = vpack.c.bf16 %v1744, %v1736
    %v2333 = vpack.c.bf16 %v1745, %v1737
    %v2334 = vpack.c.bf16 %v1746, %v1738
    %v2335 = vpack.c.bf16 %v1755, %v1747
    %v2336 = vpack.c.bf16 %v1756, %v1748
    %v2337 = vpack.c.bf16 %v1757, %v1749
    %v2338 = vpack.c.bf16 %v1758, %v1750
    %v2339 = vpack.c.bf16 %v1759, %v1751
    %v2340 = vpack.c.bf16 %v1760, %v1752
    %v2341 = vpack.c.bf16 %v1761, %v1753
    %v2342 = vpack.c.bf16 %v1762, %v1754
    %v2343 = vpack.c.bf16 %v1771, %v1763
    %v2344 = vpack.c.bf16 %v1772, %v1764
    %v2345 = vpack.c.bf16 %v1773, %v1765
    %v2346 = vpack.c.bf16 %v1774, %v1766
    %v2347 = vpack.c.bf16 %v1775, %v1767
    %v2348 = vpack.c.bf16 %v1776, %v1768
    %v2349 = vpack.c.bf16 %v1777, %v1769
    %v2350 = vpack.c.bf16 %v1778, %v1770
    %v2351 = vpack.c.bf16 %v1787, %v1779
    %v2352 = vpack.c.bf16 %v1788, %v1780
    %v2353 = vpack.c.bf16 %v1789, %v1781
    %v2354 = vpack.c.bf16 %v1790, %v1782
    %v2355 = vpack.c.bf16 %v1791, %v1783
    %v2356 = vpack.c.bf16 %v1792, %v1784
    %v2357 = vpack.c.bf16 %v1793, %v1785
    %v2358 = vpack.c.bf16 %v1794, %v1786
    %v2360 = vlaneseq
    %v2361 = vshrl.u32 %v2360, 7
    %v2362 = vsub.s32 0, %v2361
    %v2363 = vrot.slane %v2326, %v2362
    %2365 = vmatprep.subr.bf16.mxu0 0
    %2366 = vmatpush1.bf16.msra.mxu0 %v2262
    %2367 = vmatprep.subr.bf16.mxu0 0
    %2368 = vmatpush1.bf16.msra.mxu0 %v2263
    %2369 = vmatprep.subr.bf16.mxu0 0
    %2370 = vmatpush1.bf16.msra.mxu0 %v2264
    %2371 = vmatprep.subr.bf16.mxu0 0
    %2372 = vmatpush1.bf16.msra.mxu0 %v2265
    %2373 = vmatprep.subr.bf16.mxu0 0
    %2374 = vmatpush1.bf16.msra.mxu0 %v2266
    %2375 = vmatprep.subr.bf16.mxu0 0
    %2376 = vmatpush1.bf16.msra.mxu0 %v2267
    %2377 = vmatprep.subr.bf16.mxu0 0
    %2378 = vmatpush1.bf16.msra.mxu0 %v2268
    %2379 = vmatprep.subr.bf16.mxu0 0
    %2380 = vmatpush1.bf16.msra.mxu0 %v2269
    %2381 = vmatprep.subr.bf16.mxu0 0
    %2382 = vmatpush1.bf16.msra.mxu0 %v2270
    %2383 = vmatprep.subr.bf16.mxu0 0
    %2384 = vmatpush1.bf16.msra.mxu0 %v2271
    %2385 = vmatprep.subr.bf16.mxu0 0
    %2386 = vmatpush1.bf16.msra.mxu0 %v2272
    %2387 = vmatprep.subr.bf16.mxu0 0
    %2388 = vmatpush1.bf16.msra.mxu0 %v2273
    %2389 = vmatprep.subr.bf16.mxu0 0
    %2390 = vmatpush1.bf16.msra.mxu0 %v2274
    %2391 = vmatprep.subr.bf16.mxu0 0
    %2392 = vmatpush1.bf16.msra.mxu0 %v2275
    %2393 = vmatprep.subr.bf16.mxu0 0
    %2394 = vmatpush1.bf16.msra.mxu0 %v2276
    %2395 = vmatprep.subr.bf16.mxu0 0
    %2396 = vmatpush1.bf16.msra.mxu0 %v2277
    %2397 = vmatprep.mubr.bf16.mxu0 %v2328
    %2398 = vmatmul.mubr.bf16.gmra.mrb[0].mxu0 %v2327
    %v2399 = vpop.f32.mrb[0].mxu0
    %v2400 = vadd.f32 %v2363, %v2399
    %v2401 = vpop.f32.mrb[0].mxu0
    %v2402 = vpop.f32.mrb[0].mxu0
    %v2403 = vadd.f32 %v2363, %v2402
    %v2404 = vpop.f32.mrb[0].mxu0
    %2405 = vmatprep.mubr.bf16.mxu0 %v2336
    %2406 = vmatmul.mubr.bf16.gmra.mrb[0].mxu0 %v2335
    %v2407 = vpop.f32.mrb[0].mxu0
    %v2408 = vadd.f32 %v2363, %v2407
    %v2409 = vpop.f32.mrb[0].mxu0
    %v2410 = vpop.f32.mrb[0].mxu0
    %v2411 = vadd.f32 %v2363, %v2410
    %v2412 = vpop.f32.mrb[0].mxu0
    %2413 = vmatprep.mubr.bf16.mxu0 %v2344
    %2414 = vmatmul.mubr.bf16.gmra.mrb[0].mxu0 %v2343
    %v2415 = vpop.f32.mrb[0].mxu0
    %v2416 = vadd.f32 %v2363, %v2415
    %v2417 = vpop.f32.mrb[0].mxu0
    %v2418 = vpop.f32.mrb[0].mxu0
    %v2419 = vadd.f32 %v2363, %v2418
    %v2420 = vpop.f32.mrb[0].mxu0
    %2421 = vmatprep.mubr.bf16.mxu0 %v2352
    %2422 = vmatmul.mubr.bf16.gmra.mrb[0].mxu0 %v2351
    %v2423 = vpop.f32.mrb[0].mxu0
    %v2424 = vadd.f32 %v2363, %v2423
    %v2425 = vpop.f32.mrb[0].mxu0
    %v2426 = vpop.f32.mrb[0].mxu0
    %v2427 = vadd.f32 %v2363, %v2426
    %v2428 = vpop.f32.mrb[0].mxu0
    %2429 = vdwg.mxu0
    %2430 = vmatprep.subr.bf16.mxu0 0
    %2431 = vmatpush1.bf16.msra.mxu0 %v2278
    %2432 = vmatprep.subr.bf16.mxu0 0
    %2433 = vmatpush1.bf16.msra.mxu0 %v2279
    %2434 = vmatprep.subr.bf16.mxu0 0
    %2435 = vmatpush1.bf16.msra.mxu0 %v2280
    %2436 = vmatprep.subr.bf16.mxu0 0
    %2437 = vmatpush1.bf16.msra.mxu0 %v2281
    %2438 = vmatprep.subr.bf16.mxu0 0
    %2439 = vmatpush1.bf16.msra.mxu0 %v2282
    %2440 = vmatprep.subr.bf16.mxu0 0
    %2441 = vmatpush1.bf16.msra.mxu0 %v2283
    %2442 = vmatprep.subr.bf16.mxu0 0
    %2443 = vmatpush1.bf16.msra.mxu0 %v2284
    %2444 = vmatprep.subr.bf16.mxu0 0
    %2445 = vmatpush1.bf16.msra.mxu0 %v2285
    %2446 = vmatprep.subr.bf16.mxu0 0
    %2447 = vmatpush1.bf16.msra.mxu0 %v2286
    %2448 = vmatprep.subr.bf16.mxu0 0
    %2449 = vmatpush1.bf16.msra.mxu0 %v2287
    %2450 = vmatprep.subr.bf16.mxu0 0
    %2451 = vmatpush1.bf16.msra.mxu0 %v2288
    %2452 = vmatprep.subr.bf16.mxu0 0
    %2453 = vmatpush1.bf16.msra.mxu0 %v2289
    %2454 = vmatprep.subr.bf16.mxu0 0
    %2455 = vmatpush1.bf16.msra.mxu0 %v2290
    %2456 = vmatprep.subr.bf16.mxu0 0
    %2457 = vmatpush1.bf16.msra.mxu0 %v2291
    %2458 = vmatprep.subr.bf16.mxu0 0
    %2459 = vmatpush1.bf16.msra.mxu0 %v2292
    %2460 = vmatprep.subr.bf16.mxu0 0
    %2461 = vmatpush1.bf16.msra.mxu0 %v2293
    %2462 = vmatprep.mubr.bf16.mxu0 %v2330
    %2463 = vmatmul.mubr.bf16.gmra.mrb[0].mxu0 %v2329
    %v2464 = vpop.f32.mrb[0].mxu0
    %v2465 = vadd.f32 %v2400, %v2464
    %v2466 = vpop.f32.mrb[0].mxu0
    %v2467 = vpop.f32.mrb[0].mxu0
    %v2468 = vadd.f32 %v2403, %v2467
    %v2469 = vpop.f32.mrb[0].mxu0
    %2470 = vmatprep.mubr.bf16.mxu0 %v2338
    %2471 = vmatmul.mubr.bf16.gmra.mrb[0].mxu0 %v2337
    %v2472 = vpop.f32.mrb[0].mxu0
    %v2473 = vadd.f32 %v2408, %v2472
    %v2474 = vpop.f32.mrb[0].mxu0
    %v2475 = vpop.f32.mrb[0].mxu0
    %v2476 = vadd.f32 %v2411, %v2475
    %v2477 = vpop.f32.mrb[0].mxu0
    %2478 = vmatprep.mubr.bf16.mxu0 %v2346
    %2479 = vmatmul.mubr.bf16.gmra.mrb[0].mxu0 %v2345
    %v2480 = vpop.f32.mrb[0].mxu0
    %v2481 = vadd.f32 %v2416, %v2480
    %v2482 = vpop.f32.mrb[0].mxu0
    %v2483 = vpop.f32.mrb[0].mxu0
    %v2484 = vadd.f32 %v2419, %v2483
    %v2485 = vpop.f32.mrb[0].mxu0
    %2486 = vmatprep.mubr.bf16.mxu0 %v2354
    %2487 = vmatmul.mubr.bf16.gmra.mrb[0].mxu0 %v2353
    %v2488 = vpop.f32.mrb[0].mxu0
    %v2489 = vadd.f32 %v2424, %v2488
    %v2490 = vpop.f32.mrb[0].mxu0
    %v2491 = vpop.f32.mrb[0].mxu0
    %v2492 = vadd.f32 %v2427, %v2491
    %v2493 = vpop.f32.mrb[0].mxu0
    %2494 = vdwg.mxu0
    %2495 = vmatprep.subr.bf16.mxu0 0
    %2496 = vmatpush1.bf16.msra.mxu0 %v2294
    %2497 = vmatprep.subr.bf16.mxu0 0
    %2498 = vmatpush1.bf16.msra.mxu0 %v2295
    %2499 = vmatprep.subr.bf16.mxu0 0
    %2500 = vmatpush1.bf16.msra.mxu0 %v2296
    %2501 = vmatprep.subr.bf16.mxu0 0
    %2502 = vmatpush1.bf16.msra.mxu0 %v2297
    %2503 = vmatprep.subr.bf16.mxu0 0
    %2504 = vmatpush1.bf16.msra.mxu0 %v2298
    %2505 = vmatprep.subr.bf16.mxu0 0
    %2506 = vmatpush1.bf16.msra.mxu0 %v2299
    %2507 = vmatprep.subr.bf16.mxu0 0
    %2508 = vmatpush1.bf16.msra.mxu0 %v2300
    %2509 = vmatprep.subr.bf16.mxu0 0
    %2510 = vmatpush1.bf16.msra.mxu0 %v2301
    %2511 = vmatprep.subr.bf16.mxu0 0
    %2512 = vmatpush1.bf16.msra.mxu0 %v2302
    %2513 = vmatprep.subr.bf16.mxu0 0
    %2514 = vmatpush1.bf16.msra.mxu0 %v2303
    %2515 = vmatprep.subr.bf16.mxu0 0
    %2516 = vmatpush1.bf16.msra.mxu0 %v2304
    %2517 = vmatprep.subr.bf16.mxu0 0
    %2518 = vmatpush1.bf16.msra.mxu0 %v2305
    %2519 = vmatprep.subr.bf16.mxu0 0
    %2520 = vmatpush1.bf16.msra.mxu0 %v2306
    %2521 = vmatprep.subr.bf16.mxu0 0
    %2522 = vmatpush1.bf16.msra.mxu0 %v2307
    %2523 = vmatprep.subr.bf16.mxu0 0
    %2524 = vmatpush1.bf16.msra.mxu0 %v2308
    %2525 = vmatprep.subr.bf16.mxu0 0
    %2526 = vmatpush1.bf16.msra.mxu0 %v2309
    %2527 = vmatprep.mubr.bf16.mxu0 %v2332
    %2528 = vmatmul.mubr.bf16.gmra.mrb[0].mxu0 %v2331
    %v2529 = vpop.f32.mrb[0].mxu0
    %v2530 = vadd.f32 %v2465, %v2529
    %v2531 = vpop.f32.mrb[0].mxu0
    %v2532 = vpop.f32.mrb[0].mxu0
    %v2533 = vadd.f32 %v2468, %v2532
    %v2534 = vpop.f32.mrb[0].mxu0
    %2535 = vmatprep.mubr.bf16.mxu0 %v2340
    %2536 = vmatmul.mubr.bf16.gmra.mrb[0].mxu0 %v2339
    %v2537 = vpop.f32.mrb[0].mxu0
    %v2538 = vadd.f32 %v2473, %v2537
    %v2539 = vpop.f32.mrb[0].mxu0
    %v2540 = vpop.f32.mrb[0].mxu0
    %v2541 = vadd.f32 %v2476, %v2540
    %v2542 = vpop.f32.mrb[0].mxu0
    %2543 = vmatprep.mubr.bf16.mxu0 %v2348
    %2544 = vmatmul.mubr.bf16.gmra.mrb[0].mxu0 %v2347
    %v2545 = vpop.f32.mrb[0].mxu0
    %v2546 = vadd.f32 %v2481, %v2545
    %v2547 = vpop.f32.mrb[0].mxu0
    %v2548 = vpop.f32.mrb[0].mxu0
    %v2549 = vadd.f32 %v2484, %v2548
    %v2550 = vpop.f32.mrb[0].mxu0
    %2551 = vmatprep.mubr.bf16.mxu0 %v2356
    %2552 = vmatmul.mubr.bf16.gmra.mrb[0].mxu0 %v2355
    %v2553 = vpop.f32.mrb[0].mxu0
    %v2554 = vadd.f32 %v2489, %v2553
    %v2555 = vpop.f32.mrb[0].mxu0
    %v2556 = vpop.f32.mrb[0].mxu0
    %v2557 = vadd.f32 %v2492, %v2556
    %v2558 = vpop.f32.mrb[0].mxu0
    %2559 = vdwg.mxu0
    %2560 = vmatprep.subr.bf16.mxu0 0
    %2561 = vmatpush1.bf16.msra.mxu0 %v2310
    %2562 = vmatprep.subr.bf16.mxu0 0
    %2563 = vmatpush1.bf16.msra.mxu0 %v2311
    %2564 = vmatprep.subr.bf16.mxu0 0
    %2565 = vmatpush1.bf16.msra.mxu0 %v2312
    %2566 = vmatprep.subr.bf16.mxu0 0
    %2567 = vmatpush1.bf16.msra.mxu0 %v2313
    %2568 = vmatprep.subr.bf16.mxu0 0
    %2569 = vmatpush1.bf16.msra.mxu0 %v2314
    %2570 = vmatprep.subr.bf16.mxu0 0
    %2571 = vmatpush1.bf16.msra.mxu0 %v2315
    %2572 = vmatprep.subr.bf16.mxu0 0
    %2573 = vmatpush1.bf16.msra.mxu0 %v2316
    %2574 = vmatprep.subr.bf16.mxu0 0
    %2575 = vmatpush1.bf16.msra.mxu0 %v2317
    %2576 = vmatprep.subr.bf16.mxu0 0
    %2577 = vmatpush1.bf16.msra.mxu0 %v2318
    %2578 = vmatprep.subr.bf16.mxu0 0
    %2579 = vmatpush1.bf16.msra.mxu0 %v2319
    %2580 = vmatprep.subr.bf16.mxu0 0
    %2581 = vmatpush1.bf16.msra.mxu0 %v2320
    %2582 = vmatprep.subr.bf16.mxu0 0
    %2583 = vmatpush1.bf16.msra.mxu0 %v2321
    %2584 = vmatprep.subr.bf16.mxu0 0
    %2585 = vmatpush1.bf16.msra.mxu0 %v2322
    %2586 = vmatprep.subr.bf16.mxu0 0
    %2587 = vmatpush1.bf16.msra.mxu0 %v2323
    %2588 = vmatprep.subr.bf16.mxu0 0
    %2589 = vmatpush1.bf16.msra.mxu0 %v2324
    %2590 = vmatprep.subr.bf16.mxu0 0
    %2591 = vmatpush1.bf16.msra.mxu0 %v2325
    %2592 = vmatprep.mubr.bf16.mxu0 %v2334
    %2593 = vmatmul.mubr.bf16.gmra.mrb[0].mxu0 %v2333
    %v2594 = vpop.f32.mrb[0].mxu0
    %v2595 = vadd.f32 %v2530, %v2594
    %v2596 = vpop.f32.mrb[0].mxu0
    %v2597 = vpop.f32.mrb[0].mxu0
    %v2598 = vadd.f32 %v2533, %v2597
    %v2599 = vpop.f32.mrb[0].mxu0
    %2600 = vmatprep.mubr.bf16.mxu0 %v2342
    %2601 = vmatmul.mubr.bf16.gmra.mrb[0].mxu0 %v2341
    %v2602 = vpop.f32.mrb[0].mxu0
    %v2603 = vadd.f32 %v2538, %v2602
    %v2604 = vpop.f32.mrb[0].mxu0
    %v2605 = vpop.f32.mrb[0].mxu0
    %v2606 = vadd.f32 %v2541, %v2605
    %v2607 = vpop.f32.mrb[0].mxu0
    %2608 = vmatprep.mubr.bf16.mxu0 %v2350
    %2609 = vmatmul.mubr.bf16.gmra.mrb[0].mxu0 %v2349
    %v2610 = vpop.f32.mrb[0].mxu0
    %v2611 = vadd.f32 %v2546, %v2610
    %v2612 = vpop.f32.mrb[0].mxu0
    %v2613 = vpop.f32.mrb[0].mxu0
    %v2614 = vadd.f32 %v2549, %v2613
    %v2615 = vpop.f32.mrb[0].mxu0
    %2616 = vmatprep.mubr.bf16.mxu0 %v2358
    %2617 = vmatmul.mubr.bf16.gmra.mrb[0].mxu0 %v2357
    %v2618 = vpop.f32.mrb[0].mxu0
    %v2619 = vadd.f32 %v2554, %v2618
    %v2620 = vpop.f32.mrb[0].mxu0
    %v2621 = vpop.f32.mrb[0].mxu0
    %v2622 = vadd.f32 %v2557, %v2621
    %v2623 = vpop.f32.mrb[0].mxu0
    %2624 = vdwg.mxu0
    %v2625 = vmax.f32 %v2595, 0.0
    %v2626 = vmax.f32 %v2598, 0.0
    %v2627 = vmax.f32 %v2603, 0.0
    %v2628 = vmax.f32 %v2606, 0.0
    %v2629 = vmax.f32 %v2611, 0.0
    %v2630 = vmax.f32 %v2614, 0.0
    %v2631 = vmax.f32 %v2619, 0.0
    %v2632 = vmax.f32 %v2622, 0.0
    %v2633 = vld [vmem:[#allocation2 + $0x440] sm:$0xff]
    %v2634 = vld [vmem:[#allocation2 + $0x448] sm:$0xff]
    %v2635 = vld [vmem:[#allocation2 + $0x450] sm:$0xff]
    %v2636 = vld [vmem:[#allocation2 + $0x458] sm:$0xff]
    %v2637 = vld [vmem:[#allocation2 + $0x460] sm:$0xff]
    %v2638 = vld [vmem:[#allocation2 + $0x468] sm:$0xff]
    %v2639 = vld [vmem:[#allocation2 + $0x470] sm:$0xff]
    %v2640 = vld [vmem:[#allocation2 + $0x478] sm:$0xff]
    %v2641 = vld [vmem:[#allocation16 + $0x13] sm:$0x1]
    %v2642 = vpack.c.bf16 %v1884, %v1883
    %v2643 = vpack.c.bf16 %v1886, %v1885
    %v2644 = vpack.c.bf16 %v1888, %v1887
    %v2645 = vpack.c.bf16 %v1890, %v1889
    %v2647 = vlaneseq
    %v2648 = vshrl.u32 %v2647, 7
    %v2649 = vsub.s32 0, %v2648
    %v2650 = vrot.slane %v2641, %v2649
    %2652 = vmatprep.subr.bf16.mxu0 0
    %2653 = vmatpush1.bf16.msra.mxu0 %v2633
    %2654 = vmatprep.subr.bf16.mxu0 0
    %2655 = vmatpush1.bf16.msra.mxu0 %v2634
    %2656 = vmatprep.subr.bf16.mxu0 0
    %2657 = vmatpush1.bf16.msra.mxu0 %v2635
    %2658 = vmatprep.subr.bf16.mxu0 0
    %2659 = vmatpush1.bf16.msra.mxu0 %v2636
    %2660 = vmatprep.subr.bf16.mxu0 0
    %2661 = vmatpush1.bf16.msra.mxu0 %v2637
    %2662 = vmatprep.subr.bf16.mxu0 0
    %2663 = vmatpush1.bf16.msra.mxu0 %v2638
    %2664 = vmatprep.subr.bf16.mxu0 0
    %2665 = vmatpush1.bf16.msra.mxu0 %v2639
    %2666 = vmatprep.subr.bf16.mxu0 0
    %2667 = vmatpush1.bf16.msra.mxu0 %v2640
    %2668 = vmatprep.subr.bf16.mxu0 0
    %2669 = vmatpush1.bf16.msra.mxu0 0
    %2670 = vmatprep.subr.bf16.mxu0 0
    %2671 = vmatpush1.bf16.msra.mxu0 0
    %2672 = vmatprep.subr.bf16.mxu0 0
    %2673 = vmatpush1.bf16.msra.mxu0 0
    %2674 = vmatprep.subr.bf16.mxu0 0
    %2675 = vmatpush1.bf16.msra.mxu0 0
    %2676 = vmatprep.subr.bf16.mxu0 0
    %2677 = vmatpush1.bf16.msra.mxu0 0
    %2678 = vmatprep.subr.bf16.mxu0 0
    %2679 = vmatpush1.bf16.msra.mxu0 0
    %2680 = vmatprep.subr.bf16.mxu0 0
    %2681 = vmatpush1.bf16.msra.mxu0 0
    %2682 = vmatprep.subr.bf16.mxu0 0
    %2683 = vmatpush1.bf16.msra.mxu0 0
    %2684 = vmatprep.mubr.bf16.mxu0 0
    %2685 = vmatmul.mubr.bf16.gmra.mrb[0].mxu0 %v2642
    %v2686 = vpop.f32.mrb[0].mxu0
    %v2687 = vadd.f32 %v2650, %v2686
    %v2688 = vpop.f32.mrb[0].mxu0
    %v2689 = vpop.f32.mrb[0].mxu0
    %v2690 = vadd.f32 %v2650, %v2689
    %v2691 = vpop.f32.mrb[0].mxu0
    %2692 = vmatprep.mubr.bf16.mxu0 0
    %2693 = vmatmul.mubr.bf16.gmra.mrb[0].mxu0 %v2643
    %v2694 = vpop.f32.mrb[0].mxu0
    %v2695 = vadd.f32 %v2650, %v2694
    %v2696 = vpop.f32.mrb[0].mxu0
    %v2697 = vpop.f32.mrb[0].mxu0
    %v2698 = vadd.f32 %v2650, %v2697
    %v2699 = vpop.f32.mrb[0].mxu0
    %2700 = vmatprep.mubr.bf16.mxu0 0
    %2701 = vmatmul.mubr.bf16.gmra.mrb[0].mxu0 %v2644
    %v2702 = vpop.f32.mrb[0].mxu0
    %v2703 = vadd.f32 %v2650, %v2702
    %v2704 = vpop.f32.mrb[0].mxu0
    %v2705 = vpop.f32.mrb[0].mxu0
    %v2706 = vadd.f32 %v2650, %v2705
    %v2707 = vpop.f32.mrb[0].mxu0
    %2708 = vmatprep.mubr.bf16.mxu0 0
    %2709 = vmatmul.mubr.bf16.gmra.mrb[0].mxu0 %v2645
    %v2710 = vpop.f32.mrb[0].mxu0
    %v2711 = vadd.f32 %v2650, %v2710
    %v2712 = vpop.f32.mrb[0].mxu0
    %v2713 = vpop.f32.mrb[0].mxu0
    %v2714 = vadd.f32 %v2650, %v2713
    %v2715 = vpop.f32.mrb[0].mxu0
    %2716 = vdwg.mxu0
    %v2717 = vmax.f32 %v2687, 0.0
    %v2718 = vmax.f32 %v2690, 0.0
    %v2719 = vmax.f32 %v2695, 0.0
    %v2720 = vmax.f32 %v2698, 0.0
    %v2721 = vmax.f32 %v2703, 0.0
    %v2722 = vmax.f32 %v2706, 0.0
    %v2723 = vmax.f32 %v2711, 0.0
    %v2724 = vmax.f32 %v2714, 0.0
    %s2725 = smul.u32 4, 64
    %s2726 = smul.u32 %s2725, 4
    %s2727 = sshll.u32 %s2726, 4
    %2728 = dma.done %s104, %s2727
    %v2729 = vld [vmem:[#allocation3] sm:$0xff]
    %v2730 = vld [vmem:[#allocation3 + $0x8] sm:$0xff]
    %v2731 = vld [vmem:[#allocation3 + $0x10] sm:$0xff]
    %v2732 = vld [vmem:[#allocation3 + $0x18] sm:$0xff]
    %v2733 = vld [vmem:[#allocation3 + $0x20] sm:$0xff]
    %v2734 = vld [vmem:[#allocation3 + $0x28] sm:$0xff]
    %v2735 = vld [vmem:[#allocation3 + $0x30] sm:$0xff]
    %v2736 = vld [vmem:[#allocation3 + $0x38] sm:$0xff]
    %v2737 = vld [vmem:[#allocation3 + $0x40] sm:$0xff]
    %v2738 = vld [vmem:[#allocation3 + $0x48] sm:$0xff]
    %v2739 = vld [vmem:[#allocation3 + $0x50] sm:$0xff]
    %v2740 = vld [vmem:[#allocation3 + $0x58] sm:$0xff]
    %v2741 = vld [vmem:[#allocation3 + $0x60] sm:$0xff]
    %v2742 = vld [vmem:[#allocation3 + $0x68] sm:$0xff]
    %v2743 = vld [vmem:[#allocation3 + $0x70] sm:$0xff]
    %v2744 = vld [vmem:[#allocation3 + $0x78] sm:$0xff]
    %v2745 = vld [vmem:[#allocation3 + $0x80] sm:$0xff]
    %v2746 = vld [vmem:[#allocation3 + $0x88] sm:$0xff]
    %v2747 = vld [vmem:[#allocation3 + $0x90] sm:$0xff]
    %v2748 = vld [vmem:[#allocation3 + $0x98] sm:$0xff]
    %v2749 = vld [vmem:[#allocation3 + $0xa0] sm:$0xff]
    %v2750 = vld [vmem:[#allocation3 + $0xa8] sm:$0xff]
    %v2751 = vld [vmem:[#allocation3 + $0xb0] sm:$0xff]
    %v2752 = vld [vmem:[#allocation3 + $0xb8] sm:$0xff]
    %v2753 = vld [vmem:[#allocation3 + $0xc0] sm:$0xff]
    %v2754 = vld [vmem:[#allocation3 + $0xc8] sm:$0xff]
    %v2755 = vld [vmem:[#allocation3 + $0xd0] sm:$0xff]
    %v2756 = vld [vmem:[#allocation3 + $0xd8] sm:$0xff]
    %v2757 = vld [vmem:[#allocation3 + $0xe0] sm:$0xff]
    %v2758 = vld [vmem:[#allocation3 + $0xe8] sm:$0xff]
    %v2759 = vld [vmem:[#allocation3 + $0xf0] sm:$0xff]
    %v2760 = vld [vmem:[#allocation3 + $0xf8] sm:$0xff]
    %v2761 = vld [vmem:[#allocation3 + $0x100] sm:$0xff]
    %v2762 = vld [vmem:[#allocation3 + $0x108] sm:$0xff]
    %v2763 = vld [vmem:[#allocation3 + $0x110] sm:$0xff]
    %v2764 = vld [vmem:[#allocation3 + $0x118] sm:$0xff]
    %v2765 = vld [vmem:[#allocation3 + $0x120] sm:$0xff]
    %v2766 = vld [vmem:[#allocation3 + $0x128] sm:$0xff]
    %v2767 = vld [vmem:[#allocation3 + $0x130] sm:$0xff]
    %v2768 = vld [vmem:[#allocation3 + $0x138] sm:$0xff]
    %v2769 = vld [vmem:[#allocation3 + $0x140] sm:$0xff]
    %v2770 = vld [vmem:[#allocation3 + $0x148] sm:$0xff]
    %v2771 = vld [vmem:[#allocation3 + $0x150] sm:$0xff]
    %v2772 = vld [vmem:[#allocation3 + $0x158] sm:$0xff]
    %v2773 = vld [vmem:[#allocation3 + $0x160] sm:$0xff]
    %v2774 = vld [vmem:[#allocation3 + $0x168] sm:$0xff]
    %v2775 = vld [vmem:[#allocation3 + $0x170] sm:$0xff]
    %v2776 = vld [vmem:[#allocation3 + $0x178] sm:$0xff]
    %v2777 = vld [vmem:[#allocation3 + $0x180] sm:$0xff]
    %v2778 = vld [vmem:[#allocation3 + $0x188] sm:$0xff]
    %v2779 = vld [vmem:[#allocation3 + $0x190] sm:$0xff]
    %v2780 = vld [vmem:[#allocation3 + $0x198] sm:$0xff]
    %v2781 = vld [vmem:[#allocation3 + $0x1a0] sm:$0xff]
    %v2782 = vld [vmem:[#allocation3 + $0x1a8] sm:$0xff]
    %v2783 = vld [vmem:[#allocation3 + $0x1b0] sm:$0xff]
    %v2784 = vld [vmem:[#allocation3 + $0x1b8] sm:$0xff]
    %v2785 = vld [vmem:[#allocation3 + $0x1c0] sm:$0xff]
    %v2786 = vld [vmem:[#allocation3 + $0x1c8] sm:$0xff]
    %v2787 = vld [vmem:[#allocation3 + $0x1d0] sm:$0xff]
    %v2788 = vld [vmem:[#allocation3 + $0x1d8] sm:$0xff]
    %v2789 = vld [vmem:[#allocation3 + $0x1e0] sm:$0xff]
    %v2790 = vld [vmem:[#allocation3 + $0x1e8] sm:$0xff]
    %v2791 = vld [vmem:[#allocation3 + $0x1f0] sm:$0xff]
    %v2792 = vld [vmem:[#allocation3 + $0x1f8] sm:$0xff]
    %v2793 = vld [vmem:[#allocation3 + $0x200] sm:$0xff]
    %v2794 = vld [vmem:[#allocation3 + $0x208] sm:$0xff]
    %v2795 = vld [vmem:[#allocation3 + $0x210] sm:$0xff]
    %v2796 = vld [vmem:[#allocation3 + $0x218] sm:$0xff]
    %v2797 = vld [vmem:[#allocation3 + $0x220] sm:$0xff]
    %v2798 = vld [vmem:[#allocation3 + $0x228] sm:$0xff]
    %v2799 = vld [vmem:[#allocation3 + $0x230] sm:$0xff]
    %v2800 = vld [vmem:[#allocation3 + $0x238] sm:$0xff]
    %v2801 = vld [vmem:[#allocation3 + $0x240] sm:$0xff]
    %v2802 = vld [vmem:[#allocation3 + $0x248] sm:$0xff]
    %v2803 = vld [vmem:[#allocation3 + $0x250] sm:$0xff]
    %v2804 = vld [vmem:[#allocation3 + $0x258] sm:$0xff]
    %v2805 = vld [vmem:[#allocation3 + $0x260] sm:$0xff]
    %v2806 = vld [vmem:[#allocation3 + $0x268] sm:$0xff]
    %v2807 = vld [vmem:[#allocation3 + $0x270] sm:$0xff]
    %v2808 = vld [vmem:[#allocation3 + $0x278] sm:$0xff]
    %v2809 = vld [vmem:[#allocation3 + $0x280] sm:$0xff]
    %v2810 = vld [vmem:[#allocation3 + $0x288] sm:$0xff]
    %v2811 = vld [vmem:[#allocation3 + $0x290] sm:$0xff]
    %v2812 = vld [vmem:[#allocation3 + $0x298] sm:$0xff]
    %v2813 = vld [vmem:[#allocation3 + $0x2a0] sm:$0xff]
    %v2814 = vld [vmem:[#allocation3 + $0x2a8] sm:$0xff]
    %v2815 = vld [vmem:[#allocation3 + $0x2b0] sm:$0xff]
    %v2816 = vld [vmem:[#allocation3 + $0x2b8] sm:$0xff]
    %v2817 = vld [vmem:[#allocation3 + $0x2c0] sm:$0xff]
    %v2818 = vld [vmem:[#allocation3 + $0x2c8] sm:$0xff]
    %v2819 = vld [vmem:[#allocation3 + $0x2d0] sm:$0xff]
    %v2820 = vld [vmem:[#allocation3 + $0x2d8] sm:$0xff]
    %v2821 = vld [vmem:[#allocation3 + $0x2e0] sm:$0xff]
    %v2822 = vld [vmem:[#allocation3 + $0x2e8] sm:$0xff]
    %v2823 = vld [vmem:[#allocation3 + $0x2f0] sm:$0xff]
    %v2824 = vld [vmem:[#allocation3 + $0x2f8] sm:$0xff]
    %v2825 = vpack.c.bf16 %v2255, %v2254
    %v2826 = vpack.c.bf16 %v2718, %v2717
    %v2827 = vpack.c.bf16 %v2626, %v2625
    %v2828 = vpack.c.bf16 %v2257, %v2256
    %v2829 = vpack.c.bf16 %v2720, %v2719
    %v2830 = vpack.c.bf16 %v2628, %v2627
    %v2831 = vpack.c.bf16 %v2259, %v2258
    %v2832 = vpack.c.bf16 %v2722, %v2721
    %v2833 = vpack.c.bf16 %v2630, %v2629
    %v2834 = vpack.c.bf16 %v2261, %v2260
    %v2835 = vpack.c.bf16 %v2724, %v2723
    %v2836 = vpack.c.bf16 %v2632, %v2631
    %v2837 = vld [vmem:[#allocation16 + $0x14] sm:$0xf]
    %v2839 = vlaneseq
    %v2840 = vshrl.u32 %v2839, 7
    %v2841 = vsub.s32 0, %v2840
    %v2842 = vrot.slane %v2837, %v2841
    %v2843 = vlaneseq
    %v2844 = vshrl.u32 %v2843, 7
    %v2845 = vsub.s32 1, %v2844
    %v2846 = vrot.slane %v2837, %v2845
    %v2847 = vlaneseq
    %v2848 = vshrl.u32 %v2847, 7
    %v2849 = vsub.s32 2, %v2848
    %v2850 = vrot.slane %v2837, %v2849
    %v2851 = vlaneseq
    %v2852 = vshrl.u32 %v2851, 7
    %v2853 = vsub.s32 3, %v2852
    %v2854 = vrot.slane %v2837, %v2853
    %2859 = vmatprep.subr.bf16.mxu0 %v2730
    %2860 = vmatpush1.bf16.msra.mxu0 %v2729
    %2861 = vmatprep.subr.bf16.mxu0 %v2734
    %2862 = vmatpush1.bf16.msra.mxu0 %v2733
    %2863 = vmatprep.subr.bf16.mxu0 %v2738
    %2864 = vmatpush1.bf16.msra.mxu0 %v2737
    %2865 = vmatprep.subr.bf16.mxu0 %v2742
    %2866 = vmatpush1.bf16.msra.mxu0 %v2741
    %2867 = vmatprep.subr.bf16.mxu0 %v2746
    %2868 = vmatpush1.bf16.msra.mxu0 %v2745
    %2869 = vmatprep.subr.bf16.mxu0 %v2750
    %2870 = vmatpush1.bf16.msra.mxu0 %v2749
    %2871 = vmatprep.subr.bf16.mxu0 %v2754
    %2872 = vmatpush1.bf16.msra.mxu0 %v2753
    %2873 = vmatprep.subr.bf16.mxu0 %v2758
    %2874 = vmatpush1.bf16.msra.mxu0 %v2757
    %2875 = vmatprep.subr.bf16.mxu0 %v2762
    %2876 = vmatpush1.bf16.msra.mxu0 %v2761
    %2877 = vmatprep.subr.bf16.mxu0 %v2766
    %2878 = vmatpush1.bf16.msra.mxu0 %v2765
    %2879 = vmatprep.subr.bf16.mxu0 %v2770
    %2880 = vmatpush1.bf16.msra.mxu0 %v2769
    %2881 = vmatprep.subr.bf16.mxu0 %v2774
    %2882 = vmatpush1.bf16.msra.mxu0 %v2773
    %2883 = vmatprep.subr.bf16.mxu0 %v2778
    %2884 = vmatpush1.bf16.msra.mxu0 %v2777
    %2885 = vmatprep.subr.bf16.mxu0 %v2782
    %2886 = vmatpush1.bf16.msra.mxu0 %v2781
    %2887 = vmatprep.subr.bf16.mxu0 %v2786
    %2888 = vmatpush1.bf16.msra.mxu0 %v2785
    %2889 = vmatprep.subr.bf16.mxu0 %v2790
    %2890 = vmatpush1.bf16.msra.mxu0 %v2789
    %2891 = vmatprep.mubr.bf16.mxu0 %v2826
    %2892 = vmatmul.mubr.bf16.gmra.mrb[0].mxu0 %v2825
    %v2893 = vpop.f32.mrb[0].mxu0
    %v2894 = vadd.f32 %v2842, %v2893
    %v2895 = vpop.f32.mrb[0].mxu0
    %v2896 = vadd.f32 %v2846, %v2895
    %v2897 = vpop.f32.mrb[0].mxu0
    %v2898 = vadd.f32 %v2842, %v2897
    %v2899 = vpop.f32.mrb[0].mxu0
    %v2900 = vadd.f32 %v2846, %v2899
    %2901 = vmatprep.mubr.bf16.mxu0 %v2829
    %2902 = vmatmul.mubr.bf16.gmra.mrb[0].mxu0 %v2828
    %v2903 = vpop.f32.mrb[0].mxu0
    %v2904 = vadd.f32 %v2842, %v2903
    %v2905 = vpop.f32.mrb[0].mxu0
    %v2906 = vadd.f32 %v2846, %v2905
    %v2907 = vpop.f32.mrb[0].mxu0
    %v2908 = vadd.f32 %v2842, %v2907
    %v2909 = vpop.f32.mrb[0].mxu0
    %v2910 = vadd.f32 %v2846, %v2909
    %2911 = vmatprep.mubr.bf16.mxu0 %v2832
    %2912 = vmatmul.mubr.bf16.gmra.mrb[0].mxu0 %v2831
    %v2913 = vpop.f32.mrb[0].mxu0
    %v2914 = vadd.f32 %v2842, %v2913
    %v2915 = vpop.f32.mrb[0].mxu0
    %v2916 = vadd.f32 %v2846, %v2915
    %v2917 = vpop.f32.mrb[0].mxu0
    %v2918 = vadd.f32 %v2842, %v2917
    %v2919 = vpop.f32.mrb[0].mxu0
    %v2920 = vadd.f32 %v2846, %v2919
    %2921 = vmatprep.mubr.bf16.mxu0 %v2835
    %2922 = vmatmul.mubr.bf16.gmra.mrb[0].mxu0 %v2834
    %v2923 = vpop.f32.mrb[0].mxu0
    %v2924 = vadd.f32 %v2842, %v2923
    %v2925 = vpop.f32.mrb[0].mxu0
    %v2926 = vadd.f32 %v2846, %v2925
    %v2927 = vpop.f32.mrb[0].mxu0
    %v2928 = vadd.f32 %v2842, %v2927
    %v2929 = vpop.f32.mrb[0].mxu0
    %v2930 = vadd.f32 %v2846, %v2929
    %2931 = vdwg.mxu0
    %2932 = vmatprep.subr.bf16.mxu0 %v2794
    %2933 = vmatpush1.bf16.msra.mxu0 %v2793
    %2934 = vmatprep.subr.bf16.mxu0 %v2798
    %2935 = vmatpush1.bf16.msra.mxu0 %v2797
    %2936 = vmatprep.subr.bf16.mxu0 %v2802
    %2937 = vmatpush1.bf16.msra.mxu0 %v2801
    %2938 = vmatprep.subr.bf16.mxu0 %v2806
    %2939 = vmatpush1.bf16.msra.mxu0 %v2805
    %2940 = vmatprep.subr.bf16.mxu0 %v2810
    %2941 = vmatpush1.bf16.msra.mxu0 %v2809
    %2942 = vmatprep.subr.bf16.mxu0 %v2814
    %2943 = vmatpush1.bf16.msra.mxu0 %v2813
    %2944 = vmatprep.subr.bf16.mxu0 %v2818
    %2945 = vmatpush1.bf16.msra.mxu0 %v2817
    %2946 = vmatprep.subr.bf16.mxu0 %v2822
    %2947 = vmatpush1.bf16.msra.mxu0 %v2821
    %2948 = vmatprep.subr.bf16.mxu0 0
    %2949 = vmatpush1.bf16.msra.mxu0 0
    %2950 = vmatprep.subr.bf16.mxu0 0
    %2951 = vmatpush1.bf16.msra.mxu0 0
    %2952 = vmatprep.subr.bf16.mxu0 0
    %2953 = vmatpush1.bf16.msra.mxu0 0
    %2954 = vmatprep.subr.bf16.mxu0 0
    %2955 = vmatpush1.bf16.msra.mxu0 0
    %2956 = vmatprep.subr.bf16.mxu0 0
    %2957 = vmatpush1.bf16.msra.mxu0 0
    %2958 = vmatprep.subr.bf16.mxu0 0
    %2959 = vmatpush1.bf16.msra.mxu0 0
    %2960 = vmatprep.subr.bf16.mxu0 0
    %2961 = vmatpush1.bf16.msra.mxu0 0
    %2962 = vmatprep.subr.bf16.mxu0 0
    %2963 = vmatpush1.bf16.msra.mxu0 0
    %2964 = vmatprep.mubr.bf16.mxu0 0
    %2965 = vmatmul.mubr.bf16.gmra.mrb[0].mxu0 %v2827
    %v2966 = vpop.f32.mrb[0].mxu0
    %v2967 = vadd.f32 %v2894, %v2966
    %v2968 = vpop.f32.mrb[0].mxu0
    %v2969 = vadd.f32 %v2896, %v2968
    %v2970 = vpop.f32.mrb[0].mxu0
    %v2971 = vadd.f32 %v2898, %v2970
    %v2972 = vpop.f32.mrb[0].mxu0
    %v2973 = vadd.f32 %v2900, %v2972
    %2974 = vmatprep.mubr.bf16.mxu0 0
    %2975 = vmatmul.mubr.bf16.gmra.mrb[0].mxu0 %v2830
    %v2976 = vpop.f32.mrb[0].mxu0
    %v2977 = vadd.f32 %v2904, %v2976
    %v2978 = vpop.f32.mrb[0].mxu0
    %v2979 = vadd.f32 %v2906, %v2978
    %v2980 = vpop.f32.mrb[0].mxu0
    %v2981 = vadd.f32 %v2908, %v2980
    %v2982 = vpop.f32.mrb[0].mxu0
    %v2983 = vadd.f32 %v2910, %v2982
    %2984 = vmatprep.mubr.bf16.mxu0 0
    %2985 = vmatmul.mubr.bf16.gmra.mrb[0].mxu0 %v2833
    %v2986 = vpop.f32.mrb[0].mxu0
    %v2987 = vadd.f32 %v2914, %v2986
    %v2988 = vpop.f32.mrb[0].mxu0
    %v2989 = vadd.f32 %v2916, %v2988
    %v2990 = vpop.f32.mrb[0].mxu0
    %v2991 = vadd.f32 %v2918, %v2990
    %v2992 = vpop.f32.mrb[0].mxu0
    %v2993 = vadd.f32 %v2920, %v2992
    %2994 = vmatprep.mubr.bf16.mxu0 0
    %2995 = vmatmul.mubr.bf16.gmra.mrb[0].mxu0 %v2836
    %v2996 = vpop.f32.mrb[0].mxu0
    %v2997 = vadd.f32 %v2924, %v2996
    %v2998 = vpop.f32.mrb[0].mxu0
    %v2999 = vadd.f32 %v2926, %v2998
    %v3000 = vpop.f32.mrb[0].mxu0
    %v3001 = vadd.f32 %v2928, %v3000
    %v3002 = vpop.f32.mrb[0].mxu0
    %v3003 = vadd.f32 %v2930, %v3002
    %3004 = vdwg.mxu0
    %3005 = vmatprep.subr.bf16.mxu0 %v2732
    %3006 = vmatpush1.bf16.msra.mxu0 %v2731
    %3007 = vmatprep.subr.bf16.mxu0 %v2736
    %3008 = vmatpush1.bf16.msra.mxu0 %v2735
    %3009 = vmatprep.subr.bf16.mxu0 %v2740
    %3010 = vmatpush1.bf16.msra.mxu0 %v2739
    %3011 = vmatprep.subr.bf16.mxu0 %v2744
    %3012 = vmatpush1.bf16.msra.mxu0 %v2743
    %3013 = vmatprep.subr.bf16.mxu0 %v2748
    %3014 = vmatpush1.bf16.msra.mxu0 %v2747
    %3015 = vmatprep.subr.bf16.mxu0 %v2752
    %3016 = vmatpush1.bf16.msra.mxu0 %v2751
    %3017 = vmatprep.subr.bf16.mxu0 %v2756
    %3018 = vmatpush1.bf16.msra.mxu0 %v2755
    %3019 = vmatprep.subr.bf16.mxu0 %v2760
    %3020 = vmatpush1.bf16.msra.mxu0 %v2759
    %3021 = vmatprep.subr.bf16.mxu0 %v2764
    %3022 = vmatpush1.bf16.msra.mxu0 %v2763
    %3023 = vmatprep.subr.bf16.mxu0 %v2768
    %3024 = vmatpush1.bf16.msra.mxu0 %v2767
    %3025 = vmatprep.subr.bf16.mxu0 %v2772
    %3026 = vmatpush1.bf16.msra.mxu0 %v2771
    %3027 = vmatprep.subr.bf16.mxu0 %v2776
    %3028 = vmatpush1.bf16.msra.mxu0 %v2775
    %3029 = vmatprep.subr.bf16.mxu0 %v2780
    %3030 = vmatpush1.bf16.msra.mxu0 %v2779
    %3031 = vmatprep.subr.bf16.mxu0 %v2784
    %3032 = vmatpush1.bf16.msra.mxu0 %v2783
    %3033 = vmatprep.subr.bf16.mxu0 %v2788
    %3034 = vmatpush1.bf16.msra.mxu0 %v2787
    %3035 = vmatprep.subr.bf16.mxu0 %v2792
    %3036 = vmatpush1.bf16.msra.mxu0 %v2791
    %3037 = vmatprep.mubr.bf16.mxu0 %v2826
    %3038 = vmatmul.mubr.bf16.gmra.mrb[0].mxu0 %v2825
    %v3039 = vpop.f32.mrb[0].mxu0
    %v3040 = vadd.f32 %v2850, %v3039
    %v3041 = vpop.f32.mrb[0].mxu0
    %v3042 = vadd.f32 %v2854, %v3041
    %v3043 = vpop.f32.mrb[0].mxu0
    %v3044 = vadd.f32 %v2850, %v3043
    %v3045 = vpop.f32.mrb[0].mxu0
    %v3046 = vadd.f32 %v2854, %v3045
    %3047 = vmatprep.mubr.bf16.mxu0 %v2829
    %3048 = vmatmul.mubr.bf16.gmra.mrb[0].mxu0 %v2828
    %v3049 = vpop.f32.mrb[0].mxu0
    %v3050 = vadd.f32 %v2850, %v3049
    %v3051 = vpop.f32.mrb[0].mxu0
    %v3052 = vadd.f32 %v2854, %v3051
    %v3053 = vpop.f32.mrb[0].mxu0
    %v3054 = vadd.f32 %v2850, %v3053
    %v3055 = vpop.f32.mrb[0].mxu0
    %v3056 = vadd.f32 %v2854, %v3055
    %3057 = vmatprep.mubr.bf16.mxu0 %v2832
    %3058 = vmatmul.mubr.bf16.gmra.mrb[0].mxu0 %v2831
    %v3059 = vpop.f32.mrb[0].mxu0
    %v3060 = vadd.f32 %v2850, %v3059
    %v3061 = vpop.f32.mrb[0].mxu0
    %v3062 = vadd.f32 %v2854, %v3061
    %v3063 = vpop.f32.mrb[0].mxu0
    %v3064 = vadd.f32 %v2850, %v3063
    %v3065 = vpop.f32.mrb[0].mxu0
    %v3066 = vadd.f32 %v2854, %v3065
    %3067 = vmatprep.mubr.bf16.mxu0 %v2835
    %3068 = vmatmul.mubr.bf16.gmra.mrb[0].mxu0 %v2834
    %v3069 = vpop.f32.mrb[0].mxu0
    %v3070 = vadd.f32 %v2850, %v3069
    %v3071 = vpop.f32.mrb[0].mxu0
    %v3072 = vadd.f32 %v2854, %v3071
    %v3073 = vpop.f32.mrb[0].mxu0
    %v3074 = vadd.f32 %v2850, %v3073
    %v3075 = vpop.f32.mrb[0].mxu0
    %v3076 = vadd.f32 %v2854, %v3075
    %3077 = vdwg.mxu0
    %3078 = vmatprep.subr.bf16.mxu0 %v2796
    %3079 = vmatpush1.bf16.msra.mxu0 %v2795
    %3080 = vmatprep.subr.bf16.mxu0 %v2800
    %3081 = vmatpush1.bf16.msra.mxu0 %v2799
    %3082 = vmatprep.subr.bf16.mxu0 %v2804
    %3083 = vmatpush1.bf16.msra.mxu0 %v2803
    %3084 = vmatprep.subr.bf16.mxu0 %v2808
    %3085 = vmatpush1.bf16.msra.mxu0 %v2807
    %3086 = vmatprep.subr.bf16.mxu0 %v2812
    %3087 = vmatpush1.bf16.msra.mxu0 %v2811
    %3088 = vmatprep.subr.bf16.mxu0 %v2816
    %3089 = vmatpush1.bf16.msra.mxu0 %v2815
    %3090 = vmatprep.subr.bf16.mxu0 %v2820
    %3091 = vmatpush1.bf16.msra.mxu0 %v2819
    %3092 = vmatprep.subr.bf16.mxu0 %v2824
    %3093 = vmatpush1.bf16.msra.mxu0 %v2823
    %3094 = vmatprep.subr.bf16.mxu0 0
    %3095 = vmatpush1.bf16.msra.mxu0 0
    %3096 = vmatprep.subr.bf16.mxu0 0
    %3097 = vmatpush1.bf16.msra.mxu0 0
    %3098 = vmatprep.subr.bf16.mxu0 0
    %3099 = vmatpush1.bf16.msra.mxu0 0
    %3100 = vmatprep.subr.bf16.mxu0 0
    %3101 = vmatpush1.bf16.msra.mxu0 0
    %3102 = vmatprep.subr.bf16.mxu0 0
    %3103 = vmatpush1.bf16.msra.mxu0 0
    %3104 = vmatprep.subr.bf16.mxu0 0
    %3105 = vmatpush1.bf16.msra.mxu0 0
    %3106 = vmatprep.subr.bf16.mxu0 0
    %3107 = vmatpush1.bf16.msra.mxu0 0
    %3108 = vmatprep.subr.bf16.mxu0 0
    %3109 = vmatpush1.bf16.msra.mxu0 0
    %3110 = vmatprep.mubr.bf16.mxu0 0
    %3111 = vmatmul.mubr.bf16.gmra.mrb[0].mxu0 %v2827
    %v3112 = vpop.f32.mrb[0].mxu0
    %v3113 = vadd.f32 %v3040, %v3112
    %v3114 = vpop.f32.mrb[0].mxu0
    %v3115 = vadd.f32 %v3042, %v3114
    %v3116 = vpop.f32.mrb[0].mxu0
    %v3117 = vadd.f32 %v3044, %v3116
    %v3118 = vpop.f32.mrb[0].mxu0
    %v3119 = vadd.f32 %v3046, %v3118
    %3120 = vmatprep.mubr.bf16.mxu0 0
    %3121 = vmatmul.mubr.bf16.gmra.mrb[0].mxu0 %v2830
    %v3122 = vpop.f32.mrb[0].mxu0
    %v3123 = vadd.f32 %v3050, %v3122
    %v3124 = vpop.f32.mrb[0].mxu0
    %v3125 = vadd.f32 %v3052, %v3124
    %v3126 = vpop.f32.mrb[0].mxu0
    %v3127 = vadd.f32 %v3054, %v3126
    %v3128 = vpop.f32.mrb[0].mxu0
    %v3129 = vadd.f32 %v3056, %v3128
    %3130 = vmatprep.mubr.bf16.mxu0 0
    %3131 = vmatmul.mubr.bf16.gmra.mrb[0].mxu0 %v2833
    %v3132 = vpop.f32.mrb[0].mxu0
    %v3133 = vadd.f32 %v3060, %v3132
    %v3134 = vpop.f32.mrb[0].mxu0
    %v3135 = vadd.f32 %v3062, %v3134
    %v3136 = vpop.f32.mrb[0].mxu0
    %v3137 = vadd.f32 %v3064, %v3136
    %v3138 = vpop.f32.mrb[0].mxu0
    %v3139 = vadd.f32 %v3066, %v3138
    %3140 = vmatprep.mubr.bf16.mxu0 0
    %3141 = vmatmul.mubr.bf16.gmra.mrb[0].mxu0 %v2836
    %v3142 = vpop.f32.mrb[0].mxu0
    %v3143 = vadd.f32 %v3070, %v3142
    %v3144 = vpop.f32.mrb[0].mxu0
    %v3145 = vadd.f32 %v3072, %v3144
    %v3146 = vpop.f32.mrb[0].mxu0
    %v3147 = vadd.f32 %v3074, %v3146
    %v3148 = vpop.f32.mrb[0].mxu0
    %v3149 = vadd.f32 %v3076, %v3148
    %3150 = vdwg.mxu0
    %v3151 = vld [vmem:[#allocation3 + $0x300] sm:$0xff]
    %v3152 = vld [vmem:[#allocation3 + $0x308] sm:$0xff]
    %v3153 = vld [vmem:[#allocation3 + $0x310] sm:$0xff]
    %v3154 = vld [vmem:[#allocation3 + $0x318] sm:$0xff]
    %v3155 = vld [vmem:[#allocation3 + $0x320] sm:$0xff]
    %v3156 = vld [vmem:[#allocation3 + $0x328] sm:$0xff]
    %v3157 = vld [vmem:[#allocation3 + $0x330] sm:$0xff]
    %v3158 = vld [vmem:[#allocation3 + $0x338] sm:$0xff]
    %v3159 = vld [vmem:[#allocation3 + $0x340] sm:$0xff]
    %v3160 = vld [vmem:[#allocation3 + $0x348] sm:$0xff]
    %v3161 = vld [vmem:[#allocation3 + $0x350] sm:$0xff]
    %v3162 = vld [vmem:[#allocation3 + $0x358] sm:$0xff]
    %v3163 = vld [vmem:[#allocation3 + $0x360] sm:$0xff]
    %v3164 = vld [vmem:[#allocation3 + $0x368] sm:$0xff]
    %v3165 = vld [vmem:[#allocation3 + $0x370] sm:$0xff]
    %v3166 = vld [vmem:[#allocation3 + $0x378] sm:$0xff]
    %v3167 = vld [vmem:[#allocation3 + $0x380] sm:$0xff]
    %v3168 = vld [vmem:[#allocation3 + $0x388] sm:$0xff]
    %v3169 = vld [vmem:[#allocation3 + $0x390] sm:$0xff]
    %v3170 = vld [vmem:[#allocation3 + $0x398] sm:$0xff]
    %v3171 = vld [vmem:[#allocation3 + $0x3a0] sm:$0xff]
    %v3172 = vld [vmem:[#allocation3 + $0x3a8] sm:$0xff]
    %v3173 = vld [vmem:[#allocation3 + $0x3b0] sm:$0xff]
    %v3174 = vld [vmem:[#allocation3 + $0x3b8] sm:$0xff]
    %v3175 = vld [vmem:[#allocation3 + $0x3c0] sm:$0xff]
    %v3176 = vld [vmem:[#allocation3 + $0x3c8] sm:$0xff]
    %v3177 = vld [vmem:[#allocation3 + $0x3d0] sm:$0xff]
    %v3178 = vld [vmem:[#allocation3 + $0x3d8] sm:$0xff]
    %v3179 = vld [vmem:[#allocation3 + $0x3e0] sm:$0xff]
    %v3180 = vld [vmem:[#allocation3 + $0x3e8] sm:$0xff]
    %v3181 = vld [vmem:[#allocation3 + $0x3f0] sm:$0xff]
    %v3182 = vld [vmem:[#allocation3 + $0x3f8] sm:$0xff]
    %v3183 = vld [vmem:[#allocation13] sm:$0xff]
    %v3184 = vld [vmem:[#allocation13 + $0x10] sm:$0xff]
    %v3185 = vld [vmem:[#allocation13 + $0x8] sm:$0xff]
    %v3186 = vld [vmem:[#allocation13 + $0x18] sm:$0xff]
    %v3187 = vpack.c.bf16 %v3184, %v3183
    %3188 = vmatprep.subr.bf16.mxu0 %v3152
    %3189 = vmatpush1.bf16.msra.mxu0 %v3151
    %3190 = vmatprep.subr.bf16.mxu0 %v3156
    %3191 = vmatpush1.bf16.msra.mxu0 %v3155
    %3192 = vmatprep.subr.bf16.mxu0 %v3160
    %3193 = vmatpush1.bf16.msra.mxu0 %v3159
    %3194 = vmatprep.subr.bf16.mxu0 %v3164
    %3195 = vmatpush1.bf16.msra.mxu0 %v3163
    %3196 = vmatprep.subr.bf16.mxu0 %v3168
    %3197 = vmatpush1.bf16.msra.mxu0 %v3167
    %3198 = vmatprep.subr.bf16.mxu0 %v3172
    %3199 = vmatpush1.bf16.msra.mxu0 %v3171
    %3200 = vmatprep.subr.bf16.mxu0 %v3176
    %3201 = vmatpush1.bf16.msra.mxu0 %v3175
    %3202 = vmatprep.subr.bf16.mxu0 %v3180
    %3203 = vmatpush1.bf16.msra.mxu0 %v3179
    %3204 = vmatprep.subr.bf16.mxu0 0
    %3205 = vmatpush1.bf16.msra.mxu0 0
    %3206 = vmatprep.subr.bf16.mxu0 0
    %3207 = vmatpush1.bf16.msra.mxu0 0
    %3208 = vmatprep.subr.bf16.mxu0 0
    %3209 = vmatpush1.bf16.msra.mxu0 0
    %3210 = vmatprep.subr.bf16.mxu0 0
    %3211 = vmatpush1.bf16.msra.mxu0 0
    %3212 = vmatprep.subr.bf16.mxu0 0
    %3213 = vmatpush1.bf16.msra.mxu0 0
    %3214 = vmatprep.subr.bf16.mxu0 0
    %3215 = vmatpush1.bf16.msra.mxu0 0
    %3216 = vmatprep.subr.bf16.mxu0 0
    %3217 = vmatpush1.bf16.msra.mxu0 0
    %3218 = vmatprep.subr.bf16.mxu0 0
    %3219 = vmatpush1.bf16.msra.mxu0 0
    %3220 = vmatprep.mubr.bf16.mxu0 0
    %3221 = vmatmul.mubr.bf16.gmra.mrb[0].mxu0 %v3187
    %v3222 = vpop.f32.mrb[0].mxu0
    %v3223 = vadd.f32 0.0, %v3222
    %v3224 = vpop.f32.mrb[0].mxu0
    %v3225 = vadd.f32 0.0, %v3224
    %v3226 = vpop.f32.mrb[0].mxu0
    %v3227 = vadd.f32 0.0, %v3226
    %v3228 = vpop.f32.mrb[0].mxu0
    %v3229 = vadd.f32 0.0, %v3228
    %3230 = vdwg.mxu0
    %3231 = vmatprep.subr.bf16.mxu0 %v3154
    %3232 = vmatpush1.bf16.msra.mxu0 %v3153
    %3233 = vmatprep.subr.bf16.mxu0 %v3158
    %3234 = vmatpush1.bf16.msra.mxu0 %v3157
    %3235 = vmatprep.subr.bf16.mxu0 %v3162
    %3236 = vmatpush1.bf16.msra.mxu0 %v3161
    %3237 = vmatprep.subr.bf16.mxu0 %v3166
    %3238 = vmatpush1.bf16.msra.mxu0 %v3165
    %3239 = vmatprep.subr.bf16.mxu0 %v3170
    %3240 = vmatpush1.bf16.msra.mxu0 %v3169
    %3241 = vmatprep.subr.bf16.mxu0 %v3174
    %3242 = vmatpush1.bf16.msra.mxu0 %v3173
    %3243 = vmatprep.subr.bf16.mxu0 %v3178
    %3244 = vmatpush1.bf16.msra.mxu0 %v3177
    %3245 = vmatprep.subr.bf16.mxu0 %v3182
    %3246 = vmatpush1.bf16.msra.mxu0 %v3181
    %3247 = vmatprep.subr.bf16.mxu0 0
    %3248 = vmatpush1.bf16.msra.mxu0 0
    %3249 = vmatprep.subr.bf16.mxu0 0
    %3250 = vmatpush1.bf16.msra.mxu0 0
    %3251 = vmatprep.subr.bf16.mxu0 0
    %3252 = vmatpush1.bf16.msra.mxu0 0
    %3253 = vmatprep.subr.bf16.mxu0 0
    %3254 = vmatpush1.bf16.msra.mxu0 0
    %3255 = vmatprep.subr.bf16.mxu0 0
    %3256 = vmatpush1.bf16.msra.mxu0 0
    %3257 = vmatprep.subr.bf16.mxu0 0
    %3258 = vmatpush1.bf16.msra.mxu0 0
    %3259 = vmatprep.subr.bf16.mxu0 0
    %3260 = vmatpush1.bf16.msra.mxu0 0
    %3261 = vmatprep.subr.bf16.mxu0 0
    %3262 = vmatpush1.bf16.msra.mxu0 0
    %3263 = vmatprep.mubr.bf16.mxu0 0
    %3264 = vmatmul.mubr.bf16.gmra.mrb[0].mxu0 %v3187
    %v3265 = vpop.f32.mrb[0].mxu0
    %v3266 = vadd.f32 0.0, %v3265
    %v3267 = vpop.f32.mrb[0].mxu0
    %v3268 = vadd.f32 0.0, %v3267
    %v3269 = vpop.f32.mrb[0].mxu0
    %v3270 = vadd.f32 0.0, %v3269
    %v3271 = vpop.f32.mrb[0].mxu0
    %v3272 = vadd.f32 0.0, %v3271
    %3273 = vdwg.mxu0
    %v3274 = vadd.f32 %v2967, %v3223
    %v3275 = vadd.f32 %v2969, %v3225
    %v3276 = vadd.f32 %v3113, %v3266
    %v3277 = vadd.f32 %v3115, %v3268
    %v3278 = vadd.f32 %v2971, %v3227
    %v3279 = vadd.f32 %v2973, %v3229
    %v3280 = vadd.f32 %v3117, %v3270
    %v3281 = vadd.f32 %v3119, %v3272
    %v3282 = vxor.u32 %v3274, 2147483648
    %v3283 = vxor.u32 %v3278, 2147483648
    %v3284 = vmul.f32 %v3282, 1.442695
    %v3285 = vpow.pop %v3284
    %v3286 = vmul.f32 %v3283, 1.442695
    %v3287 = vpow.pop %v3286
    %v3288 = vadd.f32 %v3285, 1.0
    %v3289 = vadd.f32 %v3287, 1.0
    %v3290 = vrcp.pop %v3288
    %v3291 = vmul.f32 1.0, %v3290
    %v3292 = vrcp.pop %v3289
    %v3293 = vmul.f32 1.0, %v3292
    %v3294 = vxor.u32 %v3275, 2147483648
    %v3295 = vxor.u32 %v3279, 2147483648
    %v3296 = vmul.f32 %v3294, 1.442695
    %v3297 = vpow.pop %v3296
    %v3298 = vmul.f32 %v3295, 1.442695
    %v3299 = vpow.pop %v3298
    %v3300 = vadd.f32 %v3297, 1.0
    %v3301 = vadd.f32 %v3299, 1.0
    %v3302 = vrcp.pop %v3300
    %v3303 = vmul.f32 1.0, %v3302
    %v3304 = vrcp.pop %v3301
    %v3305 = vmul.f32 1.0, %v3304
    %v3306 = vtanh.pop %v3276
    %v3307 = vtanh.pop %v3280
    %v3308 = vxor.u32 %v3277, 2147483648
    %v3309 = vxor.u32 %v3281, 2147483648
    %v3310 = vmul.f32 %v3308, 1.442695
    %v3311 = vpow.pop %v3310
    %v3312 = vmul.f32 %v3309, 1.442695
    %v3313 = vpow.pop %v3312
    %v3314 = vadd.f32 %v3311, 1.0
    %v3315 = vadd.f32 %v3313, 1.0
    %v3316 = vrcp.pop %v3314
    %v3317 = vmul.f32 1.0, %v3316
    %v3318 = vrcp.pop %v3315
    %v3319 = vmul.f32 1.0, %v3318
    %v3320 = vmul.f32 %v3303, %v3185
    %v3321 = vmul.f32 %v3305, %v3186
    %v3322 = vmul.f32 %v3291, %v3306
    %v3323 = vmul.f32 %v3293, %v3307
    %v3324 = vadd.f32 %v3320, %v3322
    %v3325 = vadd.f32 %v3321, %v3323
    %v3326 = vtanh.pop %v3324
    %v3327 = vtanh.pop %v3325
    %v3328 = vmul.f32 %v3317, %v3326
    %v3329 = vmul.f32 %v3319, %v3327
    %v3330 = vpack.c.bf16 %v3329, %v3328
    %3331 = vmatprep.subr.bf16.mxu0 %v3152
    %3332 = vmatpush1.bf16.msra.mxu0 %v3151
    %3333 = vmatprep.subr.bf16.mxu0 %v3156
    %3334 = vmatpush1.bf16.msra.mxu0 %v3155
    %3335 = vmatprep.subr.bf16.mxu0 %v3160
    %3336 = vmatpush1.bf16.msra.mxu0 %v3159
    %3337 = vmatprep.subr.bf16.mxu0 %v3164
    %3338 = vmatpush1.bf16.msra.mxu0 %v3163
    %3339 = vmatprep.subr.bf16.mxu0 %v3168
    %3340 = vmatpush1.bf16.msra.mxu0 %v3167
    %3341 = vmatprep.subr.bf16.mxu0 %v3172
    %3342 = vmatpush1.bf16.msra.mxu0 %v3171
    %3343 = vmatprep.subr.bf16.mxu0 %v3176
    %3344 = vmatpush1.bf16.msra.mxu0 %v3175
    %3345 = vmatprep.subr.bf16.mxu0 %v3180
    %3346 = vmatpush1.bf16.msra.mxu0 %v3179
    %3347 = vmatprep.subr.bf16.mxu0 0
    %3348 = vmatpush1.bf16.msra.mxu0 0
    %3349 = vmatprep.subr.bf16.mxu0 0
    %3350 = vmatpush1.bf16.msra.mxu0 0
    %3351 = vmatprep.subr.bf16.mxu0 0
    %3352 = vmatpush1.bf16.msra.mxu0 0
    %3353 = vmatprep.subr.bf16.mxu0 0
    %3354 = vmatpush1.bf16.msra.mxu0 0
    %3355 = vmatprep.subr.bf16.mxu0 0
    %3356 = vmatpush1.bf16.msra.mxu0 0
    %3357 = vmatprep.subr.bf16.mxu0 0
    %3358 = vmatpush1.bf16.msra.mxu0 0
    %3359 = vmatprep.subr.bf16.mxu0 0
    %3360 = vmatpush1.bf16.msra.mxu0 0
    %3361 = vmatprep.subr.bf16.mxu0 0
    %3362 = vmatpush1.bf16.msra.mxu0 0
    %3363 = vmatprep.mubr.bf16.mxu0 0
    %3364 = vmatmul.mubr.bf16.gmra.mrb[0].mxu0 %v3330
    %v3365 = vpop.f32.mrb[0].mxu0
    %v3366 = vadd.f32 0.0, %v3365
    %v3367 = vpop.f32.mrb[0].mxu0
    %v3368 = vadd.f32 0.0, %v3367
    %v3369 = vpop.f32.mrb[0].mxu0
    %v3370 = vadd.f32 0.0, %v3369
    %v3371 = vpop.f32.mrb[0].mxu0
    %v3372 = vadd.f32 0.0, %v3371
    %3373 = vdwg.mxu0
    %3374 = vmatprep.subr.bf16.mxu0 %v3154
    %3375 = vmatpush1.bf16.msra.mxu0 %v3153
    %3376 = vmatprep.subr.bf16.mxu0 %v3158
    %3377 = vmatpush1.bf16.msra.mxu0 %v3157
    %3378 = vmatprep.subr.bf16.mxu0 %v3162
    %3379 = vmatpush1.bf16.msra.mxu0 %v3161
    %3380 = vmatprep.subr.bf16.mxu0 %v3166
    %3381 = vmatpush1.bf16.msra.mxu0 %v3165
    %3382 = vmatprep.subr.bf16.mxu0 %v3170
    %3383 = vmatpush1.bf16.msra.mxu0 %v3169
    %3384 = vmatprep.subr.bf16.mxu0 %v3174
    %3385 = vmatpush1.bf16.msra.mxu0 %v3173
    %3386 = vmatprep.subr.bf16.mxu0 %v3178
    %3387 = vmatpush1.bf16.msra.mxu0 %v3177
    %3388 = vmatprep.subr.bf16.mxu0 %v3182
    %3389 = vmatpush1.bf16.msra.mxu0 %v3181
    %3390 = vmatprep.subr.bf16.mxu0 0
    %3391 = vmatpush1.bf16.msra.mxu0 0
    %3392 = vmatprep.subr.bf16.mxu0 0
    %3393 = vmatpush1.bf16.msra.mxu0 0
    %3394 = vmatprep.subr.bf16.mxu0 0
    %3395 = vmatpush1.bf16.msra.mxu0 0
    %3396 = vmatprep.subr.bf16.mxu0 0
    %3397 = vmatpush1.bf16.msra.mxu0 0
    %3398 = vmatprep.subr.bf16.mxu0 0
    %3399 = vmatpush1.bf16.msra.mxu0 0
    %3400 = vmatprep.subr.bf16.mxu0 0
    %3401 = vmatpush1.bf16.msra.mxu0 0
    %3402 = vmatprep.subr.bf16.mxu0 0
    %3403 = vmatpush1.bf16.msra.mxu0 0
    %3404 = vmatprep.subr.bf16.mxu0 0
    %3405 = vmatpush1.bf16.msra.mxu0 0
    %3406 = vmatprep.mubr.bf16.mxu0 0
    %3407 = vmatmul.mubr.bf16.gmra.mrb[0].mxu0 %v3330
    %v3408 = vpop.f32.mrb[0].mxu0
    %v3409 = vadd.f32 0.0, %v3408
    %v3410 = vpop.f32.mrb[0].mxu0
    %v3411 = vadd.f32 0.0, %v3410
    %v3412 = vpop.f32.mrb[0].mxu0
    %v3413 = vadd.f32 0.0, %v3412
    %v3414 = vpop.f32.mrb[0].mxu0
    %v3415 = vadd.f32 0.0, %v3414
    %3416 = vdwg.mxu0
    %v3417 = vadd.f32 %v2977, %v3366
    %v3418 = vadd.f32 %v2979, %v3368
    %v3419 = vadd.f32 %v3123, %v3409
    %v3420 = vadd.f32 %v3125, %v3411
    %v3421 = vadd.f32 %v2981, %v3370
    %v3422 = vadd.f32 %v2983, %v3372
    %v3423 = vadd.f32 %v3127, %v3413
    %v3424 = vadd.f32 %v3129, %v3415
    %v3425 = vxor.u32 %v3417, 2147483648
    %v3426 = vxor.u32 %v3421, 2147483648
    %v3427 = vmul.f32 %v3425, 1.442695
    %v3428 = vpow.pop %v3427
    %v3429 = vmul.f32 %v3426, 1.442695
    %v3430 = vpow.pop %v3429
    %v3431 = vadd.f32 %v3428, 1.0
    %v3432 = vadd.f32 %v3430, 1.0
    %v3433 = vrcp.pop %v3431
    %v3434 = vmul.f32 1.0, %v3433
    %v3435 = vrcp.pop %v3432
    %v3436 = vmul.f32 1.0, %v3435
    %v3437 = vxor.u32 %v3418, 2147483648
    %v3438 = vxor.u32 %v3422, 2147483648
    %v3439 = vmul.f32 %v3437, 1.442695
    %v3440 = vpow.pop %v3439
    %v3441 = vmul.f32 %v3438, 1.442695
    %v3442 = vpow.pop %v3441
    %v3443 = vadd.f32 %v3440, 1.0
    %v3444 = vadd.f32 %v3442, 1.0
    %v3445 = vrcp.pop %v3443
    %v3446 = vmul.f32 1.0, %v3445
    %v3447 = vrcp.pop %v3444
    %v3448 = vmul.f32 1.0, %v3447
    %v3449 = vtanh.pop %v3419
    %v3450 = vtanh.pop %v3423
    %v3451 = vxor.u32 %v3420, 2147483648
    %v3452 = vxor.u32 %v3424, 2147483648
    %v3453 = vmul.f32 %v3451, 1.442695
    %v3454 = vpow.pop %v3453
    %v3455 = vmul.f32 %v3452, 1.442695
    %v3456 = vpow.pop %v3455
    %v3457 = vadd.f32 %v3454, 1.0
    %v3458 = vadd.f32 %v3456, 1.0
    %v3459 = vrcp.pop %v3457
    %v3460 = vmul.f32 1.0, %v3459
    %v3461 = vrcp.pop %v3458
    %v3462 = vmul.f32 1.0, %v3461
    %v3463 = vmul.f32 %v3446, %v3324
    %v3464 = vmul.f32 %v3448, %v3325
    %v3465 = vmul.f32 %v3434, %v3449
    %v3466 = vmul.f32 %v3436, %v3450
    %v3467 = vadd.f32 %v3463, %v3465
    %v3468 = vadd.f32 %v3464, %v3466
    %v3469 = vtanh.pop %v3467
    %v3470 = vtanh.pop %v3468
    %v3471 = vmul.f32 %v3460, %v3469
    %v3472 = vmul.f32 %v3462, %v3470
    %v3473 = vpack.c.bf16 %v3472, %v3471
    %3474 = vmatprep.subr.bf16.mxu0 %v3152
    %3475 = vmatpush1.bf16.msra.mxu0 %v3151
    %3476 = vmatprep.subr.bf16.mxu0 %v3156
    %3477 = vmatpush1.bf16.msra.mxu0 %v3155
    %3478 = vmatprep.subr.bf16.mxu0 %v3160
    %3479 = vmatpush1.bf16.msra.mxu0 %v3159
    %3480 = vmatprep.subr.bf16.mxu0 %v3164
    %3481 = vmatpush1.bf16.msra.mxu0 %v3163
    %3482 = vmatprep.subr.bf16.mxu0 %v3168
    %3483 = vmatpush1.bf16.msra.mxu0 %v3167
    %3484 = vmatprep.subr.bf16.mxu0 %v3172
    %3485 = vmatpush1.bf16.msra.mxu0 %v3171
    %3486 = vmatprep.subr.bf16.mxu0 %v3176
    %3487 = vmatpush1.bf16.msra.mxu0 %v3175
    %3488 = vmatprep.subr.bf16.mxu0 %v3180
    %3489 = vmatpush1.bf16.msra.mxu0 %v3179
    %3490 = vmatprep.subr.bf16.mxu0 0
    %3491 = vmatpush1.bf16.msra.mxu0 0
    %3492 = vmatprep.subr.bf16.mxu0 0
    %3493 = vmatpush1.bf16.msra.mxu0 0
    %3494 = vmatprep.subr.bf16.mxu0 0
    %3495 = vmatpush1.bf16.msra.mxu0 0
    %3496 = vmatprep.subr.bf16.mxu0 0
    %3497 = vmatpush1.bf16.msra.mxu0 0
    %3498 = vmatprep.subr.bf16.mxu0 0
    %3499 = vmatpush1.bf16.msra.mxu0 0
    %3500 = vmatprep.subr.bf16.mxu0 0
    %3501 = vmatpush1.bf16.msra.mxu0 0
    %3502 = vmatprep.subr.bf16.mxu0 0
    %3503 = vmatpush1.bf16.msra.mxu0 0
    %3504 = vmatprep.subr.bf16.mxu0 0
    %3505 = vmatpush1.bf16.msra.mxu0 0
    %3506 = vmatprep.mubr.bf16.mxu0 0
    %3507 = vmatmul.mubr.bf16.gmra.mrb[0].mxu0 %v3473
    %v3508 = vpop.f32.mrb[0].mxu0
    %v3509 = vadd.f32 0.0, %v3508
    %v3510 = vpop.f32.mrb[0].mxu0
    %v3511 = vadd.f32 0.0, %v3510
    %v3512 = vpop.f32.mrb[0].mxu0
    %v3513 = vadd.f32 0.0, %v3512
    %v3514 = vpop.f32.mrb[0].mxu0
    %v3515 = vadd.f32 0.0, %v3514
    %3516 = vdwg.mxu0
    %3517 = vmatprep.subr.bf16.mxu0 %v3154
    %3518 = vmatpush1.bf16.msra.mxu0 %v3153
    %3519 = vmatprep.subr.bf16.mxu0 %v3158
    %3520 = vmatpush1.bf16.msra.mxu0 %v3157
    %3521 = vmatprep.subr.bf16.mxu0 %v3162
    %3522 = vmatpush1.bf16.msra.mxu0 %v3161
    %3523 = vmatprep.subr.bf16.mxu0 %v3166
    %3524 = vmatpush1.bf16.msra.mxu0 %v3165
    %3525 = vmatprep.subr.bf16.mxu0 %v3170
    %3526 = vmatpush1.bf16.msra.mxu0 %v3169
    %3527 = vmatprep.subr.bf16.mxu0 %v3174
    %3528 = vmatpush1.bf16.msra.mxu0 %v3173
    %3529 = vmatprep.subr.bf16.mxu0 %v3178
    %3530 = vmatpush1.bf16.msra.mxu0 %v3177
    %3531 = vmatprep.subr.bf16.mxu0 %v3182
    %3532 = vmatpush1.bf16.msra.mxu0 %v3181
    %3533 = vmatprep.subr.bf16.mxu0 0
    %3534 = vmatpush1.bf16.msra.mxu0 0
    %3535 = vmatprep.subr.bf16.mxu0 0
    %3536 = vmatpush1.bf16.msra.mxu0 0
    %3537 = vmatprep.subr.bf16.mxu0 0
    %3538 = vmatpush1.bf16.msra.mxu0 0
    %3539 = vmatprep.subr.bf16.mxu0 0
    %3540 = vmatpush1.bf16.msra.mxu0 0
    %3541 = vmatprep.subr.bf16.mxu0 0
    %3542 = vmatpush1.bf16.msra.mxu0 0
    %3543 = vmatprep.subr.bf16.mxu0 0
    %3544 = vmatpush1.bf16.msra.mxu0 0
    %3545 = vmatprep.subr.bf16.mxu0 0
    %3546 = vmatpush1.bf16.msra.mxu0 0
    %3547 = vmatprep.subr.bf16.mxu0 0
    %3548 = vmatpush1.bf16.msra.mxu0 0
    %3549 = vmatprep.mubr.bf16.mxu0 0
    %3550 = vmatmul.mubr.bf16.gmra.mrb[0].mxu0 %v3473
    %v3551 = vpop.f32.mrb[0].mxu0
    %v3552 = vadd.f32 0.0, %v3551
    %v3553 = vpop.f32.mrb[0].mxu0
    %v3554 = vadd.f32 0.0, %v3553
    %v3555 = vpop.f32.mrb[0].mxu0
    %v3556 = vadd.f32 0.0, %v3555
    %v3557 = vpop.f32.mrb[0].mxu0
    %v3558 = vadd.f32 0.0, %v3557
    %3559 = vdwg.mxu0
    %v3560 = vadd.f32 %v2987, %v3509
    %v3561 = vadd.f32 %v2989, %v3511
    %v3562 = vadd.f32 %v3133, %v3552
    %v3563 = vadd.f32 %v3135, %v3554
    %v3564 = vadd.f32 %v2991, %v3513
    %v3565 = vadd.f32 %v2993, %v3515
    %v3566 = vadd.f32 %v3137, %v3556
    %v3567 = vadd.f32 %v3139, %v3558
    %v3568 = vxor.u32 %v3560, 2147483648
    %v3569 = vxor.u32 %v3564, 2147483648
    %v3570 = vmul.f32 %v3568, 1.442695
    %v3571 = vpow.pop %v3570
    %v3572 = vmul.f32 %v3569, 1.442695
    %v3573 = vpow.pop %v3572
    %v3574 = vadd.f32 %v3571, 1.0
    %v3575 = vadd.f32 %v3573, 1.0
    %v3576 = vrcp.pop %v3574
    %v3577 = vmul.f32 1.0, %v3576
    %v3578 = vrcp.pop %v3575
    %v3579 = vmul.f32 1.0, %v3578
    %v3580 = vxor.u32 %v3561, 2147483648
    %v3581 = vxor.u32 %v3565, 2147483648
    %v3582 = vmul.f32 %v3580, 1.442695
    %v3583 = vpow.pop %v3582
    %v3584 = vmul.f32 %v3581, 1.442695
    %v3585 = vpow.pop %v3584
    %v3586 = vadd.f32 %v3583, 1.0
    %v3587 = vadd.f32 %v3585, 1.0
    %v3588 = vrcp.pop %v3586
    %v3589 = vmul.f32 1.0, %v3588
    %v3590 = vrcp.pop %v3587
    %v3591 = vmul.f32 1.0, %v3590
    %v3592 = vtanh.pop %v3562
    %v3593 = vtanh.pop %v3566
    %v3594 = vxor.u32 %v3563, 2147483648
    %v3595 = vxor.u32 %v3567, 2147483648
    %v3596 = vmul.f32 %v3594, 1.442695
    %v3597 = vpow.pop %v3596
    %v3598 = vmul.f32 %v3595, 1.442695
    %v3599 = vpow.pop %v3598
    %v3600 = vadd.f32 %v3597, 1.0
    %v3601 = vadd.f32 %v3599, 1.0
    %v3602 = vrcp.pop %v3600
    %v3603 = vmul.f32 1.0, %v3602
    %v3604 = vrcp.pop %v3601
    %v3605 = vmul.f32 1.0, %v3604
    %v3606 = vmul.f32 %v3589, %v3467
    %v3607 = vmul.f32 %v3591, %v3468
    %v3608 = vmul.f32 %v3577, %v3592
    %v3609 = vmul.f32 %v3579, %v3593
    %v3610 = vadd.f32 %v3606, %v3608
    %v3611 = vadd.f32 %v3607, %v3609
    %v3612 = vtanh.pop %v3610
    %v3613 = vtanh.pop %v3611
    %v3614 = vmul.f32 %v3603, %v3612
    %v3615 = vmul.f32 %v3605, %v3613
    %v3616 = vpack.c.bf16 %v3615, %v3614
    %3617 = vmatprep.subr.bf16.mxu0 %v3152
    %3618 = vmatpush1.bf16.msra.mxu0 %v3151
    %3619 = vmatprep.subr.bf16.mxu0 %v3156
    %3620 = vmatpush1.bf16.msra.mxu0 %v3155
    %3621 = vmatprep.subr.bf16.mxu0 %v3160
    %3622 = vmatpush1.bf16.msra.mxu0 %v3159
    %3623 = vmatprep.subr.bf16.mxu0 %v3164
    %3624 = vmatpush1.bf16.msra.mxu0 %v3163
    %3625 = vmatprep.subr.bf16.mxu0 %v3168
    %3626 = vmatpush1.bf16.msra.mxu0 %v3167
    %3627 = vmatprep.subr.bf16.mxu0 %v3172
    %3628 = vmatpush1.bf16.msra.mxu0 %v3171
    %3629 = vmatprep.subr.bf16.mxu0 %v3176
    %3630 = vmatpush1.bf16.msra.mxu0 %v3175
    %3631 = vmatprep.subr.bf16.mxu0 %v3180
    %3632 = vmatpush1.bf16.msra.mxu0 %v3179
    %3633 = vmatprep.subr.bf16.mxu0 0
    %3634 = vmatpush1.bf16.msra.mxu0 0
    %3635 = vmatprep.subr.bf16.mxu0 0
    %3636 = vmatpush1.bf16.msra.mxu0 0
    %3637 = vmatprep.subr.bf16.mxu0 0
    %3638 = vmatpush1.bf16.msra.mxu0 0
    %3639 = vmatprep.subr.bf16.mxu0 0
    %3640 = vmatpush1.bf16.msra.mxu0 0
    %3641 = vmatprep.subr.bf16.mxu0 0
    %3642 = vmatpush1.bf16.msra.mxu0 0
    %3643 = vmatprep.subr.bf16.mxu0 0
    %3644 = vmatpush1.bf16.msra.mxu0 0
    %3645 = vmatprep.subr.bf16.mxu0 0
    %3646 = vmatpush1.bf16.msra.mxu0 0
    %3647 = vmatprep.subr.bf16.mxu0 0
    %3648 = vmatpush1.bf16.msra.mxu0 0
    %3649 = vmatprep.mubr.bf16.mxu0 0
    %3650 = vmatmul.mubr.bf16.gmra.mrb[0].mxu0 %v3616
    %v3651 = vpop.f32.mrb[0].mxu0
    %v3652 = vadd.f32 0.0, %v3651
    %v3653 = vpop.f32.mrb[0].mxu0
    %v3654 = vadd.f32 0.0, %v3653
    %v3655 = vpop.f32.mrb[0].mxu0
    %v3656 = vadd.f32 0.0, %v3655
    %v3657 = vpop.f32.mrb[0].mxu0
    %v3658 = vadd.f32 0.0, %v3657
    %3659 = vdwg.mxu0
    %3660 = vmatprep.subr.bf16.mxu0 %v3154
    %3661 = vmatpush1.bf16.msra.mxu0 %v3153
    %3662 = vmatprep.subr.bf16.mxu0 %v3158
    %3663 = vmatpush1.bf16.msra.mxu0 %v3157
    %3664 = vmatprep.subr.bf16.mxu0 %v3162
    %3665 = vmatpush1.bf16.msra.mxu0 %v3161
    %3666 = vmatprep.subr.bf16.mxu0 %v3166
    %3667 = vmatpush1.bf16.msra.mxu0 %v3165
    %3668 = vmatprep.subr.bf16.mxu0 %v3170
    %3669 = vmatpush1.bf16.msra.mxu0 %v3169
    %3670 = vmatprep.subr.bf16.mxu0 %v3174
    %3671 = vmatpush1.bf16.msra.mxu0 %v3173
    %3672 = vmatprep.subr.bf16.mxu0 %v3178
    %3673 = vmatpush1.bf16.msra.mxu0 %v3177
    %3674 = vmatprep.subr.bf16.mxu0 %v3182
    %3675 = vmatpush1.bf16.msra.mxu0 %v3181
    %3676 = vmatprep.subr.bf16.mxu0 0
    %3677 = vmatpush1.bf16.msra.mxu0 0
    %3678 = vmatprep.subr.bf16.mxu0 0
    %3679 = vmatpush1.bf16.msra.mxu0 0
    %3680 = vmatprep.subr.bf16.mxu0 0
    %3681 = vmatpush1.bf16.msra.mxu0 0
    %3682 = vmatprep.subr.bf16.mxu0 0
    %3683 = vmatpush1.bf16.msra.mxu0 0
    %3684 = vmatprep.subr.bf16.mxu0 0
    %3685 = vmatpush1.bf16.msra.mxu0 0
    %3686 = vmatprep.subr.bf16.mxu0 0
    %3687 = vmatpush1.bf16.msra.mxu0 0
    %3688 = vmatprep.subr.bf16.mxu0 0
    %3689 = vmatpush1.bf16.msra.mxu0 0
    %3690 = vmatprep.subr.bf16.mxu0 0
    %3691 = vmatpush1.bf16.msra.mxu0 0
    %3692 = vmatprep.mubr.bf16.mxu0 0
    %3693 = vmatmul.mubr.bf16.gmra.mrb[0].mxu0 %v3616
    %v3694 = vpop.f32.mrb[0].mxu0
    %v3695 = vadd.f32 0.0, %v3694
    %v3696 = vpop.f32.mrb[0].mxu0
    %v3697 = vadd.f32 0.0, %v3696
    %v3698 = vpop.f32.mrb[0].mxu0
    %v3699 = vadd.f32 0.0, %v3698
    %v3700 = vpop.f32.mrb[0].mxu0
    %v3701 = vadd.f32 0.0, %v3700
    %3702 = vdwg.mxu0
    %v3703 = vadd.f32 %v2997, %v3652
    %v3704 = vadd.f32 %v2999, %v3654
    %v3705 = vadd.f32 %v3143, %v3695
    %v3706 = vadd.f32 %v3145, %v3697
    %v3707 = vadd.f32 %v3001, %v3656
    %v3708 = vadd.f32 %v3003, %v3658
    %v3709 = vadd.f32 %v3147, %v3699
    %v3710 = vadd.f32 %v3149, %v3701
    %v3711 = vxor.u32 %v3703, 2147483648
    %v3712 = vxor.u32 %v3707, 2147483648
    %v3713 = vmul.f32 %v3711, 1.442695
    %v3714 = vpow.pop %v3713
    %v3715 = vmul.f32 %v3712, 1.442695
    %v3716 = vpow.pop %v3715
    %v3717 = vadd.f32 %v3714, 1.0
    %v3718 = vadd.f32 %v3716, 1.0
    %v3719 = vrcp.pop %v3717
    %v3720 = vmul.f32 1.0, %v3719
    %v3721 = vrcp.pop %v3718
    %v3722 = vmul.f32 1.0, %v3721
    %v3723 = vxor.u32 %v3704, 2147483648
    %v3724 = vxor.u32 %v3708, 2147483648
    %v3725 = vmul.f32 %v3723, 1.442695
    %v3726 = vpow.pop %v3725
    %v3727 = vmul.f32 %v3724, 1.442695
    %v3728 = vpow.pop %v3727
    %v3729 = vadd.f32 %v3726, 1.0
    %v3730 = vadd.f32 %v3728, 1.0
    %v3731 = vrcp.pop %v3729
    %v3732 = vmul.f32 1.0, %v3731
    %v3733 = vrcp.pop %v3730
    %v3734 = vmul.f32 1.0, %v3733
    %v3735 = vtanh.pop %v3705
    %v3736 = vtanh.pop %v3709
    %v3737 = vxor.u32 %v3706, 2147483648
    %v3738 = vxor.u32 %v3710, 2147483648
    %v3739 = vmul.f32 %v3737, 1.442695
    %v3740 = vpow.pop %v3739
    %v3741 = vmul.f32 %v3738, 1.442695
    %v3742 = vpow.pop %v3741
    %v3743 = vadd.f32 %v3740, 1.0
    %v3744 = vadd.f32 %v3742, 1.0
    %v3745 = vrcp.pop %v3743
    %v3746 = vmul.f32 1.0, %v3745
    %v3747 = vrcp.pop %v3744
    %v3748 = vmul.f32 1.0, %v3747
    %v3749 = vmul.f32 %v3732, %v3610
    %v3750 = vmul.f32 %v3734, %v3611
    %v3751 = vmul.f32 %v3720, %v3735
    %v3752 = vmul.f32 %v3722, %v3736
    %v3753 = vadd.f32 %v3749, %v3751
    %v3754 = vadd.f32 %v3750, %v3752
    %v3755 = vtanh.pop %v3753
    %v3756 = vtanh.pop %v3754
    %v3757 = vmul.f32 %v3746, %v3755
    %v3758 = vmul.f32 %v3748, %v3756
    %s3759 = smul.u32 4, 50
    %s3760 = smul.u32 %s3759, 8
    %s3761 = sshll.u32 %s3760, 4
    %3762 = dma.done %s140, %s3761
    %s3763 = smul.u32 4, 256
    %s3764 = smul.u32 %s3763, 1
    %s3765 = sshll.u32 %s3764, 4
    %3766 = dma.done %s175, %s3765
    %s3767 = smul.u32 4, 16
    %s3768 = smul.u32 %s3767, 1
    %s3769 = sshll.u32 %s3768, 4
    %3770 = dma.done %s187, %s3769
    %v3771 = vld [vmem:[#allocation11] sm:$0xff]
    %v3772 = vld [vmem:[#allocation11 + $0x8] sm:$0xff]
    %v3773 = vld [vmem:[#allocation11 + $0x10] sm:$0xff]
    %v3774 = vld [vmem:[#allocation11 + $0x18] sm:$0xff]
    %v3775 = vld [vmem:[#allocation4] sm:$0xff]
    %v3776 = vld [vmem:[#allocation4 + $0x8] sm:$0xff]
    %v3777 = vld [vmem:[#allocation4 + $0x10] sm:$0xff]
    %v3778 = vld [vmem:[#allocation4 + $0x18] sm:$0xff]
    %v3779 = vld [vmem:[#allocation4 + $0x20] sm:$0xff]
    %v3780 = vld [vmem:[#allocation4 + $0x28] sm:$0xff]
    %v3781 = vld [vmem:[#allocation4 + $0x30] sm:$0xff]
    %v3782 = vld [vmem:[#allocation4 + $0x38] sm:$0xff]
    %v3783 = vld [vmem:[#allocation4 + $0x40] sm:$0xff]
    %v3784 = vld [vmem:[#allocation4 + $0x48] sm:$0xff]
    %v3785 = vld [vmem:[#allocation4 + $0x50] sm:$0xff]
    %v3786 = vld [vmem:[#allocation4 + $0x58] sm:$0xff]
    %v3787 = vld [vmem:[#allocation4 + $0x60] sm:$0xff]
    %v3788 = vld [vmem:[#allocation4 + $0x68] sm:$0xff]
    %v3789 = vld [vmem:[#allocation4 + $0x70] sm:$0xff]
    %v3790 = vld [vmem:[#allocation4 + $0x78] sm:$0xff]
    %v3791 = vld [vmem:[#allocation4 + $0x80] sm:$0xff]
    %v3792 = vld [vmem:[#allocation4 + $0x88] sm:$0xff]
    %v3793 = vld [vmem:[#allocation4 + $0x90] sm:$0xff]
    %v3794 = vld [vmem:[#allocation4 + $0x98] sm:$0xff]
    %v3795 = vld [vmem:[#allocation4 + $0xa0] sm:$0xff]
    %v3796 = vld [vmem:[#allocation4 + $0xa8] sm:$0xff]
    %v3797 = vld [vmem:[#allocation4 + $0xb0] sm:$0xff]
    %v3798 = vld [vmem:[#allocation4 + $0xb8] sm:$0xff]
    %v3799 = vld [vmem:[#allocation4 + $0xc0] sm:$0xff]
    %v3800 = vld [vmem:[#allocation4 + $0xc8] sm:$0xff]
    %v3801 = vld [vmem:[#allocation4 + $0xd0] sm:$0xff]
    %v3802 = vld [vmem:[#allocation4 + $0xd8] sm:$0xff]
    %v3803 = vld [vmem:[#allocation4 + $0xe0] sm:$0xff]
    %v3804 = vld [vmem:[#allocation4 + $0xe8] sm:$0xff]
    %v3805 = vld [vmem:[#allocation4 + $0xf0] sm:$0xff]
    %v3806 = vld [vmem:[#allocation4 + $0xf8] sm:$0xff]
    %v3807 = vld [vmem:[#allocation4 + $0x100] sm:$0xff]
    %v3808 = vld [vmem:[#allocation4 + $0x108] sm:$0xff]
    %v3809 = vld [vmem:[#allocation4 + $0x110] sm:$0xff]
    %v3810 = vld [vmem:[#allocation4 + $0x118] sm:$0xff]
    %v3811 = vld [vmem:[#allocation4 + $0x120] sm:$0xff]
    %v3812 = vld [vmem:[#allocation4 + $0x128] sm:$0xff]
    %v3813 = vld [vmem:[#allocation4 + $0x130] sm:$0xff]
    %v3814 = vld [vmem:[#allocation4 + $0x138] sm:$0xff]
    %v3815 = vld [vmem:[#allocation4 + $0x140] sm:$0xff]
    %v3816 = vld [vmem:[#allocation4 + $0x148] sm:$0xff]
    %v3817 = vld [vmem:[#allocation4 + $0x150] sm:$0xff]
    %v3818 = vld [vmem:[#allocation4 + $0x158] sm:$0xff]
    %v3819 = vld [vmem:[#allocation4 + $0x160] sm:$0xff]
    %v3820 = vld [vmem:[#allocation4 + $0x168] sm:$0xff]
    %v3821 = vld [vmem:[#allocation4 + $0x170] sm:$0xff]
    %v3822 = vld [vmem:[#allocation4 + $0x178] sm:$0xff]
    %v3823 = vld [vmem:[#allocation4 + $0x180] sm:$0xff]
    %v3824 = vld [vmem:[#allocation4 + $0x188] sm:$0xff]
    %v3825 = vld [vmem:[#allocation4 + $0x190] sm:$0xff]
    %v3826 = vld [vmem:[#allocation4 + $0x198] sm:$0xff]
    %v3827 = vld [vmem:[#allocation4 + $0x1a0] sm:$0xff]
    %v3828 = vld [vmem:[#allocation4 + $0x1a8] sm:$0xff]
    %v3829 = vld [vmem:[#allocation4 + $0x1b0] sm:$0xff]
    %v3830 = vld [vmem:[#allocation4 + $0x1b8] sm:$0xff]
    %v3831 = vld [vmem:[#allocation4 + $0x1c0] sm:$0xff]
    %v3832 = vld [vmem:[#allocation4 + $0x1c8] sm:$0xff]
    %v3833 = vld [vmem:[#allocation4 + $0x1d0] sm:$0xff]
    %v3834 = vld [vmem:[#allocation4 + $0x1d8] sm:$0xff]
    %v3835 = vld [vmem:[#allocation4 + $0x1e0] sm:$0xff]
    %v3836 = vld [vmem:[#allocation4 + $0x1e8] sm:$0xff]
    %v3837 = vld [vmem:[#allocation4 + $0x1f0] sm:$0xff]
    %v3838 = vld [vmem:[#allocation4 + $0x1f8] sm:$0xff]
    %v3839 = vld [vmem:[#allocation4 + $0x200] sm:$0xff]
    %v3840 = vld [vmem:[#allocation4 + $0x208] sm:$0xff]
    %v3841 = vld [vmem:[#allocation4 + $0x210] sm:$0xff]
    %v3842 = vld [vmem:[#allocation4 + $0x218] sm:$0xff]
    %v3843 = vld [vmem:[#allocation4 + $0x220] sm:$0xff]
    %v3844 = vld [vmem:[#allocation4 + $0x228] sm:$0xff]
    %v3845 = vld [vmem:[#allocation4 + $0x230] sm:$0xff]
    %v3846 = vld [vmem:[#allocation4 + $0x238] sm:$0xff]
    %v3847 = vld [vmem:[#allocation16 + $0x18] sm:$0xff]
    %v3848 = vpack.c.bf16 %v3773, %v3771
    %v3849 = vpack.c.bf16 %v3774, %v3772
    %v3851 = vlaneseq
    %v3852 = vshrl.u32 %v3851, 7
    %v3853 = vsub.s32 0, %v3852
    %v3854 = vrot.slane %v3847, %v3853
    %v3855 = vlaneseq
    %v3856 = vshrl.u32 %v3855, 7
    %v3857 = vsub.s32 1, %v3856
    %v3858 = vrot.slane %v3847, %v3857
    %v3859 = vlaneseq
    %v3860 = vshrl.u32 %v3859, 7
    %v3861 = vsub.s32 2, %v3860
    %v3862 = vrot.slane %v3847, %v3861
    %v3863 = vlaneseq
    %v3864 = vshrl.u32 %v3863, 7
    %v3865 = vsub.s32 3, %v3864
    %v3866 = vrot.slane %v3847, %v3865
    %v3867 = vlaneseq
    %v3868 = vshrl.u32 %v3867, 7
    %v3869 = vsub.s32 4, %v3868
    %v3870 = vrot.slane %v3847, %v3869
    %v3871 = vlaneseq
    %v3872 = vshrl.u32 %v3871, 7
    %v3873 = vsub.s32 5, %v3872
    %v3874 = vrot.slane %v3847, %v3873
    %v3875 = vlaneseq
    %v3876 = vshrl.u32 %v3875, 7
    %v3877 = vsub.s32 6, %v3876
    %v3878 = vrot.slane %v3847, %v3877
    %v3879 = vlaneseq
    %v3880 = vshrl.u32 %v3879, 7
    %v3881 = vsub.s32 7, %v3880
    %v3882 = vrot.slane %v3847, %v3881
    %vm3891 = vcmask 130048
    %v3893 = vsel %vm3891, %v3849, 0
    %3895 = vmatprep.subr.bf16.mxu0 %v3776
    %3896 = vmatpush1.bf16.msra.mxu0 %v3775
    %3897 = vmatprep.subr.bf16.mxu0 %v3784
    %3898 = vmatpush1.bf16.msra.mxu0 %v3783
    %3899 = vmatprep.subr.bf16.mxu0 %v3792
    %3900 = vmatpush1.bf16.msra.mxu0 %v3791
    %3901 = vmatprep.subr.bf16.mxu0 %v3800
    %3902 = vmatpush1.bf16.msra.mxu0 %v3799
    %3903 = vmatprep.subr.bf16.mxu0 %v3808
    %3904 = vmatpush1.bf16.msra.mxu0 %v3807
    %3905 = vmatprep.subr.bf16.mxu0 %v3816
    %3906 = vmatpush1.bf16.msra.mxu0 %v3815
    %3907 = vmatprep.subr.bf16.mxu0 %v3824
    %3908 = vmatpush1.bf16.msra.mxu0 %v3823
    %3909 = vmatprep.subr.bf16.mxu0 %v3832
    %3910 = vmatpush1.bf16.msra.mxu0 %v3831
    %3911 = vmatprep.subr.bf16.mxu0 %v3840
    %3912 = vmatpush1.bf16.msra.mxu0 %v3839
    %3913 = vmatprep.subr.bf16.mxu0 0
    %3914 = vmatpush1.bf16.msra.mxu0 0
    %3915 = vmatprep.subr.bf16.mxu0 0
    %3916 = vmatpush1.bf16.msra.mxu0 0
    %3917 = vmatprep.subr.bf16.mxu0 0
    %3918 = vmatpush1.bf16.msra.mxu0 0
    %3919 = vmatprep.subr.bf16.mxu0 0
    %3920 = vmatpush1.bf16.msra.mxu0 0
    %3921 = vmatprep.subr.bf16.mxu0 0
    %3922 = vmatpush1.bf16.msra.mxu0 0
    %3923 = vmatprep.subr.bf16.mxu0 0
    %3924 = vmatpush1.bf16.msra.mxu0 0
    %3925 = vmatprep.subr.bf16.mxu0 0
    %3926 = vmatpush1.bf16.msra.mxu0 0
    %3927 = vmatprep.mubr.bf16.mxu0 %v3893
    %3928 = vmatmul.mubr.bf16.gmra.mrb[0].mxu0 %v3848
    %v3929 = vpop.f32.mrb[0].mxu0
    %v3930 = vadd.f32 %v3854, %v3929
    %v3931 = vpop.f32.mrb[0].mxu0
    %v3932 = vadd.f32 %v3858, %v3931
    %v3933 = vpop.f32.mrb[0].mxu0
    %v3934 = vadd.f32 %v3854, %v3933
    %v3935 = vpop.f32.mrb[0].mxu0
    %v3936 = vadd.f32 %v3858, %v3935
    %3937 = vdwg.mxu0
    %3938 = vmatprep.subr.bf16.mxu0 %v3778
    %3939 = vmatpush1.bf16.msra.mxu0 %v3777
    %3940 = vmatprep.subr.bf16.mxu0 %v3786
    %3941 = vmatpush1.bf16.msra.mxu0 %v3785
    %3942 = vmatprep.subr.bf16.mxu0 %v3794
    %3943 = vmatpush1.bf16.msra.mxu0 %v3793
    %3944 = vmatprep.subr.bf16.mxu0 %v3802
    %3945 = vmatpush1.bf16.msra.mxu0 %v3801
    %3946 = vmatprep.subr.bf16.mxu0 %v3810
    %3947 = vmatpush1.bf16.msra.mxu0 %v3809
    %3948 = vmatprep.subr.bf16.mxu0 %v3818
    %3949 = vmatpush1.bf16.msra.mxu0 %v3817
    %3950 = vmatprep.subr.bf16.mxu0 %v3826
    %3951 = vmatpush1.bf16.msra.mxu0 %v3825
    %3952 = vmatprep.subr.bf16.mxu0 %v3834
    %3953 = vmatpush1.bf16.msra.mxu0 %v3833
    %3954 = vmatprep.subr.bf16.mxu0 %v3842
    %3955 = vmatpush1.bf16.msra.mxu0 %v3841
    %3956 = vmatprep.subr.bf16.mxu0 0
    %3957 = vmatpush1.bf16.msra.mxu0 0
    %3958 = vmatprep.subr.bf16.mxu0 0
    %3959 = vmatpush1.bf16.msra.mxu0 0
    %3960 = vmatprep.subr.bf16.mxu0 0
    %3961 = vmatpush1.bf16.msra.mxu0 0
    %3962 = vmatprep.subr.bf16.mxu0 0
    %3963 = vmatpush1.bf16.msra.mxu0 0
    %3964 = vmatprep.subr.bf16.mxu0 0
    %3965 = vmatpush1.bf16.msra.mxu0 0
    %3966 = vmatprep.subr.bf16.mxu0 0
    %3967 = vmatpush1.bf16.msra.mxu0 0
    %3968 = vmatprep.subr.bf16.mxu0 0
    %3969 = vmatpush1.bf16.msra.mxu0 0
    %3970 = vmatprep.mubr.bf16.mxu0 %v3893
    %3971 = vmatmul.mubr.bf16.gmra.mrb[0].mxu0 %v3848
    %v3972 = vpop.f32.mrb[0].mxu0
    %v3973 = vadd.f32 %v3862, %v3972
    %v3974 = vpop.f32.mrb[0].mxu0
    %v3975 = vadd.f32 %v3866, %v3974
    %v3976 = vpop.f32.mrb[0].mxu0
    %v3977 = vadd.f32 %v3862, %v3976
    %v3978 = vpop.f32.mrb[0].mxu0
    %v3979 = vadd.f32 %v3866, %v3978
    %3980 = vdwg.mxu0
    %3981 = vmatprep.subr.bf16.mxu0 %v3780
    %3982 = vmatpush1.bf16.msra.mxu0 %v3779
    %3983 = vmatprep.subr.bf16.mxu0 %v3788
    %3984 = vmatpush1.bf16.msra.mxu0 %v3787
    %3985 = vmatprep.subr.bf16.mxu0 %v3796
    %3986 = vmatpush1.bf16.msra.mxu0 %v3795
    %3987 = vmatprep.subr.bf16.mxu0 %v3804
    %3988 = vmatpush1.bf16.msra.mxu0 %v3803
    %3989 = vmatprep.subr.bf16.mxu0 %v3812
    %3990 = vmatpush1.bf16.msra.mxu0 %v3811
    %3991 = vmatprep.subr.bf16.mxu0 %v3820
    %3992 = vmatpush1.bf16.msra.mxu0 %v3819
    %3993 = vmatprep.subr.bf16.mxu0 %v3828
    %3994 = vmatpush1.bf16.msra.mxu0 %v3827
    %3995 = vmatprep.subr.bf16.mxu0 %v3836
    %3996 = vmatpush1.bf16.msra.mxu0 %v3835
    %3997 = vmatprep.subr.bf16.mxu0 %v3844
    %3998 = vmatpush1.bf16.msra.mxu0 %v3843
    %3999 = vmatprep.subr.bf16.mxu0 0
    %4000 = vmatpush1.bf16.msra.mxu0 0
    %4001 = vmatprep.subr.bf16.mxu0 0
    %4002 = vmatpush1.bf16.msra.mxu0 0
    %4003 = vmatprep.subr.bf16.mxu0 0
    %4004 = vmatpush1.bf16.msra.mxu0 0
    %4005 = vmatprep.subr.bf16.mxu0 0
    %4006 = vmatpush1.bf16.msra.mxu0 0
    %4007 = vmatprep.subr.bf16.mxu0 0
    %4008 = vmatpush1.bf16.msra.mxu0 0
    %4009 = vmatprep.subr.bf16.mxu0 0
    %4010 = vmatpush1.bf16.msra.mxu0 0
    %4011 = vmatprep.subr.bf16.mxu0 0
    %4012 = vmatpush1.bf16.msra.mxu0 0
    %4013 = vmatprep.mubr.bf16.mxu0 %v3893
    %4014 = vmatmul.mubr.bf16.gmra.mrb[0].mxu0 %v3848
    %v4015 = vpop.f32.mrb[0].mxu0
    %v4016 = vadd.f32 %v3870, %v4015
    %v4017 = vpop.f32.mrb[0].mxu0
    %v4018 = vadd.f32 %v3874, %v4017
    %v4019 = vpop.f32.mrb[0].mxu0
    %v4020 = vadd.f32 %v3870, %v4019
    %v4021 = vpop.f32.mrb[0].mxu0
    %v4022 = vadd.f32 %v3874, %v4021
    %4023 = vdwg.mxu0
    %4024 = vmatprep.subr.bf16.mxu0 %v3782
    %4025 = vmatpush1.bf16.msra.mxu0 %v3781
    %4026 = vmatprep.subr.bf16.mxu0 %v3790
    %4027 = vmatpush1.bf16.msra.mxu0 %v3789
    %4028 = vmatprep.subr.bf16.mxu0 %v3798
    %4029 = vmatpush1.bf16.msra.mxu0 %v3797
    %4030 = vmatprep.subr.bf16.mxu0 %v3806
    %4031 = vmatpush1.bf16.msra.mxu0 %v3805
    %4032 = vmatprep.subr.bf16.mxu0 %v3814
    %4033 = vmatpush1.bf16.msra.mxu0 %v3813
    %4034 = vmatprep.subr.bf16.mxu0 %v3822
    %4035 = vmatpush1.bf16.msra.mxu0 %v3821
    %4036 = vmatprep.subr.bf16.mxu0 %v3830
    %4037 = vmatpush1.bf16.msra.mxu0 %v3829
    %4038 = vmatprep.subr.bf16.mxu0 %v3838
    %4039 = vmatpush1.bf16.msra.mxu0 %v3837
    %4040 = vmatprep.subr.bf16.mxu0 %v3846
    %4041 = vmatpush1.bf16.msra.mxu0 %v3845
    %4042 = vmatprep.subr.bf16.mxu0 0
    %4043 = vmatpush1.bf16.msra.mxu0 0
    %4044 = vmatprep.subr.bf16.mxu0 0
    %4045 = vmatpush1.bf16.msra.mxu0 0
    %4046 = vmatprep.subr.bf16.mxu0 0
    %4047 = vmatpush1.bf16.msra.mxu0 0
    %4048 = vmatprep.subr.bf16.mxu0 0
    %4049 = vmatpush1.bf16.msra.mxu0 0
    %4050 = vmatprep.subr.bf16.mxu0 0
    %4051 = vmatpush1.bf16.msra.mxu0 0
    %4052 = vmatprep.subr.bf16.mxu0 0
    %4053 = vmatpush1.bf16.msra.mxu0 0
    %4054 = vmatprep.subr.bf16.mxu0 0
    %4055 = vmatpush1.bf16.msra.mxu0 0
    %4056 = vmatprep.mubr.bf16.mxu0 %v3893
    %4057 = vmatmul.mubr.bf16.gmra.mrb[0].mxu0 %v3848
    %v4058 = vpop.f32.mrb[0].mxu0
    %v4059 = vadd.f32 %v3878, %v4058
    %v4060 = vpop.f32.mrb[0].mxu0
    %v4061 = vadd.f32 %v3882, %v4060
    %v4062 = vpop.f32.mrb[0].mxu0
    %v4063 = vadd.f32 %v3878, %v4062
    %v4064 = vpop.f32.mrb[0].mxu0
    %v4065 = vadd.f32 %v3882, %v4064
    %4066 = vdwg.mxu0
    %v4067 = vmax.f32 %v3930, 0.0
    %v4068 = vmax.f32 %v3932, 0.0
    %v4069 = vmax.f32 %v3973, 0.0
    %v4070 = vmax.f32 %v3975, 0.0
    %v4071 = vmax.f32 %v4016, 0.0
    %v4072 = vmax.f32 %v4018, 0.0
    %v4073 = vmax.f32 %v4059, 0.0
    %v4074 = vmax.f32 %v4061, 0.0
    %v4075 = vmax.f32 %v3934, 0.0
    %v4076 = vmax.f32 %v3936, 0.0
    %v4077 = vmax.f32 %v3977, 0.0
    %v4078 = vmax.f32 %v3979, 0.0
    %v4079 = vmax.f32 %v4020, 0.0
    %v4080 = vmax.f32 %v4022, 0.0
    %v4081 = vmax.f32 %v4063, 0.0
    %v4082 = vmax.f32 %v4065, 0.0
    %v4083 = vld [vmem:[#allocation5] sm:$0xff]
    %v4084 = vld [vmem:[#allocation5 + $0x8] sm:$0xff]
    %v4085 = vld [vmem:[#allocation5 + $0x10] sm:$0xff]
    %v4086 = vld [vmem:[#allocation5 + $0x18] sm:$0xff]
    %v4087 = vld [vmem:[#allocation5 + $0x20] sm:$0xff]
    %v4088 = vld [vmem:[#allocation5 + $0x28] sm:$0xff]
    %v4089 = vld [vmem:[#allocation5 + $0x30] sm:$0xff]
    %v4090 = vld [vmem:[#allocation5 + $0x38] sm:$0xff]
    %v4091 = vld [vmem:[#allocation5 + $0x40] sm:$0xff]
    %v4092 = vld [vmem:[#allocation5 + $0x48] sm:$0xff]
    %v4093 = vld [vmem:[#allocation5 + $0x50] sm:$0xff]
    %v4094 = vld [vmem:[#allocation5 + $0x58] sm:$0xff]
    %v4095 = vld [vmem:[#allocation5 + $0x60] sm:$0xff]
    %v4096 = vld [vmem:[#allocation5 + $0x68] sm:$0xff]
    %v4097 = vld [vmem:[#allocation5 + $0x70] sm:$0xff]
    %v4098 = vld [vmem:[#allocation5 + $0x78] sm:$0xff]
    %v4099 = vld [vmem:[#allocation5 + $0x80] sm:$0xff]
    %v4100 = vld [vmem:[#allocation5 + $0x88] sm:$0xff]
    %v4101 = vld [vmem:[#allocation5 + $0x90] sm:$0xff]
    %v4102 = vld [vmem:[#allocation5 + $0x98] sm:$0xff]
    %v4103 = vld [vmem:[#allocation5 + $0xa0] sm:$0xff]
    %v4104 = vld [vmem:[#allocation5 + $0xa8] sm:$0xff]
    %v4105 = vld [vmem:[#allocation5 + $0xb0] sm:$0xff]
    %v4106 = vld [vmem:[#allocation5 + $0xb8] sm:$0xff]
    %v4107 = vld [vmem:[#allocation5 + $0xc0] sm:$0xff]
    %v4108 = vld [vmem:[#allocation5 + $0xc8] sm:$0xff]
    %v4109 = vld [vmem:[#allocation5 + $0xd0] sm:$0xff]
    %v4110 = vld [vmem:[#allocation5 + $0xd8] sm:$0xff]
    %v4111 = vld [vmem:[#allocation5 + $0xe0] sm:$0xff]
    %v4112 = vld [vmem:[#allocation5 + $0xe8] sm:$0xff]
    %v4113 = vld [vmem:[#allocation5 + $0xf0] sm:$0xff]
    %v4114 = vld [vmem:[#allocation5 + $0xf8] sm:$0xff]
    %v4115 = vld [vmem:[#allocation5 + $0x100] sm:$0xff]
    %v4116 = vld [vmem:[#allocation5 + $0x108] sm:$0xff]
    %v4117 = vld [vmem:[#allocation5 + $0x110] sm:$0xff]
    %v4118 = vld [vmem:[#allocation5 + $0x118] sm:$0xff]
    %v4119 = vld [vmem:[#allocation5 + $0x120] sm:$0xff]
    %v4120 = vld [vmem:[#allocation5 + $0x128] sm:$0xff]
    %v4121 = vld [vmem:[#allocation5 + $0x130] sm:$0xff]
    %v4122 = vld [vmem:[#allocation5 + $0x138] sm:$0xff]
    %v4123 = vld [vmem:[#allocation5 + $0x140] sm:$0xff]
    %v4124 = vld [vmem:[#allocation5 + $0x148] sm:$0xff]
    %v4125 = vld [vmem:[#allocation5 + $0x150] sm:$0xff]
    %v4126 = vld [vmem:[#allocation5 + $0x158] sm:$0xff]
    %v4127 = vld [vmem:[#allocation5 + $0x160] sm:$0xff]
    %v4128 = vld [vmem:[#allocation5 + $0x168] sm:$0xff]
    %v4129 = vld [vmem:[#allocation5 + $0x170] sm:$0xff]
    %v4130 = vld [vmem:[#allocation5 + $0x178] sm:$0xff]
    %v4131 = vld [vmem:[#allocation5 + $0x180] sm:$0xff]
    %v4132 = vld [vmem:[#allocation5 + $0x188] sm:$0xff]
    %v4133 = vld [vmem:[#allocation5 + $0x190] sm:$0xff]
    %v4134 = vld [vmem:[#allocation5 + $0x198] sm:$0xff]
    %v4135 = vld [vmem:[#allocation5 + $0x1a0] sm:$0xff]
    %v4136 = vld [vmem:[#allocation5 + $0x1a8] sm:$0xff]
    %v4137 = vld [vmem:[#allocation5 + $0x1b0] sm:$0xff]
    %v4138 = vld [vmem:[#allocation5 + $0x1b8] sm:$0xff]
    %v4139 = vld [vmem:[#allocation5 + $0x1c0] sm:$0xff]
    %v4140 = vld [vmem:[#allocation5 + $0x1c8] sm:$0xff]
    %v4141 = vld [vmem:[#allocation5 + $0x1d0] sm:$0xff]
    %v4142 = vld [vmem:[#allocation5 + $0x1d8] sm:$0xff]
    %v4143 = vld [vmem:[#allocation5 + $0x1e0] sm:$0xff]
    %v4144 = vld [vmem:[#allocation5 + $0x1e8] sm:$0xff]
    %v4145 = vld [vmem:[#allocation5 + $0x1f0] sm:$0xff]
    %v4146 = vld [vmem:[#allocation5 + $0x1f8] sm:$0xff]
    %v4147 = vld [vmem:[#allocation16 + $0x20] sm:$0x1]
    %v4148 = vpack.c.bf16 %v4075, %v4067
    %v4149 = vpack.c.bf16 %v4076, %v4068
    %v4150 = vpack.c.bf16 %v4077, %v4069
    %v4151 = vpack.c.bf16 %v4078, %v4070
    %v4152 = vpack.c.bf16 %v4079, %v4071
    %v4153 = vpack.c.bf16 %v4080, %v4072
    %v4154 = vpack.c.bf16 %v4081, %v4073
    %v4155 = vpack.c.bf16 %v4082, %v4074
    %v4157 = vlaneseq
    %v4158 = vshrl.u32 %v4157, 7
    %v4159 = vsub.s32 0, %v4158
    %v4160 = vrot.slane %v4147, %v4159
    %4162 = vmatprep.subr.bf16.mxu0 0
    %4163 = vmatpush1.bf16.msra.mxu0 %v4083
    %4164 = vmatprep.subr.bf16.mxu0 0
    %4165 = vmatpush1.bf16.msra.mxu0 %v4084
    %4166 = vmatprep.subr.bf16.mxu0 0
    %4167 = vmatpush1.bf16.msra.mxu0 %v4085
    %4168 = vmatprep.subr.bf16.mxu0 0
    %4169 = vmatpush1.bf16.msra.mxu0 %v4086
    %4170 = vmatprep.subr.bf16.mxu0 0
    %4171 = vmatpush1.bf16.msra.mxu0 %v4087
    %4172 = vmatprep.subr.bf16.mxu0 0
    %4173 = vmatpush1.bf16.msra.mxu0 %v4088
    %4174 = vmatprep.subr.bf16.mxu0 0
    %4175 = vmatpush1.bf16.msra.mxu0 %v4089
    %4176 = vmatprep.subr.bf16.mxu0 0
    %4177 = vmatpush1.bf16.msra.mxu0 %v4090
    %4178 = vmatprep.subr.bf16.mxu0 0
    %4179 = vmatpush1.bf16.msra.mxu0 %v4091
    %4180 = vmatprep.subr.bf16.mxu0 0
    %4181 = vmatpush1.bf16.msra.mxu0 %v4092
    %4182 = vmatprep.subr.bf16.mxu0 0
    %4183 = vmatpush1.bf16.msra.mxu0 %v4093
    %4184 = vmatprep.subr.bf16.mxu0 0
    %4185 = vmatpush1.bf16.msra.mxu0 %v4094
    %4186 = vmatprep.subr.bf16.mxu0 0
    %4187 = vmatpush1.bf16.msra.mxu0 %v4095
    %4188 = vmatprep.subr.bf16.mxu0 0
    %4189 = vmatpush1.bf16.msra.mxu0 %v4096
    %4190 = vmatprep.subr.bf16.mxu0 0
    %4191 = vmatpush1.bf16.msra.mxu0 %v4097
    %4192 = vmatprep.subr.bf16.mxu0 0
    %4193 = vmatpush1.bf16.msra.mxu0 %v4098
    %4194 = vmatprep.mubr.bf16.mxu0 %v4149
    %4195 = vmatmul.mubr.bf16.gmra.mrb[0].mxu0 %v4148
    %v4196 = vpop.f32.mrb[0].mxu0
    %v4197 = vadd.f32 %v4160, %v4196
    %v4198 = vpop.f32.mrb[0].mxu0
    %v4199 = vpop.f32.mrb[0].mxu0
    %v4200 = vadd.f32 %v4160, %v4199
    %v4201 = vpop.f32.mrb[0].mxu0
    %4202 = vdwg.mxu0
    %4203 = vmatprep.subr.bf16.mxu0 0
    %4204 = vmatpush1.bf16.msra.mxu0 %v4099
    %4205 = vmatprep.subr.bf16.mxu0 0
    %4206 = vmatpush1.bf16.msra.mxu0 %v4100
    %4207 = vmatprep.subr.bf16.mxu0 0
    %4208 = vmatpush1.bf16.msra.mxu0 %v4101
    %4209 = vmatprep.subr.bf16.mxu0 0
    %4210 = vmatpush1.bf16.msra.mxu0 %v4102
    %4211 = vmatprep.subr.bf16.mxu0 0
    %4212 = vmatpush1.bf16.msra.mxu0 %v4103
    %4213 = vmatprep.subr.bf16.mxu0 0
    %4214 = vmatpush1.bf16.msra.mxu0 %v4104
    %4215 = vmatprep.subr.bf16.mxu0 0
    %4216 = vmatpush1.bf16.msra.mxu0 %v4105
    %4217 = vmatprep.subr.bf16.mxu0 0
    %4218 = vmatpush1.bf16.msra.mxu0 %v4106
    %4219 = vmatprep.subr.bf16.mxu0 0
    %4220 = vmatpush1.bf16.msra.mxu0 %v4107
    %4221 = vmatprep.subr.bf16.mxu0 0
    %4222 = vmatpush1.bf16.msra.mxu0 %v4108
    %4223 = vmatprep.subr.bf16.mxu0 0
    %4224 = vmatpush1.bf16.msra.mxu0 %v4109
    %4225 = vmatprep.subr.bf16.mxu0 0
    %4226 = vmatpush1.bf16.msra.mxu0 %v4110
    %4227 = vmatprep.subr.bf16.mxu0 0
    %4228 = vmatpush1.bf16.msra.mxu0 %v4111
    %4229 = vmatprep.subr.bf16.mxu0 0
    %4230 = vmatpush1.bf16.msra.mxu0 %v4112
    %4231 = vmatprep.subr.bf16.mxu0 0
    %4232 = vmatpush1.bf16.msra.mxu0 %v4113
    %4233 = vmatprep.subr.bf16.mxu0 0
    %4234 = vmatpush1.bf16.msra.mxu0 %v4114
    %4235 = vmatprep.mubr.bf16.mxu0 %v4151
    %4236 = vmatmul.mubr.bf16.gmra.mrb[0].mxu0 %v4150
    %v4237 = vpop.f32.mrb[0].mxu0
    %v4238 = vadd.f32 %v4197, %v4237
    %v4239 = vpop.f32.mrb[0].mxu0
    %v4240 = vpop.f32.mrb[0].mxu0
    %v4241 = vadd.f32 %v4200, %v4240
    %v4242 = vpop.f32.mrb[0].mxu0
    %4243 = vdwg.mxu0
    %4244 = vmatprep.subr.bf16.mxu0 0
    %4245 = vmatpush1.bf16.msra.mxu0 %v4115
    %4246 = vmatprep.subr.bf16.mxu0 0
    %4247 = vmatpush1.bf16.msra.mxu0 %v4116
    %4248 = vmatprep.subr.bf16.mxu0 0
    %4249 = vmatpush1.bf16.msra.mxu0 %v4117
    %4250 = vmatprep.subr.bf16.mxu0 0
    %4251 = vmatpush1.bf16.msra.mxu0 %v4118
    %4252 = vmatprep.subr.bf16.mxu0 0
    %4253 = vmatpush1.bf16.msra.mxu0 %v4119
    %4254 = vmatprep.subr.bf16.mxu0 0
    %4255 = vmatpush1.bf16.msra.mxu0 %v4120
    %4256 = vmatprep.subr.bf16.mxu0 0
    %4257 = vmatpush1.bf16.msra.mxu0 %v4121
    %4258 = vmatprep.subr.bf16.mxu0 0
    %4259 = vmatpush1.bf16.msra.mxu0 %v4122
    %4260 = vmatprep.subr.bf16.mxu0 0
    %4261 = vmatpush1.bf16.msra.mxu0 %v4123
    %4262 = vmatprep.subr.bf16.mxu0 0
    %4263 = vmatpush1.bf16.msra.mxu0 %v4124
    %4264 = vmatprep.subr.bf16.mxu0 0
    %4265 = vmatpush1.bf16.msra.mxu0 %v4125
    %4266 = vmatprep.subr.bf16.mxu0 0
    %4267 = vmatpush1.bf16.msra.mxu0 %v4126
    %4268 = vmatprep.subr.bf16.mxu0 0
    %4269 = vmatpush1.bf16.msra.mxu0 %v4127
    %4270 = vmatprep.subr.bf16.mxu0 0
    %4271 = vmatpush1.bf16.msra.mxu0 %v4128
    %4272 = vmatprep.subr.bf16.mxu0 0
    %4273 = vmatpush1.bf16.msra.mxu0 %v4129
    %4274 = vmatprep.subr.bf16.mxu0 0
    %4275 = vmatpush1.bf16.msra.mxu0 %v4130
    %4276 = vmatprep.mubr.bf16.mxu0 %v4153
    %4277 = vmatmul.mubr.bf16.gmra.mrb[0].mxu0 %v4152
    %v4278 = vpop.f32.mrb[0].mxu0
    %v4279 = vadd.f32 %v4238, %v4278
    %v4280 = vpop.f32.mrb[0].mxu0
    %v4281 = vpop.f32.mrb[0].mxu0
    %v4282 = vadd.f32 %v4241, %v4281
    %v4283 = vpop.f32.mrb[0].mxu0
    %4284 = vdwg.mxu0
    %4285 = vmatprep.subr.bf16.mxu0 0
    %4286 = vmatpush1.bf16.msra.mxu0 %v4131
    %4287 = vmatprep.subr.bf16.mxu0 0
    %4288 = vmatpush1.bf16.msra.mxu0 %v4132
    %4289 = vmatprep.subr.bf16.mxu0 0
    %4290 = vmatpush1.bf16.msra.mxu0 %v4133
    %4291 = vmatprep.subr.bf16.mxu0 0
    %4292 = vmatpush1.bf16.msra.mxu0 %v4134
    %4293 = vmatprep.subr.bf16.mxu0 0
    %4294 = vmatpush1.bf16.msra.mxu0 %v4135
    %4295 = vmatprep.subr.bf16.mxu0 0
    %4296 = vmatpush1.bf16.msra.mxu0 %v4136
    %4297 = vmatprep.subr.bf16.mxu0 0
    %4298 = vmatpush1.bf16.msra.mxu0 %v4137
    %4299 = vmatprep.subr.bf16.mxu0 0
    %4300 = vmatpush1.bf16.msra.mxu0 %v4138
    %4301 = vmatprep.subr.bf16.mxu0 0
    %4302 = vmatpush1.bf16.msra.mxu0 %v4139
    %4303 = vmatprep.subr.bf16.mxu0 0
    %4304 = vmatpush1.bf16.msra.mxu0 %v4140
    %4305 = vmatprep.subr.bf16.mxu0 0
    %4306 = vmatpush1.bf16.msra.mxu0 %v4141
    %4307 = vmatprep.subr.bf16.mxu0 0
    %4308 = vmatpush1.bf16.msra.mxu0 %v4142
    %4309 = vmatprep.subr.bf16.mxu0 0
    %4310 = vmatpush1.bf16.msra.mxu0 %v4143
    %4311 = vmatprep.subr.bf16.mxu0 0
    %4312 = vmatpush1.bf16.msra.mxu0 %v4144
    %4313 = vmatprep.subr.bf16.mxu0 0
    %4314 = vmatpush1.bf16.msra.mxu0 %v4145
    %4315 = vmatprep.subr.bf16.mxu0 0
    %4316 = vmatpush1.bf16.msra.mxu0 %v4146
    %4317 = vmatprep.mubr.bf16.mxu0 %v4155
    %4318 = vmatmul.mubr.bf16.gmra.mrb[0].mxu0 %v4154
    %v4319 = vpop.f32.mrb[0].mxu0
    %v4320 = vadd.f32 %v4279, %v4319
    %v4321 = vpop.f32.mrb[0].mxu0
    %v4322 = vpop.f32.mrb[0].mxu0
    %v4323 = vadd.f32 %v4282, %v4322
    %v4324 = vpop.f32.mrb[0].mxu0
    %4325 = vdwg.mxu0
    %v4326 = vmax.f32 %v4320, 0.0
    %v4327 = vmax.f32 %v4323, 0.0
    %v4328 = vld [vmem:[#allocation4 + $0x240] sm:$0xff]
    %v4329 = vld [vmem:[#allocation4 + $0x248] sm:$0xff]
    %v4330 = vld [vmem:[#allocation4 + $0x250] sm:$0xff]
    %v4331 = vld [vmem:[#allocation4 + $0x258] sm:$0xff]
    %v4332 = vld [vmem:[#allocation4 + $0x260] sm:$0xff]
    %v4333 = vld [vmem:[#allocation4 + $0x268] sm:$0xff]
    %v4334 = vld [vmem:[#allocation4 + $0x270] sm:$0xff]
    %v4335 = vld [vmem:[#allocation4 + $0x278] sm:$0xff]
    %v4336 = vld [vmem:[#allocation4 + $0x280] sm:$0xff]
    %v4337 = vld [vmem:[#allocation4 + $0x288] sm:$0xff]
    %v4338 = vld [vmem:[#allocation4 + $0x290] sm:$0xff]
    %v4339 = vld [vmem:[#allocation4 + $0x298] sm:$0xff]
    %v4340 = vld [vmem:[#allocation4 + $0x2a0] sm:$0xff]
    %v4341 = vld [vmem:[#allocation4 + $0x2a8] sm:$0xff]
    %v4342 = vld [vmem:[#allocation4 + $0x2b0] sm:$0xff]
    %v4343 = vld [vmem:[#allocation4 + $0x2b8] sm:$0xff]
    %v4344 = vld [vmem:[#allocation4 + $0x2c0] sm:$0xff]
    %v4345 = vld [vmem:[#allocation4 + $0x2c8] sm:$0xff]
    %v4346 = vld [vmem:[#allocation4 + $0x2d0] sm:$0xff]
    %v4347 = vld [vmem:[#allocation4 + $0x2d8] sm:$0xff]
    %v4348 = vld [vmem:[#allocation4 + $0x2e0] sm:$0xff]
    %v4349 = vld [vmem:[#allocation4 + $0x2e8] sm:$0xff]
    %v4350 = vld [vmem:[#allocation4 + $0x2f0] sm:$0xff]
    %v4351 = vld [vmem:[#allocation4 + $0x2f8] sm:$0xff]
    %v4352 = vld [vmem:[#allocation4 + $0x300] sm:$0xff]
    %v4353 = vld [vmem:[#allocation4 + $0x308] sm:$0xff]
    %v4354 = vld [vmem:[#allocation4 + $0x310] sm:$0xff]
    %v4355 = vld [vmem:[#allocation4 + $0x318] sm:$0xff]
    %v4356 = vld [vmem:[#allocation4 + $0x320] sm:$0xff]
    %v4357 = vld [vmem:[#allocation4 + $0x328] sm:$0xff]
    %v4358 = vld [vmem:[#allocation4 + $0x330] sm:$0xff]
    %v4359 = vld [vmem:[#allocation4 + $0x338] sm:$0xff]
    %v4360 = vld [vmem:[#allocation4 + $0x340] sm:$0xff]
    %v4361 = vld [vmem:[#allocation4 + $0x348] sm:$0xff]
    %v4362 = vld [vmem:[#allocation4 + $0x350] sm:$0xff]
    %v4363 = vld [vmem:[#allocation4 + $0x358] sm:$0xff]
    %v4364 = vld [vmem:[#allocation4 + $0x360] sm:$0xff]
    %v4365 = vld [vmem:[#allocation4 + $0x368] sm:$0xff]
    %v4366 = vld [vmem:[#allocation4 + $0x370] sm:$0xff]
    %v4367 = vld [vmem:[#allocation4 + $0x378] sm:$0xff]
    %v4368 = vld [vmem:[#allocation4 + $0x380] sm:$0xff]
    %v4369 = vld [vmem:[#allocation4 + $0x388] sm:$0xff]
    %v4370 = vld [vmem:[#allocation4 + $0x390] sm:$0xff]
    %v4371 = vld [vmem:[#allocation4 + $0x398] sm:$0xff]
    %v4372 = vld [vmem:[#allocation4 + $0x3a0] sm:$0xff]
    %v4373 = vld [vmem:[#allocation4 + $0x3a8] sm:$0xff]
    %v4374 = vld [vmem:[#allocation4 + $0x3b0] sm:$0xff]
    %v4375 = vld [vmem:[#allocation4 + $0x3b8] sm:$0xff]
    %v4376 = vld [vmem:[#allocation4 + $0x3c0] sm:$0xff]
    %v4377 = vld [vmem:[#allocation4 + $0x3c8] sm:$0xff]
    %v4378 = vld [vmem:[#allocation4 + $0x3d0] sm:$0xff]
    %v4379 = vld [vmem:[#allocation4 + $0x3d8] sm:$0xff]
    %v4380 = vld [vmem:[#allocation4 + $0x3e0] sm:$0xff]
    %v4381 = vld [vmem:[#allocation4 + $0x3e8] sm:$0xff]
    %v4382 = vld [vmem:[#allocation4 + $0x3f0] sm:$0xff]
    %v4383 = vld [vmem:[#allocation4 + $0x3f8] sm:$0xff]
    %v4384 = vld [vmem:[#allocation4 + $0x400] sm:$0xff]
    %v4385 = vld [vmem:[#allocation4 + $0x408] sm:$0xff]
    %v4386 = vld [vmem:[#allocation4 + $0x410] sm:$0xff]
    %v4387 = vld [vmem:[#allocation4 + $0x418] sm:$0xff]
    %v4388 = vld [vmem:[#allocation4 + $0x420] sm:$0xff]
    %v4389 = vld [vmem:[#allocation4 + $0x428] sm:$0xff]
    %v4390 = vld [vmem:[#allocation4 + $0x430] sm:$0xff]
    %v4391 = vld [vmem:[#allocation4 + $0x438] sm:$0xff]
    %v4392 = vpack.c.bf16 %v3758, %v3757
    %v4393 = vld [vmem:[#allocation4 + $0x440] sm:$0xff]
    %v4394 = vld [vmem:[#allocation4 + $0x448] sm:$0xff]
    %v4395 = vld [vmem:[#allocation4 + $0x450] sm:$0xff]
    %v4396 = vld [vmem:[#allocation4 + $0x458] sm:$0xff]
    %v4397 = vld [vmem:[#allocation4 + $0x460] sm:$0xff]
    %v4398 = vld [vmem:[#allocation4 + $0x468] sm:$0xff]
    %v4399 = vld [vmem:[#allocation4 + $0x470] sm:$0xff]
    %v4400 = vld [vmem:[#allocation4 + $0x478] sm:$0xff]
    %v4401 = vld [vmem:[#allocation4 + $0x480] sm:$0xff]
    %v4402 = vld [vmem:[#allocation4 + $0x488] sm:$0xff]
    %v4403 = vld [vmem:[#allocation4 + $0x490] sm:$0xff]
    %v4404 = vld [vmem:[#allocation4 + $0x498] sm:$0xff]
    %v4405 = vld [vmem:[#allocation4 + $0x4a0] sm:$0xff]
    %v4406 = vld [vmem:[#allocation4 + $0x4a8] sm:$0xff]
    %v4407 = vld [vmem:[#allocation4 + $0x4b0] sm:$0xff]
    %v4408 = vld [vmem:[#allocation4 + $0x4b8] sm:$0xff]
    %v4409 = vld [vmem:[#allocation4 + $0x4c0] sm:$0xff]
    %v4410 = vld [vmem:[#allocation4 + $0x4c8] sm:$0xff]
    %v4411 = vld [vmem:[#allocation4 + $0x4d0] sm:$0xff]
    %v4412 = vld [vmem:[#allocation4 + $0x4d8] sm:$0xff]
    %v4413 = vld [vmem:[#allocation4 + $0x4e0] sm:$0xff]
    %v4414 = vld [vmem:[#allocation4 + $0x4e8] sm:$0xff]
    %v4415 = vld [vmem:[#allocation4 + $0x4f0] sm:$0xff]
    %v4416 = vld [vmem:[#allocation4 + $0x4f8] sm:$0xff]
    %v4417 = vld [vmem:[#allocation4 + $0x500] sm:$0xff]
    %v4418 = vld [vmem:[#allocation4 + $0x508] sm:$0xff]
    %v4419 = vld [vmem:[#allocation4 + $0x510] sm:$0xff]
    %v4420 = vld [vmem:[#allocation4 + $0x518] sm:$0xff]
    %v4421 = vld [vmem:[#allocation4 + $0x520] sm:$0xff]
    %v4422 = vld [vmem:[#allocation4 + $0x528] sm:$0xff]
    %v4423 = vld [vmem:[#allocation4 + $0x530] sm:$0xff]
    %v4424 = vld [vmem:[#allocation4 + $0x538] sm:$0xff]
    %v4425 = vld [vmem:[#allocation4 + $0x540] sm:$0xff]
    %v4426 = vld [vmem:[#allocation4 + $0x548] sm:$0xff]
    %v4427 = vld [vmem:[#allocation4 + $0x550] sm:$0xff]
    %v4428 = vld [vmem:[#allocation4 + $0x558] sm:$0xff]
    %v4429 = vld [vmem:[#allocation4 + $0x560] sm:$0xff]
    %v4430 = vld [vmem:[#allocation4 + $0x568] sm:$0xff]
    %v4431 = vld [vmem:[#allocation4 + $0x570] sm:$0xff]
    %v4432 = vld [vmem:[#allocation4 + $0x578] sm:$0xff]
    %v4433 = vld [vmem:[#allocation4 + $0x580] sm:$0xff]
    %v4434 = vld [vmem:[#allocation4 + $0x588] sm:$0xff]
    %v4435 = vld [vmem:[#allocation4 + $0x590] sm:$0xff]
    %v4436 = vld [vmem:[#allocation4 + $0x598] sm:$0xff]
    %v4437 = vld [vmem:[#allocation4 + $0x5a0] sm:$0xff]
    %v4438 = vld [vmem:[#allocation4 + $0x5a8] sm:$0xff]
    %v4439 = vld [vmem:[#allocation4 + $0x5b0] sm:$0xff]
    %v4440 = vld [vmem:[#allocation4 + $0x5b8] sm:$0xff]
    %v4441 = vld [vmem:[#allocation4 + $0x5c0] sm:$0xff]
    %v4442 = vld [vmem:[#allocation4 + $0x5c8] sm:$0xff]
    %v4443 = vld [vmem:[#allocation4 + $0x5d0] sm:$0xff]
    %v4444 = vld [vmem:[#allocation4 + $0x5d8] sm:$0xff]
    %v4445 = vld [vmem:[#allocation4 + $0x5e0] sm:$0xff]
    %v4446 = vld [vmem:[#allocation4 + $0x5e8] sm:$0xff]
    %v4447 = vld [vmem:[#allocation4 + $0x5f0] sm:$0xff]
    %v4448 = vld [vmem:[#allocation4 + $0x5f8] sm:$0xff]
    %v4449 = vld [vmem:[#allocation4 + $0x600] sm:$0xff]
    %v4450 = vld [vmem:[#allocation4 + $0x608] sm:$0xff]
    %v4451 = vld [vmem:[#allocation4 + $0x610] sm:$0xff]
    %v4452 = vld [vmem:[#allocation4 + $0x618] sm:$0xff]
    %v4453 = vld [vmem:[#allocation4 + $0x620] sm:$0xff]
    %v4454 = vld [vmem:[#allocation4 + $0x628] sm:$0xff]
    %v4455 = vld [vmem:[#allocation4 + $0x630] sm:$0xff]
    %v4456 = vld [vmem:[#allocation4 + $0x638] sm:$0xff]
    %v4457 = vpack.c.bf16 %v4327, %v4326
    %4458 = vmatprep.subr.bf16.mxu0 %v4394
    %4459 = vmatpush1.bf16.msra.mxu0 %v4393
    %4460 = vmatprep.subr.bf16.mxu0 %v4402
    %4461 = vmatpush1.bf16.msra.mxu0 %v4401
    %4462 = vmatprep.subr.bf16.mxu0 %v4410
    %4463 = vmatpush1.bf16.msra.mxu0 %v4409
    %4464 = vmatprep.subr.bf16.mxu0 %v4418
    %4465 = vmatpush1.bf16.msra.mxu0 %v4417
    %4466 = vmatprep.subr.bf16.mxu0 %v4426
    %4467 = vmatpush1.bf16.msra.mxu0 %v4425
    %4468 = vmatprep.subr.bf16.mxu0 %v4434
    %4469 = vmatpush1.bf16.msra.mxu0 %v4433
    %4470 = vmatprep.subr.bf16.mxu0 %v4442
    %4471 = vmatpush1.bf16.msra.mxu0 %v4441
    %4472 = vmatprep.subr.bf16.mxu0 %v4450
    %4473 = vmatpush1.bf16.msra.mxu0 %v4449
    %4474 = vmatprep.subr.bf16.mxu0 0
    %4475 = vmatpush1.bf16.msra.mxu0 0
    %4476 = vmatprep.subr.bf16.mxu0 0
    %4477 = vmatpush1.bf16.msra.mxu0 0
    %4478 = vmatprep.subr.bf16.mxu0 0
    %4479 = vmatpush1.bf16.msra.mxu0 0
    %4480 = vmatprep.subr.bf16.mxu0 0
    %4481 = vmatpush1.bf16.msra.mxu0 0
    %4482 = vmatprep.subr.bf16.mxu0 0
    %4483 = vmatpush1.bf16.msra.mxu0 0
    %4484 = vmatprep.subr.bf16.mxu0 0
    %4485 = vmatpush1.bf16.msra.mxu0 0
    %4486 = vmatprep.subr.bf16.mxu0 0
    %4487 = vmatpush1.bf16.msra.mxu0 0
    %4488 = vmatprep.subr.bf16.mxu0 0
    %4489 = vmatpush1.bf16.msra.mxu0 0
    %4490 = vmatprep.mubr.bf16.mxu0 0
    %4491 = vmatmul.mubr.bf16.gmra.mrb[0].mxu0 %v4457
    %v4492 = vpop.f32.mrb[0].mxu0
    %v4493 = vadd.f32 0.0, %v4492
    %v4494 = vpop.f32.mrb[0].mxu0
    %v4495 = vadd.f32 0.0, %v4494
    %v4496 = vpop.f32.mrb[0].mxu0
    %v4497 = vadd.f32 0.0, %v4496
    %v4498 = vpop.f32.mrb[0].mxu0
    %v4499 = vadd.f32 0.0, %v4498
    %4500 = vdwg.mxu0
    %4501 = vmatprep.subr.bf16.mxu0 %v4396
    %4502 = vmatpush1.bf16.msra.mxu0 %v4395
    %4503 = vmatprep.subr.bf16.mxu0 %v4404
    %4504 = vmatpush1.bf16.msra.mxu0 %v4403
    %4505 = vmatprep.subr.bf16.mxu0 %v4412
    %4506 = vmatpush1.bf16.msra.mxu0 %v4411
    %4507 = vmatprep.subr.bf16.mxu0 %v4420
    %4508 = vmatpush1.bf16.msra.mxu0 %v4419
    %4509 = vmatprep.subr.bf16.mxu0 %v4428
    %4510 = vmatpush1.bf16.msra.mxu0 %v4427
    %4511 = vmatprep.subr.bf16.mxu0 %v4436
    %4512 = vmatpush1.bf16.msra.mxu0 %v4435
    %4513 = vmatprep.subr.bf16.mxu0 %v4444
    %4514 = vmatpush1.bf16.msra.mxu0 %v4443
    %4515 = vmatprep.subr.bf16.mxu0 %v4452
    %4516 = vmatpush1.bf16.msra.mxu0 %v4451
    %4517 = vmatprep.subr.bf16.mxu0 0
    %4518 = vmatpush1.bf16.msra.mxu0 0
    %4519 = vmatprep.subr.bf16.mxu0 0
    %4520 = vmatpush1.bf16.msra.mxu0 0
    %4521 = vmatprep.subr.bf16.mxu0 0
    %4522 = vmatpush1.bf16.msra.mxu0 0
    %4523 = vmatprep.subr.bf16.mxu0 0
    %4524 = vmatpush1.bf16.msra.mxu0 0
    %4525 = vmatprep.subr.bf16.mxu0 0
    %4526 = vmatpush1.bf16.msra.mxu0 0
    %4527 = vmatprep.subr.bf16.mxu0 0
    %4528 = vmatpush1.bf16.msra.mxu0 0
    %4529 = vmatprep.subr.bf16.mxu0 0
    %4530 = vmatpush1.bf16.msra.mxu0 0
    %4531 = vmatprep.subr.bf16.mxu0 0
    %4532 = vmatpush1.bf16.msra.mxu0 0
    %4533 = vmatprep.mubr.bf16.mxu0 0
    %4534 = vmatmul.mubr.bf16.gmra.mrb[0].mxu0 %v4457
    %v4535 = vpop.f32.mrb[0].mxu0
    %v4536 = vadd.f32 0.0, %v4535
    %v4537 = vpop.f32.mrb[0].mxu0
    %v4538 = vadd.f32 0.0, %v4537
    %v4539 = vpop.f32.mrb[0].mxu0
    %v4540 = vadd.f32 0.0, %v4539
    %v4541 = vpop.f32.mrb[0].mxu0
    %v4542 = vadd.f32 0.0, %v4541
    %4543 = vdwg.mxu0
    %4544 = vmatprep.subr.bf16.mxu0 %v4398
    %4545 = vmatpush1.bf16.msra.mxu0 %v4397
    %4546 = vmatprep.subr.bf16.mxu0 %v4406
    %4547 = vmatpush1.bf16.msra.mxu0 %v4405
    %4548 = vmatprep.subr.bf16.mxu0 %v4414
    %4549 = vmatpush1.bf16.msra.mxu0 %v4413
    %4550 = vmatprep.subr.bf16.mxu0 %v4422
    %4551 = vmatpush1.bf16.msra.mxu0 %v4421
    %4552 = vmatprep.subr.bf16.mxu0 %v4430
    %4553 = vmatpush1.bf16.msra.mxu0 %v4429
    %4554 = vmatprep.subr.bf16.mxu0 %v4438
    %4555 = vmatpush1.bf16.msra.mxu0 %v4437
    %4556 = vmatprep.subr.bf16.mxu0 %v4446
    %4557 = vmatpush1.bf16.msra.mxu0 %v4445
    %4558 = vmatprep.subr.bf16.mxu0 %v4454
    %4559 = vmatpush1.bf16.msra.mxu0 %v4453
    %4560 = vmatprep.subr.bf16.mxu0 0
    %4561 = vmatpush1.bf16.msra.mxu0 0
    %4562 = vmatprep.subr.bf16.mxu0 0
    %4563 = vmatpush1.bf16.msra.mxu0 0
    %4564 = vmatprep.subr.bf16.mxu0 0
    %4565 = vmatpush1.bf16.msra.mxu0 0
    %4566 = vmatprep.subr.bf16.mxu0 0
    %4567 = vmatpush1.bf16.msra.mxu0 0
    %4568 = vmatprep.subr.bf16.mxu0 0
    %4569 = vmatpush1.bf16.msra.mxu0 0
    %4570 = vmatprep.subr.bf16.mxu0 0
    %4571 = vmatpush1.bf16.msra.mxu0 0
    %4572 = vmatprep.subr.bf16.mxu0 0
    %4573 = vmatpush1.bf16.msra.mxu0 0
    %4574 = vmatprep.subr.bf16.mxu0 0
    %4575 = vmatpush1.bf16.msra.mxu0 0
    %4576 = vmatprep.mubr.bf16.mxu0 0
    %4577 = vmatmul.mubr.bf16.gmra.mrb[0].mxu0 %v4457
    %v4578 = vpop.f32.mrb[0].mxu0
    %v4579 = vadd.f32 0.0, %v4578
    %v4580 = vpop.f32.mrb[0].mxu0
    %v4581 = vadd.f32 0.0, %v4580
    %v4582 = vpop.f32.mrb[0].mxu0
    %v4583 = vadd.f32 0.0, %v4582
    %v4584 = vpop.f32.mrb[0].mxu0
    %v4585 = vadd.f32 0.0, %v4584
    %4586 = vdwg.mxu0
    %4587 = vmatprep.subr.bf16.mxu0 %v4400
    %4588 = vmatpush1.bf16.msra.mxu0 %v4399
    %4589 = vmatprep.subr.bf16.mxu0 %v4408
    %4590 = vmatpush1.bf16.msra.mxu0 %v4407
    %4591 = vmatprep.subr.bf16.mxu0 %v4416
    %4592 = vmatpush1.bf16.msra.mxu0 %v4415
    %4593 = vmatprep.subr.bf16.mxu0 %v4424
    %4594 = vmatpush1.bf16.msra.mxu0 %v4423
    %4595 = vmatprep.subr.bf16.mxu0 %v4432
    %4596 = vmatpush1.bf16.msra.mxu0 %v4431
    %4597 = vmatprep.subr.bf16.mxu0 %v4440
    %4598 = vmatpush1.bf16.msra.mxu0 %v4439
    %4599 = vmatprep.subr.bf16.mxu0 %v4448
    %4600 = vmatpush1.bf16.msra.mxu0 %v4447
    %4601 = vmatprep.subr.bf16.mxu0 %v4456
    %4602 = vmatpush1.bf16.msra.mxu0 %v4455
    %4603 = vmatprep.subr.bf16.mxu0 0
    %4604 = vmatpush1.bf16.msra.mxu0 0
    %4605 = vmatprep.subr.bf16.mxu0 0
    %4606 = vmatpush1.bf16.msra.mxu0 0
    %4607 = vmatprep.subr.bf16.mxu0 0
    %4608 = vmatpush1.bf16.msra.mxu0 0
    %4609 = vmatprep.subr.bf16.mxu0 0
    %4610 = vmatpush1.bf16.msra.mxu0 0
    %4611 = vmatprep.subr.bf16.mxu0 0
    %4612 = vmatpush1.bf16.msra.mxu0 0
    %4613 = vmatprep.subr.bf16.mxu0 0
    %4614 = vmatpush1.bf16.msra.mxu0 0
    %4615 = vmatprep.subr.bf16.mxu0 0
    %4616 = vmatpush1.bf16.msra.mxu0 0
    %4617 = vmatprep.subr.bf16.mxu0 0
    %4618 = vmatpush1.bf16.msra.mxu0 0
    %4619 = vmatprep.mubr.bf16.mxu0 0
    %4620 = vmatmul.mubr.bf16.gmra.mrb[0].mxu0 %v4457
    %v4621 = vpop.f32.mrb[0].mxu0
    %v4622 = vadd.f32 0.0, %v4621
    %v4623 = vpop.f32.mrb[0].mxu0
    %v4624 = vadd.f32 0.0, %v4623
    %v4625 = vpop.f32.mrb[0].mxu0
    %v4626 = vadd.f32 0.0, %v4625
    %v4627 = vpop.f32.mrb[0].mxu0
    %v4628 = vadd.f32 0.0, %v4627
    %4629 = vdwg.mxu0
    %4630 = vmatprep.subr.bf16.mxu0 %v4329
    %4631 = vmatpush1.bf16.msra.mxu0 %v4328
    %4632 = vmatprep.subr.bf16.mxu0 %v4337
    %4633 = vmatpush1.bf16.msra.mxu0 %v4336
    %4634 = vmatprep.subr.bf16.mxu0 %v4345
    %4635 = vmatpush1.bf16.msra.mxu0 %v4344
    %4636 = vmatprep.subr.bf16.mxu0 %v4353
    %4637 = vmatpush1.bf16.msra.mxu0 %v4352
    %4638 = vmatprep.subr.bf16.mxu0 %v4361
    %4639 = vmatpush1.bf16.msra.mxu0 %v4360
    %4640 = vmatprep.subr.bf16.mxu0 %v4369
    %4641 = vmatpush1.bf16.msra.mxu0 %v4368
    %4642 = vmatprep.subr.bf16.mxu0 %v4377
    %4643 = vmatpush1.bf16.msra.mxu0 %v4376
    %4644 = vmatprep.subr.bf16.mxu0 %v4385
    %4645 = vmatpush1.bf16.msra.mxu0 %v4384
    %4646 = vmatprep.subr.bf16.mxu0 0
    %4647 = vmatpush1.bf16.msra.mxu0 0
    %4648 = vmatprep.subr.bf16.mxu0 0
    %4649 = vmatpush1.bf16.msra.mxu0 0
    %4650 = vmatprep.subr.bf16.mxu0 0
    %4651 = vmatpush1.bf16.msra.mxu0 0
    %4652 = vmatprep.subr.bf16.mxu0 0
    %4653 = vmatpush1.bf16.msra.mxu0 0
    %4654 = vmatprep.subr.bf16.mxu0 0
    %4655 = vmatpush1.bf16.msra.mxu0 0
    %4656 = vmatprep.subr.bf16.mxu0 0
    %4657 = vmatpush1.bf16.msra.mxu0 0
    %4658 = vmatprep.subr.bf16.mxu0 0
    %4659 = vmatpush1.bf16.msra.mxu0 0
    %4660 = vmatprep.subr.bf16.mxu0 0
    %4661 = vmatpush1.bf16.msra.mxu0 0
    %4662 = vmatprep.mubr.bf16.mxu0 0
    %4663 = vmatmul.mubr.bf16.gmra.mrb[0].mxu0 %v4392
    %v4664 = vpop.f32.mrb[0].mxu0
    %v4665 = vadd.f32 %v4493, %v4664
    %v4666 = vpop.f32.mrb[0].mxu0
    %v4667 = vadd.f32 %v4495, %v4666
    %v4668 = vpop.f32.mrb[0].mxu0
    %v4669 = vadd.f32 %v4497, %v4668
    %v4670 = vpop.f32.mrb[0].mxu0
    %v4671 = vadd.f32 %v4499, %v4670
    %4672 = vdwg.mxu0
    %4673 = vmatprep.subr.bf16.mxu0 %v4331
    %4674 = vmatpush1.bf16.msra.mxu0 %v4330
    %4675 = vmatprep.subr.bf16.mxu0 %v4339
    %4676 = vmatpush1.bf16.msra.mxu0 %v4338
    %4677 = vmatprep.subr.bf16.mxu0 %v4347
    %4678 = vmatpush1.bf16.msra.mxu0 %v4346
    %4679 = vmatprep.subr.bf16.mxu0 %v4355
    %4680 = vmatpush1.bf16.msra.mxu0 %v4354
    %4681 = vmatprep.subr.bf16.mxu0 %v4363
    %4682 = vmatpush1.bf16.msra.mxu0 %v4362
    %4683 = vmatprep.subr.bf16.mxu0 %v4371
    %4684 = vmatpush1.bf16.msra.mxu0 %v4370
    %4685 = vmatprep.subr.bf16.mxu0 %v4379
    %4686 = vmatpush1.bf16.msra.mxu0 %v4378
    %4687 = vmatprep.subr.bf16.mxu0 %v4387
    %4688 = vmatpush1.bf16.msra.mxu0 %v4386
    %4689 = vmatprep.subr.bf16.mxu0 0
    %4690 = vmatpush1.bf16.msra.mxu0 0
    %4691 = vmatprep.subr.bf16.mxu0 0
    %4692 = vmatpush1.bf16.msra.mxu0 0
    %4693 = vmatprep.subr.bf16.mxu0 0
    %4694 = vmatpush1.bf16.msra.mxu0 0
    %4695 = vmatprep.subr.bf16.mxu0 0
    %4696 = vmatpush1.bf16.msra.mxu0 0
    %4697 = vmatprep.subr.bf16.mxu0 0
    %4698 = vmatpush1.bf16.msra.mxu0 0
    %4699 = vmatprep.subr.bf16.mxu0 0
    %4700 = vmatpush1.bf16.msra.mxu0 0
    %4701 = vmatprep.subr.bf16.mxu0 0
    %4702 = vmatpush1.bf16.msra.mxu0 0
    %4703 = vmatprep.subr.bf16.mxu0 0
    %4704 = vmatpush1.bf16.msra.mxu0 0
    %4705 = vmatprep.mubr.bf16.mxu0 0
    %4706 = vmatmul.mubr.bf16.gmra.mrb[0].mxu0 %v4392
    %v4707 = vpop.f32.mrb[0].mxu0
    %v4708 = vadd.f32 %v4536, %v4707
    %v4709 = vpop.f32.mrb[0].mxu0
    %v4710 = vadd.f32 %v4538, %v4709
    %v4711 = vpop.f32.mrb[0].mxu0
    %v4712 = vadd.f32 %v4540, %v4711
    %v4713 = vpop.f32.mrb[0].mxu0
    %v4714 = vadd.f32 %v4542, %v4713
    %4715 = vdwg.mxu0
    %4716 = vmatprep.subr.bf16.mxu0 %v4333
    %4717 = vmatpush1.bf16.msra.mxu0 %v4332
    %4718 = vmatprep.subr.bf16.mxu0 %v4341
    %4719 = vmatpush1.bf16.msra.mxu0 %v4340
    %4720 = vmatprep.subr.bf16.mxu0 %v4349
    %4721 = vmatpush1.bf16.msra.mxu0 %v4348
    %4722 = vmatprep.subr.bf16.mxu0 %v4357
    %4723 = vmatpush1.bf16.msra.mxu0 %v4356
    %4724 = vmatprep.subr.bf16.mxu0 %v4365
    %4725 = vmatpush1.bf16.msra.mxu0 %v4364
    %4726 = vmatprep.subr.bf16.mxu0 %v4373
    %4727 = vmatpush1.bf16.msra.mxu0 %v4372
    %4728 = vmatprep.subr.bf16.mxu0 %v4381
    %4729 = vmatpush1.bf16.msra.mxu0 %v4380
    %4730 = vmatprep.subr.bf16.mxu0 %v4389
    %4731 = vmatpush1.bf16.msra.mxu0 %v4388
    %4732 = vmatprep.subr.bf16.mxu0 0
    %4733 = vmatpush1.bf16.msra.mxu0 0
    %4734 = vmatprep.subr.bf16.mxu0 0
    %4735 = vmatpush1.bf16.msra.mxu0 0
    %4736 = vmatprep.subr.bf16.mxu0 0
    %4737 = vmatpush1.bf16.msra.mxu0 0
    %4738 = vmatprep.subr.bf16.mxu0 0
    %4739 = vmatpush1.bf16.msra.mxu0 0
    %4740 = vmatprep.subr.bf16.mxu0 0
    %4741 = vmatpush1.bf16.msra.mxu0 0
    %4742 = vmatprep.subr.bf16.mxu0 0
    %4743 = vmatpush1.bf16.msra.mxu0 0
    %4744 = vmatprep.subr.bf16.mxu0 0
    %4745 = vmatpush1.bf16.msra.mxu0 0
    %4746 = vmatprep.subr.bf16.mxu0 0
    %4747 = vmatpush1.bf16.msra.mxu0 0
    %4748 = vmatprep.mubr.bf16.mxu0 0
    %4749 = vmatmul.mubr.bf16.gmra.mrb[0].mxu0 %v4392
    %v4750 = vpop.f32.mrb[0].mxu0
    %v4751 = vadd.f32 %v4579, %v4750
    %v4752 = vpop.f32.mrb[0].mxu0
    %v4753 = vadd.f32 %v4581, %v4752
    %v4754 = vpop.f32.mrb[0].mxu0
    %v4755 = vadd.f32 %v4583, %v4754
    %v4756 = vpop.f32.mrb[0].mxu0
    %v4757 = vadd.f32 %v4585, %v4756
    %4758 = vdwg.mxu0
    %4759 = vmatprep.subr.bf16.mxu0 %v4335
    %4760 = vmatpush1.bf16.msra.mxu0 %v4334
    %4761 = vmatprep.subr.bf16.mxu0 %v4343
    %4762 = vmatpush1.bf16.msra.mxu0 %v4342
    %4763 = vmatprep.subr.bf16.mxu0 %v4351
    %4764 = vmatpush1.bf16.msra.mxu0 %v4350
    %4765 = vmatprep.subr.bf16.mxu0 %v4359
    %4766 = vmatpush1.bf16.msra.mxu0 %v4358
    %4767 = vmatprep.subr.bf16.mxu0 %v4367
    %4768 = vmatpush1.bf16.msra.mxu0 %v4366
    %4769 = vmatprep.subr.bf16.mxu0 %v4375
    %4770 = vmatpush1.bf16.msra.mxu0 %v4374
    %4771 = vmatprep.subr.bf16.mxu0 %v4383
    %4772 = vmatpush1.bf16.msra.mxu0 %v4382
    %4773 = vmatprep.subr.bf16.mxu0 %v4391
    %4774 = vmatpush1.bf16.msra.mxu0 %v4390
    %4775 = vmatprep.subr.bf16.mxu0 0
    %4776 = vmatpush1.bf16.msra.mxu0 0
    %4777 = vmatprep.subr.bf16.mxu0 0
    %4778 = vmatpush1.bf16.msra.mxu0 0
    %4779 = vmatprep.subr.bf16.mxu0 0
    %4780 = vmatpush1.bf16.msra.mxu0 0
    %4781 = vmatprep.subr.bf16.mxu0 0
    %4782 = vmatpush1.bf16.msra.mxu0 0
    %4783 = vmatprep.subr.bf16.mxu0 0
    %4784 = vmatpush1.bf16.msra.mxu0 0
    %4785 = vmatprep.subr.bf16.mxu0 0
    %4786 = vmatpush1.bf16.msra.mxu0 0
    %4787 = vmatprep.subr.bf16.mxu0 0
    %4788 = vmatpush1.bf16.msra.mxu0 0
    %4789 = vmatprep.subr.bf16.mxu0 0
    %4790 = vmatpush1.bf16.msra.mxu0 0
    %4791 = vmatprep.mubr.bf16.mxu0 0
    %4792 = vmatmul.mubr.bf16.gmra.mrb[0].mxu0 %v4392
    %v4793 = vpop.f32.mrb[0].mxu0
    %v4794 = vadd.f32 %v4622, %v4793
    %v4795 = vpop.f32.mrb[0].mxu0
    %v4796 = vadd.f32 %v4624, %v4795
    %v4797 = vpop.f32.mrb[0].mxu0
    %v4798 = vadd.f32 %v4626, %v4797
    %v4799 = vpop.f32.mrb[0].mxu0
    %v4800 = vadd.f32 %v4628, %v4799
    %4801 = vdwg.mxu0
    %v4802 = vld [vmem:[#allocation16 + $0x21] sm:$0xff]
    %v4804 = vlaneseq
    %v4805 = vshrl.u32 %v4804, 7
    %v4806 = vsub.s32 0, %v4805
    %v4807 = vrot.slane %v4802, %v4806
    %v4808 = vlaneseq
    %v4809 = vshrl.u32 %v4808, 7
    %v4810 = vsub.s32 1, %v4809
    %v4811 = vrot.slane %v4802, %v4810
    %v4812 = vlaneseq
    %v4813 = vshrl.u32 %v4812, 7
    %v4814 = vsub.s32 2, %v4813
    %v4815 = vrot.slane %v4802, %v4814
    %v4816 = vlaneseq
    %v4817 = vshrl.u32 %v4816, 7
    %v4818 = vsub.s32 3, %v4817
    %v4819 = vrot.slane %v4802, %v4818
    %v4820 = vlaneseq
    %v4821 = vshrl.u32 %v4820, 7
    %v4822 = vsub.s32 4, %v4821
    %v4823 = vrot.slane %v4802, %v4822
    %v4824 = vlaneseq
    %v4825 = vshrl.u32 %v4824, 7
    %v4826 = vsub.s32 5, %v4825
    %v4827 = vrot.slane %v4802, %v4826
    %v4828 = vlaneseq
    %v4829 = vshrl.u32 %v4828, 7
    %v4830 = vsub.s32 6, %v4829
    %v4831 = vrot.slane %v4802, %v4830
    %v4832 = vlaneseq
    %v4833 = vshrl.u32 %v4832, 7
    %v4834 = vsub.s32 7, %v4833
    %v4835 = vrot.slane %v4802, %v4834
    %v4844 = vadd.f32 %v4665, %v4807
    %v4845 = vadd.f32 %v4667, %v4811
    %v4846 = vadd.f32 %v4708, %v4815
    %v4847 = vadd.f32 %v4710, %v4819
    %v4848 = vadd.f32 %v4751, %v4823
    %v4849 = vadd.f32 %v4753, %v4827
    %v4850 = vadd.f32 %v4794, %v4831
    %v4851 = vadd.f32 %v4796, %v4835
    %v4852 = vadd.f32 %v4669, %v4807
    %v4853 = vadd.f32 %v4671, %v4811
    %v4854 = vadd.f32 %v4712, %v4815
    %v4855 = vadd.f32 %v4714, %v4819
    %v4856 = vadd.f32 %v4755, %v4823
    %v4857 = vadd.f32 %v4757, %v4827
    %v4858 = vadd.f32 %v4798, %v4831
    %v4859 = vadd.f32 %v4800, %v4835
    %v4860 = vmax.f32 %v4844, 0.0
    %v4861 = vmax.f32 %v4845, 0.0
    %v4862 = vmax.f32 %v4846, 0.0
    %v4863 = vmax.f32 %v4847, 0.0
    %v4864 = vmax.f32 %v4848, 0.0
    %v4865 = vmax.f32 %v4849, 0.0
    %v4866 = vmax.f32 %v4850, 0.0
    %v4867 = vmax.f32 %v4851, 0.0
    %v4868 = vmax.f32 %v4852, 0.0
    %v4869 = vmax.f32 %v4853, 0.0
    %v4870 = vmax.f32 %v4854, 0.0
    %v4871 = vmax.f32 %v4855, 0.0
    %v4872 = vmax.f32 %v4856, 0.0
    %v4873 = vmax.f32 %v4857, 0.0
    %v4874 = vmax.f32 %v4858, 0.0
    %v4875 = vmax.f32 %v4859, 0.0
    %v4876 = vld [vmem:[#allocation5 + $0x200] sm:$0xff]
    %v4877 = vld [vmem:[#allocation5 + $0x208] sm:$0xff]
    %v4878 = vld [vmem:[#allocation5 + $0x210] sm:$0xff]
    %v4879 = vld [vmem:[#allocation5 + $0x218] sm:$0xff]
    %v4880 = vld [vmem:[#allocation5 + $0x220] sm:$0xff]
    %v4881 = vld [vmem:[#allocation5 + $0x228] sm:$0xff]
    %v4882 = vld [vmem:[#allocation5 + $0x230] sm:$0xff]
    %v4883 = vld [vmem:[#allocation5 + $0x238] sm:$0xff]
    %v4884 = vld [vmem:[#allocation5 + $0x240] sm:$0xff]
    %v4885 = vld [vmem:[#allocation5 + $0x248] sm:$0xff]
    %v4886 = vld [vmem:[#allocation5 + $0x250] sm:$0xff]
    %v4887 = vld [vmem:[#allocation5 + $0x258] sm:$0xff]
    %v4888 = vld [vmem:[#allocation5 + $0x260] sm:$0xff]
    %v4889 = vld [vmem:[#allocation5 + $0x268] sm:$0xff]
    %v4890 = vld [vmem:[#allocation5 + $0x270] sm:$0xff]
    %v4891 = vld [vmem:[#allocation5 + $0x278] sm:$0xff]
    %v4892 = vld [vmem:[#allocation5 + $0x280] sm:$0xff]
    %v4893 = vld [vmem:[#allocation5 + $0x288] sm:$0xff]
    %v4894 = vld [vmem:[#allocation5 + $0x290] sm:$0xff]
    %v4895 = vld [vmem:[#allocation5 + $0x298] sm:$0xff]
    %v4896 = vld [vmem:[#allocation5 + $0x2a0] sm:$0xff]
    %v4897 = vld [vmem:[#allocation5 + $0x2a8] sm:$0xff]
    %v4898 = vld [vmem:[#allocation5 + $0x2b0] sm:$0xff]
    %v4899 = vld [vmem:[#allocation5 + $0x2b8] sm:$0xff]
    %v4900 = vld [vmem:[#allocation5 + $0x2c0] sm:$0xff]
    %v4901 = vld [vmem:[#allocation5 + $0x2c8] sm:$0xff]
    %v4902 = vld [vmem:[#allocation5 + $0x2d0] sm:$0xff]
    %v4903 = vld [vmem:[#allocation5 + $0x2d8] sm:$0xff]
    %v4904 = vld [vmem:[#allocation5 + $0x2e0] sm:$0xff]
    %v4905 = vld [vmem:[#allocation5 + $0x2e8] sm:$0xff]
    %v4906 = vld [vmem:[#allocation5 + $0x2f0] sm:$0xff]
    %v4907 = vld [vmem:[#allocation5 + $0x2f8] sm:$0xff]
    %v4908 = vld [vmem:[#allocation5 + $0x300] sm:$0xff]
    %v4909 = vld [vmem:[#allocation5 + $0x308] sm:$0xff]
    %v4910 = vld [vmem:[#allocation5 + $0x310] sm:$0xff]
    %v4911 = vld [vmem:[#allocation5 + $0x318] sm:$0xff]
    %v4912 = vld [vmem:[#allocation5 + $0x320] sm:$0xff]
    %v4913 = vld [vmem:[#allocation5 + $0x328] sm:$0xff]
    %v4914 = vld [vmem:[#allocation5 + $0x330] sm:$0xff]
    %v4915 = vld [vmem:[#allocation5 + $0x338] sm:$0xff]
    %v4916 = vld [vmem:[#allocation5 + $0x340] sm:$0xff]
    %v4917 = vld [vmem:[#allocation5 + $0x348] sm:$0xff]
    %v4918 = vld [vmem:[#allocation5 + $0x350] sm:$0xff]
    %v4919 = vld [vmem:[#allocation5 + $0x358] sm:$0xff]
    %v4920 = vld [vmem:[#allocation5 + $0x360] sm:$0xff]
    %v4921 = vld [vmem:[#allocation5 + $0x368] sm:$0xff]
    %v4922 = vld [vmem:[#allocation5 + $0x370] sm:$0xff]
    %v4923 = vld [vmem:[#allocation5 + $0x378] sm:$0xff]
    %v4924 = vld [vmem:[#allocation5 + $0x380] sm:$0xff]
    %v4925 = vld [vmem:[#allocation5 + $0x388] sm:$0xff]
    %v4926 = vld [vmem:[#allocation5 + $0x390] sm:$0xff]
    %v4927 = vld [vmem:[#allocation5 + $0x398] sm:$0xff]
    %v4928 = vld [vmem:[#allocation5 + $0x3a0] sm:$0xff]
    %v4929 = vld [vmem:[#allocation5 + $0x3a8] sm:$0xff]
    %v4930 = vld [vmem:[#allocation5 + $0x3b0] sm:$0xff]
    %v4931 = vld [vmem:[#allocation5 + $0x3b8] sm:$0xff]
    %v4932 = vld [vmem:[#allocation5 + $0x3c0] sm:$0xff]
    %v4933 = vld [vmem:[#allocation5 + $0x3c8] sm:$0xff]
    %v4934 = vld [vmem:[#allocation5 + $0x3d0] sm:$0xff]
    %v4935 = vld [vmem:[#allocation5 + $0x3d8] sm:$0xff]
    %v4936 = vld [vmem:[#allocation5 + $0x3e0] sm:$0xff]
    %v4937 = vld [vmem:[#allocation5 + $0x3e8] sm:$0xff]
    %v4938 = vld [vmem:[#allocation5 + $0x3f0] sm:$0xff]
    %v4939 = vld [vmem:[#allocation5 + $0x3f8] sm:$0xff]
    %v4940 = vld [vmem:[#allocation16 + $0x29] sm:$0x1]
    %v4941 = vpack.c.bf16 %v4868, %v4860
    %v4942 = vpack.c.bf16 %v4869, %v4861
    %v4943 = vpack.c.bf16 %v4870, %v4862
    %v4944 = vpack.c.bf16 %v4871, %v4863
    %v4945 = vpack.c.bf16 %v4872, %v4864
    %v4946 = vpack.c.bf16 %v4873, %v4865
    %v4947 = vpack.c.bf16 %v4874, %v4866
    %v4948 = vpack.c.bf16 %v4875, %v4867
    %v4950 = vlaneseq
    %v4951 = vshrl.u32 %v4950, 7
    %v4952 = vsub.s32 0, %v4951
    %v4953 = vrot.slane %v4940, %v4952
    %4955 = vmatprep.subr.bf16.mxu0 0
    %4956 = vmatpush1.bf16.msra.mxu0 %v4876
    %4957 = vmatprep.subr.bf16.mxu0 0
    %4958 = vmatpush1.bf16.msra.mxu0 %v4877
    %4959 = vmatprep.subr.bf16.mxu0 0
    %4960 = vmatpush1.bf16.msra.mxu0 %v4878
    %4961 = vmatprep.subr.bf16.mxu0 0
    %4962 = vmatpush1.bf16.msra.mxu0 %v4879
    %4963 = vmatprep.subr.bf16.mxu0 0
    %4964 = vmatpush1.bf16.msra.mxu0 %v4880
    %4965 = vmatprep.subr.bf16.mxu0 0
    %4966 = vmatpush1.bf16.msra.mxu0 %v4881
    %4967 = vmatprep.subr.bf16.mxu0 0
    %4968 = vmatpush1.bf16.msra.mxu0 %v4882
    %4969 = vmatprep.subr.bf16.mxu0 0
    %4970 = vmatpush1.bf16.msra.mxu0 %v4883
    %4971 = vmatprep.subr.bf16.mxu0 0
    %4972 = vmatpush1.bf16.msra.mxu0 %v4884
    %4973 = vmatprep.subr.bf16.mxu0 0
    %4974 = vmatpush1.bf16.msra.mxu0 %v4885
    %4975 = vmatprep.subr.bf16.mxu0 0
    %4976 = vmatpush1.bf16.msra.mxu0 %v4886
    %4977 = vmatprep.subr.bf16.mxu0 0
    %4978 = vmatpush1.bf16.msra.mxu0 %v4887
    %4979 = vmatprep.subr.bf16.mxu0 0
    %4980 = vmatpush1.bf16.msra.mxu0 %v4888
    %4981 = vmatprep.subr.bf16.mxu0 0
    %4982 = vmatpush1.bf16.msra.mxu0 %v4889
    %4983 = vmatprep.subr.bf16.mxu0 0
    %4984 = vmatpush1.bf16.msra.mxu0 %v4890
    %4985 = vmatprep.subr.bf16.mxu0 0
    %4986 = vmatpush1.bf16.msra.mxu0 %v4891
    %4987 = vmatprep.mubr.bf16.mxu0 %v4942
    %4988 = vmatmul.mubr.bf16.gmra.mrb[0].mxu0 %v4941
    %v4989 = vpop.f32.mrb[0].mxu0
    %v4990 = vadd.f32 %v4953, %v4989
    %v4991 = vpop.f32.mrb[0].mxu0
    %v4992 = vpop.f32.mrb[0].mxu0
    %v4993 = vadd.f32 %v4953, %v4992
    %v4994 = vpop.f32.mrb[0].mxu0
    %4995 = vdwg.mxu0
    %4996 = vmatprep.subr.bf16.mxu0 0
    %4997 = vmatpush1.bf16.msra.mxu0 %v4892
    %4998 = vmatprep.subr.bf16.mxu0 0
    %4999 = vmatpush1.bf16.msra.mxu0 %v4893
    %5000 = vmatprep.subr.bf16.mxu0 0
    %5001 = vmatpush1.bf16.msra.mxu0 %v4894
    %5002 = vmatprep.subr.bf16.mxu0 0
    %5003 = vmatpush1.bf16.msra.mxu0 %v4895
    %5004 = vmatprep.subr.bf16.mxu0 0
    %5005 = vmatpush1.bf16.msra.mxu0 %v4896
    %5006 = vmatprep.subr.bf16.mxu0 0
    %5007 = vmatpush1.bf16.msra.mxu0 %v4897
    %5008 = vmatprep.subr.bf16.mxu0 0
    %5009 = vmatpush1.bf16.msra.mxu0 %v4898
    %5010 = vmatprep.subr.bf16.mxu0 0
    %5011 = vmatpush1.bf16.msra.mxu0 %v4899
    %5012 = vmatprep.subr.bf16.mxu0 0
    %5013 = vmatpush1.bf16.msra.mxu0 %v4900
    %5014 = vmatprep.subr.bf16.mxu0 0
    %5015 = vmatpush1.bf16.msra.mxu0 %v4901
    %5016 = vmatprep.subr.bf16.mxu0 0
    %5017 = vmatpush1.bf16.msra.mxu0 %v4902
    %5018 = vmatprep.subr.bf16.mxu0 0
    %5019 = vmatpush1.bf16.msra.mxu0 %v4903
    %5020 = vmatprep.subr.bf16.mxu0 0
    %5021 = vmatpush1.bf16.msra.mxu0 %v4904
    %5022 = vmatprep.subr.bf16.mxu0 0
    %5023 = vmatpush1.bf16.msra.mxu0 %v4905
    %5024 = vmatprep.subr.bf16.mxu0 0
    %5025 = vmatpush1.bf16.msra.mxu0 %v4906
    %5026 = vmatprep.subr.bf16.mxu0 0
    %5027 = vmatpush1.bf16.msra.mxu0 %v4907
    %5028 = vmatprep.mubr.bf16.mxu0 %v4944
    %5029 = vmatmul.mubr.bf16.gmra.mrb[0].mxu0 %v4943
    %v5030 = vpop.f32.mrb[0].mxu0
    %v5031 = vadd.f32 %v4990, %v5030
    %v5032 = vpop.f32.mrb[0].mxu0
    %v5033 = vpop.f32.mrb[0].mxu0
    %v5034 = vadd.f32 %v4993, %v5033
    %v5035 = vpop.f32.mrb[0].mxu0
    %5036 = vdwg.mxu0
    %5037 = vmatprep.subr.bf16.mxu0 0
    %5038 = vmatpush1.bf16.msra.mxu0 %v4908
    %5039 = vmatprep.subr.bf16.mxu0 0
    %5040 = vmatpush1.bf16.msra.mxu0 %v4909
    %5041 = vmatprep.subr.bf16.mxu0 0
    %5042 = vmatpush1.bf16.msra.mxu0 %v4910
    %5043 = vmatprep.subr.bf16.mxu0 0
    %5044 = vmatpush1.bf16.msra.mxu0 %v4911
    %5045 = vmatprep.subr.bf16.mxu0 0
    %5046 = vmatpush1.bf16.msra.mxu0 %v4912
    %5047 = vmatprep.subr.bf16.mxu0 0
    %5048 = vmatpush1.bf16.msra.mxu0 %v4913
    %5049 = vmatprep.subr.bf16.mxu0 0
    %5050 = vmatpush1.bf16.msra.mxu0 %v4914
    %5051 = vmatprep.subr.bf16.mxu0 0
    %5052 = vmatpush1.bf16.msra.mxu0 %v4915
    %5053 = vmatprep.subr.bf16.mxu0 0
    %5054 = vmatpush1.bf16.msra.mxu0 %v4916
    %5055 = vmatprep.subr.bf16.mxu0 0
    %5056 = vmatpush1.bf16.msra.mxu0 %v4917
    %5057 = vmatprep.subr.bf16.mxu0 0
    %5058 = vmatpush1.bf16.msra.mxu0 %v4918
    %5059 = vmatprep.subr.bf16.mxu0 0
    %5060 = vmatpush1.bf16.msra.mxu0 %v4919
    %5061 = vmatprep.subr.bf16.mxu0 0
    %5062 = vmatpush1.bf16.msra.mxu0 %v4920
    %5063 = vmatprep.subr.bf16.mxu0 0
    %5064 = vmatpush1.bf16.msra.mxu0 %v4921
    %5065 = vmatprep.subr.bf16.mxu0 0
    %5066 = vmatpush1.bf16.msra.mxu0 %v4922
    %5067 = vmatprep.subr.bf16.mxu0 0
    %5068 = vmatpush1.bf16.msra.mxu0 %v4923
    %5069 = vmatprep.mubr.bf16.mxu0 %v4946
    %5070 = vmatmul.mubr.bf16.gmra.mrb[0].mxu0 %v4945
    %v5071 = vpop.f32.mrb[0].mxu0
    %v5072 = vadd.f32 %v5031, %v5071
    %v5073 = vpop.f32.mrb[0].mxu0
    %v5074 = vpop.f32.mrb[0].mxu0
    %v5075 = vadd.f32 %v5034, %v5074
    %v5076 = vpop.f32.mrb[0].mxu0
    %5077 = vdwg.mxu0
    %5078 = vmatprep.subr.bf16.mxu0 0
    %5079 = vmatpush1.bf16.msra.mxu0 %v4924
    %5080 = vmatprep.subr.bf16.mxu0 0
    %5081 = vmatpush1.bf16.msra.mxu0 %v4925
    %5082 = vmatprep.subr.bf16.mxu0 0
    %5083 = vmatpush1.bf16.msra.mxu0 %v4926
    %5084 = vmatprep.subr.bf16.mxu0 0
    %5085 = vmatpush1.bf16.msra.mxu0 %v4927
    %5086 = vmatprep.subr.bf16.mxu0 0
    %5087 = vmatpush1.bf16.msra.mxu0 %v4928
    %5088 = vmatprep.subr.bf16.mxu0 0
    %5089 = vmatpush1.bf16.msra.mxu0 %v4929
    %5090 = vmatprep.subr.bf16.mxu0 0
    %5091 = vmatpush1.bf16.msra.mxu0 %v4930
    %5092 = vmatprep.subr.bf16.mxu0 0
    %5093 = vmatpush1.bf16.msra.mxu0 %v4931
    %5094 = vmatprep.subr.bf16.mxu0 0
    %5095 = vmatpush1.bf16.msra.mxu0 %v4932
    %5096 = vmatprep.subr.bf16.mxu0 0
    %5097 = vmatpush1.bf16.msra.mxu0 %v4933
    %5098 = vmatprep.subr.bf16.mxu0 0
    %5099 = vmatpush1.bf16.msra.mxu0 %v4934
    %5100 = vmatprep.subr.bf16.mxu0 0
    %5101 = vmatpush1.bf16.msra.mxu0 %v4935
    %5102 = vmatprep.subr.bf16.mxu0 0
    %5103 = vmatpush1.bf16.msra.mxu0 %v4936
    %5104 = vmatprep.subr.bf16.mxu0 0
    %5105 = vmatpush1.bf16.msra.mxu0 %v4937
    %5106 = vmatprep.subr.bf16.mxu0 0
    %5107 = vmatpush1.bf16.msra.mxu0 %v4938
    %5108 = vmatprep.subr.bf16.mxu0 0
    %5109 = vmatpush1.bf16.msra.mxu0 %v4939
    %5110 = vmatprep.mubr.bf16.mxu0 %v4948
    %5111 = vmatmul.mubr.bf16.gmra.mrb[0].mxu0 %v4947
    %v5112 = vpop.f32.mrb[0].mxu0
    %v5113 = vadd.f32 %v5072, %v5112
    %v5114 = vpop.f32.mrb[0].mxu0
    %v5115 = vpop.f32.mrb[0].mxu0
    %v5116 = vadd.f32 %v5075, %v5115
    %v5117 = vpop.f32.mrb[0].mxu0
    %5118 = vdwg.mxu0
    %v5119 = vmax.f32 %v5113, 0.0
    %v5120 = vmax.f32 %v5116, 0.0
    %v5121 = vld [vmem:[#allocation6] sm:$0xff]
    %v5122 = vld [vmem:[#allocation6 + $0x8] sm:$0xff]
    %v5123 = vld [vmem:[#allocation6 + $0x10] sm:$0xff]
    %v5124 = vld [vmem:[#allocation6 + $0x18] sm:$0xff]
    %v5125 = vld [vmem:[#allocation6 + $0x20] sm:$0xff]
    %v5126 = vld [vmem:[#allocation6 + $0x28] sm:$0xff]
    %v5127 = vld [vmem:[#allocation6 + $0x30] sm:$0xff]
    %v5128 = vld [vmem:[#allocation6 + $0x38] sm:$0xff]
    %v5129 = vpack.c.bf16 %v5120, %v5119
    %v5130 = vld [vmem:[#allocation16 + $0x2a] sm:$0x1]
    %v5132 = vlaneseq
    %v5133 = vshrl.u32 %v5132, 7
    %v5134 = vsub.s32 0, %v5133
    %v5135 = vrot.slane %v5130, %v5134
    %5137 = vmatprep.subr.bf16.mxu0 0
    %5138 = vmatpush1.bf16.msra.mxu0 %v5121
    %5139 = vmatprep.subr.bf16.mxu0 0
    %5140 = vmatpush1.bf16.msra.mxu0 %v5122
    %5141 = vmatprep.subr.bf16.mxu0 0
    %5142 = vmatpush1.bf16.msra.mxu0 %v5123
    %5143 = vmatprep.subr.bf16.mxu0 0
    %5144 = vmatpush1.bf16.msra.mxu0 %v5124
    %5145 = vmatprep.subr.bf16.mxu0 0
    %5146 = vmatpush1.bf16.msra.mxu0 %v5125
    %5147 = vmatprep.subr.bf16.mxu0 0
    %5148 = vmatpush1.bf16.msra.mxu0 %v5126
    %5149 = vmatprep.subr.bf16.mxu0 0
    %5150 = vmatpush1.bf16.msra.mxu0 %v5127
    %5151 = vmatprep.subr.bf16.mxu0 0
    %5152 = vmatpush1.bf16.msra.mxu0 %v5128
    %5153 = vmatprep.subr.bf16.mxu0 0
    %5154 = vmatpush1.bf16.msra.mxu0 0
    %5155 = vmatprep.subr.bf16.mxu0 0
    %5156 = vmatpush1.bf16.msra.mxu0 0
    %5157 = vmatprep.subr.bf16.mxu0 0
    %5158 = vmatpush1.bf16.msra.mxu0 0
    %5159 = vmatprep.subr.bf16.mxu0 0
    %5160 = vmatpush1.bf16.msra.mxu0 0
    %5161 = vmatprep.subr.bf16.mxu0 0
    %5162 = vmatpush1.bf16.msra.mxu0 0
    %5163 = vmatprep.subr.bf16.mxu0 0
    %5164 = vmatpush1.bf16.msra.mxu0 0
    %5165 = vmatprep.subr.bf16.mxu0 0
    %5166 = vmatpush1.bf16.msra.mxu0 0
    %5167 = vmatprep.subr.bf16.mxu0 0
    %5168 = vmatpush1.bf16.msra.mxu0 0
    %5169 = vmatprep.mubr.bf16.mxu0 0
    %5170 = vmatmul.mubr.bf16.gmra.mrb[0].mxu0 %v5129
    %v5171 = vpop.f32.mrb[0].mxu0
    %v5172 = vadd.f32 %v5135, %v5171
    %v5173 = vpop.f32.mrb[0].mxu0
    %v5174 = vpop.f32.mrb[0].mxu0
    %v5175 = vadd.f32 %v5135, %v5174
    %v5176 = vpop.f32.mrb[0].mxu0
    %5177 = vdwg.mxu0
    %v5178 = vlaneseq
    %v5179 = vand.u32 %v5178, 127
    %vm5180 = vcmp.ge.s32.totalorder %v5179, 0
    %vm5181 = vcmp.lt.s32.totalorder %v5179, 4
    %vm5182 = vmand %vm5180, %vm5181
    %v5183 = vsel %vm5182, %v5172, -1e+30
    %v5184 = vsel %vm5182, %v5175, -1e+30
    %5185 = vmax.xlane.f32.xlu0 %v5183
    %v5186 = vpop.xlane.xlu0 %5185
    %5187 = vmax.xlane.f32.xlu0 %v5184
    %v5188 = vpop.xlane.xlu0 %5187
    %v5189 = vsub.f32 %v5172, %v5186
    %v5190 = vsub.f32 %v5175, %v5188
    %v5191 = vsel %vm5182, %v5189, -1e+30
    %v5192 = vsel %vm5182, %v5190, -1e+30
    %v5193 = vmul.f32 %v5191, 1.442695
    %v5194 = vpow.pop %v5193
    %v5195 = vmul.f32 %v5192, 1.442695
    %v5196 = vpow.pop %v5195
    %5197 = vadd.xlane.f32.xlu0 %v5194
    %v5198 = vpop.xlane.xlu0 %5197
    %5199 = vadd.xlane.f32.xlu0 %v5196
    %v5200 = vpop.xlane.xlu0 %5199
    %v5201 = vsel %vm5182, 1, 0
    %v5202 = vcvt.s32.f32 %v5201
    %v5203 = vmul.f32 %v5202, %v5186
    %v5204 = vmul.f32 %v5202, %v5188
    %v5205 = vadd.f32 %v5203, 0.0
    %v5206 = vadd.f32 %v5204, 0.0
    %v5207 = vlog2.pop %v5198
    %v5208 = vmul.f32 %v5207, 0.6931472
    %v5209 = vlog2.pop %v5200
    %v5210 = vmul.f32 %v5209, 0.6931472
    %v5211 = vmul.f32 %v5202, %v5208
    %v5212 = vmul.f32 %v5202, %v5210
    %v5213 = vadd.f32 %v5211, 0.0
    %v5214 = vadd.f32 %v5212, 0.0
    %vm5215 = vcmp.ge.s32.totalorder %v5179, 4
    %vm5216 = vcmp.lt.s32.totalorder %v5179, 12
    %vm5217 = vmand %vm5215, %vm5216
    %v5218 = vsel %vm5217, %v5172, -1e+30
    %v5219 = vsel %vm5217, %v5175, -1e+30
    %5220 = vmax.xlane.f32.xlu0 %v5218
    %v5221 = vpop.xlane.xlu0 %5220
    %5222 = vmax.xlane.f32.xlu0 %v5219
    %v5223 = vpop.xlane.xlu0 %5222
    %v5224 = vsub.f32 %v5172, %v5221
    %v5225 = vsub.f32 %v5175, %v5223
    %v5226 = vsel %vm5217, %v5224, -1e+30
    %v5227 = vsel %vm5217, %v5225, -1e+30
    %v5228 = vmul.f32 %v5226, 1.442695
    %v5229 = vpow.pop %v5228
    %v5230 = vmul.f32 %v5227, 1.442695
    %v5231 = vpow.pop %v5230
    %5232 = vadd.xlane.f32.xlu0 %v5229
    %v5233 = vpop.xlane.xlu0 %5232
    %5234 = vadd.xlane.f32.xlu0 %v5231
    %v5235 = vpop.xlane.xlu0 %5234
    %v5236 = vsel %vm5217, 1, 0
    %v5237 = vcvt.s32.f32 %v5236
    %v5238 = vmul.f32 %v5237, %v5221
    %v5239 = vmul.f32 %v5237, %v5223
    %v5240 = vadd.f32 %v5205, %v5238
    %v5241 = vadd.f32 %v5206, %v5239
    %v5242 = vlog2.pop %v5233
    %v5243 = vmul.f32 %v5242, 0.6931472
    %v5244 = vlog2.pop %v5235
    %v5245 = vmul.f32 %v5244, 0.6931472
    %v5246 = vmul.f32 %v5237, %v5243
    %v5247 = vmul.f32 %v5237, %v5245
    %v5248 = vadd.f32 %v5213, %v5246
    %v5249 = vadd.f32 %v5214, %v5247
    %vm5250 = vcmp.ge.s32.totalorder %v5179, 12
    %vm5251 = vcmp.lt.s32.totalorder %v5179, 14
    %vm5252 = vmand %vm5250, %vm5251
    %v5253 = vsel %vm5252, %v5172, -1e+30
    %v5254 = vsel %vm5252, %v5175, -1e+30
    %5255 = vmax.xlane.f32.xlu0 %v5253
    %v5256 = vpop.xlane.xlu0 %5255
    %5257 = vmax.xlane.f32.xlu0 %v5254
    %v5258 = vpop.xlane.xlu0 %5257
    %v5259 = vsub.f32 %v5172, %v5256
    %v5260 = vsub.f32 %v5175, %v5258
    %v5261 = vsel %vm5252, %v5259, -1e+30
    %v5262 = vsel %vm5252, %v5260, -1e+30
    %v5263 = vmul.f32 %v5261, 1.442695
    %v5264 = vpow.pop %v5263
    %v5265 = vmul.f32 %v5262, 1.442695
    %v5266 = vpow.pop %v5265
    %5267 = vadd.xlane.f32.xlu0 %v5264
    %v5268 = vpop.xlane.xlu0 %5267
    %5269 = vadd.xlane.f32.xlu0 %v5266
    %v5270 = vpop.xlane.xlu0 %5269
    %v5271 = vsel %vm5252, 1, 0
    %v5272 = vcvt.s32.f32 %v5271
    %v5273 = vmul.f32 %v5272, %v5256
    %v5274 = vmul.f32 %v5272, %v5258
    %v5275 = vadd.f32 %v5240, %v5273
    %v5276 = vadd.f32 %v5241, %v5274
    %v5277 = vlog2.pop %v5268
    %v5278 = vmul.f32 %v5277, 0.6931472
    %v5279 = vlog2.pop %v5270
    %v5280 = vmul.f32 %v5279, 0.6931472
    %v5281 = vmul.f32 %v5272, %v5278
    %v5282 = vmul.f32 %v5272, %v5280
    %v5283 = vadd.f32 %v5248, %v5281
    %v5284 = vadd.f32 %v5249, %v5282
    %v5285 = vsub.f32 %v5172, %v5275
    %v5286 = vsub.f32 %v5175, %v5276
    %v5287 = vsub.f32 %v5285, %v5283
    %v5288 = vsub.f32 %v5286, %v5284
    %5289 = vst [vmem:[#allocation17] sm:$0xff] %v5287
    %5290 = vst [vmem:[#allocation17 + $0x8] sm:$0xff] %v5288
    // Predicated region
    $region54: #{tpu_custom_call.1} parent=1 // pred_check
      _
    $region55: #{tpu_custom_call.1} parent=1 // pred_check_branch
      %5292 = sbr.rel (0) target = $region57
    $region56: #{tpu_custom_call.1} parent=1 // pred_region
      %s5294 = ssub.s32 256, 256
      %5295 = vsyncadd [#allocation10], %s5294
      %s5296 = sshll.u32 [#allocation17], 4
      %s5297 = int_to_ptr.vmem [resolvable:$true] %s5296
      %5302 = dma.vmem_to_hbm [thread:$0]  %s5297, 256, %s10, [#allocation10], 128, 128, 8
    $region57: #{tpu_custom_call.1} parent=1 // pred_fallthru
      _
    // Predicated region
    $region58: #{tpu_custom_call.1} parent=1 // pred_check
      _
    $region59: #{tpu_custom_call.1} parent=1 // pred_check_branch
      %5304 = sbr.rel (0) target = $region61
    $region60: #{tpu_custom_call.1} parent=1 // pred_region
      %5305 = dma.done [#allocation10], 256
    $region61: #{tpu_custom_call.1} parent=1 // pred_fallthru
      _
    %5306 = vsyncpa [#allocation9], 1
    %5307 = vsyncpa [#allocation12], 1
    %5308 = vsyncpa [#allocation15], 1
    %5309 = vsyncpa [#allocation10], 1
  %5310 = vsyncmov [#allocation7]
  %s5311 = vpop.sfrf %5310
  %p5312 = scmp.eq.s32.totalorder %s5311, 0
  %p5313 = pneg %p5312
  %5315 = shalt.err (%p5313)
  %s5316 = scalar_lea.sflag [#allocation7], 1
  %5317 = vsyncmov %s5316
  %s5318 = vpop.sfrf %5317
  %p5319 = scmp.eq.s32.totalorder %s5318, 0
  %p5320 = pneg %p5319
  %5322 = shalt.err (%p5320)
  %s5323 = scalar_lea.sflag [#allocation7], 2
  %5324 = vsyncmov %s5323
  %s5325 = vpop.sfrf %5324
  %p5326 = scmp.eq.s32.totalorder %s5325, 0
  %p5327 = pneg %p5326
  %5329 = shalt.err (%p5327)
  %s5330 = scalar_lea.sflag [#allocation7], 3
  %5331 = vsyncmov %s5330
  %s5332 = vpop.sfrf %5331
  %p5333 = scmp.eq.s32.totalorder %s5332, 0
  %p5334 = pneg %p5333
  %5336 = shalt.err (%p5334)
  %s5337 = scalar_lea.sflag [#allocation7], 4
  %5338 = vsyncmov %s5337
  %s5339 = vpop.sfrf %5338
  %p5340 = scmp.eq.s32.totalorder %s5339, 0
  %p5341 = pneg %p5340
  %5343 = shalt.err (%p5341)

</llo_original>
